<compile_context>
chip_gen: v7x
topology: tpu7x:2x2x1
jax: 0.10.0
libtpu: 0.0.40
codegen_flags: <defaults>
</compile_context>

<pallas_src>
import numpy as np
import jax
import jax.numpy as jnp
from jax.experimental import pallas as pl
from jax.experimental.pallas import tpu as pltpu

# Make the plain-JAX reference / glue matmuls run in true f32 so validation is
# against full-precision XLA math.
jax.config.update("jax_default_matmul_precision", "highest")

EMBED = 100
N_CONT = 3
GRU_IN = N_CONT + 8 * EMBED          # 803
LANE = 128

_EMB_KEYS = ("hour_emb", "day_emb", "month_emb", "year_emb",
             "dow_emb", "doy_emb", "weekend_emb", "worktime_emb")
_EMB_ROWS = (24, 31, 12, 2, 7, 366, 2, 2)


def _round_up(n, m):
    return (n + m - 1) // m * m


# ----------------------------------------------------------------------------
# Pallas kernel: GRU recurrence over one T-chunk + fused Linear heads.
# Gate order matches PyTorch nn.GRU: (r, z, n); each gate occupies its own
# 128-lane block of the GP = 3*HP axis.
# ----------------------------------------------------------------------------
def _gru_kernel(gi_ref, h0_ref, w_hh_ref, b_hh_ref,
                w_out_ref, b_out_ref, w_ht_ref, b_ht_ref,
                out_ref, hn_ref, ht_ref, h_carry, h_all):
    """gi_ref : (Tc*B, GP) bf16  pre-projected gate inputs (per-gate lane blocks)
       h0_ref : (B, HP)  f32     initial hidden, zero-padded to HP lanes
       out_ref: (Tc*B, OP) f32   `out` head for this chunk (lane-dense)
       hn_ref : (B, HP)  f32     final hidden (written back after last step)
       ht_ref : (B, OP)  f32     `hidden_transform` head of the final hidden
       h_carry: (B, HP)  f32     hidden state carried across grid steps
       h_all  : (Tc*B, HP) f32   staged per-step hidden states for the out head"""
    B, HP = h0_ref.shape
    GP = gi_ref.shape[-1]
    Tc = gi_ref.shape[0] // B

    @pl.when(pl.program_id(0) == 0)
    def _():
        h_carry[...] = h0_ref[...]

    # Hoist weight load / bias broadcast out of the step loop (no CSE in JAX).
    w_hh = w_hh_ref[...]
    b_hh = jnp.broadcast_to(b_hh_ref[...], (B, GP))

    # Recurrence: short static loop over the chunk; the T-chunk grid bounds live
    # ranges, so Tc acts as the unroll factor (no full-T unroll).
    for i in range(Tc):
        h_prev = h_carry[...]                                       # (B, HP)
        gi = gi_ref[i * B:(i + 1) * B, :].astype(jnp.float32)       # (B, GP)
        gh = jnp.dot(h_prev, w_hh, preferred_element_type=jnp.float32) + b_hh
        # Gate slices land exactly on 128-lane vreg boundaries.
        r = jax.nn.sigmoid(gi[:, 0:HP] + gh[:, 0:HP])
        z = jax.nn.sigmoid(gi[:, HP:2 * HP] + gh[:, HP:2 * HP])
        n = jnp.tanh(gi[:, 2 * HP:3 * HP] + r * gh[:, 2 * HP:3 * HP])
        h_new = (1.0 - z) * n + z * h_prev
        h_carry[...] = h_new
        h_all[i * B:(i + 1) * B, :] = h_new

    # `out` head hoisted off the serial path: one batched MXU GEMM per chunk,
    # lane-dense unmasked store.
    out_ref[...] = (jnp.dot(h_all[...], w_out_ref[...],
                            preferred_element_type=jnp.float32) + b_out_ref[...])

    # Final-hidden outputs: constant block index -> written back to HBM only
    # once, after the last grid step.
    hn = h_carry[...]
    hn_ref[...] = hn
    ht_ref[...] = (jnp.dot(hn, w_ht_ref[...],
                           preferred_element_type=jnp.float32) + b_ht_ref[...])


def gru_forward(gi2d, h0, w_hh, b_hh, w_out, b_out, w_ht, b_ht, *, t_chunk):
    TB, GP = gi2d.shape
    B, HP = h0.shape
    OP = w_out.shape[1]
    T = TB // B
    assert T % t_chunk == 0
    rows = t_chunk * B                       # rows per chunk (multiple of 8)
    grid = (T // t_chunk,)

    return pl.pallas_call(
        _gru_kernel,
        out_shape=(jax.ShapeDtypeStruct((TB, OP), jnp.float32),   # out head
                   jax.ShapeDtypeStruct((B, HP), jnp.float32),    # final hidden
                   jax.ShapeDtypeStruct((B, OP), jnp.float32)),   # hidden_transform
        grid=grid,
        in_specs=[
            pl.BlockSpec((rows, GP), lambda t: (t, 0)),   # gi chunk (pipelined)
            pl.BlockSpec((B, HP), lambda t: (0, 0)),      # h0
            pl.BlockSpec((HP, GP), lambda t: (0, 0)),     # w_hh
            pl.BlockSpec((1, GP), lambda t: (0, 0)),      # b_hh
            pl.BlockSpec((HP, OP), lambda t: (0, 0)),     # w_out
            pl.BlockSpec((1, OP), lambda t: (0, 0)),      # b_out
            pl.BlockSpec((HP, OP), lambda t: (0, 0)),     # w_ht
            pl.BlockSpec((1, OP), lambda t: (0, 0)),      # b_ht
        ],
        out_specs=(
            pl.BlockSpec((rows, OP), lambda t: (t, 0)),   # out chunk (pipelined)
            pl.BlockSpec((B, HP), lambda t: (0, 0)),
            pl.BlockSpec((B, OP), lambda t: (0, 0)),
        ),
        scratch_shapes=[pltpu.VMEM((B, HP), jnp.float32),       # hidden carry
                        pltpu.VMEM((rows, HP), jnp.float32)],   # staged h_t
        compiler_params=pltpu.CompilerParams(
            dimension_semantics=("arbitrary",),                 # serial in T
            vmem_limit_bytes=32 * 1024 * 1024),
    )(gi2d, h0, w_hh, b_hh, w_out, b_out, w_ht, b_ht)


# ----------------------------------------------------------------------------
# Parameter init (shapes from VanillaEncoder.__init__), pre-laid-out for the
# kernel: per-gate 128-lane blocks, hidden/output dims zero-padded to 128.
# ----------------------------------------------------------------------------
def init_params(key, hidden_size, output_size):
    H, O = hidden_size, output_size
    HP = _round_up(H, LANE)           # per-gate lane block
    GP = 3 * HP                       # r | z | n blocks
    OP = _round_up(O, LANE)
    G = 3 * H
    ks = jax.random.split(key, 16)

    def u(k, shape, scale):
        return jax.random.uniform(k, shape, jnp.float32, -scale, scale)

    def gate_pad(w):
        """(rows, 3H) -> (rows, GP): gate g occupies lanes [g*HP, g*HP+H)."""
        out = jnp.zeros((w.shape[0], GP), w.dtype)
        for g in range(3):
            out = out.at[:, g * HP:g * HP + H].set(w[:, g * H:(g + 1) * H])
        return out

    def pad_rows(a, rows):
        return jnp.pad(a, ((0, rows - a.shape[0]), (0, 0)))

    def pad_cols(a, cols):
        return jnp.pad(a, ((0, 0), (0, cols - a.shape[1])))

    sg = 1.0 / np.sqrt(H)
    w_ih = u(ks[0], (GRU_IN, G), sg)      # pre-transposed for x @ W
    w_hh = u(ks[1], (H, G), sg)
    b_ih = u(ks[2], (1, G), sg)
    b_hh = u(ks[3], (1, G), sg)
    w_ht = u(ks[12], (H, O), sg)
    b_ht = u(ks[13], (1, O), sg)
    w_out = u(ks[14], (H, O), sg)
    b_out = u(ks[15], (1, O), sg)

    params = {
        "w_ih_pad": gate_pad(w_ih),                      # (803, GP) f32
        "b_ih_pad": gate_pad(b_ih),                      # (1, GP)
        "w_hh_pad": pad_rows(gate_pad(w_hh), HP),        # (HP, GP)
        "b_hh_pad": gate_pad(b_hh),                      # (1, GP)
        "w_out_pad": pad_rows(pad_cols(w_out, OP), HP),  # (HP, OP)
        "b_out_pad": pad_cols(b_out, OP),                # (1, OP)
        "w_ht_pad": pad_rows(pad_cols(w_ht, OP), HP),    # (HP, OP)
        "b_ht_pad": pad_cols(b_ht, OP),                  # (1, OP)
    }
    for i, (name, rows) in enumerate(zip(_EMB_KEYS, _EMB_ROWS)):
        params[name] = jax.random.normal(ks[4 + i], (rows, EMBED), jnp.float32)
    return params


# ----------------------------------------------------------------------------
# Embedding pre-projection (plain-JAX glue): gi = x @ W_ih + b_ih computed
# WITHOUT ever materializing the 803-wide x. Each tiny table is projected
# through its W_ih slice into gate space once, then gathered and summed.
# ----------------------------------------------------------------------------
def build_gate_inputs(params, input_seqs):
    """(T, B, 11) -> (T, B, GP) bf16 per-gate-padded input projection."""
    w_ih = params["w_ih_pad"]                                         # (803, GP)
    gi = input_seqs[:, :, :N_CONT] @ w_ih[:N_CONT] + params["b_ih_pad"]
    idx = input_seqs[:, :, N_CONT:N_CONT + 8].astype(jnp.int32)       # (T, B, 8)
    for i, name in enumerate(_EMB_KEYS):
        lo = N_CONT + i * EMBED
        proj_tbl = params[name] @ w_ih[lo:lo + EMBED]                 # (<=366, GP)
        gi = gi + jnp.take(proj_tbl, idx[..., i], axis=0)
    return gi.astype(jnp.bfloat16)    # bf16 halves HBM traffic into the kernel


# ----------------------------------------------------------------------------
# Full forward pass (mirrors VanillaEncoder.forward).
# ----------------------------------------------------------------------------
def vanilla_encoder_forward(params, input_seqs, hidden_size, output_size,
                            hidden=None, t_chunk=None):
    T, B, _ = input_seqs.shape
    H, O = hidden_size, output_size
    HP, GP = params["w_hh_pad"].shape
    OP = params["w_out_pad"].shape[1]

    gi = build_gate_inputs(params, input_seqs).reshape(T * B, GP)

    h0 = jnp.zeros((B, HP), jnp.float32)
    if hidden is not None:
        h0 = h0.at[:, :H].set(hidden.reshape(B, H).astype(jnp.float32))

    if t_chunk is None:
        t_chunk = next((c for c in (8, 4, 2, 1)
                        if T % c == 0 and (c * B) % 8 == 0), T)

    out2d, hn, ht = gru_forward(
        gi, h0, params["w_hh_pad"], params["b_hh_pad"],
        params["w_out_pad"], params["b_out_pad"],
        params["w_ht_pad"], params["b_ht_pad"], t_chunk=t_chunk)

    outputs_transformed = out2d.reshape(T, B, OP)[:, :, :O].transpose(1, 0, 2)
    hidden_out = hn[:, :H][None]                     # (1, B, H)
    hidden_transformed = ht[:, :O][None]             # (1, B, O)
    return outputs_transformed, hidden_out, hidden_transformed


# ----------------------------------------------------------------------------
# Pure-JAX reference on UNPADDED weights (shares only the bf16 gate-input
# rounding with the kernel path) for validation.
# ----------------------------------------------------------------------------
def _reference_forward(params, input_seqs, hidden_size, output_size, hidden=None):
    T, B, _ = input_seqs.shape
    H, O = hidden_size, output_size
    HP = params["w_hh_pad"].shape[0]

    gi = build_gate_inputs(params, input_seqs).astype(jnp.float32)   # (T, B, GP)

    def gates(a):   # (..., GP) -> 3 unpadded (..., H) gate slices
        return tuple(a[..., g * HP:g * HP + H] for g in range(3))

    w_hh = params["w_hh_pad"][:H]
    b_hh = params["b_hh_pad"]
    w_out = params["w_out_pad"][:H, :O]
    b_out = params["b_out_pad"][:, :O]
    w_ht = params["w_ht_pad"][:H, :O]
    b_ht = params["b_ht_pad"][:, :O]

    h0 = (jnp.zeros((B, H), jnp.float32) if hidden is None
          else hidden.reshape(B, H).astype(jnp.float32))

    def step(h, gi_t):
        gh = h @ w_hh + b_hh
        gi_r, gi_z, gi_n = gates(gi_t)
        gh_r, gh_z, gh_n = gates(gh)
        r = jax.nn.sigmoid(gi_r + gh_r)
        z = jax.nn.sigmoid(gi_z + gh_z)
        n = jnp.tanh(gi_n + r * gh_n)
        h_new = (1.0 - z) * n + z * h
        return h_new, h_new

    hn, ys = jax.lax.scan(step, h0, gi)
    out = (ys @ w_out + b_out).transpose(1, 0, 2)     # (B, T, O)
    ht = (hn @ w_ht + b_ht)[None]                     # (1, B, O)
    return out, hn[None], ht


if __name__ == "__main__":
    T, B = 8, 4                        # seq_len, batch
    hidden_size, output_size = 32, 16

    key = jax.random.PRNGKey(0)
    pkey, xkey, ikey = jax.random.split(key, 3)
    params = init_params(pkey, hidden_size, output_size)

    # input_seqs (T, B, 11): 3 continuous features + 8 integer category indices.
    cont = jax.random.normal(xkey, (T, B, 3), jnp.float32)
    maxes = jnp.array(_EMB_ROWS, jnp.int32)
    cats = jax.random.randint(ikey, (T, B, 8), 0, 1_000_000) % maxes
    input_seqs = jnp.concatenate([cont, cats.astype(jnp.float32)], axis=2)

    # t_chunk=4 -> 2 grid steps, exercising the cross-chunk hidden-state carry.
    outputs_t, hidden, hidden_t = jax.block_until_ready(
        vanilla_encoder_forward(params, input_seqs, hidden_size, output_size,
                                t_chunk=4))

    assert outputs_t.shape == (B, T, output_size)
    assert hidden.shape == (1, B, hidden_size)
    assert hidden_t.shape == (1, B, output_size)

    out_ref, hid_ref, ht_ref = _reference_forward(
        params, input_seqs, hidden_size, output_size)
    np.testing.assert_allclose(np.asarray(hidden), np.asarray(hid_ref),
                               rtol=2e-3, atol=2e-3)
    np.testing.assert_allclose(np.asarray(outputs_t), np.asarray(out_ref),
                               rtol=2e-3, atol=2e-3)
    np.testing.assert_allclose(np.asarray(hidden_t), np.asarray(ht_ref),
                               rtol=2e-3, atol=2e-3)

    print("KERNEL_OK")
</pallas_src>

<mosaic_0001>
module attributes {stable_mosaic.version = 11 : i64} {
  func.func @_gru_kernel(%arg0: i32, %arg1: memref<16x384xbf16, #tpu.memory_space<vmem>>, %arg2: memref<4x128xf32, #tpu.memory_space<vmem>>, %arg3: memref<128x384xf32, #tpu.memory_space<vmem>>, %arg4: memref<1x384xf32, #tpu.memory_space<vmem>>, %arg5: memref<128x128xf32, #tpu.memory_space<vmem>>, %arg6: memref<1x128xf32, #tpu.memory_space<vmem>>, %arg7: memref<128x128xf32, #tpu.memory_space<vmem>>, %arg8: memref<1x128xf32, #tpu.memory_space<vmem>>, %arg9: memref<16x128xf32, #tpu.memory_space<vmem>>, %arg10: memref<4x128xf32, #tpu.memory_space<vmem>>, %arg11: memref<4x128xf32, #tpu.memory_space<vmem>>, %arg12: memref<4x128xf32, #tpu.memory_space<vmem>>, %arg13: memref<16x128xf32, #tpu.memory_space<vmem>>) attributes {dimension_semantics = [#tpu.dimension_semantics<arbitrary>], iteration_bounds = array<i64: 2>, scalar_prefetch = 0 : i64, scratch_operands = 2 : i64, tpu.core_type = #tpu.core_type<tc>, window_params = [{transform_indices = @transform_0, window_bounds = array<i64: 16, 384>}, {pipeline_mode = #tpu.pipeline_mode<synchronous>, transform_indices = @transform_1, window_bounds = array<i64: 4, 128>}, {pipeline_mode = #tpu.pipeline_mode<synchronous>, transform_indices = @transform_2, window_bounds = array<i64: 128, 384>}, {pipeline_mode = #tpu.pipeline_mode<synchronous>, transform_indices = @transform_3, window_bounds = array<i64: 1, 384>}, {pipeline_mode = #tpu.pipeline_mode<synchronous>, transform_indices = @transform_4, window_bounds = array<i64: 128, 128>}, {pipeline_mode = #tpu.pipeline_mode<synchronous>, transform_indices = @transform_5, window_bounds = array<i64: 1, 128>}, {pipeline_mode = #tpu.pipeline_mode<synchronous>, transform_indices = @transform_6, window_bounds = array<i64: 128, 128>}, {pipeline_mode = #tpu.pipeline_mode<synchronous>, transform_indices = @transform_7, window_bounds = array<i64: 1, 128>}, {transform_indices = @transform_8, window_bounds = array<i64: 16, 128>}, {pipeline_mode = #tpu.pipeline_mode<synchronous>, transform_indices = @transform_9, window_bounds = array<i64: 4, 128>}, {pipeline_mode = #tpu.pipeline_mode<synchronous>, transform_indices = @transform_10, window_bounds = array<i64: 4, 128>}]} {
    %c0_i32 = arith.constant 0 : i32
    %0 = arith.cmpi eq, %arg0, %c0_i32 : i32
    %1 = arith.extui %0 : i1 to i32
    %c0_i32_0 = arith.constant 0 : i32
    %2 = arith.cmpi ne, %1, %c0_i32_0 : i32
    scf.if %2 {
      %c0_68 = arith.constant 0 : index
      %c0_69 = arith.constant 0 : index
      %154 = vector.load %arg2[%c0_68, %c0_69] : memref<4x128xf32, #tpu.memory_space<vmem>>, vector<4x128xf32>
      %c0_70 = arith.constant 0 : index
      %c0_71 = arith.constant 0 : index
      %155 = vector.load %arg12[%c0_70, %c0_71] : memref<4x128xf32, #tpu.memory_space<vmem>>, vector<4x128xf32>
      tpu.vector_store %arg12[%c0_70, %c0_71], %154 {strides = array<i32>} : memref<4x128xf32, #tpu.memory_space<vmem>>, vector<4x128xf32>,
    } else {
    }
    %c0 = arith.constant 0 : index
    %c0_1 = arith.constant 0 : index
    %3 = vector.load %arg3[%c0, %c0_1] : memref<128x384xf32, #tpu.memory_space<vmem>>, vector<128x384xf32>
    %c0_2 = arith.constant 0 : index
    %c0_3 = arith.constant 0 : index
    %4 = vector.load %arg4[%c0_2, %c0_3] : memref<1x384xf32, #tpu.memory_space<vmem>>, vector<1x384xf32>
    %5 = vector.shape_cast %4 : vector<1x384xf32> to vector<1x384xf32>
    %6 = vector.broadcast %5 : vector<1x384xf32> to vector<4x384xf32>
    %c0_4 = arith.constant 0 : index
    %c0_5 = arith.constant 0 : index
    %7 = vector.load %arg12[%c0_4, %c0_5] : memref<4x128xf32, #tpu.memory_space<vmem>>, vector<4x128xf32>
    %c0_6 = arith.constant 0 : index
    %c0_7 = arith.constant 0 : index
    %8 = vector.load %arg1[%c0_6, %c0_7] : memref<16x384xbf16, #tpu.memory_space<vmem>>, vector<4x384xbf16>
    %9 = arith.extf %8 : vector<4x384xbf16> to vector<4x384xf32>
    %cst = arith.constant dense<0.000000e+00> : vector<4x384xf32>
    %10 = tpu.matmul %7, %3, %cst {dimension_numbers = #tpu.dot_dimension_numbers<[1], [0], [0], [1], [0, 0, 1, 1], [], []>, precision = #tpu.contract_precision<fp32>} : vector<4x128xf32>, vector<128x384xf32>, vector<4x384xf32> -> vector<4x384xf32>
    %11 = arith.addf %10, %6 : vector<4x384xf32>
    %12 = vector.extract_strided_slice %9 {offsets = [0, 0], sizes = [4, 128], strides = [1, 1]} : vector<4x384xf32> to vector<4x128xf32>
    %13 = vector.extract_strided_slice %11 {offsets = [0, 0], sizes = [4, 128], strides = [1, 1]} : vector<4x384xf32> to vector<4x128xf32>
    %14 = arith.addf %12, %13 : vector<4x128xf32>
    %15 = arith.negf %14 : vector<4x128xf32>
    %16 = math.exp %15 : vector<4x128xf32>
    %cst_8 = arith.constant 1.000000e+00 : f32
    %17 = vector.broadcast %cst_8 : f32 to vector<4x128xf32>
    %18 = arith.addf %17, %16 : vector<4x128xf32>
    %19 = arith.divf %17, %18 : vector<4x128xf32>
    %20 = vector.extract_strided_slice %9 {offsets = [0, 128], sizes = [4, 128], strides = [1, 1]} : vector<4x384xf32> to vector<4x128xf32>
    %21 = vector.extract_strided_slice %11 {offsets = [0, 128], sizes = [4, 128], strides = [1, 1]} : vector<4x384xf32> to vector<4x128xf32>
    %22 = arith.addf %20, %21 : vector<4x128xf32>
    %23 = arith.negf %22 : vector<4x128xf32>
    %24 = math.exp %23 : vector<4x128xf32>
    %cst_9 = arith.constant 1.000000e+00 : f32
    %25 = vector.broadcast %cst_9 : f32 to vector<4x128xf32>
    %26 = arith.addf %25, %24 : vector<4x128xf32>
    %27 = arith.divf %25, %26 : vector<4x128xf32>
    %28 = vector.extract_strided_slice %9 {offsets = [0, 256], sizes = [4, 128], strides = [1, 1]} : vector<4x384xf32> to vector<4x128xf32>
    %29 = vector.extract_strided_slice %11 {offsets = [0, 256], sizes = [4, 128], strides = [1, 1]} : vector<4x384xf32> to vector<4x128xf32>
    %30 = arith.mulf %19, %29 : vector<4x128xf32>
    %31 = arith.addf %28, %30 : vector<4x128xf32>
    %32 = math.tanh %31 : vector<4x128xf32>
    %cst_10 = arith.constant 1.000000e+00 : f32
    %33 = vector.broadcast %cst_10 : f32 to vector<4x128xf32>
    %34 = arith.subf %33, %27 : vector<4x128xf32>
    %35 = arith.mulf %34, %32 : vector<4x128xf32>
    %36 = arith.mulf %27, %7 : vector<4x128xf32>
    %37 = arith.addf %35, %36 : vector<4x128xf32>
    %c0_11 = arith.constant 0 : index
    %c0_12 = arith.constant 0 : index
    %38 = vector.load %arg12[%c0_11, %c0_12] : memref<4x128xf32, #tpu.memory_space<vmem>>, vector<4x128xf32>
    tpu.vector_store %arg12[%c0_11, %c0_12], %37 {strides = array<i32>} : memref<4x128xf32, #tpu.memory_space<vmem>>, vector<4x128xf32>,
    %c0_13 = arith.constant 0 : index
    %c0_14 = arith.constant 0 : index
    %39 = vector.load %arg13[%c0_13, %c0_14] : memref<16x128xf32, #tpu.memory_space<vmem>>, vector<4x128xf32>
    tpu.vector_store %arg13[%c0_13, %c0_14], %37 {strides = array<i32>} : memref<16x128xf32, #tpu.memory_space<vmem>>, vector<4x128xf32>,
    %c0_15 = arith.constant 0 : index
    %c0_16 = arith.constant 0 : index
    %40 = vector.load %arg12[%c0_15, %c0_16] : memref<4x128xf32, #tpu.memory_space<vmem>>, vector<4x128xf32>
    %c4 = arith.constant 4 : index
    %c0_17 = arith.constant 0 : index
    %41 = vector.load %arg1[%c4, %c0_17] : memref<16x384xbf16, #tpu.memory_space<vmem>>, vector<4x384xbf16>
    %42 = arith.extf %41 : vector<4x384xbf16> to vector<4x384xf32>
    %cst_18 = arith.constant dense<0.000000e+00> : vector<4x384xf32>
    %43 = tpu.matmul %40, %3, %cst_18 {dimension_numbers = #tpu.dot_dimension_numbers<[1], [0], [0], [1], [0, 0, 1, 1], [], []>, precision = #tpu.contract_precision<fp32>} : vector<4x128xf32>, vector<128x384xf32>, vector<4x384xf32> -> vector<4x384xf32>
    %44 = arith.addf %43, %6 : vector<4x384xf32>
    %45 = vector.extract_strided_slice %42 {offsets = [0, 0], sizes = [4, 128], strides = [1, 1]} : vector<4x384xf32> to vector<4x128xf32>
    %46 = vector.extract_strided_slice %44 {offsets = [0, 0], sizes = [4, 128], strides = [1, 1]} : vector<4x384xf32> to vector<4x128xf32>
    %47 = arith.addf %45, %46 : vector<4x128xf32>
    %48 = arith.negf %47 : vector<4x128xf32>
    %49 = math.exp %48 : vector<4x128xf32>
    %cst_19 = arith.constant 1.000000e+00 : f32
    %50 = vector.broadcast %cst_19 : f32 to vector<4x128xf32>
    %51 = arith.addf %50, %49 : vector<4x128xf32>
    %52 = arith.divf %50, %51 : vector<4x128xf32>
    %53 = vector.extract_strided_slice %42 {offsets = [0, 128], sizes = [4, 128], strides = [1, 1]} : vector<4x384xf32> to vector<4x128xf32>
    %54 = vector.extract_strided_slice %44 {offsets = [0, 128], sizes = [4, 128], strides = [1, 1]} : vector<4x384xf32> to vector<4x128xf32>
    %55 = arith.addf %53, %54 : vector<4x128xf32>
    %56 = arith.negf %55 : vector<4x128xf32>
    %57 = math.exp %56 : vector<4x128xf32>
    %cst_20 = arith.constant 1.000000e+00 : f32
    %58 = vector.broadcast %cst_20 : f32 to vector<4x128xf32>
    %59 = arith.addf %58, %57 : vector<4x128xf32>
    %60 = arith.divf %58, %59 : vector<4x128xf32>
    %61 = vector.extract_strided_slice %42 {offsets = [0, 256], sizes = [4, 128], strides = [1, 1]} : vector<4x384xf32> to vector<4x128xf32>
    %62 = vector.extract_strided_slice %44 {offsets = [0, 256], sizes = [4, 128], strides = [1, 1]} : vector<4x384xf32> to vector<4x128xf32>
    %63 = arith.mulf %52, %62 : vector<4x128xf32>
    %64 = arith.addf %61, %63 : vector<4x128xf32>
    %65 = math.tanh %64 : vector<4x128xf32>
    %cst_21 = arith.constant 1.000000e+00 : f32
    %66 = vector.broadcast %cst_21 : f32 to vector<4x128xf32>
    %67 = arith.subf %66, %60 : vector<4x128xf32>
    %68 = arith.mulf %67, %65 : vector<4x128xf32>
    %69 = arith.mulf %60, %40 : vector<4x128xf32>
    %70 = arith.addf %68, %69 : vector<4x128xf32>
    %c0_22 = arith.constant 0 : index
    %c0_23 = arith.constant 0 : index
    %71 = vector.load %arg12[%c0_22, %c0_23] : memref<4x128xf32, #tpu.memory_space<vmem>>, vector<4x128xf32>
    tpu.vector_store %arg12[%c0_22, %c0_23], %70 {strides = array<i32>} : memref<4x128xf32, #tpu.memory_space<vmem>>, vector<4x128xf32>,
    %c4_24 = arith.constant 4 : index
    %c0_25 = arith.constant 0 : index
    %72 = vector.load %arg13[%c4_24, %c0_25] : memref<16x128xf32, #tpu.memory_space<vmem>>, vector<4x128xf32>
    tpu.vector_store %arg13[%c4_24, %c0_25], %70 {strides = array<i32>} : memref<16x128xf32, #tpu.memory_space<vmem>>, vector<4x128xf32>,
    %c0_26 = arith.constant 0 : index
    %c0_27 = arith.constant 0 : index
    %73 = vector.load %arg12[%c0_26, %c0_27] : memref<4x128xf32, #tpu.memory_space<vmem>>, vector<4x128xf32>
    %c8 = arith.constant 8 : index
    %c0_28 = arith.constant 0 : index
    %74 = vector.load %arg1[%c8, %c0_28] : memref<16x384xbf16, #tpu.memory_space<vmem>>, vector<4x384xbf16>
    %75 = arith.extf %74 : vector<4x384xbf16> to vector<4x384xf32>
    %cst_29 = arith.constant dense<0.000000e+00> : vector<4x384xf32>
    %76 = tpu.matmul %73, %3, %cst_29 {dimension_numbers = #tpu.dot_dimension_numbers<[1], [0], [0], [1], [0, 0, 1, 1], [], []>, precision = #tpu.contract_precision<fp32>} : vector<4x128xf32>, vector<128x384xf32>, vector<4x384xf32> -> vector<4x384xf32>
    %77 = arith.addf %76, %6 : vector<4x384xf32>
    %78 = vector.extract_strided_slice %75 {offsets = [0, 0], sizes = [4, 128], strides = [1, 1]} : vector<4x384xf32> to vector<4x128xf32>
    %79 = vector.extract_strided_slice %77 {offsets = [0, 0], sizes = [4, 128], strides = [1, 1]} : vector<4x384xf32> to vector<4x128xf32>
    %80 = arith.addf %78, %79 : vector<4x128xf32>
    %81 = arith.negf %80 : vector<4x128xf32>
    %82 = math.exp %81 : vector<4x128xf32>
    %cst_30 = arith.constant 1.000000e+00 : f32
    %83 = vector.broadcast %cst_30 : f32 to vector<4x128xf32>
    %84 = arith.addf %83, %82 : vector<4x128xf32>
    %85 = arith.divf %83, %84 : vector<4x128xf32>
    %86 = vector.extract_strided_slice %75 {offsets = [0, 128], sizes = [4, 128], strides = [1, 1]} : vector<4x384xf32> to vector<4x128xf32>
    %87 = vector.extract_strided_slice %77 {offsets = [0, 128], sizes = [4, 128], strides = [1, 1]} : vector<4x384xf32> to vector<4x128xf32>
    %88 = arith.addf %86, %87 : vector<4x128xf32>
    %89 = arith.negf %88 : vector<4x128xf32>
    %90 = math.exp %89 : vector<4x128xf32>
    %cst_31 = arith.constant 1.000000e+00 : f32
    %91 = vector.broadcast %cst_31 : f32 to vector<4x128xf32>
    %92 = arith.addf %91, %90 : vector<4x128xf32>
    %93 = arith.divf %91, %92 : vector<4x128xf32>
    %94 = vector.extract_strided_slice %75 {offsets = [0, 256], sizes = [4, 128], strides = [1, 1]} : vector<4x384xf32> to vector<4x128xf32>
    %95 = vector.extract_strided_slice %77 {offsets = [0, 256], sizes = [4, 128], strides = [1, 1]} : vector<4x384xf32> to vector<4x128xf32>
    %96 = arith.mulf %85, %95 : vector<4x128xf32>
    %97 = arith.addf %94, %96 : vector<4x128xf32>
    %98 = math.tanh %97 : vector<4x128xf32>
    %cst_32 = arith.constant 1.000000e+00 : f32
    %99 = vector.broadcast %cst_32 : f32 to vector<4x128xf32>
    %100 = arith.subf %99, %93 : vector<4x128xf32>
    %101 = arith.mulf %100, %98 : vector<4x128xf32>
    %102 = arith.mulf %93, %73 : vector<4x128xf32>
    %103 = arith.addf %101, %102 : vector<4x128xf32>
    %c0_33 = arith.constant 0 : index
    %c0_34 = arith.constant 0 : index
    %104 = vector.load %arg12[%c0_33, %c0_34] : memref<4x128xf32, #tpu.memory_space<vmem>>, vector<4x128xf32>
    tpu.vector_store %arg12[%c0_33, %c0_34], %103 {strides = array<i32>} : memref<4x128xf32, #tpu.memory_space<vmem>>, vector<4x128xf32>,
    %c8_35 = arith.constant 8 : index
    %c0_36 = arith.constant 0 : index
    %105 = vector.load %arg13[%c8_35, %c0_36] : memref<16x128xf32, #tpu.memory_space<vmem>>, vector<4x128xf32>
    tpu.vector_store %arg13[%c8_35, %c0_36], %103 {strides = array<i32>} : memref<16x128xf32, #tpu.memory_space<vmem>>, vector<4x128xf32>,
    %c0_37 = arith.constant 0 : index
    %c0_38 = arith.constant 0 : index
    %106 = vector.load %arg12[%c0_37, %c0_38] : memref<4x128xf32, #tpu.memory_space<vmem>>, vector<4x128xf32>
    %c12 = arith.constant 12 : index
    %c0_39 = arith.constant 0 : index
    %107 = vector.load %arg1[%c12, %c0_39] : memref<16x384xbf16, #tpu.memory_space<vmem>>, vector<4x384xbf16>
    %108 = arith.extf %107 : vector<4x384xbf16> to vector<4x384xf32>
    %cst_40 = arith.constant dense<0.000000e+00> : vector<4x384xf32>
    %109 = tpu.matmul %106, %3, %cst_40 {dimension_numbers = #tpu.dot_dimension_numbers<[1], [0], [0], [1], [0, 0, 1, 1], [], []>, precision = #tpu.contract_precision<fp32>} : vector<4x128xf32>, vector<128x384xf32>, vector<4x384xf32> -> vector<4x384xf32>
    %110 = arith.addf %109, %6 : vector<4x384xf32>
    %111 = vector.extract_strided_slice %108 {offsets = [0, 0], sizes = [4, 128], strides = [1, 1]} : vector<4x384xf32> to vector<4x128xf32>
    %112 = vector.extract_strided_slice %110 {offsets = [0, 0], sizes = [4, 128], strides = [1, 1]} : vector<4x384xf32> to vector<4x128xf32>
    %113 = arith.addf %111, %112 : vector<4x128xf32>
    %114 = arith.negf %113 : vector<4x128xf32>
    %115 = math.exp %114 : vector<4x128xf32>
    %cst_41 = arith.constant 1.000000e+00 : f32
    %116 = vector.broadcast %cst_41 : f32 to vector<4x128xf32>
    %117 = arith.addf %116, %115 : vector<4x128xf32>
    %118 = arith.divf %116, %117 : vector<4x128xf32>
    %119 = vector.extract_strided_slice %108 {offsets = [0, 128], sizes = [4, 128], strides = [1, 1]} : vector<4x384xf32> to vector<4x128xf32>
    %120 = vector.extract_strided_slice %110 {offsets = [0, 128], sizes = [4, 128], strides = [1, 1]} : vector<4x384xf32> to vector<4x128xf32>
    %121 = arith.addf %119, %120 : vector<4x128xf32>
    %122 = arith.negf %121 : vector<4x128xf32>
    %123 = math.exp %122 : vector<4x128xf32>
    %cst_42 = arith.constant 1.000000e+00 : f32
    %124 = vector.broadcast %cst_42 : f32 to vector<4x128xf32>
    %125 = arith.addf %124, %123 : vector<4x128xf32>
    %126 = arith.divf %124, %125 : vector<4x128xf32>
    %127 = vector.extract_strided_slice %108 {offsets = [0, 256], sizes = [4, 128], strides = [1, 1]} : vector<4x384xf32> to vector<4x128xf32>
    %128 = vector.extract_strided_slice %110 {offsets = [0, 256], sizes = [4, 128], strides = [1, 1]} : vector<4x384xf32> to vector<4x128xf32>
    %129 = arith.mulf %118, %128 : vector<4x128xf32>
    %130 = arith.addf %127, %129 : vector<4x128xf32>
    %131 = math.tanh %130 : vector<4x128xf32>
    %cst_43 = arith.constant 1.000000e+00 : f32
    %132 = vector.broadcast %cst_43 : f32 to vector<4x128xf32>
    %133 = arith.subf %132, %126 : vector<4x128xf32>
    %134 = arith.mulf %133, %131 : vector<4x128xf32>
    %135 = arith.mulf %126, %106 : vector<4x128xf32>
    %136 = arith.addf %134, %135 : vector<4x128xf32>
    %c0_44 = arith.constant 0 : index
    %c0_45 = arith.constant 0 : index
    %137 = vector.load %arg12[%c0_44, %c0_45] : memref<4x128xf32, #tpu.memory_space<vmem>>, vector<4x128xf32>
    tpu.vector_store %arg12[%c0_44, %c0_45], %136 {strides = array<i32>} : memref<4x128xf32, #tpu.memory_space<vmem>>, vector<4x128xf32>,
    %c12_46 = arith.constant 12 : index
    %c0_47 = arith.constant 0 : index
    %138 = vector.load %arg13[%c12_46, %c0_47] : memref<16x128xf32, #tpu.memory_space<vmem>>, vector<4x128xf32>
    tpu.vector_store %arg13[%c12_46, %c0_47], %136 {strides = array<i32>} : memref<16x128xf32, #tpu.memory_space<vmem>>, vector<4x128xf32>,
    %c0_48 = arith.constant 0 : index
    %c0_49 = arith.constant 0 : index
    %139 = vector.load %arg13[%c0_48, %c0_49] : memref<16x128xf32, #tpu.memory_space<vmem>>, vector<16x128xf32>
    %c0_50 = arith.constant 0 : index
    %c0_51 = arith.constant 0 : index
    %140 = vector.load %arg5[%c0_50, %c0_51] : memref<128x128xf32, #tpu.memory_space<vmem>>, vector<128x128xf32>
    %cst_52 = arith.constant dense<0.000000e+00> : vector<16x128xf32>
    %141 = tpu.matmul %139, %140, %cst_52 {dimension_numbers = #tpu.dot_dimension_numbers<[1], [0], [0], [1], [0, 0, 1, 1], [], []>, precision = #tpu.contract_precision<fp32>} : vector<16x128xf32>, vector<128x128xf32>, vector<16x128xf32> -> vector<16x128xf32>
    %c0_53 = arith.constant 0 : index
    %c0_54 = arith.constant 0 : index
    %142 = vector.load %arg6[%c0_53, %c0_54] : memref<1x128xf32, #tpu.memory_space<vmem>>, vector<1x128xf32>
    %143 = vector.broadcast %142 : vector<1x128xf32> to vector<16x128xf32>
    %144 = arith.addf %141, %143 : vector<16x128xf32>
    %c0_55 = arith.constant 0 : index
    %c0_56 = arith.constant 0 : index
    %145 = vector.load %arg9[%c0_55, %c0_56] : memref<16x128xf32, #tpu.memory_space<vmem>>, vector<16x128xf32>
    tpu.vector_store %arg9[%c0_55, %c0_56], %144 {strides = array<i32>} : memref<16x128xf32, #tpu.memory_space<vmem>>, vector<16x128xf32>,
    %c0_57 = arith.constant 0 : index
    %c0_58 = arith.constant 0 : index
    %146 = vector.load %arg12[%c0_57, %c0_58] : memref<4x128xf32, #tpu.memory_space<vmem>>, vector<4x128xf32>
    %c0_59 = arith.constant 0 : index
    %c0_60 = arith.constant 0 : index
    %147 = vector.load %arg10[%c0_59, %c0_60] : memref<4x128xf32, #tpu.memory_space<vmem>>, vector<4x128xf32>
    tpu.vector_store %arg10[%c0_59, %c0_60], %146 {strides = array<i32>} : memref<4x128xf32, #tpu.memory_space<vmem>>, vector<4x128xf32>,
    %c0_61 = arith.constant 0 : index
    %c0_62 = arith.constant 0 : index
    %148 = vector.load %arg7[%c0_61, %c0_62] : memref<128x128xf32, #tpu.memory_space<vmem>>, vector<128x128xf32>
    %cst_63 = arith.constant dense<0.000000e+00> : vector<4x128xf32>
    %149 = tpu.matmul %146, %148, %cst_63 {dimension_numbers = #tpu.dot_dimension_numbers<[1], [0], [0], [1], [0, 0, 1, 1], [], []>, precision = #tpu.contract_precision<fp32>} : vector<4x128xf32>, vector<128x128xf32>, vector<4x128xf32> -> vector<4x128xf32>
    %c0_64 = arith.constant 0 : index
    %c0_65 = arith.constant 0 : index
    %150 = vector.load %arg8[%c0_64, %c0_65] : memref<1x128xf32, #tpu.memory_space<vmem>>, vector<1x128xf32>
    %151 = vector.broadcast %150 : vector<1x128xf32> to vector<4x128xf32>
    %152 = arith.addf %149, %151 : vector<4x128xf32>
    %c0_66 = arith.constant 0 : index
    %c0_67 = arith.constant 0 : index
    %153 = vector.load %arg11[%c0_66, %c0_67] : memref<4x128xf32, #tpu.memory_space<vmem>>, vector<4x128xf32>
    tpu.vector_store %arg11[%c0_66, %c0_67], %152 {strides = array<i32>} : memref<4x128xf32, #tpu.memory_space<vmem>>, vector<4x128xf32>,
    return
  }
  func.func @transform_0(%arg0: i32) -> (i32, i32) {
    %c0_i32 = arith.constant 0 : i32
    %c0_i32_0 = arith.constant 0 : i32
    return %arg0, %c0_i32 : i32, i32
  }
  func.func @transform_1(%arg0: i32) -> (i32, i32) {
    %c0_i32 = arith.constant 0 : i32
    %c0_i32_0 = arith.constant 0 : i32
    %c0_i32_1 = arith.constant 0 : i32
    return %c0_i32, %c0_i32_0 : i32, i32
  }
  func.func @transform_2(%arg0: i32) -> (i32, i32) {
    %c0_i32 = arith.constant 0 : i32
    %c0_i32_0 = arith.constant 0 : i32
    %c0_i32_1 = arith.constant 0 : i32
    return %c0_i32, %c0_i32_0 : i32, i32
  }
  func.func @transform_3(%arg0: i32) -> (i32, i32) {
    %c0_i32 = arith.constant 0 : i32
    %c0_i32_0 = arith.constant 0 : i32
    %c0_i32_1 = arith.constant 0 : i32
    return %c0_i32, %c0_i32_0 : i32, i32
  }
  func.func @transform_4(%arg0: i32) -> (i32, i32) {
    %c0_i32 = arith.constant 0 : i32
    %c0_i32_0 = arith.constant 0 : i32
    %c0_i32_1 = arith.constant 0 : i32
    return %c0_i32, %c0_i32_0 : i32, i32
  }
  func.func @transform_5(%arg0: i32) -> (i32, i32) {
    %c0_i32 = arith.constant 0 : i32
    %c0_i32_0 = arith.constant 0 : i32
    %c0_i32_1 = arith.constant 0 : i32
    return %c0_i32, %c0_i32_0 : i32, i32
  }
  func.func @transform_6(%arg0: i32) -> (i32, i32) {
    %c0_i32 = arith.constant 0 : i32
    %c0_i32_0 = arith.constant 0 : i32
    %c0_i32_1 = arith.constant 0 : i32
    return %c0_i32, %c0_i32_0 : i32, i32
  }
  func.func @transform_7(%arg0: i32) -> (i32, i32) {
    %c0_i32 = arith.constant 0 : i32
    %c0_i32_0 = arith.constant 0 : i32
    %c0_i32_1 = arith.constant 0 : i32
    return %c0_i32, %c0_i32_0 : i32, i32
  }
  func.func @transform_8(%arg0: i32) -> (i32, i32) {
    %c0_i32 = arith.constant 0 : i32
    %c0_i32_0 = arith.constant 0 : i32
    return %arg0, %c0_i32 : i32, i32
  }
  func.func @transform_9(%arg0: i32) -> (i32, i32) {
    %c0_i32 = arith.constant 0 : i32
    %c0_i32_0 = arith.constant 0 : i32
    %c0_i32_1 = arith.constant 0 : i32
    return %c0_i32, %c0_i32_0 : i32, i32
  }
  func.func @transform_10(%arg0: i32) -> (i32, i32) {
    %c0_i32 = arith.constant 0 : i32
    %c0_i32_0 = arith.constant 0 : i32
    %c0_i32_1 = arith.constant 0 : i32
    return %c0_i32, %c0_i32_0 : i32, i32
  }
}

</mosaic_0001>

<llo_original>
// kernel: tpu_custom_call.1
$region0: #{tpu_custom_call.1}
  #allocation0 [shape = 'u32[]', space=smem, size = 0x4, offset = 0x4, fixed_abs, tag = 'smem constant byte address 0x4 - core index']
  #allocation1 [shape = 'u32[144,128]{1,0:T(1,128)}', space=vmem, size = 0x12000, scoped, tag = 'internal scratch']
  #allocation2 [shape = 'f32[4,128]{1,0:T(4,128)}', space=vmem, size = 0x800, scoped, tag = 'scratch operand']
  #allocation3 [shape = 'f32[16,128]{1,0:T(8,128)}', space=vmem, size = 0x2000, scoped, tag = 'scratch operand']
  %s0 = inlined_call_operand.hbm [shape: bf16[32,384], index: 0, kind: input, shape index: {}]
  %s1 = inlined_call_operand.hbm [shape: f32[4,128], index: 1, kind: input, shape index: {}]
  %s2 = inlined_call_operand.hbm [shape: f32[128,384], index: 2, kind: input, shape index: {}]
  %s3 = inlined_call_operand.vmem [shape: f32[1,384], index: 3, kind: input, shape index: {}]
  %s4 = inlined_call_operand.hbm [shape: f32[128,128], index: 4, kind: input, shape index: {}]
  %s5 = inlined_call_operand.vmem [shape: f32[1,128], index: 5, kind: input, shape index: {}]
  %s6 = inlined_call_operand.hbm [shape: f32[128,128], index: 6, kind: input, shape index: {}]
  %s7 = inlined_call_operand.vmem [shape: f32[1,128], index: 7, kind: input, shape index: {}]
  %s8 = inlined_call_operand.hbm [shape: f32[32,128], index: 8, kind: output, shape index: {0}]
  %s9 = inlined_call_operand.hbm [shape: f32[4,128], index: 9, kind: output, shape index: {1}]
  %s10 = inlined_call_operand.hbm [shape: f32[4,128], index: 10, kind: output, shape index: {2}]
  %11 = xla_tuple %s8, %s9, %s10
  %s12 = sld [smem:[#allocation0]]
  $region105: #{tpu_custom_call.1} parent=0
    _
  %s14 = ssub.s32 1, %s12
  %s15 = scalar_select 0, %s14, %s12
  $region1: #{tpu_custom_call.1} parent=0
    #allocation4 [shape = 'u8[24576]{0}', space=vmem, size = 0x6000, scoped, tag = 'input window, operand 0']
    #allocation5 [shape = 's32[2]{0}', space=sflag, size = 0x8, scoped, tag = 'scoped memory for tpu_custom_call.1']
    #allocation6 [shape = 's32[2]{0}', space=sflag, size = 0x8, scoped, tag = 'scoped memory for tpu_custom_call.1']
    #allocation7 [shape = 'u8[2048]{0}', space=vmem, size = 0x800, scoped, tag = 'input window, operand 1, single buffered']
    #allocation8 [shape = 's32[1]{0}', space=sflag, size = 0x4, scoped, tag = 'scoped memory for tpu_custom_call.1']
    #allocation9 [shape = 'u8[196608]{0}', space=vmem, size = 0x30000, scoped, tag = 'input window, operand 2, single buffered']
    #allocation10 [shape = 'u8[65536]{0}', space=vmem, size = 0x10000, scoped, tag = 'input window, operand 4, single buffered']
    #allocation11 [shape = 's32[1]{0}', space=sflag, size = 0x4, scoped, tag = 'scoped memory for tpu_custom_call.1']
    #allocation12 [shape = 'u8[65536]{0}', space=vmem, size = 0x10000, scoped, tag = 'input window, operand 6, single buffered']
    #allocation13 [shape = 'u8[16384]{0}', space=vmem, size = 0x4000, scoped, tag = 'output window, operand 0']
    #allocation14 [shape = 'u8[2048]{0}', space=vmem, size = 0x800, scoped, tag = 'output window, operand 1, single buffered']
    #allocation15 [shape = 's32[1]{0}', space=sflag, size = 0x4, scoped, tag = 'scoped memory for tpu_custom_call.1']
    #allocation16 [shape = 'u8[2048]{0}', space=vmem, size = 0x800, scoped, tag = 'output window, operand 2, single buffered']
    %16 = vsyncpa [#allocation5], 0
    %s17 = scalar_lea.sflag [#allocation5], 1
    %18 = vsyncpa %s17, 0
    %19 = vsyncpa [#allocation8], 0
    %20 = vsyncpa [#allocation11], 0
    %21 = vsyncpa [#allocation6], 0
    %s22 = scalar_lea.sflag [#allocation6], 1
    %23 = vsyncpa %s22, 0
    %24 = vsyncpa [#allocation15], 0
    loop: start=0, step=1, limit=4
    $region2: #{tpu_custom_call.1} parent=1 // loop_pre_header
      _
    $region3: #{tpu_custom_call.1} parent=1 // loop_header
      %s26 = sphi 0, %s30
      %p27 = scmp.ge.s32.totalorder %s26, 4
      %s36 = sphi 0, %s38
      %s39 = sphi 0, %s36
      %s40 = sphi 0, %s39
      %s56 = sphi 0, %s40
      %s60 = sphi 0, %s60
      %s62 = sphi 0, %s60
      %s63 = sphi 0, %s62
      %s77 = sphi 0, %s63
      %s81 = sphi 0, %s81
      %s83 = sphi 0, %s81
      %s84 = sphi 0, %s83
      %s98 = sphi 0, %s84
      %s102 = sphi 0, %s102
      %s104 = sphi 0, %s102
      %s105 = sphi 0, %s104
      %s119 = sphi 0, %s105
      %s123 = sphi 0, %s123
      %s125 = sphi 0, %s123
      %s126 = sphi 0, %s125
      %s140 = sphi 0, %s126
      %s144 = sphi 0, %s144
      %s146 = sphi 0, %s144
      %s147 = sphi 0, %s146
      %s161 = sphi 0, %s147
      %s165 = sphi 0, %s165
      %s167 = sphi 0, %s165
      %s168 = sphi 0, %s167
      %s182 = sphi 0, %s168
      %s186 = sphi 0, %s186
      %s188 = sphi 0, %s186
      %s189 = sphi 0, %s188
      %s203 = sphi 0, %s189
      %s209 = sphi 0, %s211
      %s212 = sphi 0, %s209
      %s213 = sphi 0, %s212
      %s229 = sphi 0, %s213
      %s233 = sphi 0, %s233
      %s235 = sphi 0, %s233
      %s236 = sphi 0, %s235
      %s250 = sphi 0, %s236
      %s254 = sphi 0, %s254
      %s256 = sphi 0, %s254
      %s257 = sphi 0, %s256
      %s271 = sphi 0, %s257
    $region4: #{tpu_custom_call.1} parent=1 // loop_header_branch
      %29 = sbr.rel (%p27) target = $region8
    $region5: #{tpu_custom_call.1} parent=1 // loop_body
      %s31 = ssub.s32 %s26, 1
      %s32 = ssub.s32 %s26, 2
      %s33 = sadd.s32 %s26, 1
      %s34 = ssub.s32 %s26, %s33
      %p35 = scmp.eq.s32.totalorder %s34, 0
      %s37 = sadd.s32 %s36, 1
      %s38 = scalar_select %p35, %s36, %s37
      %p41 = pneg %p35
      %p42 = scmp.eq.s32.totalorder %s26, 1
      %p43 = por %p41, %p42
      %p44 = scmp.ne.s32.totalorder %s36, %s39
      %p45 = scmp.eq.s32.totalorder %s26, 0
      %p46 = por %p44, %p45
      %p47 = scmp.ne.s32.totalorder %s36, %s39
      %p48 = scmp.eq.s32.totalorder %s31, 1
      %p49 = por %p47, %p48
      %p50 = scmp.ne.s32.totalorder %s39, %s40
      %p51 = scmp.eq.s32.totalorder %s31, 0
      %p52 = por %p50, %p51
      %p53 = scmp.ne.s32.totalorder %s39, %s40
      %p54 = scmp.eq.s32.totalorder %s32, 1
      %p55 = por %p53, %p54
      %p57 = scmp.ne.s32.totalorder %s40, %s56
      %p58 = scmp.eq.s32.totalorder %s32, 0
      %p59 = por %p57, %p58
      %s61 = sadd.s32 %s60, 1
      %p64 = scmp.eq.s32.totalorder %s26, 1
      %p65 = scmp.ne.s32.totalorder %s60, %s62
      %p66 = scmp.eq.s32.totalorder %s26, 0
      %p67 = por %p65, %p66
      %p68 = scmp.ne.s32.totalorder %s60, %s62
      %p69 = scmp.eq.s32.totalorder %s31, 1
      %p70 = por %p68, %p69
      %p71 = scmp.ne.s32.totalorder %s62, %s63
      %p72 = scmp.eq.s32.totalorder %s31, 0
      %p73 = por %p71, %p72
      %p74 = scmp.ne.s32.totalorder %s62, %s63
      %p75 = scmp.eq.s32.totalorder %s32, 1
      %p76 = por %p74, %p75
      %p78 = scmp.ne.s32.totalorder %s63, %s77
      %p79 = scmp.eq.s32.totalorder %s32, 0
      %p80 = por %p78, %p79
      %s82 = sadd.s32 %s81, 1
      %p85 = scmp.eq.s32.totalorder %s26, 1
      %p86 = scmp.ne.s32.totalorder %s81, %s83
      %p87 = scmp.eq.s32.totalorder %s26, 0
      %p88 = por %p86, %p87
      %p89 = scmp.ne.s32.totalorder %s81, %s83
      %p90 = scmp.eq.s32.totalorder %s31, 1
      %p91 = por %p89, %p90
      %p92 = scmp.ne.s32.totalorder %s83, %s84
      %p93 = scmp.eq.s32.totalorder %s31, 0
      %p94 = por %p92, %p93
      %p95 = scmp.ne.s32.totalorder %s83, %s84
      %p96 = scmp.eq.s32.totalorder %s32, 1
      %p97 = por %p95, %p96
      %p99 = scmp.ne.s32.totalorder %s84, %s98
      %p100 = scmp.eq.s32.totalorder %s32, 0
      %p101 = por %p99, %p100
      %s103 = sadd.s32 %s102, 1
      %p106 = scmp.eq.s32.totalorder %s26, 1
      %p107 = scmp.ne.s32.totalorder %s102, %s104
      %p108 = scmp.eq.s32.totalorder %s26, 0
      %p109 = por %p107, %p108
      %p110 = scmp.ne.s32.totalorder %s102, %s104
      %p111 = scmp.eq.s32.totalorder %s31, 1
      %p112 = por %p110, %p111
      %p113 = scmp.ne.s32.totalorder %s104, %s105
      %p114 = scmp.eq.s32.totalorder %s31, 0
      %p115 = por %p113, %p114
      %p116 = scmp.ne.s32.totalorder %s104, %s105
      %p117 = scmp.eq.s32.totalorder %s32, 1
      %p118 = por %p116, %p117
      %p120 = scmp.ne.s32.totalorder %s105, %s119
      %p121 = scmp.eq.s32.totalorder %s32, 0
      %p122 = por %p120, %p121
      %s124 = sadd.s32 %s123, 1
      %p127 = scmp.eq.s32.totalorder %s26, 1
      %p128 = scmp.ne.s32.totalorder %s123, %s125
      %p129 = scmp.eq.s32.totalorder %s26, 0
      %p130 = por %p128, %p129
      %p131 = scmp.ne.s32.totalorder %s123, %s125
      %p132 = scmp.eq.s32.totalorder %s31, 1
      %p133 = por %p131, %p132
      %p134 = scmp.ne.s32.totalorder %s125, %s126
      %p135 = scmp.eq.s32.totalorder %s31, 0
      %p136 = por %p134, %p135
      %p137 = scmp.ne.s32.totalorder %s125, %s126
      %p138 = scmp.eq.s32.totalorder %s32, 1
      %p139 = por %p137, %p138
      %p141 = scmp.ne.s32.totalorder %s126, %s140
      %p142 = scmp.eq.s32.totalorder %s32, 0
      %p143 = por %p141, %p142
      %s145 = sadd.s32 %s144, 1
      %p148 = scmp.eq.s32.totalorder %s26, 1
      %p149 = scmp.ne.s32.totalorder %s144, %s146
      %p150 = scmp.eq.s32.totalorder %s26, 0
      %p151 = por %p149, %p150
      %p152 = scmp.ne.s32.totalorder %s144, %s146
      %p153 = scmp.eq.s32.totalorder %s31, 1
      %p154 = por %p152, %p153
      %p155 = scmp.ne.s32.totalorder %s146, %s147
      %p156 = scmp.eq.s32.totalorder %s31, 0
      %p157 = por %p155, %p156
      %p158 = scmp.ne.s32.totalorder %s146, %s147
      %p159 = scmp.eq.s32.totalorder %s32, 1
      %p160 = por %p158, %p159
      %p162 = scmp.ne.s32.totalorder %s147, %s161
      %p163 = scmp.eq.s32.totalorder %s32, 0
      %p164 = por %p162, %p163
      %s166 = sadd.s32 %s165, 1
      %p169 = scmp.eq.s32.totalorder %s26, 1
      %p170 = scmp.ne.s32.totalorder %s165, %s167
      %p171 = scmp.eq.s32.totalorder %s26, 0
      %p172 = por %p170, %p171
      %p173 = scmp.ne.s32.totalorder %s165, %s167
      %p174 = scmp.eq.s32.totalorder %s31, 1
      %p175 = por %p173, %p174
      %p176 = scmp.ne.s32.totalorder %s167, %s168
      %p177 = scmp.eq.s32.totalorder %s31, 0
      %p178 = por %p176, %p177
      %p179 = scmp.ne.s32.totalorder %s167, %s168
      %p180 = scmp.eq.s32.totalorder %s32, 1
      %p181 = por %p179, %p180
      %p183 = scmp.ne.s32.totalorder %s168, %s182
      %p184 = scmp.eq.s32.totalorder %s32, 0
      %p185 = por %p183, %p184
      %s187 = sadd.s32 %s186, 1
      %p190 = scmp.eq.s32.totalorder %s26, 1
      %p191 = scmp.ne.s32.totalorder %s186, %s188
      %p192 = scmp.eq.s32.totalorder %s26, 0
      %p193 = por %p191, %p192
      %p194 = scmp.ne.s32.totalorder %s186, %s188
      %p195 = scmp.eq.s32.totalorder %s31, 1
      %p196 = por %p194, %p195
      %p197 = scmp.ne.s32.totalorder %s188, %s189
      %p198 = scmp.eq.s32.totalorder %s31, 0
      %p199 = por %p197, %p198
      %p200 = scmp.ne.s32.totalorder %s188, %s189
      %p201 = scmp.eq.s32.totalorder %s32, 1
      %p202 = por %p200, %p201
      %p204 = scmp.ne.s32.totalorder %s189, %s203
      %p205 = scmp.eq.s32.totalorder %s32, 0
      %p206 = por %p204, %p205
      %s207 = ssub.s32 %s26, %s33
      %p208 = scmp.eq.s32.totalorder %s207, 0
      %s210 = sadd.s32 %s209, 1
      %s211 = scalar_select %p208, %s209, %s210
      %p214 = pneg %p208
      %p215 = scmp.eq.s32.totalorder %s26, 1
      %p216 = por %p214, %p215
      %p217 = scmp.ne.s32.totalorder %s209, %s212
      %p218 = scmp.eq.s32.totalorder %s26, 0
      %p219 = por %p217, %p218
      %p220 = scmp.ne.s32.totalorder %s209, %s212
      %p221 = scmp.eq.s32.totalorder %s31, 1
      %p222 = por %p220, %p221
      %p223 = scmp.ne.s32.totalorder %s212, %s213
      %p224 = scmp.eq.s32.totalorder %s31, 0
      %p225 = por %p223, %p224
      %p226 = scmp.ne.s32.totalorder %s212, %s213
      %p227 = scmp.eq.s32.totalorder %s32, 1
      %p228 = por %p226, %p227
      %p230 = scmp.ne.s32.totalorder %s213, %s229
      %p231 = scmp.eq.s32.totalorder %s32, 0
      %p232 = por %p230, %p231
      %s234 = sadd.s32 %s233, 1
      %p237 = scmp.eq.s32.totalorder %s26, 1
      %p238 = scmp.ne.s32.totalorder %s233, %s235
      %p239 = scmp.eq.s32.totalorder %s26, 0
      %p240 = por %p238, %p239
      %p241 = scmp.ne.s32.totalorder %s233, %s235
      %p242 = scmp.eq.s32.totalorder %s31, 1
      %p243 = por %p241, %p242
      %p244 = scmp.ne.s32.totalorder %s235, %s236
      %p245 = scmp.eq.s32.totalorder %s31, 0
      %p246 = por %p244, %p245
      %p247 = scmp.ne.s32.totalorder %s235, %s236
      %p248 = scmp.eq.s32.totalorder %s32, 1
      %p249 = por %p247, %p248
      %p251 = scmp.ne.s32.totalorder %s236, %s250
      %p252 = scmp.eq.s32.totalorder %s32, 0
      %p253 = por %p251, %p252
      %s255 = sadd.s32 %s254, 1
      %p258 = scmp.eq.s32.totalorder %s26, 1
      %p259 = scmp.ne.s32.totalorder %s254, %s256
      %p260 = scmp.eq.s32.totalorder %s26, 0
      %p261 = por %p259, %p260
      %p262 = scmp.ne.s32.totalorder %s254, %s256
      %p263 = scmp.eq.s32.totalorder %s31, 1
      %p264 = por %p262, %p263
      %p265 = scmp.ne.s32.totalorder %s256, %s257
      %p266 = scmp.eq.s32.totalorder %s31, 0
      %p267 = por %p265, %p266
      %p268 = scmp.ne.s32.totalorder %s256, %s257
      %p269 = scmp.eq.s32.totalorder %s32, 1
      %p270 = por %p268, %p269
      %p272 = scmp.ne.s32.totalorder %s257, %s271
      %p273 = scmp.eq.s32.totalorder %s32, 0
      %p274 = por %p272, %p273
      %p275 = scmp.le.s32.totalorder 1, %s26
      %p276 = scmp.lt.s32.totalorder %s26, 3
      %p277 = pnand %p275, %p276
      %p278 = pneg %p277
      // Predicated region
      $region9: #{tpu_custom_call.1} parent=5 // pred_check
        _
      $region10: #{tpu_custom_call.1} parent=5 // pred_check_branch
        %280 = sbr.rel (%p277) target = $region12
      $region11: #{tpu_custom_call.1} parent=5 // pred_region
        %s281 = ssub.s32 %s26, 1
        // Predicated region
        $region13: #{tpu_custom_call.1} parent=11 // pred_check
          %p282 = pneg %p73
        $region14: #{tpu_custom_call.1} parent=11 // pred_check_branch
          %284 = sbr.rel (%p282) target = $region16
        $region15: #{tpu_custom_call.1} parent=11 // pred_region
          %s286 = ssub.s32 64, 64
          %287 = vsyncadd [#allocation8], %s286
          %s289 = sshll.u32 [#allocation7], 4
          %s290 = int_to_ptr.vmem [resolvable:$true] %s289
          %292 = dma.hbm_to_vmem [thread:$0]  %s1, 64, %s290, [#allocation8]
        $region16: #{tpu_custom_call.1} parent=11 // pred_fallthru
          _
        // Predicated region
        $region17: #{tpu_custom_call.1} parent=11 // pred_check
          %p293 = pneg %p94
        $region18: #{tpu_custom_call.1} parent=11 // pred_check_branch
          %295 = sbr.rel (%p293) target = $region20
        $region19: #{tpu_custom_call.1} parent=11 // pred_region
          %s297 = ssub.s32 6144, 6144
          %298 = vsyncadd [#allocation8], %s297
          %s299 = sshll.u32 [#allocation9], 4
          %s300 = int_to_ptr.vmem [resolvable:$true] %s299
          %305 = dma.hbm_to_vmem [thread:$0]  %s2, 6144, %s300, [#allocation8], 384, 384, 24
        $region20: #{tpu_custom_call.1} parent=11 // pred_fallthru
          _
        // Predicated region
        $region21: #{tpu_custom_call.1} parent=11 // pred_check
          %p306 = pneg %p115
        $region22: #{tpu_custom_call.1} parent=11 // pred_check_branch
          %308 = sbr.rel (%p306) target = $region24
        $region23: #{tpu_custom_call.1} parent=11 // pred_region
          _
        $region24: #{tpu_custom_call.1} parent=11 // pred_fallthru
          _
        // Predicated region
        $region25: #{tpu_custom_call.1} parent=11 // pred_check
          %p309 = pneg %p136
        $region26: #{tpu_custom_call.1} parent=11 // pred_check_branch
          %311 = sbr.rel (%p309) target = $region28
        $region27: #{tpu_custom_call.1} parent=11 // pred_region
          %s313 = ssub.s32 2048, 2048
          %314 = vsyncadd [#allocation11], %s313
          %s315 = sshll.u32 [#allocation10], 4
          %s316 = int_to_ptr.vmem [resolvable:$true] %s315
          %321 = dma.hbm_to_vmem [thread:$0]  %s4, 2048, %s316, [#allocation11], 128, 128, 8
        $region28: #{tpu_custom_call.1} parent=11 // pred_fallthru
          _
        // Predicated region
        $region29: #{tpu_custom_call.1} parent=11 // pred_check
          %p322 = pneg %p157
        $region30: #{tpu_custom_call.1} parent=11 // pred_check_branch
          %324 = sbr.rel (%p322) target = $region32
        $region31: #{tpu_custom_call.1} parent=11 // pred_region
          _
        $region32: #{tpu_custom_call.1} parent=11 // pred_fallthru
          _
        // Predicated region
        $region33: #{tpu_custom_call.1} parent=11 // pred_check
          %p325 = pneg %p178
        $region34: #{tpu_custom_call.1} parent=11 // pred_check_branch
          %327 = sbr.rel (%p325) target = $region36
        $region35: #{tpu_custom_call.1} parent=11 // pred_region
          %s329 = ssub.s32 2048, 2048
          %330 = vsyncadd [#allocation11], %s329
          %s331 = sshll.u32 [#allocation12], 4
          %s332 = int_to_ptr.vmem [resolvable:$true] %s331
          %337 = dma.hbm_to_vmem [thread:$0]  %s6, 2048, %s332, [#allocation11], 128, 128, 8
        $region36: #{tpu_custom_call.1} parent=11 // pred_fallthru
          _
        // Predicated region
        $region37: #{tpu_custom_call.1} parent=11 // pred_check
          %p338 = pneg %p199
        $region38: #{tpu_custom_call.1} parent=11 // pred_check_branch
          %340 = sbr.rel (%p338) target = $region40
        $region39: #{tpu_custom_call.1} parent=11 // pred_region
          _
        $region40: #{tpu_custom_call.1} parent=11 // pred_fallthru
          _
      $region12: #{tpu_custom_call.1} parent=5 // pred_fallthru
        _
      %p341 = scmp.lt.s32.totalorder %s26, 2
      // Predicated region
      $region41: #{tpu_custom_call.1} parent=5 // pred_check
        %p342 = pneg %p341
      $region42: #{tpu_custom_call.1} parent=5 // pred_check_branch
        %344 = sbr.rel (%p342) target = $region44
      $region43: #{tpu_custom_call.1} parent=5 // pred_region
        // Predicated region
        $region45: #{tpu_custom_call.1} parent=43 // pred_check
          %p345 = pneg %p46
        $region46: #{tpu_custom_call.1} parent=43 // pred_check_branch
          %347 = sbr.rel (%p345) target = $region48
        $region47: #{tpu_custom_call.1} parent=43 // pred_region
          %s348 = sand.u32 %s36, 1
          %s349 = scalar_lea.sflag [#allocation5], %s348
          %s350 = sand.u32 %s36, 1
          %s351 = smul.addr %s350, 24
          %s352 = scalar_lea.vmem [#allocation4], %s351
          %s353 = smul.u32 2, %s26
          %s355 = ssub.s32 384, 384
          %356 = vsyncadd %s349, %s355
          %s357 = smul.addr %s353, 3
          %s358 = smul.addr %s357, 64
          %s359 = scalar_lea.hbm %s0, %s358
          %s360 = sshll.u32 %s352, 4
          %s361 = int_to_ptr.vmem [resolvable:$true] %s360
          %366 = dma.hbm_to_vmem [thread:$0]  %s359, 384, %s361, %s349, 192, 192, 12
        $region48: #{tpu_custom_call.1} parent=43 // pred_fallthru
          _
      $region44: #{tpu_custom_call.1} parent=5 // pred_fallthru
        _
      %p367 = scmp.le.s32.totalorder 1, %s26
      %p368 = scmp.lt.s32.totalorder %s26, 3
      %p369 = pnand %p367, %p368
      %p370 = pneg %p369
      // Predicated region
      $region49: #{tpu_custom_call.1} parent=5 // pred_check
        _
      $region50: #{tpu_custom_call.1} parent=5 // pred_check_branch
        %372 = sbr.rel (%p369) target = $region52
      $region51: #{tpu_custom_call.1} parent=5 // pred_region
        %s373 = ssub.s32 %s26, 1
        %s374 = sand.u32 %s39, 1
        %s375 = scalar_lea.sflag [#allocation5], %s374
        %s376 = sand.u32 %s39, 1
        %s377 = smul.addr %s376, 24
        %s378 = scalar_lea.vmem [#allocation4], %s377
        // Predicated region
        $region53: #{tpu_custom_call.1} parent=51 // pred_check
          %p379 = pneg %p52
        $region54: #{tpu_custom_call.1} parent=51 // pred_check_branch
          %381 = sbr.rel (%p379) target = $region56
        $region55: #{tpu_custom_call.1} parent=51 // pred_region
          %382 = dma.done %s375, 384
        $region56: #{tpu_custom_call.1} parent=51 // pred_fallthru
          _
        // Predicated region
        $region57: #{tpu_custom_call.1} parent=51 // pred_check
          %p383 = pneg %p73
        $region58: #{tpu_custom_call.1} parent=51 // pred_check_branch
          %385 = sbr.rel (%p383) target = $region60
        $region59: #{tpu_custom_call.1} parent=51 // pred_region
          %386 = dma.done [#allocation8], 64
        $region60: #{tpu_custom_call.1} parent=51 // pred_fallthru
          _
        // Predicated region
        $region61: #{tpu_custom_call.1} parent=51 // pred_check
          %p387 = pneg %p94
        $region62: #{tpu_custom_call.1} parent=51 // pred_check_branch
          %389 = sbr.rel (%p387) target = $region64
        $region63: #{tpu_custom_call.1} parent=51 // pred_region
          %390 = dma.done [#allocation8], 6144
        $region64: #{tpu_custom_call.1} parent=51 // pred_fallthru
          _
        // Predicated region
        $region65: #{tpu_custom_call.1} parent=51 // pred_check
          %p391 = pneg %p136
        $region66: #{tpu_custom_call.1} parent=51 // pred_check_branch
          %393 = sbr.rel (%p391) target = $region68
        $region67: #{tpu_custom_call.1} parent=51 // pred_region
          %394 = dma.done [#allocation11], 2048
        $region68: #{tpu_custom_call.1} parent=51 // pred_fallthru
          _
        // Predicated region
        $region69: #{tpu_custom_call.1} parent=51 // pred_check
          %p395 = pneg %p178
        $region70: #{tpu_custom_call.1} parent=51 // pred_check_branch
          %397 = sbr.rel (%p395) target = $region72
        $region71: #{tpu_custom_call.1} parent=51 // pred_region
          %398 = dma.done [#allocation11], 2048
        $region72: #{tpu_custom_call.1} parent=51 // pred_fallthru
          _
        %s399 = sand.u32 %s39, 1
        %s400 = scalar_lea.sflag [#allocation5], %s399
        %s401 = sand.u32 %s39, 1
        %s402 = smul.addr %s401, 24
        %s403 = scalar_lea.vmem [#allocation4], %s402
        %p404 = pneg %p52
        %p405 = pneg %p49
        %p406 = pneg %p73
        %p407 = pneg %p70
        %p408 = pneg %p94
        %p409 = pneg %p91
        %p410 = pneg %p115
        %p411 = pneg %p112
        %p412 = pneg %p136
        %p413 = pneg %p133
        %p414 = pneg %p157
        %p415 = pneg %p154
        %p416 = pneg %p178
        %p417 = pneg %p175
        %p418 = pneg %p199
        %p419 = pneg %p196
        %p420 = pneg %p225
        %p421 = pneg %p222
        %s422 = sand.u32 %s212, 1
        %s423 = scalar_lea.sflag [#allocation6], %s422
        %s424 = sand.u32 %s212, 1
        %s425 = smul.addr %s424, 16
        %s426 = scalar_lea.vmem [#allocation13], %s425
        %p427 = pneg %p246
        %p428 = pneg %p243
        %p429 = pneg %p267
        %p430 = pneg %p264
        %s431 = smul.u32 2, %s31
        %s432 = smul.u32 2, %s31
        %p433 = scmp.eq.s32.totalorder %s31, 0
        // Predicated region
        $region73: #{tpu_custom_call.1} parent=51 // pred_check
          %p434 = pneg %p433
        $region74: #{tpu_custom_call.1} parent=51 // pred_check_branch
          %436 = sbr.rel (%p434) target = $region76
        $region75: #{tpu_custom_call.1} parent=51 // pred_region
          %v437 = vld [vmem:[#allocation7] sm:$0xf]
          %438 = vst [vmem:[#allocation2] sm:$0xf] %v437
        $region76: #{tpu_custom_call.1} parent=51 // pred_fallthru
          _
        %v439 = vld [vmem:[#allocation9] sm:$0xff]
        %v440 = vld [vmem:[#allocation9 + $0x8] sm:$0xff]
        %v441 = vld [vmem:[#allocation9 + $0x10] sm:$0xff]
        %v442 = vld [vmem:[#allocation9 + $0x18] sm:$0xff]
        %v443 = vld [vmem:[#allocation9 + $0x20] sm:$0xff]
        %v444 = vld [vmem:[#allocation9 + $0x28] sm:$0xff]
        %v445 = vld [vmem:[#allocation9 + $0x30] sm:$0xff]
        %v446 = vld [vmem:[#allocation9 + $0x38] sm:$0xff]
        %v447 = vld [vmem:[#allocation9 + $0x40] sm:$0xff]
        %v448 = vld [vmem:[#allocation9 + $0x48] sm:$0xff]
        %v449 = vld [vmem:[#allocation9 + $0x50] sm:$0xff]
        %v450 = vld [vmem:[#allocation9 + $0x58] sm:$0xff]
        %v451 = vld [vmem:[#allocation9 + $0x60] sm:$0xff]
        %v452 = vld [vmem:[#allocation9 + $0x68] sm:$0xff]
        %v453 = vld [vmem:[#allocation9 + $0x70] sm:$0xff]
        %v454 = vld [vmem:[#allocation9 + $0x78] sm:$0xff]
        %v455 = vld [vmem:[#allocation9 + $0x80] sm:$0xff]
        %v456 = vld [vmem:[#allocation9 + $0x88] sm:$0xff]
        %v457 = vld [vmem:[#allocation9 + $0x90] sm:$0xff]
        %v458 = vld [vmem:[#allocation9 + $0x98] sm:$0xff]
        %v459 = vld [vmem:[#allocation9 + $0xa0] sm:$0xff]
        %v460 = vld [vmem:[#allocation9 + $0xa8] sm:$0xff]
        %v461 = vld [vmem:[#allocation9 + $0xb0] sm:$0xff]
        %v462 = vld [vmem:[#allocation9 + $0xb8] sm:$0xff]
        %v463 = vld [vmem:[#allocation9 + $0xc0] sm:$0xff]
        %v464 = vld [vmem:[#allocation9 + $0xc8] sm:$0xff]
        %v465 = vld [vmem:[#allocation9 + $0xd0] sm:$0xff]
        %v466 = vld [vmem:[#allocation9 + $0xd8] sm:$0xff]
        %v467 = vld [vmem:[#allocation9 + $0xe0] sm:$0xff]
        %v468 = vld [vmem:[#allocation9 + $0xe8] sm:$0xff]
        %v469 = vld [vmem:[#allocation9 + $0xf0] sm:$0xff]
        %v470 = vld [vmem:[#allocation9 + $0xf8] sm:$0xff]
        %v471 = vld [vmem:[#allocation9 + $0x100] sm:$0xff]
        %v472 = vld [vmem:[#allocation9 + $0x108] sm:$0xff]
        %v473 = vld [vmem:[#allocation9 + $0x110] sm:$0xff]
        %v474 = vld [vmem:[#allocation9 + $0x118] sm:$0xff]
        %v475 = vld [vmem:[#allocation9 + $0x120] sm:$0xff]
        %v476 = vld [vmem:[#allocation9 + $0x128] sm:$0xff]
        %v477 = vld [vmem:[#allocation9 + $0x130] sm:$0xff]
        %v478 = vld [vmem:[#allocation9 + $0x138] sm:$0xff]
        %v479 = vld [vmem:[#allocation9 + $0x140] sm:$0xff]
        %v480 = vld [vmem:[#allocation9 + $0x148] sm:$0xff]
        %v481 = vld [vmem:[#allocation9 + $0x150] sm:$0xff]
        %v482 = vld [vmem:[#allocation9 + $0x158] sm:$0xff]
        %v483 = vld [vmem:[#allocation9 + $0x160] sm:$0xff]
        %v484 = vld [vmem:[#allocation9 + $0x168] sm:$0xff]
        %v485 = vld [vmem:[#allocation9 + $0x170] sm:$0xff]
        %v486 = vld [vmem:[#allocation9 + $0x178] sm:$0xff]
        %v487 = vld [vmem:[%s3] sm:$0x7]
        %v489 = vlaneseq
        %v490 = vshrl.u32 %v489, 7
        %v491 = vsub.s32 0, %v490
        %v492 = vrot.slane %v487, %v491
        %v493 = vlaneseq
        %v494 = vshrl.u32 %v493, 7
        %v495 = vsub.s32 1, %v494
        %v496 = vrot.slane %v487, %v495
        %v497 = vlaneseq
        %v498 = vshrl.u32 %v497, 7
        %v499 = vsub.s32 2, %v498
        %v500 = vrot.slane %v487, %v499
        %v504 = vld [vmem:[#allocation2] sm:$0xf]
        %v505 = vld [vmem:[%s378] sm:$0x33]
        %v506 = vld [vmem:[%s378 + $0x8] sm:$0x3]
        %v507 = vunpack.c.l.bf16 %v505
        %v508 = vunpack.c.h.bf16 %v505
        %v509 = vunpack.c.l.bf16 %v506
        %v510 = vand.u32 %v440, 4294901760
        %511 = vmatprep.subr.mxu0 %v510
        %v512 = vand.u32 %v439, 4294901760
        %513 = vmatpush1.msra.mxu0 %v512
        %v514 = vand.u32 %v443, 4294901760
        %515 = vmatprep.subr.mxu0 %v514
        %v516 = vand.u32 %v442, 4294901760
        %517 = vmatpush1.msra.mxu0 %v516
        %v518 = vand.u32 %v446, 4294901760
        %519 = vmatprep.subr.mxu0 %v518
        %v520 = vand.u32 %v445, 4294901760
        %521 = vmatpush1.msra.mxu0 %v520
        %v522 = vand.u32 %v449, 4294901760
        %523 = vmatprep.subr.mxu0 %v522
        %v524 = vand.u32 %v448, 4294901760
        %525 = vmatpush1.msra.mxu0 %v524
        %v526 = vand.u32 %v452, 4294901760
        %527 = vmatprep.subr.mxu0 %v526
        %v528 = vand.u32 %v451, 4294901760
        %529 = vmatpush1.msra.mxu0 %v528
        %v530 = vand.u32 %v455, 4294901760
        %531 = vmatprep.subr.mxu0 %v530
        %v532 = vand.u32 %v454, 4294901760
        %533 = vmatpush1.msra.mxu0 %v532
        %v534 = vand.u32 %v458, 4294901760
        %535 = vmatprep.subr.mxu0 %v534
        %v536 = vand.u32 %v457, 4294901760
        %537 = vmatpush1.msra.mxu0 %v536
        %v538 = vand.u32 %v461, 4294901760
        %539 = vmatprep.subr.mxu0 %v538
        %v540 = vand.u32 %v460, 4294901760
        %541 = vmatpush1.msra.mxu0 %v540
        %v542 = vand.u32 %v464, 4294901760
        %543 = vmatprep.subr.mxu0 %v542
        %v544 = vand.u32 %v463, 4294901760
        %545 = vmatpush1.msra.mxu0 %v544
        %v546 = vand.u32 %v467, 4294901760
        %547 = vmatprep.subr.mxu0 %v546
        %v548 = vand.u32 %v466, 4294901760
        %549 = vmatpush1.msra.mxu0 %v548
        %v550 = vand.u32 %v470, 4294901760
        %551 = vmatprep.subr.mxu0 %v550
        %v552 = vand.u32 %v469, 4294901760
        %553 = vmatpush1.msra.mxu0 %v552
        %v554 = vand.u32 %v473, 4294901760
        %555 = vmatprep.subr.mxu0 %v554
        %v556 = vand.u32 %v472, 4294901760
        %557 = vmatpush1.msra.mxu0 %v556
        %v558 = vand.u32 %v476, 4294901760
        %559 = vmatprep.subr.mxu0 %v558
        %v560 = vand.u32 %v475, 4294901760
        %561 = vmatpush1.msra.mxu0 %v560
        %v562 = vand.u32 %v479, 4294901760
        %563 = vmatprep.subr.mxu0 %v562
        %v564 = vand.u32 %v478, 4294901760
        %565 = vmatpush1.msra.mxu0 %v564
        %v566 = vand.u32 %v482, 4294901760
        %567 = vmatprep.subr.mxu0 %v566
        %v568 = vand.u32 %v481, 4294901760
        %569 = vmatpush1.msra.mxu0 %v568
        %v570 = vand.u32 %v485, 4294901760
        %571 = vmatprep.subr.mxu0 %v570
        %v572 = vand.u32 %v484, 4294901760
        %573 = vmatpush1.msra.mxu0 %v572
        %574 = vmatprep.subr.mxu0 0.0
        %575 = vmatpush1.msra.mxu0 0.0
        %576 = vmatprep.subr.mxu0 0.0
        %577 = vmatpush1.msra.mxu0 0.0
        %578 = vmatprep.subr.mxu0 0.0
        %579 = vmatpush1.msra.mxu0 0.0
        %580 = vmatprep.subr.mxu0 0.0
        %581 = vmatpush1.msra.mxu0 0.0
        %582 = vmatprep.subr.mxu0 0.0
        %583 = vmatpush1.msra.mxu0 0.0
        %584 = vmatprep.subr.mxu0 0.0
        %585 = vmatpush1.msra.mxu0 0.0
        %586 = vmatprep.subr.mxu0 0.0
        %587 = vmatpush1.msra.mxu0 0.0
        %588 = vmatprep.subr.mxu0 0.0
        %589 = vmatpush1.msra.mxu0 0.0
        %590 = vmatprep.subr.mxu0 0.0
        %591 = vmatpush1.msra.mxu0 0.0
        %592 = vmatprep.subr.mxu0 0.0
        %593 = vmatpush1.msra.mxu0 0.0
        %594 = vmatprep.subr.mxu0 0.0
        %595 = vmatpush1.msra.mxu0 0.0
        %596 = vmatprep.subr.mxu0 0.0
        %597 = vmatpush1.msra.mxu0 0.0
        %598 = vmatprep.subr.mxu0 0.0
        %599 = vmatpush1.msra.mxu0 0.0
        %600 = vmatprep.subr.mxu0 0.0
        %601 = vmatpush1.msra.mxu0 0.0
        %602 = vmatprep.subr.mxu0 0.0
        %603 = vmatpush1.msra.mxu0 0.0
        %604 = vmatprep.subr.mxu0 0.0
        %605 = vmatpush1.msra.mxu0 0.0
        %606 = vmatprep.mubr.f32.mxu0 0.0
        %v607 = vand.u32 %v504, 4294901760
        %v608 = vsub.f32 %v504, %v607
        %v609 = vand.u32 %v608, 4294901760
        %v610 = vsub.f32 %v608, %v609
        %v611 = vand.u32 %v610, 4294901760
        %612 = vmatmul.mubr.f32.gmra.mrb[0].mxu0 %v611
        %v613 = vpop.f32.mrb[0].mxu0
        %v614 = vadd.f32 %v492, %v613
        %v615 = vpop.f32.mrb[0].mxu0
        %v616 = vadd.f32 %v496, %v615
        %617 = vdwg.mxu0
        %v618 = vand.u32 %v440, 4294901760
        %v619 = vsub.f32 %v440, %v618
        %v620 = vand.u32 %v619, 4294901760
        %v621 = vsub.f32 %v619, %v620
        %v622 = vand.u32 %v621, 4294901760
        %623 = vmatprep.subr.mxu0 %v622
        %v624 = vand.u32 %v439, 4294901760
        %v625 = vsub.f32 %v439, %v624
        %v626 = vand.u32 %v625, 4294901760
        %v627 = vsub.f32 %v625, %v626
        %v628 = vand.u32 %v627, 4294901760
        %629 = vmatpush1.msra.mxu0 %v628
        %v630 = vand.u32 %v443, 4294901760
        %v631 = vsub.f32 %v443, %v630
        %v632 = vand.u32 %v631, 4294901760
        %v633 = vsub.f32 %v631, %v632
        %v634 = vand.u32 %v633, 4294901760
        %635 = vmatprep.subr.mxu0 %v634
        %v636 = vand.u32 %v442, 4294901760
        %v637 = vsub.f32 %v442, %v636
        %v638 = vand.u32 %v637, 4294901760
        %v639 = vsub.f32 %v637, %v638
        %v640 = vand.u32 %v639, 4294901760
        %641 = vmatpush1.msra.mxu0 %v640
        %v642 = vand.u32 %v446, 4294901760
        %v643 = vsub.f32 %v446, %v642
        %v644 = vand.u32 %v643, 4294901760
        %v645 = vsub.f32 %v643, %v644
        %v646 = vand.u32 %v645, 4294901760
        %647 = vmatprep.subr.mxu0 %v646
        %v648 = vand.u32 %v445, 4294901760
        %v649 = vsub.f32 %v445, %v648
        %v650 = vand.u32 %v649, 4294901760
        %v651 = vsub.f32 %v649, %v650
        %v652 = vand.u32 %v651, 4294901760
        %653 = vmatpush1.msra.mxu0 %v652
        %v654 = vand.u32 %v449, 4294901760
        %v655 = vsub.f32 %v449, %v654
        %v656 = vand.u32 %v655, 4294901760
        %v657 = vsub.f32 %v655, %v656
        %v658 = vand.u32 %v657, 4294901760
        %659 = vmatprep.subr.mxu0 %v658
        %v660 = vand.u32 %v448, 4294901760
        %v661 = vsub.f32 %v448, %v660
        %v662 = vand.u32 %v661, 4294901760
        %v663 = vsub.f32 %v661, %v662
        %v664 = vand.u32 %v663, 4294901760
        %665 = vmatpush1.msra.mxu0 %v664
        %v666 = vand.u32 %v452, 4294901760
        %v667 = vsub.f32 %v452, %v666
        %v668 = vand.u32 %v667, 4294901760
        %v669 = vsub.f32 %v667, %v668
        %v670 = vand.u32 %v669, 4294901760
        %671 = vmatprep.subr.mxu0 %v670
        %v672 = vand.u32 %v451, 4294901760
        %v673 = vsub.f32 %v451, %v672
        %v674 = vand.u32 %v673, 4294901760
        %v675 = vsub.f32 %v673, %v674
        %v676 = vand.u32 %v675, 4294901760
        %677 = vmatpush1.msra.mxu0 %v676
        %v678 = vand.u32 %v455, 4294901760
        %v679 = vsub.f32 %v455, %v678
        %v680 = vand.u32 %v679, 4294901760
        %v681 = vsub.f32 %v679, %v680
        %v682 = vand.u32 %v681, 4294901760
        %683 = vmatprep.subr.mxu0 %v682
        %v684 = vand.u32 %v454, 4294901760
        %v685 = vsub.f32 %v454, %v684
        %v686 = vand.u32 %v685, 4294901760
        %v687 = vsub.f32 %v685, %v686
        %v688 = vand.u32 %v687, 4294901760
        %689 = vmatpush1.msra.mxu0 %v688
        %v690 = vand.u32 %v458, 4294901760
        %v691 = vsub.f32 %v458, %v690
        %v692 = vand.u32 %v691, 4294901760
        %v693 = vsub.f32 %v691, %v692
        %v694 = vand.u32 %v693, 4294901760
        %695 = vmatprep.subr.mxu0 %v694
        %v696 = vand.u32 %v457, 4294901760
        %v697 = vsub.f32 %v457, %v696
        %v698 = vand.u32 %v697, 4294901760
        %v699 = vsub.f32 %v697, %v698
        %v700 = vand.u32 %v699, 4294901760
        %701 = vmatpush1.msra.mxu0 %v700
        %v702 = vand.u32 %v461, 4294901760
        %v703 = vsub.f32 %v461, %v702
        %v704 = vand.u32 %v703, 4294901760
        %v705 = vsub.f32 %v703, %v704
        %v706 = vand.u32 %v705, 4294901760
        %707 = vmatprep.subr.mxu0 %v706
        %v708 = vand.u32 %v460, 4294901760
        %v709 = vsub.f32 %v460, %v708
        %v710 = vand.u32 %v709, 4294901760
        %v711 = vsub.f32 %v709, %v710
        %v712 = vand.u32 %v711, 4294901760
        %713 = vmatpush1.msra.mxu0 %v712
        %v714 = vand.u32 %v464, 4294901760
        %v715 = vsub.f32 %v464, %v714
        %v716 = vand.u32 %v715, 4294901760
        %v717 = vsub.f32 %v715, %v716
        %v718 = vand.u32 %v717, 4294901760
        %719 = vmatprep.subr.mxu0 %v718
        %v720 = vand.u32 %v463, 4294901760
        %v721 = vsub.f32 %v463, %v720
        %v722 = vand.u32 %v721, 4294901760
        %v723 = vsub.f32 %v721, %v722
        %v724 = vand.u32 %v723, 4294901760
        %725 = vmatpush1.msra.mxu0 %v724
        %v726 = vand.u32 %v467, 4294901760
        %v727 = vsub.f32 %v467, %v726
        %v728 = vand.u32 %v727, 4294901760
        %v729 = vsub.f32 %v727, %v728
        %v730 = vand.u32 %v729, 4294901760
        %731 = vmatprep.subr.mxu0 %v730
        %v732 = vand.u32 %v466, 4294901760
        %v733 = vsub.f32 %v466, %v732
        %v734 = vand.u32 %v733, 4294901760
        %v735 = vsub.f32 %v733, %v734
        %v736 = vand.u32 %v735, 4294901760
        %737 = vmatpush1.msra.mxu0 %v736
        %v738 = vand.u32 %v470, 4294901760
        %v739 = vsub.f32 %v470, %v738
        %v740 = vand.u32 %v739, 4294901760
        %v741 = vsub.f32 %v739, %v740
        %v742 = vand.u32 %v741, 4294901760
        %743 = vmatprep.subr.mxu0 %v742
        %v744 = vand.u32 %v469, 4294901760
        %v745 = vsub.f32 %v469, %v744
        %v746 = vand.u32 %v745, 4294901760
        %v747 = vsub.f32 %v745, %v746
        %v748 = vand.u32 %v747, 4294901760
        %749 = vmatpush1.msra.mxu0 %v748
        %v750 = vand.u32 %v473, 4294901760
        %v751 = vsub.f32 %v473, %v750
        %v752 = vand.u32 %v751, 4294901760
        %v753 = vsub.f32 %v751, %v752
        %v754 = vand.u32 %v753, 4294901760
        %755 = vmatprep.subr.mxu0 %v754
        %v756 = vand.u32 %v472, 4294901760
        %v757 = vsub.f32 %v472, %v756
        %v758 = vand.u32 %v757, 4294901760
        %v759 = vsub.f32 %v757, %v758
        %v760 = vand.u32 %v759, 4294901760
        %761 = vmatpush1.msra.mxu0 %v760
        %v762 = vand.u32 %v476, 4294901760
        %v763 = vsub.f32 %v476, %v762
        %v764 = vand.u32 %v763, 4294901760
        %v765 = vsub.f32 %v763, %v764
        %v766 = vand.u32 %v765, 4294901760
        %767 = vmatprep.subr.mxu0 %v766
        %v768 = vand.u32 %v475, 4294901760
        %v769 = vsub.f32 %v475, %v768
        %v770 = vand.u32 %v769, 4294901760
        %v771 = vsub.f32 %v769, %v770
        %v772 = vand.u32 %v771, 4294901760
        %773 = vmatpush1.msra.mxu0 %v772
        %v774 = vand.u32 %v479, 4294901760
        %v775 = vsub.f32 %v479, %v774
        %v776 = vand.u32 %v775, 4294901760
        %v777 = vsub.f32 %v775, %v776
        %v778 = vand.u32 %v777, 4294901760
        %779 = vmatprep.subr.mxu0 %v778
        %v780 = vand.u32 %v478, 4294901760
        %v781 = vsub.f32 %v478, %v780
        %v782 = vand.u32 %v781, 4294901760
        %v783 = vsub.f32 %v781, %v782
        %v784 = vand.u32 %v783, 4294901760
        %785 = vmatpush1.msra.mxu0 %v784
        %v786 = vand.u32 %v482, 4294901760
        %v787 = vsub.f32 %v482, %v786
        %v788 = vand.u32 %v787, 4294901760
        %v789 = vsub.f32 %v787, %v788
        %v790 = vand.u32 %v789, 4294901760
        %791 = vmatprep.subr.mxu0 %v790
        %v792 = vand.u32 %v481, 4294901760
        %v793 = vsub.f32 %v481, %v792
        %v794 = vand.u32 %v793, 4294901760
        %v795 = vsub.f32 %v793, %v794
        %v796 = vand.u32 %v795, 4294901760
        %797 = vmatpush1.msra.mxu0 %v796
        %v798 = vand.u32 %v485, 4294901760
        %v799 = vsub.f32 %v485, %v798
        %v800 = vand.u32 %v799, 4294901760
        %v801 = vsub.f32 %v799, %v800
        %v802 = vand.u32 %v801, 4294901760
        %803 = vmatprep.subr.mxu0 %v802
        %v804 = vand.u32 %v484, 4294901760
        %v805 = vsub.f32 %v484, %v804
        %v806 = vand.u32 %v805, 4294901760
        %v807 = vsub.f32 %v805, %v806
        %v808 = vand.u32 %v807, 4294901760
        %809 = vmatpush1.msra.mxu0 %v808
        %810 = vmatprep.subr.mxu0 0.0
        %811 = vmatpush1.msra.mxu0 0.0
        %812 = vmatprep.subr.mxu0 0.0
        %813 = vmatpush1.msra.mxu0 0.0
        %814 = vmatprep.subr.mxu0 0.0
        %815 = vmatpush1.msra.mxu0 0.0
        %816 = vmatprep.subr.mxu0 0.0
        %817 = vmatpush1.msra.mxu0 0.0
        %818 = vmatprep.subr.mxu0 0.0
        %819 = vmatpush1.msra.mxu0 0.0
        %820 = vmatprep.subr.mxu0 0.0
        %821 = vmatpush1.msra.mxu0 0.0
        %822 = vmatprep.subr.mxu0 0.0
        %823 = vmatpush1.msra.mxu0 0.0
        %824 = vmatprep.subr.mxu0 0.0
        %825 = vmatpush1.msra.mxu0 0.0
        %826 = vmatprep.subr.mxu0 0.0
        %827 = vmatpush1.msra.mxu0 0.0
        %828 = vmatprep.subr.mxu0 0.0
        %829 = vmatpush1.msra.mxu0 0.0
        %830 = vmatprep.subr.mxu0 0.0
        %831 = vmatpush1.msra.mxu0 0.0
        %832 = vmatprep.subr.mxu0 0.0
        %833 = vmatpush1.msra.mxu0 0.0
        %834 = vmatprep.subr.mxu0 0.0
        %835 = vmatpush1.msra.mxu0 0.0
        %836 = vmatprep.subr.mxu0 0.0
        %837 = vmatpush1.msra.mxu0 0.0
        %838 = vmatprep.subr.mxu0 0.0
        %839 = vmatpush1.msra.mxu0 0.0
        %840 = vmatprep.subr.mxu0 0.0
        %841 = vmatpush1.msra.mxu0 0.0
        %842 = vmatprep.mubr.f32.mxu0 0.0
        %v843 = vand.u32 %v504, 4294901760
        %844 = vmatmul.mubr.f32.gmra.mrb[0].mxu0 %v843
        %v845 = vpop.f32.mrb[0].mxu0
        %v846 = vadd.f32 %v614, %v845
        %v847 = vpop.f32.mrb[0].mxu0
        %v848 = vadd.f32 %v616, %v847
        %849 = vdwg.mxu0
        %v850 = vand.u32 %v440, 4294901760
        %v851 = vsub.f32 %v440, %v850
        %852 = vmatprep.subr.mxu0 %v851
        %v853 = vand.u32 %v439, 4294901760
        %v854 = vsub.f32 %v439, %v853
        %855 = vmatpush1.msra.mxu0 %v854
        %v856 = vand.u32 %v443, 4294901760
        %v857 = vsub.f32 %v443, %v856
        %858 = vmatprep.subr.mxu0 %v857
        %v859 = vand.u32 %v442, 4294901760
        %v860 = vsub.f32 %v442, %v859
        %861 = vmatpush1.msra.mxu0 %v860
        %v862 = vand.u32 %v446, 4294901760
        %v863 = vsub.f32 %v446, %v862
        %864 = vmatprep.subr.mxu0 %v863
        %v865 = vand.u32 %v445, 4294901760
        %v866 = vsub.f32 %v445, %v865
        %867 = vmatpush1.msra.mxu0 %v866
        %v868 = vand.u32 %v449, 4294901760
        %v869 = vsub.f32 %v449, %v868
        %870 = vmatprep.subr.mxu0 %v869
        %v871 = vand.u32 %v448, 4294901760
        %v872 = vsub.f32 %v448, %v871
        %873 = vmatpush1.msra.mxu0 %v872
        %v874 = vand.u32 %v452, 4294901760
        %v875 = vsub.f32 %v452, %v874
        %876 = vmatprep.subr.mxu0 %v875
        %v877 = vand.u32 %v451, 4294901760
        %v878 = vsub.f32 %v451, %v877
        %879 = vmatpush1.msra.mxu0 %v878
        %v880 = vand.u32 %v455, 4294901760
        %v881 = vsub.f32 %v455, %v880
        %882 = vmatprep.subr.mxu0 %v881
        %v883 = vand.u32 %v454, 4294901760
        %v884 = vsub.f32 %v454, %v883
        %885 = vmatpush1.msra.mxu0 %v884
        %v886 = vand.u32 %v458, 4294901760
        %v887 = vsub.f32 %v458, %v886
        %888 = vmatprep.subr.mxu0 %v887
        %v889 = vand.u32 %v457, 4294901760
        %v890 = vsub.f32 %v457, %v889
        %891 = vmatpush1.msra.mxu0 %v890
        %v892 = vand.u32 %v461, 4294901760
        %v893 = vsub.f32 %v461, %v892
        %894 = vmatprep.subr.mxu0 %v893
        %v895 = vand.u32 %v460, 4294901760
        %v896 = vsub.f32 %v460, %v895
        %897 = vmatpush1.msra.mxu0 %v896
        %v898 = vand.u32 %v464, 4294901760
        %v899 = vsub.f32 %v464, %v898
        %900 = vmatprep.subr.mxu0 %v899
        %v901 = vand.u32 %v463, 4294901760
        %v902 = vsub.f32 %v463, %v901
        %903 = vmatpush1.msra.mxu0 %v902
        %v904 = vand.u32 %v467, 4294901760
        %v905 = vsub.f32 %v467, %v904
        %906 = vmatprep.subr.mxu0 %v905
        %v907 = vand.u32 %v466, 4294901760
        %v908 = vsub.f32 %v466, %v907
        %909 = vmatpush1.msra.mxu0 %v908
        %v910 = vand.u32 %v470, 4294901760
        %v911 = vsub.f32 %v470, %v910
        %912 = vmatprep.subr.mxu0 %v911
        %v913 = vand.u32 %v469, 4294901760
        %v914 = vsub.f32 %v469, %v913
        %915 = vmatpush1.msra.mxu0 %v914
        %v916 = vand.u32 %v473, 4294901760
        %v917 = vsub.f32 %v473, %v916
        %918 = vmatprep.subr.mxu0 %v917
        %v919 = vand.u32 %v472, 4294901760
        %v920 = vsub.f32 %v472, %v919
        %921 = vmatpush1.msra.mxu0 %v920
        %v922 = vand.u32 %v476, 4294901760
        %v923 = vsub.f32 %v476, %v922
        %924 = vmatprep.subr.mxu0 %v923
        %v925 = vand.u32 %v475, 4294901760
        %v926 = vsub.f32 %v475, %v925
        %927 = vmatpush1.msra.mxu0 %v926
        %v928 = vand.u32 %v479, 4294901760
        %v929 = vsub.f32 %v479, %v928
        %930 = vmatprep.subr.mxu0 %v929
        %v931 = vand.u32 %v478, 4294901760
        %v932 = vsub.f32 %v478, %v931
        %933 = vmatpush1.msra.mxu0 %v932
        %v934 = vand.u32 %v482, 4294901760
        %v935 = vsub.f32 %v482, %v934
        %936 = vmatprep.subr.mxu0 %v935
        %v937 = vand.u32 %v481, 4294901760
        %v938 = vsub.f32 %v481, %v937
        %939 = vmatpush1.msra.mxu0 %v938
        %v940 = vand.u32 %v485, 4294901760
        %v941 = vsub.f32 %v485, %v940
        %942 = vmatprep.subr.mxu0 %v941
        %v943 = vand.u32 %v484, 4294901760
        %v944 = vsub.f32 %v484, %v943
        %945 = vmatpush1.msra.mxu0 %v944
        %946 = vmatprep.subr.mxu0 0.0
        %947 = vmatpush1.msra.mxu0 0.0
        %948 = vmatprep.subr.mxu0 0.0
        %949 = vmatpush1.msra.mxu0 0.0
        %950 = vmatprep.subr.mxu0 0.0
        %951 = vmatpush1.msra.mxu0 0.0
        %952 = vmatprep.subr.mxu0 0.0
        %953 = vmatpush1.msra.mxu0 0.0
        %954 = vmatprep.subr.mxu0 0.0
        %955 = vmatpush1.msra.mxu0 0.0
        %956 = vmatprep.subr.mxu0 0.0
        %957 = vmatpush1.msra.mxu0 0.0
        %958 = vmatprep.subr.mxu0 0.0
        %959 = vmatpush1.msra.mxu0 0.0
        %960 = vmatprep.subr.mxu0 0.0
        %961 = vmatpush1.msra.mxu0 0.0
        %962 = vmatprep.subr.mxu0 0.0
        %963 = vmatpush1.msra.mxu0 0.0
        %964 = vmatprep.subr.mxu0 0.0
        %965 = vmatpush1.msra.mxu0 0.0
        %966 = vmatprep.subr.mxu0 0.0
        %967 = vmatpush1.msra.mxu0 0.0
        %968 = vmatprep.subr.mxu0 0.0
        %969 = vmatpush1.msra.mxu0 0.0
        %970 = vmatprep.subr.mxu0 0.0
        %971 = vmatpush1.msra.mxu0 0.0
        %972 = vmatprep.subr.mxu0 0.0
        %973 = vmatpush1.msra.mxu0 0.0
        %974 = vmatprep.subr.mxu0 0.0
        %975 = vmatpush1.msra.mxu0 0.0
        %976 = vmatprep.subr.mxu0 0.0
        %977 = vmatpush1.msra.mxu0 0.0
        %978 = vmatprep.mubr.f32.mxu0 0.0
        %v979 = vand.u32 %v504, 4294901760
        %v980 = vsub.f32 %v504, %v979
        %981 = vmatmul.mubr.f32.gmra.mrb[0].mxu0 %v980
        %v982 = vpop.f32.mrb[0].mxu0
        %v983 = vadd.f32 %v846, %v982
        %v984 = vpop.f32.mrb[0].mxu0
        %v985 = vadd.f32 %v848, %v984
        %986 = vdwg.mxu0
        %v987 = vand.u32 %v440, 4294901760
        %988 = vmatprep.subr.mxu0 %v987
        %v989 = vand.u32 %v439, 4294901760
        %990 = vmatpush1.msra.mxu0 %v989
        %v991 = vand.u32 %v443, 4294901760
        %992 = vmatprep.subr.mxu0 %v991
        %v993 = vand.u32 %v442, 4294901760
        %994 = vmatpush1.msra.mxu0 %v993
        %v995 = vand.u32 %v446, 4294901760
        %996 = vmatprep.subr.mxu0 %v995
        %v997 = vand.u32 %v445, 4294901760
        %998 = vmatpush1.msra.mxu0 %v997
        %v999 = vand.u32 %v449, 4294901760
        %1000 = vmatprep.subr.mxu0 %v999
        %v1001 = vand.u32 %v448, 4294901760
        %1002 = vmatpush1.msra.mxu0 %v1001
        %v1003 = vand.u32 %v452, 4294901760
        %1004 = vmatprep.subr.mxu0 %v1003
        %v1005 = vand.u32 %v451, 4294901760
        %1006 = vmatpush1.msra.mxu0 %v1005
        %v1007 = vand.u32 %v455, 4294901760
        %1008 = vmatprep.subr.mxu0 %v1007
        %v1009 = vand.u32 %v454, 4294901760
        %1010 = vmatpush1.msra.mxu0 %v1009
        %v1011 = vand.u32 %v458, 4294901760
        %1012 = vmatprep.subr.mxu0 %v1011
        %v1013 = vand.u32 %v457, 4294901760
        %1014 = vmatpush1.msra.mxu0 %v1013
        %v1015 = vand.u32 %v461, 4294901760
        %1016 = vmatprep.subr.mxu0 %v1015
        %v1017 = vand.u32 %v460, 4294901760
        %1018 = vmatpush1.msra.mxu0 %v1017
        %v1019 = vand.u32 %v464, 4294901760
        %1020 = vmatprep.subr.mxu0 %v1019
        %v1021 = vand.u32 %v463, 4294901760
        %1022 = vmatpush1.msra.mxu0 %v1021
        %v1023 = vand.u32 %v467, 4294901760
        %1024 = vmatprep.subr.mxu0 %v1023
        %v1025 = vand.u32 %v466, 4294901760
        %1026 = vmatpush1.msra.mxu0 %v1025
        %v1027 = vand.u32 %v470, 4294901760
        %1028 = vmatprep.subr.mxu0 %v1027
        %v1029 = vand.u32 %v469, 4294901760
        %1030 = vmatpush1.msra.mxu0 %v1029
        %v1031 = vand.u32 %v473, 4294901760
        %1032 = vmatprep.subr.mxu0 %v1031
        %v1033 = vand.u32 %v472, 4294901760
        %1034 = vmatpush1.msra.mxu0 %v1033
        %v1035 = vand.u32 %v476, 4294901760
        %1036 = vmatprep.subr.mxu0 %v1035
        %v1037 = vand.u32 %v475, 4294901760
        %1038 = vmatpush1.msra.mxu0 %v1037
        %v1039 = vand.u32 %v479, 4294901760
        %1040 = vmatprep.subr.mxu0 %v1039
        %v1041 = vand.u32 %v478, 4294901760
        %1042 = vmatpush1.msra.mxu0 %v1041
        %v1043 = vand.u32 %v482, 4294901760
        %1044 = vmatprep.subr.mxu0 %v1043
        %v1045 = vand.u32 %v481, 4294901760
        %1046 = vmatpush1.msra.mxu0 %v1045
        %v1047 = vand.u32 %v485, 4294901760
        %1048 = vmatprep.subr.mxu0 %v1047
        %v1049 = vand.u32 %v484, 4294901760
        %1050 = vmatpush1.msra.mxu0 %v1049
        %1051 = vmatprep.subr.mxu0 0.0
        %1052 = vmatpush1.msra.mxu0 0.0
        %1053 = vmatprep.subr.mxu0 0.0
        %1054 = vmatpush1.msra.mxu0 0.0
        %1055 = vmatprep.subr.mxu0 0.0
        %1056 = vmatpush1.msra.mxu0 0.0
        %1057 = vmatprep.subr.mxu0 0.0
        %1058 = vmatpush1.msra.mxu0 0.0
        %1059 = vmatprep.subr.mxu0 0.0
        %1060 = vmatpush1.msra.mxu0 0.0
        %1061 = vmatprep.subr.mxu0 0.0
        %1062 = vmatpush1.msra.mxu0 0.0
        %1063 = vmatprep.subr.mxu0 0.0
        %1064 = vmatpush1.msra.mxu0 0.0
        %1065 = vmatprep.subr.mxu0 0.0
        %1066 = vmatpush1.msra.mxu0 0.0
        %1067 = vmatprep.subr.mxu0 0.0
        %1068 = vmatpush1.msra.mxu0 0.0
        %1069 = vmatprep.subr.mxu0 0.0
        %1070 = vmatpush1.msra.mxu0 0.0
        %1071 = vmatprep.subr.mxu0 0.0
        %1072 = vmatpush1.msra.mxu0 0.0
        %1073 = vmatprep.subr.mxu0 0.0
        %1074 = vmatpush1.msra.mxu0 0.0
        %1075 = vmatprep.subr.mxu0 0.0
        %1076 = vmatpush1.msra.mxu0 0.0
        %1077 = vmatprep.subr.mxu0 0.0
        %1078 = vmatpush1.msra.mxu0 0.0
        %1079 = vmatprep.subr.mxu0 0.0
        %1080 = vmatpush1.msra.mxu0 0.0
        %1081 = vmatprep.subr.mxu0 0.0
        %1082 = vmatpush1.msra.mxu0 0.0
        %1083 = vmatprep.mubr.f32.mxu0 0.0
        %v1084 = vand.u32 %v504, 4294901760
        %v1085 = vsub.f32 %v504, %v1084
        %v1086 = vand.u32 %v1085, 4294901760
        %1087 = vmatmul.mubr.f32.gmra.mrb[0].mxu0 %v1086
        %v1088 = vpop.f32.mrb[0].mxu0
        %v1089 = vadd.f32 %v983, %v1088
        %v1090 = vpop.f32.mrb[0].mxu0
        %v1091 = vadd.f32 %v985, %v1090
        %1092 = vdwg.mxu0
        %v1093 = vand.u32 %v440, 4294901760
        %v1094 = vsub.f32 %v440, %v1093
        %v1095 = vand.u32 %v1094, 4294901760
        %1096 = vmatprep.subr.mxu0 %v1095
        %v1097 = vand.u32 %v439, 4294901760
        %v1098 = vsub.f32 %v439, %v1097
        %v1099 = vand.u32 %v1098, 4294901760
        %1100 = vmatpush1.msra.mxu0 %v1099
        %v1101 = vand.u32 %v443, 4294901760
        %v1102 = vsub.f32 %v443, %v1101
        %v1103 = vand.u32 %v1102, 4294901760
        %1104 = vmatprep.subr.mxu0 %v1103
        %v1105 = vand.u32 %v442, 4294901760
        %v1106 = vsub.f32 %v442, %v1105
        %v1107 = vand.u32 %v1106, 4294901760
        %1108 = vmatpush1.msra.mxu0 %v1107
        %v1109 = vand.u32 %v446, 4294901760
        %v1110 = vsub.f32 %v446, %v1109
        %v1111 = vand.u32 %v1110, 4294901760
        %1112 = vmatprep.subr.mxu0 %v1111
        %v1113 = vand.u32 %v445, 4294901760
        %v1114 = vsub.f32 %v445, %v1113
        %v1115 = vand.u32 %v1114, 4294901760
        %1116 = vmatpush1.msra.mxu0 %v1115
        %v1117 = vand.u32 %v449, 4294901760
        %v1118 = vsub.f32 %v449, %v1117
        %v1119 = vand.u32 %v1118, 4294901760
        %1120 = vmatprep.subr.mxu0 %v1119
        %v1121 = vand.u32 %v448, 4294901760
        %v1122 = vsub.f32 %v448, %v1121
        %v1123 = vand.u32 %v1122, 4294901760
        %1124 = vmatpush1.msra.mxu0 %v1123
        %v1125 = vand.u32 %v452, 4294901760
        %v1126 = vsub.f32 %v452, %v1125
        %v1127 = vand.u32 %v1126, 4294901760
        %1128 = vmatprep.subr.mxu0 %v1127
        %v1129 = vand.u32 %v451, 4294901760
        %v1130 = vsub.f32 %v451, %v1129
        %v1131 = vand.u32 %v1130, 4294901760
        %1132 = vmatpush1.msra.mxu0 %v1131
        %v1133 = vand.u32 %v455, 4294901760
        %v1134 = vsub.f32 %v455, %v1133
        %v1135 = vand.u32 %v1134, 4294901760
        %1136 = vmatprep.subr.mxu0 %v1135
        %v1137 = vand.u32 %v454, 4294901760
        %v1138 = vsub.f32 %v454, %v1137
        %v1139 = vand.u32 %v1138, 4294901760
        %1140 = vmatpush1.msra.mxu0 %v1139
        %v1141 = vand.u32 %v458, 4294901760
        %v1142 = vsub.f32 %v458, %v1141
        %v1143 = vand.u32 %v1142, 4294901760
        %1144 = vmatprep.subr.mxu0 %v1143
        %v1145 = vand.u32 %v457, 4294901760
        %v1146 = vsub.f32 %v457, %v1145
        %v1147 = vand.u32 %v1146, 4294901760
        %1148 = vmatpush1.msra.mxu0 %v1147
        %v1149 = vand.u32 %v461, 4294901760
        %v1150 = vsub.f32 %v461, %v1149
        %v1151 = vand.u32 %v1150, 4294901760
        %1152 = vmatprep.subr.mxu0 %v1151
        %v1153 = vand.u32 %v460, 4294901760
        %v1154 = vsub.f32 %v460, %v1153
        %v1155 = vand.u32 %v1154, 4294901760
        %1156 = vmatpush1.msra.mxu0 %v1155
        %v1157 = vand.u32 %v464, 4294901760
        %v1158 = vsub.f32 %v464, %v1157
        %v1159 = vand.u32 %v1158, 4294901760
        %1160 = vmatprep.subr.mxu0 %v1159
        %v1161 = vand.u32 %v463, 4294901760
        %v1162 = vsub.f32 %v463, %v1161
        %v1163 = vand.u32 %v1162, 4294901760
        %1164 = vmatpush1.msra.mxu0 %v1163
        %v1165 = vand.u32 %v467, 4294901760
        %v1166 = vsub.f32 %v467, %v1165
        %v1167 = vand.u32 %v1166, 4294901760
        %1168 = vmatprep.subr.mxu0 %v1167
        %v1169 = vand.u32 %v466, 4294901760
        %v1170 = vsub.f32 %v466, %v1169
        %v1171 = vand.u32 %v1170, 4294901760
        %1172 = vmatpush1.msra.mxu0 %v1171
        %v1173 = vand.u32 %v470, 4294901760
        %v1174 = vsub.f32 %v470, %v1173
        %v1175 = vand.u32 %v1174, 4294901760
        %1176 = vmatprep.subr.mxu0 %v1175
        %v1177 = vand.u32 %v469, 4294901760
        %v1178 = vsub.f32 %v469, %v1177
        %v1179 = vand.u32 %v1178, 4294901760
        %1180 = vmatpush1.msra.mxu0 %v1179
        %v1181 = vand.u32 %v473, 4294901760
        %v1182 = vsub.f32 %v473, %v1181
        %v1183 = vand.u32 %v1182, 4294901760
        %1184 = vmatprep.subr.mxu0 %v1183
        %v1185 = vand.u32 %v472, 4294901760
        %v1186 = vsub.f32 %v472, %v1185
        %v1187 = vand.u32 %v1186, 4294901760
        %1188 = vmatpush1.msra.mxu0 %v1187
        %v1189 = vand.u32 %v476, 4294901760
        %v1190 = vsub.f32 %v476, %v1189
        %v1191 = vand.u32 %v1190, 4294901760
        %1192 = vmatprep.subr.mxu0 %v1191
        %v1193 = vand.u32 %v475, 4294901760
        %v1194 = vsub.f32 %v475, %v1193
        %v1195 = vand.u32 %v1194, 4294901760
        %1196 = vmatpush1.msra.mxu0 %v1195
        %v1197 = vand.u32 %v479, 4294901760
        %v1198 = vsub.f32 %v479, %v1197
        %v1199 = vand.u32 %v1198, 4294901760
        %1200 = vmatprep.subr.mxu0 %v1199
        %v1201 = vand.u32 %v478, 4294901760
        %v1202 = vsub.f32 %v478, %v1201
        %v1203 = vand.u32 %v1202, 4294901760
        %1204 = vmatpush1.msra.mxu0 %v1203
        %v1205 = vand.u32 %v482, 4294901760
        %v1206 = vsub.f32 %v482, %v1205
        %v1207 = vand.u32 %v1206, 4294901760
        %1208 = vmatprep.subr.mxu0 %v1207
        %v1209 = vand.u32 %v481, 4294901760
        %v1210 = vsub.f32 %v481, %v1209
        %v1211 = vand.u32 %v1210, 4294901760
        %1212 = vmatpush1.msra.mxu0 %v1211
        %v1213 = vand.u32 %v485, 4294901760
        %v1214 = vsub.f32 %v485, %v1213
        %v1215 = vand.u32 %v1214, 4294901760
        %1216 = vmatprep.subr.mxu0 %v1215
        %v1217 = vand.u32 %v484, 4294901760
        %v1218 = vsub.f32 %v484, %v1217
        %v1219 = vand.u32 %v1218, 4294901760
        %1220 = vmatpush1.msra.mxu0 %v1219
        %1221 = vmatprep.subr.mxu0 0.0
        %1222 = vmatpush1.msra.mxu0 0.0
        %1223 = vmatprep.subr.mxu0 0.0
        %1224 = vmatpush1.msra.mxu0 0.0
        %1225 = vmatprep.subr.mxu0 0.0
        %1226 = vmatpush1.msra.mxu0 0.0
        %1227 = vmatprep.subr.mxu0 0.0
        %1228 = vmatpush1.msra.mxu0 0.0
        %1229 = vmatprep.subr.mxu0 0.0
        %1230 = vmatpush1.msra.mxu0 0.0
        %1231 = vmatprep.subr.mxu0 0.0
        %1232 = vmatpush1.msra.mxu0 0.0
        %1233 = vmatprep.subr.mxu0 0.0
        %1234 = vmatpush1.msra.mxu0 0.0
        %1235 = vmatprep.subr.mxu0 0.0
        %1236 = vmatpush1.msra.mxu0 0.0
        %1237 = vmatprep.subr.mxu0 0.0
        %1238 = vmatpush1.msra.mxu0 0.0
        %1239 = vmatprep.subr.mxu0 0.0
        %1240 = vmatpush1.msra.mxu0 0.0
        %1241 = vmatprep.subr.mxu0 0.0
        %1242 = vmatpush1.msra.mxu0 0.0
        %1243 = vmatprep.subr.mxu0 0.0
        %1244 = vmatpush1.msra.mxu0 0.0
        %1245 = vmatprep.subr.mxu0 0.0
        %1246 = vmatpush1.msra.mxu0 0.0
        %1247 = vmatprep.subr.mxu0 0.0
        %1248 = vmatpush1.msra.mxu0 0.0
        %1249 = vmatprep.subr.mxu0 0.0
        %1250 = vmatpush1.msra.mxu0 0.0
        %1251 = vmatprep.subr.mxu0 0.0
        %1252 = vmatpush1.msra.mxu0 0.0
        %1253 = vmatprep.mubr.f32.mxu0 0.0
        %v1254 = vand.u32 %v504, 4294901760
        %1255 = vmatmul.mubr.f32.gmra.mrb[0].mxu0 %v1254
        %v1256 = vpop.f32.mrb[0].mxu0
        %v1257 = vadd.f32 %v1089, %v1256
        %v1258 = vpop.f32.mrb[0].mxu0
        %v1259 = vadd.f32 %v1091, %v1258
        %1260 = vdwg.mxu0
        %v1261 = vand.u32 %v440, 4294901760
        %1262 = vmatprep.subr.mxu0 %v1261
        %v1263 = vand.u32 %v439, 4294901760
        %1264 = vmatpush1.msra.mxu0 %v1263
        %v1265 = vand.u32 %v443, 4294901760
        %1266 = vmatprep.subr.mxu0 %v1265
        %v1267 = vand.u32 %v442, 4294901760
        %1268 = vmatpush1.msra.mxu0 %v1267
        %v1269 = vand.u32 %v446, 4294901760
        %1270 = vmatprep.subr.mxu0 %v1269
        %v1271 = vand.u32 %v445, 4294901760
        %1272 = vmatpush1.msra.mxu0 %v1271
        %v1273 = vand.u32 %v449, 4294901760
        %1274 = vmatprep.subr.mxu0 %v1273
        %v1275 = vand.u32 %v448, 4294901760
        %1276 = vmatpush1.msra.mxu0 %v1275
        %v1277 = vand.u32 %v452, 4294901760
        %1278 = vmatprep.subr.mxu0 %v1277
        %v1279 = vand.u32 %v451, 4294901760
        %1280 = vmatpush1.msra.mxu0 %v1279
        %v1281 = vand.u32 %v455, 4294901760
        %1282 = vmatprep.subr.mxu0 %v1281
        %v1283 = vand.u32 %v454, 4294901760
        %1284 = vmatpush1.msra.mxu0 %v1283
        %v1285 = vand.u32 %v458, 4294901760
        %1286 = vmatprep.subr.mxu0 %v1285
        %v1287 = vand.u32 %v457, 4294901760
        %1288 = vmatpush1.msra.mxu0 %v1287
        %v1289 = vand.u32 %v461, 4294901760
        %1290 = vmatprep.subr.mxu0 %v1289
        %v1291 = vand.u32 %v460, 4294901760
        %1292 = vmatpush1.msra.mxu0 %v1291
        %v1293 = vand.u32 %v464, 4294901760
        %1294 = vmatprep.subr.mxu0 %v1293
        %v1295 = vand.u32 %v463, 4294901760
        %1296 = vmatpush1.msra.mxu0 %v1295
        %v1297 = vand.u32 %v467, 4294901760
        %1298 = vmatprep.subr.mxu0 %v1297
        %v1299 = vand.u32 %v466, 4294901760
        %1300 = vmatpush1.msra.mxu0 %v1299
        %v1301 = vand.u32 %v470, 4294901760
        %1302 = vmatprep.subr.mxu0 %v1301
        %v1303 = vand.u32 %v469, 4294901760
        %1304 = vmatpush1.msra.mxu0 %v1303
        %v1305 = vand.u32 %v473, 4294901760
        %1306 = vmatprep.subr.mxu0 %v1305
        %v1307 = vand.u32 %v472, 4294901760
        %1308 = vmatpush1.msra.mxu0 %v1307
        %v1309 = vand.u32 %v476, 4294901760
        %1310 = vmatprep.subr.mxu0 %v1309
        %v1311 = vand.u32 %v475, 4294901760
        %1312 = vmatpush1.msra.mxu0 %v1311
        %v1313 = vand.u32 %v479, 4294901760
        %1314 = vmatprep.subr.mxu0 %v1313
        %v1315 = vand.u32 %v478, 4294901760
        %1316 = vmatpush1.msra.mxu0 %v1315
        %v1317 = vand.u32 %v482, 4294901760
        %1318 = vmatprep.subr.mxu0 %v1317
        %v1319 = vand.u32 %v481, 4294901760
        %1320 = vmatpush1.msra.mxu0 %v1319
        %v1321 = vand.u32 %v485, 4294901760
        %1322 = vmatprep.subr.mxu0 %v1321
        %v1323 = vand.u32 %v484, 4294901760
        %1324 = vmatpush1.msra.mxu0 %v1323
        %1325 = vmatprep.subr.mxu0 0.0
        %1326 = vmatpush1.msra.mxu0 0.0
        %1327 = vmatprep.subr.mxu0 0.0
        %1328 = vmatpush1.msra.mxu0 0.0
        %1329 = vmatprep.subr.mxu0 0.0
        %1330 = vmatpush1.msra.mxu0 0.0
        %1331 = vmatprep.subr.mxu0 0.0
        %1332 = vmatpush1.msra.mxu0 0.0
        %1333 = vmatprep.subr.mxu0 0.0
        %1334 = vmatpush1.msra.mxu0 0.0
        %1335 = vmatprep.subr.mxu0 0.0
        %1336 = vmatpush1.msra.mxu0 0.0
        %1337 = vmatprep.subr.mxu0 0.0
        %1338 = vmatpush1.msra.mxu0 0.0
        %1339 = vmatprep.subr.mxu0 0.0
        %1340 = vmatpush1.msra.mxu0 0.0
        %1341 = vmatprep.subr.mxu0 0.0
        %1342 = vmatpush1.msra.mxu0 0.0
        %1343 = vmatprep.subr.mxu0 0.0
        %1344 = vmatpush1.msra.mxu0 0.0
        %1345 = vmatprep.subr.mxu0 0.0
        %1346 = vmatpush1.msra.mxu0 0.0
        %1347 = vmatprep.subr.mxu0 0.0
        %1348 = vmatpush1.msra.mxu0 0.0
        %1349 = vmatprep.subr.mxu0 0.0
        %1350 = vmatpush1.msra.mxu0 0.0
        %1351 = vmatprep.subr.mxu0 0.0
        %1352 = vmatpush1.msra.mxu0 0.0
        %1353 = vmatprep.subr.mxu0 0.0
        %1354 = vmatpush1.msra.mxu0 0.0
        %1355 = vmatprep.subr.mxu0 0.0
        %1356 = vmatpush1.msra.mxu0 0.0
        %1357 = vmatprep.mubr.f32.mxu0 0.0
        %v1358 = vand.u32 %v504, 4294901760
        %1359 = vmatmul.mubr.f32.gmra.mrb[0].mxu0 %v1358
        %v1360 = vpop.f32.mrb[0].mxu0
        %v1361 = vadd.f32 %v1257, %v1360
        %v1362 = vpop.f32.mrb[0].mxu0
        %v1363 = vadd.f32 %v1259, %v1362
        %1364 = vdwg.mxu0
        %1365 = vmatprep.subr.mxu0 0.0
        %v1366 = vand.u32 %v441, 4294901760
        %1367 = vmatpush1.msra.mxu0 %v1366
        %1368 = vmatprep.subr.mxu0 0.0
        %v1369 = vand.u32 %v444, 4294901760
        %1370 = vmatpush1.msra.mxu0 %v1369
        %1371 = vmatprep.subr.mxu0 0.0
        %v1372 = vand.u32 %v447, 4294901760
        %1373 = vmatpush1.msra.mxu0 %v1372
        %1374 = vmatprep.subr.mxu0 0.0
        %v1375 = vand.u32 %v450, 4294901760
        %1376 = vmatpush1.msra.mxu0 %v1375
        %1377 = vmatprep.subr.mxu0 0.0
        %v1378 = vand.u32 %v453, 4294901760
        %1379 = vmatpush1.msra.mxu0 %v1378
        %1380 = vmatprep.subr.mxu0 0.0
        %v1381 = vand.u32 %v456, 4294901760
        %1382 = vmatpush1.msra.mxu0 %v1381
        %1383 = vmatprep.subr.mxu0 0.0
        %v1384 = vand.u32 %v459, 4294901760
        %1385 = vmatpush1.msra.mxu0 %v1384
        %1386 = vmatprep.subr.mxu0 0.0
        %v1387 = vand.u32 %v462, 4294901760
        %1388 = vmatpush1.msra.mxu0 %v1387
        %1389 = vmatprep.subr.mxu0 0.0
        %v1390 = vand.u32 %v465, 4294901760
        %1391 = vmatpush1.msra.mxu0 %v1390
        %1392 = vmatprep.subr.mxu0 0.0
        %v1393 = vand.u32 %v468, 4294901760
        %1394 = vmatpush1.msra.mxu0 %v1393
        %1395 = vmatprep.subr.mxu0 0.0
        %v1396 = vand.u32 %v471, 4294901760
        %1397 = vmatpush1.msra.mxu0 %v1396
        %1398 = vmatprep.subr.mxu0 0.0
        %v1399 = vand.u32 %v474, 4294901760
        %1400 = vmatpush1.msra.mxu0 %v1399
        %1401 = vmatprep.subr.mxu0 0.0
        %v1402 = vand.u32 %v477, 4294901760
        %1403 = vmatpush1.msra.mxu0 %v1402
        %1404 = vmatprep.subr.mxu0 0.0
        %v1405 = vand.u32 %v480, 4294901760
        %1406 = vmatpush1.msra.mxu0 %v1405
        %1407 = vmatprep.subr.mxu0 0.0
        %v1408 = vand.u32 %v483, 4294901760
        %1409 = vmatpush1.msra.mxu0 %v1408
        %1410 = vmatprep.subr.mxu0 0.0
        %v1411 = vand.u32 %v486, 4294901760
        %1412 = vmatpush1.msra.mxu0 %v1411
        %1413 = vmatprep.subr.mxu0 0.0
        %1414 = vmatpush1.msra.mxu0 0.0
        %1415 = vmatprep.subr.mxu0 0.0
        %1416 = vmatpush1.msra.mxu0 0.0
        %1417 = vmatprep.subr.mxu0 0.0
        %1418 = vmatpush1.msra.mxu0 0.0
        %1419 = vmatprep.subr.mxu0 0.0
        %1420 = vmatpush1.msra.mxu0 0.0
        %1421 = vmatprep.subr.mxu0 0.0
        %1422 = vmatpush1.msra.mxu0 0.0
        %1423 = vmatprep.subr.mxu0 0.0
        %1424 = vmatpush1.msra.mxu0 0.0
        %1425 = vmatprep.subr.mxu0 0.0
        %1426 = vmatpush1.msra.mxu0 0.0
        %1427 = vmatprep.subr.mxu0 0.0
        %1428 = vmatpush1.msra.mxu0 0.0
        %1429 = vmatprep.subr.mxu0 0.0
        %1430 = vmatpush1.msra.mxu0 0.0
        %1431 = vmatprep.subr.mxu0 0.0
        %1432 = vmatpush1.msra.mxu0 0.0
        %1433 = vmatprep.subr.mxu0 0.0
        %1434 = vmatpush1.msra.mxu0 0.0
        %1435 = vmatprep.subr.mxu0 0.0
        %1436 = vmatpush1.msra.mxu0 0.0
        %1437 = vmatprep.subr.mxu0 0.0
        %1438 = vmatpush1.msra.mxu0 0.0
        %1439 = vmatprep.subr.mxu0 0.0
        %1440 = vmatpush1.msra.mxu0 0.0
        %1441 = vmatprep.subr.mxu0 0.0
        %1442 = vmatpush1.msra.mxu0 0.0
        %1443 = vmatprep.subr.mxu0 0.0
        %1444 = vmatpush1.msra.mxu0 0.0
        %1445 = vmatprep.mubr.f32.mxu0 0.0
        %v1446 = vand.u32 %v504, 4294901760
        %v1447 = vsub.f32 %v504, %v1446
        %v1448 = vand.u32 %v1447, 4294901760
        %v1449 = vsub.f32 %v1447, %v1448
        %v1450 = vand.u32 %v1449, 4294901760
        %1451 = vmatmul.mubr.f32.gmra.mrb[0].mxu0 %v1450
        %v1452 = vpop.f32.mrb[0].mxu0
        %v1453 = vadd.f32 %v500, %v1452
        %v1454 = vpop.f32.mrb[0].mxu0
        %1455 = vdwg.mxu0
        %1456 = vmatprep.subr.mxu0 0.0
        %v1457 = vand.u32 %v441, 4294901760
        %v1458 = vsub.f32 %v441, %v1457
        %v1459 = vand.u32 %v1458, 4294901760
        %v1460 = vsub.f32 %v1458, %v1459
        %v1461 = vand.u32 %v1460, 4294901760
        %1462 = vmatpush1.msra.mxu0 %v1461
        %1463 = vmatprep.subr.mxu0 0.0
        %v1464 = vand.u32 %v444, 4294901760
        %v1465 = vsub.f32 %v444, %v1464
        %v1466 = vand.u32 %v1465, 4294901760
        %v1467 = vsub.f32 %v1465, %v1466
        %v1468 = vand.u32 %v1467, 4294901760
        %1469 = vmatpush1.msra.mxu0 %v1468
        %1470 = vmatprep.subr.mxu0 0.0
        %v1471 = vand.u32 %v447, 4294901760
        %v1472 = vsub.f32 %v447, %v1471
        %v1473 = vand.u32 %v1472, 4294901760
        %v1474 = vsub.f32 %v1472, %v1473
        %v1475 = vand.u32 %v1474, 4294901760
        %1476 = vmatpush1.msra.mxu0 %v1475
        %1477 = vmatprep.subr.mxu0 0.0
        %v1478 = vand.u32 %v450, 4294901760
        %v1479 = vsub.f32 %v450, %v1478
        %v1480 = vand.u32 %v1479, 4294901760
        %v1481 = vsub.f32 %v1479, %v1480
        %v1482 = vand.u32 %v1481, 4294901760
        %1483 = vmatpush1.msra.mxu0 %v1482
        %1484 = vmatprep.subr.mxu0 0.0
        %v1485 = vand.u32 %v453, 4294901760
        %v1486 = vsub.f32 %v453, %v1485
        %v1487 = vand.u32 %v1486, 4294901760
        %v1488 = vsub.f32 %v1486, %v1487
        %v1489 = vand.u32 %v1488, 4294901760
        %1490 = vmatpush1.msra.mxu0 %v1489
        %1491 = vmatprep.subr.mxu0 0.0
        %v1492 = vand.u32 %v456, 4294901760
        %v1493 = vsub.f32 %v456, %v1492
        %v1494 = vand.u32 %v1493, 4294901760
        %v1495 = vsub.f32 %v1493, %v1494
        %v1496 = vand.u32 %v1495, 4294901760
        %1497 = vmatpush1.msra.mxu0 %v1496
        %1498 = vmatprep.subr.mxu0 0.0
        %v1499 = vand.u32 %v459, 4294901760
        %v1500 = vsub.f32 %v459, %v1499
        %v1501 = vand.u32 %v1500, 4294901760
        %v1502 = vsub.f32 %v1500, %v1501
        %v1503 = vand.u32 %v1502, 4294901760
        %1504 = vmatpush1.msra.mxu0 %v1503
        %1505 = vmatprep.subr.mxu0 0.0
        %v1506 = vand.u32 %v462, 4294901760
        %v1507 = vsub.f32 %v462, %v1506
        %v1508 = vand.u32 %v1507, 4294901760
        %v1509 = vsub.f32 %v1507, %v1508
        %v1510 = vand.u32 %v1509, 4294901760
        %1511 = vmatpush1.msra.mxu0 %v1510
        %1512 = vmatprep.subr.mxu0 0.0
        %v1513 = vand.u32 %v465, 4294901760
        %v1514 = vsub.f32 %v465, %v1513
        %v1515 = vand.u32 %v1514, 4294901760
        %v1516 = vsub.f32 %v1514, %v1515
        %v1517 = vand.u32 %v1516, 4294901760
        %1518 = vmatpush1.msra.mxu0 %v1517
        %1519 = vmatprep.subr.mxu0 0.0
        %v1520 = vand.u32 %v468, 4294901760
        %v1521 = vsub.f32 %v468, %v1520
        %v1522 = vand.u32 %v1521, 4294901760
        %v1523 = vsub.f32 %v1521, %v1522
        %v1524 = vand.u32 %v1523, 4294901760
        %1525 = vmatpush1.msra.mxu0 %v1524
        %1526 = vmatprep.subr.mxu0 0.0
        %v1527 = vand.u32 %v471, 4294901760
        %v1528 = vsub.f32 %v471, %v1527
        %v1529 = vand.u32 %v1528, 4294901760
        %v1530 = vsub.f32 %v1528, %v1529
        %v1531 = vand.u32 %v1530, 4294901760
        %1532 = vmatpush1.msra.mxu0 %v1531
        %1533 = vmatprep.subr.mxu0 0.0
        %v1534 = vand.u32 %v474, 4294901760
        %v1535 = vsub.f32 %v474, %v1534
        %v1536 = vand.u32 %v1535, 4294901760
        %v1537 = vsub.f32 %v1535, %v1536
        %v1538 = vand.u32 %v1537, 4294901760
        %1539 = vmatpush1.msra.mxu0 %v1538
        %1540 = vmatprep.subr.mxu0 0.0
        %v1541 = vand.u32 %v477, 4294901760
        %v1542 = vsub.f32 %v477, %v1541
        %v1543 = vand.u32 %v1542, 4294901760
        %v1544 = vsub.f32 %v1542, %v1543
        %v1545 = vand.u32 %v1544, 4294901760
        %1546 = vmatpush1.msra.mxu0 %v1545
        %1547 = vmatprep.subr.mxu0 0.0
        %v1548 = vand.u32 %v480, 4294901760
        %v1549 = vsub.f32 %v480, %v1548
        %v1550 = vand.u32 %v1549, 4294901760
        %v1551 = vsub.f32 %v1549, %v1550
        %v1552 = vand.u32 %v1551, 4294901760
        %1553 = vmatpush1.msra.mxu0 %v1552
        %1554 = vmatprep.subr.mxu0 0.0
        %v1555 = vand.u32 %v483, 4294901760
        %v1556 = vsub.f32 %v483, %v1555
        %v1557 = vand.u32 %v1556, 4294901760
        %v1558 = vsub.f32 %v1556, %v1557
        %v1559 = vand.u32 %v1558, 4294901760
        %1560 = vmatpush1.msra.mxu0 %v1559
        %1561 = vmatprep.subr.mxu0 0.0
        %v1562 = vand.u32 %v486, 4294901760
        %v1563 = vsub.f32 %v486, %v1562
        %v1564 = vand.u32 %v1563, 4294901760
        %v1565 = vsub.f32 %v1563, %v1564
        %v1566 = vand.u32 %v1565, 4294901760
        %1567 = vmatpush1.msra.mxu0 %v1566
        %1568 = vmatprep.subr.mxu0 0.0
        %1569 = vmatpush1.msra.mxu0 0.0
        %1570 = vmatprep.subr.mxu0 0.0
        %1571 = vmatpush1.msra.mxu0 0.0
        %1572 = vmatprep.subr.mxu0 0.0
        %1573 = vmatpush1.msra.mxu0 0.0
        %1574 = vmatprep.subr.mxu0 0.0
        %1575 = vmatpush1.msra.mxu0 0.0
        %1576 = vmatprep.subr.mxu0 0.0
        %1577 = vmatpush1.msra.mxu0 0.0
        %1578 = vmatprep.subr.mxu0 0.0
        %1579 = vmatpush1.msra.mxu0 0.0
        %1580 = vmatprep.subr.mxu0 0.0
        %1581 = vmatpush1.msra.mxu0 0.0
        %1582 = vmatprep.subr.mxu0 0.0
        %1583 = vmatpush1.msra.mxu0 0.0
        %1584 = vmatprep.subr.mxu0 0.0
        %1585 = vmatpush1.msra.mxu0 0.0
        %1586 = vmatprep.subr.mxu0 0.0
        %1587 = vmatpush1.msra.mxu0 0.0
        %1588 = vmatprep.subr.mxu0 0.0
        %1589 = vmatpush1.msra.mxu0 0.0
        %1590 = vmatprep.subr.mxu0 0.0
        %1591 = vmatpush1.msra.mxu0 0.0
        %1592 = vmatprep.subr.mxu0 0.0
        %1593 = vmatpush1.msra.mxu0 0.0
        %1594 = vmatprep.subr.mxu0 0.0
        %1595 = vmatpush1.msra.mxu0 0.0
        %1596 = vmatprep.subr.mxu0 0.0
        %1597 = vmatpush1.msra.mxu0 0.0
        %1598 = vmatprep.subr.mxu0 0.0
        %1599 = vmatpush1.msra.mxu0 0.0
        %1600 = vmatprep.mubr.f32.mxu0 0.0
        %v1601 = vand.u32 %v504, 4294901760
        %1602 = vmatmul.mubr.f32.gmra.mrb[0].mxu0 %v1601
        %v1603 = vpop.f32.mrb[0].mxu0
        %v1604 = vadd.f32 %v1453, %v1603
        %v1605 = vpop.f32.mrb[0].mxu0
        %1606 = vdwg.mxu0
        %1607 = vmatprep.subr.mxu0 0.0
        %v1608 = vand.u32 %v441, 4294901760
        %v1609 = vsub.f32 %v441, %v1608
        %1610 = vmatpush1.msra.mxu0 %v1609
        %1611 = vmatprep.subr.mxu0 0.0
        %v1612 = vand.u32 %v444, 4294901760
        %v1613 = vsub.f32 %v444, %v1612
        %1614 = vmatpush1.msra.mxu0 %v1613
        %1615 = vmatprep.subr.mxu0 0.0
        %v1616 = vand.u32 %v447, 4294901760
        %v1617 = vsub.f32 %v447, %v1616
        %1618 = vmatpush1.msra.mxu0 %v1617
        %1619 = vmatprep.subr.mxu0 0.0
        %v1620 = vand.u32 %v450, 4294901760
        %v1621 = vsub.f32 %v450, %v1620
        %1622 = vmatpush1.msra.mxu0 %v1621
        %1623 = vmatprep.subr.mxu0 0.0
        %v1624 = vand.u32 %v453, 4294901760
        %v1625 = vsub.f32 %v453, %v1624
        %1626 = vmatpush1.msra.mxu0 %v1625
        %1627 = vmatprep.subr.mxu0 0.0
        %v1628 = vand.u32 %v456, 4294901760
        %v1629 = vsub.f32 %v456, %v1628
        %1630 = vmatpush1.msra.mxu0 %v1629
        %1631 = vmatprep.subr.mxu0 0.0
        %v1632 = vand.u32 %v459, 4294901760
        %v1633 = vsub.f32 %v459, %v1632
        %1634 = vmatpush1.msra.mxu0 %v1633
        %1635 = vmatprep.subr.mxu0 0.0
        %v1636 = vand.u32 %v462, 4294901760
        %v1637 = vsub.f32 %v462, %v1636
        %1638 = vmatpush1.msra.mxu0 %v1637
        %1639 = vmatprep.subr.mxu0 0.0
        %v1640 = vand.u32 %v465, 4294901760
        %v1641 = vsub.f32 %v465, %v1640
        %1642 = vmatpush1.msra.mxu0 %v1641
        %1643 = vmatprep.subr.mxu0 0.0
        %v1644 = vand.u32 %v468, 4294901760
        %v1645 = vsub.f32 %v468, %v1644
        %1646 = vmatpush1.msra.mxu0 %v1645
        %1647 = vmatprep.subr.mxu0 0.0
        %v1648 = vand.u32 %v471, 4294901760
        %v1649 = vsub.f32 %v471, %v1648
        %1650 = vmatpush1.msra.mxu0 %v1649
        %1651 = vmatprep.subr.mxu0 0.0
        %v1652 = vand.u32 %v474, 4294901760
        %v1653 = vsub.f32 %v474, %v1652
        %1654 = vmatpush1.msra.mxu0 %v1653
        %1655 = vmatprep.subr.mxu0 0.0
        %v1656 = vand.u32 %v477, 4294901760
        %v1657 = vsub.f32 %v477, %v1656
        %1658 = vmatpush1.msra.mxu0 %v1657
        %1659 = vmatprep.subr.mxu0 0.0
        %v1660 = vand.u32 %v480, 4294901760
        %v1661 = vsub.f32 %v480, %v1660
        %1662 = vmatpush1.msra.mxu0 %v1661
        %1663 = vmatprep.subr.mxu0 0.0
        %v1664 = vand.u32 %v483, 4294901760
        %v1665 = vsub.f32 %v483, %v1664
        %1666 = vmatpush1.msra.mxu0 %v1665
        %1667 = vmatprep.subr.mxu0 0.0
        %v1668 = vand.u32 %v486, 4294901760
        %v1669 = vsub.f32 %v486, %v1668
        %1670 = vmatpush1.msra.mxu0 %v1669
        %1671 = vmatprep.subr.mxu0 0.0
        %1672 = vmatpush1.msra.mxu0 0.0
        %1673 = vmatprep.subr.mxu0 0.0
        %1674 = vmatpush1.msra.mxu0 0.0
        %1675 = vmatprep.subr.mxu0 0.0
        %1676 = vmatpush1.msra.mxu0 0.0
        %1677 = vmatprep.subr.mxu0 0.0
        %1678 = vmatpush1.msra.mxu0 0.0
        %1679 = vmatprep.subr.mxu0 0.0
        %1680 = vmatpush1.msra.mxu0 0.0
        %1681 = vmatprep.subr.mxu0 0.0
        %1682 = vmatpush1.msra.mxu0 0.0
        %1683 = vmatprep.subr.mxu0 0.0
        %1684 = vmatpush1.msra.mxu0 0.0
        %1685 = vmatprep.subr.mxu0 0.0
        %1686 = vmatpush1.msra.mxu0 0.0
        %1687 = vmatprep.subr.mxu0 0.0
        %1688 = vmatpush1.msra.mxu0 0.0
        %1689 = vmatprep.subr.mxu0 0.0
        %1690 = vmatpush1.msra.mxu0 0.0
        %1691 = vmatprep.subr.mxu0 0.0
        %1692 = vmatpush1.msra.mxu0 0.0
        %1693 = vmatprep.subr.mxu0 0.0
        %1694 = vmatpush1.msra.mxu0 0.0
        %1695 = vmatprep.subr.mxu0 0.0
        %1696 = vmatpush1.msra.mxu0 0.0
        %1697 = vmatprep.subr.mxu0 0.0
        %1698 = vmatpush1.msra.mxu0 0.0
        %1699 = vmatprep.subr.mxu0 0.0
        %1700 = vmatpush1.msra.mxu0 0.0
        %1701 = vmatprep.subr.mxu0 0.0
        %1702 = vmatpush1.msra.mxu0 0.0
        %1703 = vmatprep.mubr.f32.mxu0 0.0
        %v1704 = vand.u32 %v504, 4294901760
        %v1705 = vsub.f32 %v504, %v1704
        %1706 = vmatmul.mubr.f32.gmra.mrb[0].mxu0 %v1705
        %v1707 = vpop.f32.mrb[0].mxu0
        %v1708 = vadd.f32 %v1604, %v1707
        %v1709 = vpop.f32.mrb[0].mxu0
        %1710 = vdwg.mxu0
        %1711 = vmatprep.subr.mxu0 0.0
        %v1712 = vand.u32 %v441, 4294901760
        %1713 = vmatpush1.msra.mxu0 %v1712
        %1714 = vmatprep.subr.mxu0 0.0
        %v1715 = vand.u32 %v444, 4294901760
        %1716 = vmatpush1.msra.mxu0 %v1715
        %1717 = vmatprep.subr.mxu0 0.0
        %v1718 = vand.u32 %v447, 4294901760
        %1719 = vmatpush1.msra.mxu0 %v1718
        %1720 = vmatprep.subr.mxu0 0.0
        %v1721 = vand.u32 %v450, 4294901760
        %1722 = vmatpush1.msra.mxu0 %v1721
        %1723 = vmatprep.subr.mxu0 0.0
        %v1724 = vand.u32 %v453, 4294901760
        %1725 = vmatpush1.msra.mxu0 %v1724
        %1726 = vmatprep.subr.mxu0 0.0
        %v1727 = vand.u32 %v456, 4294901760
        %1728 = vmatpush1.msra.mxu0 %v1727
        %1729 = vmatprep.subr.mxu0 0.0
        %v1730 = vand.u32 %v459, 4294901760
        %1731 = vmatpush1.msra.mxu0 %v1730
        %1732 = vmatprep.subr.mxu0 0.0
        %v1733 = vand.u32 %v462, 4294901760
        %1734 = vmatpush1.msra.mxu0 %v1733
        %1735 = vmatprep.subr.mxu0 0.0
        %v1736 = vand.u32 %v465, 4294901760
        %1737 = vmatpush1.msra.mxu0 %v1736
        %1738 = vmatprep.subr.mxu0 0.0
        %v1739 = vand.u32 %v468, 4294901760
        %1740 = vmatpush1.msra.mxu0 %v1739
        %1741 = vmatprep.subr.mxu0 0.0
        %v1742 = vand.u32 %v471, 4294901760
        %1743 = vmatpush1.msra.mxu0 %v1742
        %1744 = vmatprep.subr.mxu0 0.0
        %v1745 = vand.u32 %v474, 4294901760
        %1746 = vmatpush1.msra.mxu0 %v1745
        %1747 = vmatprep.subr.mxu0 0.0
        %v1748 = vand.u32 %v477, 4294901760
        %1749 = vmatpush1.msra.mxu0 %v1748
        %1750 = vmatprep.subr.mxu0 0.0
        %v1751 = vand.u32 %v480, 4294901760
        %1752 = vmatpush1.msra.mxu0 %v1751
        %1753 = vmatprep.subr.mxu0 0.0
        %v1754 = vand.u32 %v483, 4294901760
        %1755 = vmatpush1.msra.mxu0 %v1754
        %1756 = vmatprep.subr.mxu0 0.0
        %v1757 = vand.u32 %v486, 4294901760
        %1758 = vmatpush1.msra.mxu0 %v1757
        %1759 = vmatprep.subr.mxu0 0.0
        %1760 = vmatpush1.msra.mxu0 0.0
        %1761 = vmatprep.subr.mxu0 0.0
        %1762 = vmatpush1.msra.mxu0 0.0
        %1763 = vmatprep.subr.mxu0 0.0
        %1764 = vmatpush1.msra.mxu0 0.0
        %1765 = vmatprep.subr.mxu0 0.0
        %1766 = vmatpush1.msra.mxu0 0.0
        %1767 = vmatprep.subr.mxu0 0.0
        %1768 = vmatpush1.msra.mxu0 0.0
        %1769 = vmatprep.subr.mxu0 0.0
        %1770 = vmatpush1.msra.mxu0 0.0
        %1771 = vmatprep.subr.mxu0 0.0
        %1772 = vmatpush1.msra.mxu0 0.0
        %1773 = vmatprep.subr.mxu0 0.0
        %1774 = vmatpush1.msra.mxu0 0.0
        %1775 = vmatprep.subr.mxu0 0.0
        %1776 = vmatpush1.msra.mxu0 0.0
        %1777 = vmatprep.subr.mxu0 0.0
        %1778 = vmatpush1.msra.mxu0 0.0
        %1779 = vmatprep.subr.mxu0 0.0
        %1780 = vmatpush1.msra.mxu0 0.0
        %1781 = vmatprep.subr.mxu0 0.0
        %1782 = vmatpush1.msra.mxu0 0.0
        %1783 = vmatprep.subr.mxu0 0.0
        %1784 = vmatpush1.msra.mxu0 0.0
        %1785 = vmatprep.subr.mxu0 0.0
        %1786 = vmatpush1.msra.mxu0 0.0
        %1787 = vmatprep.subr.mxu0 0.0
        %1788 = vmatpush1.msra.mxu0 0.0
        %1789 = vmatprep.subr.mxu0 0.0
        %1790 = vmatpush1.msra.mxu0 0.0
        %1791 = vmatprep.mubr.f32.mxu0 0.0
        %v1792 = vand.u32 %v504, 4294901760
        %v1793 = vsub.f32 %v504, %v1792
        %v1794 = vand.u32 %v1793, 4294901760
        %1795 = vmatmul.mubr.f32.gmra.mrb[0].mxu0 %v1794
        %v1796 = vpop.f32.mrb[0].mxu0
        %v1797 = vadd.f32 %v1708, %v1796
        %v1798 = vpop.f32.mrb[0].mxu0
        %1799 = vdwg.mxu0
        %1800 = vmatprep.subr.mxu0 0.0
        %v1801 = vand.u32 %v441, 4294901760
        %v1802 = vsub.f32 %v441, %v1801
        %v1803 = vand.u32 %v1802, 4294901760
        %1804 = vmatpush1.msra.mxu0 %v1803
        %1805 = vmatprep.subr.mxu0 0.0
        %v1806 = vand.u32 %v444, 4294901760
        %v1807 = vsub.f32 %v444, %v1806
        %v1808 = vand.u32 %v1807, 4294901760
        %1809 = vmatpush1.msra.mxu0 %v1808
        %1810 = vmatprep.subr.mxu0 0.0
        %v1811 = vand.u32 %v447, 4294901760
        %v1812 = vsub.f32 %v447, %v1811
        %v1813 = vand.u32 %v1812, 4294901760
        %1814 = vmatpush1.msra.mxu0 %v1813
        %1815 = vmatprep.subr.mxu0 0.0
        %v1816 = vand.u32 %v450, 4294901760
        %v1817 = vsub.f32 %v450, %v1816
        %v1818 = vand.u32 %v1817, 4294901760
        %1819 = vmatpush1.msra.mxu0 %v1818
        %1820 = vmatprep.subr.mxu0 0.0
        %v1821 = vand.u32 %v453, 4294901760
        %v1822 = vsub.f32 %v453, %v1821
        %v1823 = vand.u32 %v1822, 4294901760
        %1824 = vmatpush1.msra.mxu0 %v1823
        %1825 = vmatprep.subr.mxu0 0.0
        %v1826 = vand.u32 %v456, 4294901760
        %v1827 = vsub.f32 %v456, %v1826
        %v1828 = vand.u32 %v1827, 4294901760
        %1829 = vmatpush1.msra.mxu0 %v1828
        %1830 = vmatprep.subr.mxu0 0.0
        %v1831 = vand.u32 %v459, 4294901760
        %v1832 = vsub.f32 %v459, %v1831
        %v1833 = vand.u32 %v1832, 4294901760
        %1834 = vmatpush1.msra.mxu0 %v1833
        %1835 = vmatprep.subr.mxu0 0.0
        %v1836 = vand.u32 %v462, 4294901760
        %v1837 = vsub.f32 %v462, %v1836
        %v1838 = vand.u32 %v1837, 4294901760
        %1839 = vmatpush1.msra.mxu0 %v1838
        %1840 = vmatprep.subr.mxu0 0.0
        %v1841 = vand.u32 %v465, 4294901760
        %v1842 = vsub.f32 %v465, %v1841
        %v1843 = vand.u32 %v1842, 4294901760
        %1844 = vmatpush1.msra.mxu0 %v1843
        %1845 = vmatprep.subr.mxu0 0.0
        %v1846 = vand.u32 %v468, 4294901760
        %v1847 = vsub.f32 %v468, %v1846
        %v1848 = vand.u32 %v1847, 4294901760
        %1849 = vmatpush1.msra.mxu0 %v1848
        %1850 = vmatprep.subr.mxu0 0.0
        %v1851 = vand.u32 %v471, 4294901760
        %v1852 = vsub.f32 %v471, %v1851
        %v1853 = vand.u32 %v1852, 4294901760
        %1854 = vmatpush1.msra.mxu0 %v1853
        %1855 = vmatprep.subr.mxu0 0.0
        %v1856 = vand.u32 %v474, 4294901760
        %v1857 = vsub.f32 %v474, %v1856
        %v1858 = vand.u32 %v1857, 4294901760
        %1859 = vmatpush1.msra.mxu0 %v1858
        %1860 = vmatprep.subr.mxu0 0.0
        %v1861 = vand.u32 %v477, 4294901760
        %v1862 = vsub.f32 %v477, %v1861
        %v1863 = vand.u32 %v1862, 4294901760
        %1864 = vmatpush1.msra.mxu0 %v1863
        %1865 = vmatprep.subr.mxu0 0.0
        %v1866 = vand.u32 %v480, 4294901760
        %v1867 = vsub.f32 %v480, %v1866
        %v1868 = vand.u32 %v1867, 4294901760
        %1869 = vmatpush1.msra.mxu0 %v1868
        %1870 = vmatprep.subr.mxu0 0.0
        %v1871 = vand.u32 %v483, 4294901760
        %v1872 = vsub.f32 %v483, %v1871
        %v1873 = vand.u32 %v1872, 4294901760
        %1874 = vmatpush1.msra.mxu0 %v1873
        %1875 = vmatprep.subr.mxu0 0.0
        %v1876 = vand.u32 %v486, 4294901760
        %v1877 = vsub.f32 %v486, %v1876
        %v1878 = vand.u32 %v1877, 4294901760
        %1879 = vmatpush1.msra.mxu0 %v1878
        %1880 = vmatprep.subr.mxu0 0.0
        %1881 = vmatpush1.msra.mxu0 0.0
        %1882 = vmatprep.subr.mxu0 0.0
        %1883 = vmatpush1.msra.mxu0 0.0
        %1884 = vmatprep.subr.mxu0 0.0
        %1885 = vmatpush1.msra.mxu0 0.0
        %1886 = vmatprep.subr.mxu0 0.0
        %1887 = vmatpush1.msra.mxu0 0.0
        %1888 = vmatprep.subr.mxu0 0.0
        %1889 = vmatpush1.msra.mxu0 0.0
        %1890 = vmatprep.subr.mxu0 0.0
        %1891 = vmatpush1.msra.mxu0 0.0
        %1892 = vmatprep.subr.mxu0 0.0
        %1893 = vmatpush1.msra.mxu0 0.0
        %1894 = vmatprep.subr.mxu0 0.0
        %1895 = vmatpush1.msra.mxu0 0.0
        %1896 = vmatprep.subr.mxu0 0.0
        %1897 = vmatpush1.msra.mxu0 0.0
        %1898 = vmatprep.subr.mxu0 0.0
        %1899 = vmatpush1.msra.mxu0 0.0
        %1900 = vmatprep.subr.mxu0 0.0
        %1901 = vmatpush1.msra.mxu0 0.0
        %1902 = vmatprep.subr.mxu0 0.0
        %1903 = vmatpush1.msra.mxu0 0.0
        %1904 = vmatprep.subr.mxu0 0.0
        %1905 = vmatpush1.msra.mxu0 0.0
        %1906 = vmatprep.subr.mxu0 0.0
        %1907 = vmatpush1.msra.mxu0 0.0
        %1908 = vmatprep.subr.mxu0 0.0
        %1909 = vmatpush1.msra.mxu0 0.0
        %1910 = vmatprep.subr.mxu0 0.0
        %1911 = vmatpush1.msra.mxu0 0.0
        %1912 = vmatprep.mubr.f32.mxu0 0.0
        %v1913 = vand.u32 %v504, 4294901760
        %1914 = vmatmul.mubr.f32.gmra.mrb[0].mxu0 %v1913
        %v1915 = vpop.f32.mrb[0].mxu0
        %v1916 = vadd.f32 %v1797, %v1915
        %v1917 = vpop.f32.mrb[0].mxu0
        %1918 = vdwg.mxu0
        %1919 = vmatprep.subr.mxu0 0.0
        %v1920 = vand.u32 %v441, 4294901760
        %1921 = vmatpush1.msra.mxu0 %v1920
        %1922 = vmatprep.subr.mxu0 0.0
        %v1923 = vand.u32 %v444, 4294901760
        %1924 = vmatpush1.msra.mxu0 %v1923
        %1925 = vmatprep.subr.mxu0 0.0
        %v1926 = vand.u32 %v447, 4294901760
        %1927 = vmatpush1.msra.mxu0 %v1926
        %1928 = vmatprep.subr.mxu0 0.0
        %v1929 = vand.u32 %v450, 4294901760
        %1930 = vmatpush1.msra.mxu0 %v1929
        %1931 = vmatprep.subr.mxu0 0.0
        %v1932 = vand.u32 %v453, 4294901760
        %1933 = vmatpush1.msra.mxu0 %v1932
        %1934 = vmatprep.subr.mxu0 0.0
        %v1935 = vand.u32 %v456, 4294901760
        %1936 = vmatpush1.msra.mxu0 %v1935
        %1937 = vmatprep.subr.mxu0 0.0
        %v1938 = vand.u32 %v459, 4294901760
        %1939 = vmatpush1.msra.mxu0 %v1938
        %1940 = vmatprep.subr.mxu0 0.0
        %v1941 = vand.u32 %v462, 4294901760
        %1942 = vmatpush1.msra.mxu0 %v1941
        %1943 = vmatprep.subr.mxu0 0.0
        %v1944 = vand.u32 %v465, 4294901760
        %1945 = vmatpush1.msra.mxu0 %v1944
        %1946 = vmatprep.subr.mxu0 0.0
        %v1947 = vand.u32 %v468, 4294901760
        %1948 = vmatpush1.msra.mxu0 %v1947
        %1949 = vmatprep.subr.mxu0 0.0
        %v1950 = vand.u32 %v471, 4294901760
        %1951 = vmatpush1.msra.mxu0 %v1950
        %1952 = vmatprep.subr.mxu0 0.0
        %v1953 = vand.u32 %v474, 4294901760
        %1954 = vmatpush1.msra.mxu0 %v1953
        %1955 = vmatprep.subr.mxu0 0.0
        %v1956 = vand.u32 %v477, 4294901760
        %1957 = vmatpush1.msra.mxu0 %v1956
        %1958 = vmatprep.subr.mxu0 0.0
        %v1959 = vand.u32 %v480, 4294901760
        %1960 = vmatpush1.msra.mxu0 %v1959
        %1961 = vmatprep.subr.mxu0 0.0
        %v1962 = vand.u32 %v483, 4294901760
        %1963 = vmatpush1.msra.mxu0 %v1962
        %1964 = vmatprep.subr.mxu0 0.0
        %v1965 = vand.u32 %v486, 4294901760
        %1966 = vmatpush1.msra.mxu0 %v1965
        %1967 = vmatprep.subr.mxu0 0.0
        %1968 = vmatpush1.msra.mxu0 0.0
        %1969 = vmatprep.subr.mxu0 0.0
        %1970 = vmatpush1.msra.mxu0 0.0
        %1971 = vmatprep.subr.mxu0 0.0
        %1972 = vmatpush1.msra.mxu0 0.0
        %1973 = vmatprep.subr.mxu0 0.0
        %1974 = vmatpush1.msra.mxu0 0.0
        %1975 = vmatprep.subr.mxu0 0.0
        %1976 = vmatpush1.msra.mxu0 0.0
        %1977 = vmatprep.subr.mxu0 0.0
        %1978 = vmatpush1.msra.mxu0 0.0
        %1979 = vmatprep.subr.mxu0 0.0
        %1980 = vmatpush1.msra.mxu0 0.0
        %1981 = vmatprep.subr.mxu0 0.0
        %1982 = vmatpush1.msra.mxu0 0.0
        %1983 = vmatprep.subr.mxu0 0.0
        %1984 = vmatpush1.msra.mxu0 0.0
        %1985 = vmatprep.subr.mxu0 0.0
        %1986 = vmatpush1.msra.mxu0 0.0
        %1987 = vmatprep.subr.mxu0 0.0
        %1988 = vmatpush1.msra.mxu0 0.0
        %1989 = vmatprep.subr.mxu0 0.0
        %1990 = vmatpush1.msra.mxu0 0.0
        %1991 = vmatprep.subr.mxu0 0.0
        %1992 = vmatpush1.msra.mxu0 0.0
        %1993 = vmatprep.subr.mxu0 0.0
        %1994 = vmatpush1.msra.mxu0 0.0
        %1995 = vmatprep.subr.mxu0 0.0
        %1996 = vmatpush1.msra.mxu0 0.0
        %1997 = vmatprep.subr.mxu0 0.0
        %1998 = vmatpush1.msra.mxu0 0.0
        %1999 = vmatprep.mubr.f32.mxu0 0.0
        %v2000 = vand.u32 %v504, 4294901760
        %2001 = vmatmul.mubr.f32.gmra.mrb[0].mxu0 %v2000
        %v2002 = vpop.f32.mrb[0].mxu0
        %v2003 = vadd.f32 %v1916, %v2002
        %v2004 = vpop.f32.mrb[0].mxu0
        %2005 = vdwg.mxu0
        %v2006 = vadd.f32 %v507, %v1361
        %v2007 = vxor.u32 %v2006, 2147483648
        %v2008 = vmul.f32 %v2007, 1.442695
        %v2009 = vpow.pop %v2008
        %v2010 = vadd.f32 %v2009, 1.0
        %v2011 = vrcp.pop %v2010
        %v2012 = vmul.f32 1.0, %v2011
        %v2013 = vadd.f32 %v508, %v1363
        %v2014 = vxor.u32 %v2013, 2147483648
        %v2015 = vmul.f32 %v2014, 1.442695
        %v2016 = vpow.pop %v2015
        %v2017 = vadd.f32 %v2016, 1.0
        %v2018 = vrcp.pop %v2017
        %v2019 = vmul.f32 1.0, %v2018
        %v2020 = vmul.f32 %v2012, %v2003
        %v2021 = vadd.f32 %v509, %v2020
        %v2022 = vtanh.pop %v2021
        %v2023 = vsub.f32 1.0, %v2019
        %v2024 = vmul.f32 %v2023, %v2022
        %v2025 = vmul.f32 %v2019, %v504
        %v2026 = vadd.f32 %v2024, %v2025
        %2027 = vst [vmem:[#allocation2] sm:$0xf] %v2026
        %2028 = vst [vmem:[#allocation3] sm:$0xf] %v2026
        %v2029 = vld [vmem:[#allocation2] sm:$0xf]
        %v2030 = vld [vmem:[%s378] sm:$0xcc]
        %v2031 = vld [vmem:[%s378 + $0x8] sm:$0xc]
        %v2032 = vunpack.c.l.bf16 %v2030
        %v2033 = vunpack.c.h.bf16 %v2030
        %v2034 = vunpack.c.l.bf16 %v2031
        %v2035 = vand.u32 %v440, 4294901760
        %2036 = vmatprep.subr.mxu0 %v2035
        %v2037 = vand.u32 %v439, 4294901760
        %2038 = vmatpush1.msra.mxu0 %v2037
        %v2039 = vand.u32 %v443, 4294901760
        %2040 = vmatprep.subr.mxu0 %v2039
        %v2041 = vand.u32 %v442, 4294901760
        %2042 = vmatpush1.msra.mxu0 %v2041
        %v2043 = vand.u32 %v446, 4294901760
        %2044 = vmatprep.subr.mxu0 %v2043
        %v2045 = vand.u32 %v445, 4294901760
        %2046 = vmatpush1.msra.mxu0 %v2045
        %v2047 = vand.u32 %v449, 4294901760
        %2048 = vmatprep.subr.mxu0 %v2047
        %v2049 = vand.u32 %v448, 4294901760
        %2050 = vmatpush1.msra.mxu0 %v2049
        %v2051 = vand.u32 %v452, 4294901760
        %2052 = vmatprep.subr.mxu0 %v2051
        %v2053 = vand.u32 %v451, 4294901760
        %2054 = vmatpush1.msra.mxu0 %v2053
        %v2055 = vand.u32 %v455, 4294901760
        %2056 = vmatprep.subr.mxu0 %v2055
        %v2057 = vand.u32 %v454, 4294901760
        %2058 = vmatpush1.msra.mxu0 %v2057
        %v2059 = vand.u32 %v458, 4294901760
        %2060 = vmatprep.subr.mxu0 %v2059
        %v2061 = vand.u32 %v457, 4294901760
        %2062 = vmatpush1.msra.mxu0 %v2061
        %v2063 = vand.u32 %v461, 4294901760
        %2064 = vmatprep.subr.mxu0 %v2063
        %v2065 = vand.u32 %v460, 4294901760
        %2066 = vmatpush1.msra.mxu0 %v2065
        %v2067 = vand.u32 %v464, 4294901760
        %2068 = vmatprep.subr.mxu0 %v2067
        %v2069 = vand.u32 %v463, 4294901760
        %2070 = vmatpush1.msra.mxu0 %v2069
        %v2071 = vand.u32 %v467, 4294901760
        %2072 = vmatprep.subr.mxu0 %v2071
        %v2073 = vand.u32 %v466, 4294901760
        %2074 = vmatpush1.msra.mxu0 %v2073
        %v2075 = vand.u32 %v470, 4294901760
        %2076 = vmatprep.subr.mxu0 %v2075
        %v2077 = vand.u32 %v469, 4294901760
        %2078 = vmatpush1.msra.mxu0 %v2077
        %v2079 = vand.u32 %v473, 4294901760
        %2080 = vmatprep.subr.mxu0 %v2079
        %v2081 = vand.u32 %v472, 4294901760
        %2082 = vmatpush1.msra.mxu0 %v2081
        %v2083 = vand.u32 %v476, 4294901760
        %2084 = vmatprep.subr.mxu0 %v2083
        %v2085 = vand.u32 %v475, 4294901760
        %2086 = vmatpush1.msra.mxu0 %v2085
        %v2087 = vand.u32 %v479, 4294901760
        %2088 = vmatprep.subr.mxu0 %v2087
        %v2089 = vand.u32 %v478, 4294901760
        %2090 = vmatpush1.msra.mxu0 %v2089
        %v2091 = vand.u32 %v482, 4294901760
        %2092 = vmatprep.subr.mxu0 %v2091
        %v2093 = vand.u32 %v481, 4294901760
        %2094 = vmatpush1.msra.mxu0 %v2093
        %v2095 = vand.u32 %v485, 4294901760
        %2096 = vmatprep.subr.mxu0 %v2095
        %v2097 = vand.u32 %v484, 4294901760
        %2098 = vmatpush1.msra.mxu0 %v2097
        %2099 = vmatprep.subr.mxu0 0.0
        %2100 = vmatpush1.msra.mxu0 0.0
        %2101 = vmatprep.subr.mxu0 0.0
        %2102 = vmatpush1.msra.mxu0 0.0
        %2103 = vmatprep.subr.mxu0 0.0
        %2104 = vmatpush1.msra.mxu0 0.0
        %2105 = vmatprep.subr.mxu0 0.0
        %2106 = vmatpush1.msra.mxu0 0.0
        %2107 = vmatprep.subr.mxu0 0.0
        %2108 = vmatpush1.msra.mxu0 0.0
        %2109 = vmatprep.subr.mxu0 0.0
        %2110 = vmatpush1.msra.mxu0 0.0
        %2111 = vmatprep.subr.mxu0 0.0
        %2112 = vmatpush1.msra.mxu0 0.0
        %2113 = vmatprep.subr.mxu0 0.0
        %2114 = vmatpush1.msra.mxu0 0.0
        %2115 = vmatprep.subr.mxu0 0.0
        %2116 = vmatpush1.msra.mxu0 0.0
        %2117 = vmatprep.subr.mxu0 0.0
        %2118 = vmatpush1.msra.mxu0 0.0
        %2119 = vmatprep.subr.mxu0 0.0
        %2120 = vmatpush1.msra.mxu0 0.0
        %2121 = vmatprep.subr.mxu0 0.0
        %2122 = vmatpush1.msra.mxu0 0.0
        %2123 = vmatprep.subr.mxu0 0.0
        %2124 = vmatpush1.msra.mxu0 0.0
        %2125 = vmatprep.subr.mxu0 0.0
        %2126 = vmatpush1.msra.mxu0 0.0
        %2127 = vmatprep.subr.mxu0 0.0
        %2128 = vmatpush1.msra.mxu0 0.0
        %2129 = vmatprep.subr.mxu0 0.0
        %2130 = vmatpush1.msra.mxu0 0.0
        %2131 = vmatprep.mubr.f32.mxu0 0.0
        %v2132 = vand.u32 %v2029, 4294901760
        %v2133 = vsub.f32 %v2029, %v2132
        %v2134 = vand.u32 %v2133, 4294901760
        %v2135 = vsub.f32 %v2133, %v2134
        %v2136 = vand.u32 %v2135, 4294901760
        %2137 = vmatmul.mubr.f32.gmra.mrb[0].mxu0 %v2136
        %v2138 = vpop.f32.mrb[0].mxu0
        %v2139 = vadd.f32 %v492, %v2138
        %v2140 = vpop.f32.mrb[0].mxu0
        %v2141 = vadd.f32 %v496, %v2140
        %2142 = vdwg.mxu0
        %v2143 = vand.u32 %v440, 4294901760
        %v2144 = vsub.f32 %v440, %v2143
        %v2145 = vand.u32 %v2144, 4294901760
        %v2146 = vsub.f32 %v2144, %v2145
        %v2147 = vand.u32 %v2146, 4294901760
        %2148 = vmatprep.subr.mxu0 %v2147
        %v2149 = vand.u32 %v439, 4294901760
        %v2150 = vsub.f32 %v439, %v2149
        %v2151 = vand.u32 %v2150, 4294901760
        %v2152 = vsub.f32 %v2150, %v2151
        %v2153 = vand.u32 %v2152, 4294901760
        %2154 = vmatpush1.msra.mxu0 %v2153
        %v2155 = vand.u32 %v443, 4294901760
        %v2156 = vsub.f32 %v443, %v2155
        %v2157 = vand.u32 %v2156, 4294901760
        %v2158 = vsub.f32 %v2156, %v2157
        %v2159 = vand.u32 %v2158, 4294901760
        %2160 = vmatprep.subr.mxu0 %v2159
        %v2161 = vand.u32 %v442, 4294901760
        %v2162 = vsub.f32 %v442, %v2161
        %v2163 = vand.u32 %v2162, 4294901760
        %v2164 = vsub.f32 %v2162, %v2163
        %v2165 = vand.u32 %v2164, 4294901760
        %2166 = vmatpush1.msra.mxu0 %v2165
        %v2167 = vand.u32 %v446, 4294901760
        %v2168 = vsub.f32 %v446, %v2167
        %v2169 = vand.u32 %v2168, 4294901760
        %v2170 = vsub.f32 %v2168, %v2169
        %v2171 = vand.u32 %v2170, 4294901760
        %2172 = vmatprep.subr.mxu0 %v2171
        %v2173 = vand.u32 %v445, 4294901760
        %v2174 = vsub.f32 %v445, %v2173
        %v2175 = vand.u32 %v2174, 4294901760
        %v2176 = vsub.f32 %v2174, %v2175
        %v2177 = vand.u32 %v2176, 4294901760
        %2178 = vmatpush1.msra.mxu0 %v2177
        %v2179 = vand.u32 %v449, 4294901760
        %v2180 = vsub.f32 %v449, %v2179
        %v2181 = vand.u32 %v2180, 4294901760
        %v2182 = vsub.f32 %v2180, %v2181
        %v2183 = vand.u32 %v2182, 4294901760
        %2184 = vmatprep.subr.mxu0 %v2183
        %v2185 = vand.u32 %v448, 4294901760
        %v2186 = vsub.f32 %v448, %v2185
        %v2187 = vand.u32 %v2186, 4294901760
        %v2188 = vsub.f32 %v2186, %v2187
        %v2189 = vand.u32 %v2188, 4294901760
        %2190 = vmatpush1.msra.mxu0 %v2189
        %v2191 = vand.u32 %v452, 4294901760
        %v2192 = vsub.f32 %v452, %v2191
        %v2193 = vand.u32 %v2192, 4294901760
        %v2194 = vsub.f32 %v2192, %v2193
        %v2195 = vand.u32 %v2194, 4294901760
        %2196 = vmatprep.subr.mxu0 %v2195
        %v2197 = vand.u32 %v451, 4294901760
        %v2198 = vsub.f32 %v451, %v2197
        %v2199 = vand.u32 %v2198, 4294901760
        %v2200 = vsub.f32 %v2198, %v2199
        %v2201 = vand.u32 %v2200, 4294901760
        %2202 = vmatpush1.msra.mxu0 %v2201
        %v2203 = vand.u32 %v455, 4294901760
        %v2204 = vsub.f32 %v455, %v2203
        %v2205 = vand.u32 %v2204, 4294901760
        %v2206 = vsub.f32 %v2204, %v2205
        %v2207 = vand.u32 %v2206, 4294901760
        %2208 = vmatprep.subr.mxu0 %v2207
        %v2209 = vand.u32 %v454, 4294901760
        %v2210 = vsub.f32 %v454, %v2209
        %v2211 = vand.u32 %v2210, 4294901760
        %v2212 = vsub.f32 %v2210, %v2211
        %v2213 = vand.u32 %v2212, 4294901760
        %2214 = vmatpush1.msra.mxu0 %v2213
        %v2215 = vand.u32 %v458, 4294901760
        %v2216 = vsub.f32 %v458, %v2215
        %v2217 = vand.u32 %v2216, 4294901760
        %v2218 = vsub.f32 %v2216, %v2217
        %v2219 = vand.u32 %v2218, 4294901760
        %2220 = vmatprep.subr.mxu0 %v2219
        %v2221 = vand.u32 %v457, 4294901760
        %v2222 = vsub.f32 %v457, %v2221
        %v2223 = vand.u32 %v2222, 4294901760
        %v2224 = vsub.f32 %v2222, %v2223
        %v2225 = vand.u32 %v2224, 4294901760
        %2226 = vmatpush1.msra.mxu0 %v2225
        %v2227 = vand.u32 %v461, 4294901760
        %v2228 = vsub.f32 %v461, %v2227
        %v2229 = vand.u32 %v2228, 4294901760
        %v2230 = vsub.f32 %v2228, %v2229
        %v2231 = vand.u32 %v2230, 4294901760
        %2232 = vmatprep.subr.mxu0 %v2231
        %v2233 = vand.u32 %v460, 4294901760
        %v2234 = vsub.f32 %v460, %v2233
        %v2235 = vand.u32 %v2234, 4294901760
        %v2236 = vsub.f32 %v2234, %v2235
        %v2237 = vand.u32 %v2236, 4294901760
        %2238 = vmatpush1.msra.mxu0 %v2237
        %v2239 = vand.u32 %v464, 4294901760
        %v2240 = vsub.f32 %v464, %v2239
        %v2241 = vand.u32 %v2240, 4294901760
        %v2242 = vsub.f32 %v2240, %v2241
        %v2243 = vand.u32 %v2242, 4294901760
        %2244 = vmatprep.subr.mxu0 %v2243
        %v2245 = vand.u32 %v463, 4294901760
        %v2246 = vsub.f32 %v463, %v2245
        %v2247 = vand.u32 %v2246, 4294901760
        %v2248 = vsub.f32 %v2246, %v2247
        %v2249 = vand.u32 %v2248, 4294901760
        %2250 = vmatpush1.msra.mxu0 %v2249
        %v2251 = vand.u32 %v467, 4294901760
        %v2252 = vsub.f32 %v467, %v2251
        %v2253 = vand.u32 %v2252, 4294901760
        %v2254 = vsub.f32 %v2252, %v2253
        %v2255 = vand.u32 %v2254, 4294901760
        %2256 = vmatprep.subr.mxu0 %v2255
        %v2257 = vand.u32 %v466, 4294901760
        %v2258 = vsub.f32 %v466, %v2257
        %v2259 = vand.u32 %v2258, 4294901760
        %v2260 = vsub.f32 %v2258, %v2259
        %v2261 = vand.u32 %v2260, 4294901760
        %2262 = vmatpush1.msra.mxu0 %v2261
        %v2263 = vand.u32 %v470, 4294901760
        %v2264 = vsub.f32 %v470, %v2263
        %v2265 = vand.u32 %v2264, 4294901760
        %v2266 = vsub.f32 %v2264, %v2265
        %v2267 = vand.u32 %v2266, 4294901760
        %2268 = vmatprep.subr.mxu0 %v2267
        %v2269 = vand.u32 %v469, 4294901760
        %v2270 = vsub.f32 %v469, %v2269
        %v2271 = vand.u32 %v2270, 4294901760
        %v2272 = vsub.f32 %v2270, %v2271
        %v2273 = vand.u32 %v2272, 4294901760
        %2274 = vmatpush1.msra.mxu0 %v2273
        %v2275 = vand.u32 %v473, 4294901760
        %v2276 = vsub.f32 %v473, %v2275
        %v2277 = vand.u32 %v2276, 4294901760
        %v2278 = vsub.f32 %v2276, %v2277
        %v2279 = vand.u32 %v2278, 4294901760
        %2280 = vmatprep.subr.mxu0 %v2279
        %v2281 = vand.u32 %v472, 4294901760
        %v2282 = vsub.f32 %v472, %v2281
        %v2283 = vand.u32 %v2282, 4294901760
        %v2284 = vsub.f32 %v2282, %v2283
        %v2285 = vand.u32 %v2284, 4294901760
        %2286 = vmatpush1.msra.mxu0 %v2285
        %v2287 = vand.u32 %v476, 4294901760
        %v2288 = vsub.f32 %v476, %v2287
        %v2289 = vand.u32 %v2288, 4294901760
        %v2290 = vsub.f32 %v2288, %v2289
        %v2291 = vand.u32 %v2290, 4294901760
        %2292 = vmatprep.subr.mxu0 %v2291
        %v2293 = vand.u32 %v475, 4294901760
        %v2294 = vsub.f32 %v475, %v2293
        %v2295 = vand.u32 %v2294, 4294901760
        %v2296 = vsub.f32 %v2294, %v2295
        %v2297 = vand.u32 %v2296, 4294901760
        %2298 = vmatpush1.msra.mxu0 %v2297
        %v2299 = vand.u32 %v479, 4294901760
        %v2300 = vsub.f32 %v479, %v2299
        %v2301 = vand.u32 %v2300, 4294901760
        %v2302 = vsub.f32 %v2300, %v2301
        %v2303 = vand.u32 %v2302, 4294901760
        %2304 = vmatprep.subr.mxu0 %v2303
        %v2305 = vand.u32 %v478, 4294901760
        %v2306 = vsub.f32 %v478, %v2305
        %v2307 = vand.u32 %v2306, 4294901760
        %v2308 = vsub.f32 %v2306, %v2307
        %v2309 = vand.u32 %v2308, 4294901760
        %2310 = vmatpush1.msra.mxu0 %v2309
        %v2311 = vand.u32 %v482, 4294901760
        %v2312 = vsub.f32 %v482, %v2311
        %v2313 = vand.u32 %v2312, 4294901760
        %v2314 = vsub.f32 %v2312, %v2313
        %v2315 = vand.u32 %v2314, 4294901760
        %2316 = vmatprep.subr.mxu0 %v2315
        %v2317 = vand.u32 %v481, 4294901760
        %v2318 = vsub.f32 %v481, %v2317
        %v2319 = vand.u32 %v2318, 4294901760
        %v2320 = vsub.f32 %v2318, %v2319
        %v2321 = vand.u32 %v2320, 4294901760
        %2322 = vmatpush1.msra.mxu0 %v2321
        %v2323 = vand.u32 %v485, 4294901760
        %v2324 = vsub.f32 %v485, %v2323
        %v2325 = vand.u32 %v2324, 4294901760
        %v2326 = vsub.f32 %v2324, %v2325
        %v2327 = vand.u32 %v2326, 4294901760
        %2328 = vmatprep.subr.mxu0 %v2327
        %v2329 = vand.u32 %v484, 4294901760
        %v2330 = vsub.f32 %v484, %v2329
        %v2331 = vand.u32 %v2330, 4294901760
        %v2332 = vsub.f32 %v2330, %v2331
        %v2333 = vand.u32 %v2332, 4294901760
        %2334 = vmatpush1.msra.mxu0 %v2333
        %2335 = vmatprep.subr.mxu0 0.0
        %2336 = vmatpush1.msra.mxu0 0.0
        %2337 = vmatprep.subr.mxu0 0.0
        %2338 = vmatpush1.msra.mxu0 0.0
        %2339 = vmatprep.subr.mxu0 0.0
        %2340 = vmatpush1.msra.mxu0 0.0
        %2341 = vmatprep.subr.mxu0 0.0
        %2342 = vmatpush1.msra.mxu0 0.0
        %2343 = vmatprep.subr.mxu0 0.0
        %2344 = vmatpush1.msra.mxu0 0.0
        %2345 = vmatprep.subr.mxu0 0.0
        %2346 = vmatpush1.msra.mxu0 0.0
        %2347 = vmatprep.subr.mxu0 0.0
        %2348 = vmatpush1.msra.mxu0 0.0
        %2349 = vmatprep.subr.mxu0 0.0
        %2350 = vmatpush1.msra.mxu0 0.0
        %2351 = vmatprep.subr.mxu0 0.0
        %2352 = vmatpush1.msra.mxu0 0.0
        %2353 = vmatprep.subr.mxu0 0.0
        %2354 = vmatpush1.msra.mxu0 0.0
        %2355 = vmatprep.subr.mxu0 0.0
        %2356 = vmatpush1.msra.mxu0 0.0
        %2357 = vmatprep.subr.mxu0 0.0
        %2358 = vmatpush1.msra.mxu0 0.0
        %2359 = vmatprep.subr.mxu0 0.0
        %2360 = vmatpush1.msra.mxu0 0.0
        %2361 = vmatprep.subr.mxu0 0.0
        %2362 = vmatpush1.msra.mxu0 0.0
        %2363 = vmatprep.subr.mxu0 0.0
        %2364 = vmatpush1.msra.mxu0 0.0
        %2365 = vmatprep.subr.mxu0 0.0
        %2366 = vmatpush1.msra.mxu0 0.0
        %2367 = vmatprep.mubr.f32.mxu0 0.0
        %v2368 = vand.u32 %v2029, 4294901760
        %2369 = vmatmul.mubr.f32.gmra.mrb[0].mxu0 %v2368
        %v2370 = vpop.f32.mrb[0].mxu0
        %v2371 = vadd.f32 %v2139, %v2370
        %v2372 = vpop.f32.mrb[0].mxu0
        %v2373 = vadd.f32 %v2141, %v2372
        %2374 = vdwg.mxu0
        %v2375 = vand.u32 %v440, 4294901760
        %v2376 = vsub.f32 %v440, %v2375
        %2377 = vmatprep.subr.mxu0 %v2376
        %v2378 = vand.u32 %v439, 4294901760
        %v2379 = vsub.f32 %v439, %v2378
        %2380 = vmatpush1.msra.mxu0 %v2379
        %v2381 = vand.u32 %v443, 4294901760
        %v2382 = vsub.f32 %v443, %v2381
        %2383 = vmatprep.subr.mxu0 %v2382
        %v2384 = vand.u32 %v442, 4294901760
        %v2385 = vsub.f32 %v442, %v2384
        %2386 = vmatpush1.msra.mxu0 %v2385
        %v2387 = vand.u32 %v446, 4294901760
        %v2388 = vsub.f32 %v446, %v2387
        %2389 = vmatprep.subr.mxu0 %v2388
        %v2390 = vand.u32 %v445, 4294901760
        %v2391 = vsub.f32 %v445, %v2390
        %2392 = vmatpush1.msra.mxu0 %v2391
        %v2393 = vand.u32 %v449, 4294901760
        %v2394 = vsub.f32 %v449, %v2393
        %2395 = vmatprep.subr.mxu0 %v2394
        %v2396 = vand.u32 %v448, 4294901760
        %v2397 = vsub.f32 %v448, %v2396
        %2398 = vmatpush1.msra.mxu0 %v2397
        %v2399 = vand.u32 %v452, 4294901760
        %v2400 = vsub.f32 %v452, %v2399
        %2401 = vmatprep.subr.mxu0 %v2400
        %v2402 = vand.u32 %v451, 4294901760
        %v2403 = vsub.f32 %v451, %v2402
        %2404 = vmatpush1.msra.mxu0 %v2403
        %v2405 = vand.u32 %v455, 4294901760
        %v2406 = vsub.f32 %v455, %v2405
        %2407 = vmatprep.subr.mxu0 %v2406
        %v2408 = vand.u32 %v454, 4294901760
        %v2409 = vsub.f32 %v454, %v2408
        %2410 = vmatpush1.msra.mxu0 %v2409
        %v2411 = vand.u32 %v458, 4294901760
        %v2412 = vsub.f32 %v458, %v2411
        %2413 = vmatprep.subr.mxu0 %v2412
        %v2414 = vand.u32 %v457, 4294901760
        %v2415 = vsub.f32 %v457, %v2414
        %2416 = vmatpush1.msra.mxu0 %v2415
        %v2417 = vand.u32 %v461, 4294901760
        %v2418 = vsub.f32 %v461, %v2417
        %2419 = vmatprep.subr.mxu0 %v2418
        %v2420 = vand.u32 %v460, 4294901760
        %v2421 = vsub.f32 %v460, %v2420
        %2422 = vmatpush1.msra.mxu0 %v2421
        %v2423 = vand.u32 %v464, 4294901760
        %v2424 = vsub.f32 %v464, %v2423
        %2425 = vmatprep.subr.mxu0 %v2424
        %v2426 = vand.u32 %v463, 4294901760
        %v2427 = vsub.f32 %v463, %v2426
        %2428 = vmatpush1.msra.mxu0 %v2427
        %v2429 = vand.u32 %v467, 4294901760
        %v2430 = vsub.f32 %v467, %v2429
        %2431 = vmatprep.subr.mxu0 %v2430
        %v2432 = vand.u32 %v466, 4294901760
        %v2433 = vsub.f32 %v466, %v2432
        %2434 = vmatpush1.msra.mxu0 %v2433
        %v2435 = vand.u32 %v470, 4294901760
        %v2436 = vsub.f32 %v470, %v2435
        %2437 = vmatprep.subr.mxu0 %v2436
        %v2438 = vand.u32 %v469, 4294901760
        %v2439 = vsub.f32 %v469, %v2438
        %2440 = vmatpush1.msra.mxu0 %v2439
        %v2441 = vand.u32 %v473, 4294901760
        %v2442 = vsub.f32 %v473, %v2441
        %2443 = vmatprep.subr.mxu0 %v2442
        %v2444 = vand.u32 %v472, 4294901760
        %v2445 = vsub.f32 %v472, %v2444
        %2446 = vmatpush1.msra.mxu0 %v2445
        %v2447 = vand.u32 %v476, 4294901760
        %v2448 = vsub.f32 %v476, %v2447
        %2449 = vmatprep.subr.mxu0 %v2448
        %v2450 = vand.u32 %v475, 4294901760
        %v2451 = vsub.f32 %v475, %v2450
        %2452 = vmatpush1.msra.mxu0 %v2451
        %v2453 = vand.u32 %v479, 4294901760
        %v2454 = vsub.f32 %v479, %v2453
        %2455 = vmatprep.subr.mxu0 %v2454
        %v2456 = vand.u32 %v478, 4294901760
        %v2457 = vsub.f32 %v478, %v2456
        %2458 = vmatpush1.msra.mxu0 %v2457
        %v2459 = vand.u32 %v482, 4294901760
        %v2460 = vsub.f32 %v482, %v2459
        %2461 = vmatprep.subr.mxu0 %v2460
        %v2462 = vand.u32 %v481, 4294901760
        %v2463 = vsub.f32 %v481, %v2462
        %2464 = vmatpush1.msra.mxu0 %v2463
        %v2465 = vand.u32 %v485, 4294901760
        %v2466 = vsub.f32 %v485, %v2465
        %2467 = vmatprep.subr.mxu0 %v2466
        %v2468 = vand.u32 %v484, 4294901760
        %v2469 = vsub.f32 %v484, %v2468
        %2470 = vmatpush1.msra.mxu0 %v2469
        %2471 = vmatprep.subr.mxu0 0.0
        %2472 = vmatpush1.msra.mxu0 0.0
        %2473 = vmatprep.subr.mxu0 0.0
        %2474 = vmatpush1.msra.mxu0 0.0
        %2475 = vmatprep.subr.mxu0 0.0
        %2476 = vmatpush1.msra.mxu0 0.0
        %2477 = vmatprep.subr.mxu0 0.0
        %2478 = vmatpush1.msra.mxu0 0.0
        %2479 = vmatprep.subr.mxu0 0.0
        %2480 = vmatpush1.msra.mxu0 0.0
        %2481 = vmatprep.subr.mxu0 0.0
        %2482 = vmatpush1.msra.mxu0 0.0
        %2483 = vmatprep.subr.mxu0 0.0
        %2484 = vmatpush1.msra.mxu0 0.0
        %2485 = vmatprep.subr.mxu0 0.0
        %2486 = vmatpush1.msra.mxu0 0.0
        %2487 = vmatprep.subr.mxu0 0.0
        %2488 = vmatpush1.msra.mxu0 0.0
        %2489 = vmatprep.subr.mxu0 0.0
        %2490 = vmatpush1.msra.mxu0 0.0
        %2491 = vmatprep.subr.mxu0 0.0
        %2492 = vmatpush1.msra.mxu0 0.0
        %2493 = vmatprep.subr.mxu0 0.0
        %2494 = vmatpush1.msra.mxu0 0.0
        %2495 = vmatprep.subr.mxu0 0.0
        %2496 = vmatpush1.msra.mxu0 0.0
        %2497 = vmatprep.subr.mxu0 0.0
        %2498 = vmatpush1.msra.mxu0 0.0
        %2499 = vmatprep.subr.mxu0 0.0
        %2500 = vmatpush1.msra.mxu0 0.0
        %2501 = vmatprep.subr.mxu0 0.0
        %2502 = vmatpush1.msra.mxu0 0.0
        %2503 = vmatprep.mubr.f32.mxu0 0.0
        %v2504 = vand.u32 %v2029, 4294901760
        %v2505 = vsub.f32 %v2029, %v2504
        %2506 = vmatmul.mubr.f32.gmra.mrb[0].mxu0 %v2505
        %v2507 = vpop.f32.mrb[0].mxu0
        %v2508 = vadd.f32 %v2371, %v2507
        %v2509 = vpop.f32.mrb[0].mxu0
        %v2510 = vadd.f32 %v2373, %v2509
        %2511 = vdwg.mxu0
        %v2512 = vand.u32 %v440, 4294901760
        %2513 = vmatprep.subr.mxu0 %v2512
        %v2514 = vand.u32 %v439, 4294901760
        %2515 = vmatpush1.msra.mxu0 %v2514
        %v2516 = vand.u32 %v443, 4294901760
        %2517 = vmatprep.subr.mxu0 %v2516
        %v2518 = vand.u32 %v442, 4294901760
        %2519 = vmatpush1.msra.mxu0 %v2518
        %v2520 = vand.u32 %v446, 4294901760
        %2521 = vmatprep.subr.mxu0 %v2520
        %v2522 = vand.u32 %v445, 4294901760
        %2523 = vmatpush1.msra.mxu0 %v2522
        %v2524 = vand.u32 %v449, 4294901760
        %2525 = vmatprep.subr.mxu0 %v2524
        %v2526 = vand.u32 %v448, 4294901760
        %2527 = vmatpush1.msra.mxu0 %v2526
        %v2528 = vand.u32 %v452, 4294901760
        %2529 = vmatprep.subr.mxu0 %v2528
        %v2530 = vand.u32 %v451, 4294901760
        %2531 = vmatpush1.msra.mxu0 %v2530
        %v2532 = vand.u32 %v455, 4294901760
        %2533 = vmatprep.subr.mxu0 %v2532
        %v2534 = vand.u32 %v454, 4294901760
        %2535 = vmatpush1.msra.mxu0 %v2534
        %v2536 = vand.u32 %v458, 4294901760
        %2537 = vmatprep.subr.mxu0 %v2536
        %v2538 = vand.u32 %v457, 4294901760
        %2539 = vmatpush1.msra.mxu0 %v2538
        %v2540 = vand.u32 %v461, 4294901760
        %2541 = vmatprep.subr.mxu0 %v2540
        %v2542 = vand.u32 %v460, 4294901760
        %2543 = vmatpush1.msra.mxu0 %v2542
        %v2544 = vand.u32 %v464, 4294901760
        %2545 = vmatprep.subr.mxu0 %v2544
        %v2546 = vand.u32 %v463, 4294901760
        %2547 = vmatpush1.msra.mxu0 %v2546
        %v2548 = vand.u32 %v467, 4294901760
        %2549 = vmatprep.subr.mxu0 %v2548
        %v2550 = vand.u32 %v466, 4294901760
        %2551 = vmatpush1.msra.mxu0 %v2550
        %v2552 = vand.u32 %v470, 4294901760
        %2553 = vmatprep.subr.mxu0 %v2552
        %v2554 = vand.u32 %v469, 4294901760
        %2555 = vmatpush1.msra.mxu0 %v2554
        %v2556 = vand.u32 %v473, 4294901760
        %2557 = vmatprep.subr.mxu0 %v2556
        %v2558 = vand.u32 %v472, 4294901760
        %2559 = vmatpush1.msra.mxu0 %v2558
        %v2560 = vand.u32 %v476, 4294901760
        %2561 = vmatprep.subr.mxu0 %v2560
        %v2562 = vand.u32 %v475, 4294901760
        %2563 = vmatpush1.msra.mxu0 %v2562
        %v2564 = vand.u32 %v479, 4294901760
        %2565 = vmatprep.subr.mxu0 %v2564
        %v2566 = vand.u32 %v478, 4294901760
        %2567 = vmatpush1.msra.mxu0 %v2566
        %v2568 = vand.u32 %v482, 4294901760
        %2569 = vmatprep.subr.mxu0 %v2568
        %v2570 = vand.u32 %v481, 4294901760
        %2571 = vmatpush1.msra.mxu0 %v2570
        %v2572 = vand.u32 %v485, 4294901760
        %2573 = vmatprep.subr.mxu0 %v2572
        %v2574 = vand.u32 %v484, 4294901760
        %2575 = vmatpush1.msra.mxu0 %v2574
        %2576 = vmatprep.subr.mxu0 0.0
        %2577 = vmatpush1.msra.mxu0 0.0
        %2578 = vmatprep.subr.mxu0 0.0
        %2579 = vmatpush1.msra.mxu0 0.0
        %2580 = vmatprep.subr.mxu0 0.0
        %2581 = vmatpush1.msra.mxu0 0.0
        %2582 = vmatprep.subr.mxu0 0.0
        %2583 = vmatpush1.msra.mxu0 0.0
        %2584 = vmatprep.subr.mxu0 0.0
        %2585 = vmatpush1.msra.mxu0 0.0
        %2586 = vmatprep.subr.mxu0 0.0
        %2587 = vmatpush1.msra.mxu0 0.0
        %2588 = vmatprep.subr.mxu0 0.0
        %2589 = vmatpush1.msra.mxu0 0.0
        %2590 = vmatprep.subr.mxu0 0.0
        %2591 = vmatpush1.msra.mxu0 0.0
        %2592 = vmatprep.subr.mxu0 0.0
        %2593 = vmatpush1.msra.mxu0 0.0
        %2594 = vmatprep.subr.mxu0 0.0
        %2595 = vmatpush1.msra.mxu0 0.0
        %2596 = vmatprep.subr.mxu0 0.0
        %2597 = vmatpush1.msra.mxu0 0.0
        %2598 = vmatprep.subr.mxu0 0.0
        %2599 = vmatpush1.msra.mxu0 0.0
        %2600 = vmatprep.subr.mxu0 0.0
        %2601 = vmatpush1.msra.mxu0 0.0
        %2602 = vmatprep.subr.mxu0 0.0
        %2603 = vmatpush1.msra.mxu0 0.0
        %2604 = vmatprep.subr.mxu0 0.0
        %2605 = vmatpush1.msra.mxu0 0.0
        %2606 = vmatprep.subr.mxu0 0.0
        %2607 = vmatpush1.msra.mxu0 0.0
        %2608 = vmatprep.mubr.f32.mxu0 0.0
        %v2609 = vand.u32 %v2029, 4294901760
        %v2610 = vsub.f32 %v2029, %v2609
        %v2611 = vand.u32 %v2610, 4294901760
        %2612 = vmatmul.mubr.f32.gmra.mrb[0].mxu0 %v2611
        %v2613 = vpop.f32.mrb[0].mxu0
        %v2614 = vadd.f32 %v2508, %v2613
        %v2615 = vpop.f32.mrb[0].mxu0
        %v2616 = vadd.f32 %v2510, %v2615
        %2617 = vdwg.mxu0
        %v2618 = vand.u32 %v440, 4294901760
        %v2619 = vsub.f32 %v440, %v2618
        %v2620 = vand.u32 %v2619, 4294901760
        %2621 = vmatprep.subr.mxu0 %v2620
        %v2622 = vand.u32 %v439, 4294901760
        %v2623 = vsub.f32 %v439, %v2622
        %v2624 = vand.u32 %v2623, 4294901760
        %2625 = vmatpush1.msra.mxu0 %v2624
        %v2626 = vand.u32 %v443, 4294901760
        %v2627 = vsub.f32 %v443, %v2626
        %v2628 = vand.u32 %v2627, 4294901760
        %2629 = vmatprep.subr.mxu0 %v2628
        %v2630 = vand.u32 %v442, 4294901760
        %v2631 = vsub.f32 %v442, %v2630
        %v2632 = vand.u32 %v2631, 4294901760
        %2633 = vmatpush1.msra.mxu0 %v2632
        %v2634 = vand.u32 %v446, 4294901760
        %v2635 = vsub.f32 %v446, %v2634
        %v2636 = vand.u32 %v2635, 4294901760
        %2637 = vmatprep.subr.mxu0 %v2636
        %v2638 = vand.u32 %v445, 4294901760
        %v2639 = vsub.f32 %v445, %v2638
        %v2640 = vand.u32 %v2639, 4294901760
        %2641 = vmatpush1.msra.mxu0 %v2640
        %v2642 = vand.u32 %v449, 4294901760
        %v2643 = vsub.f32 %v449, %v2642
        %v2644 = vand.u32 %v2643, 4294901760
        %2645 = vmatprep.subr.mxu0 %v2644
        %v2646 = vand.u32 %v448, 4294901760
        %v2647 = vsub.f32 %v448, %v2646
        %v2648 = vand.u32 %v2647, 4294901760
        %2649 = vmatpush1.msra.mxu0 %v2648
        %v2650 = vand.u32 %v452, 4294901760
        %v2651 = vsub.f32 %v452, %v2650
        %v2652 = vand.u32 %v2651, 4294901760
        %2653 = vmatprep.subr.mxu0 %v2652
        %v2654 = vand.u32 %v451, 4294901760
        %v2655 = vsub.f32 %v451, %v2654
        %v2656 = vand.u32 %v2655, 4294901760
        %2657 = vmatpush1.msra.mxu0 %v2656
        %v2658 = vand.u32 %v455, 4294901760
        %v2659 = vsub.f32 %v455, %v2658
        %v2660 = vand.u32 %v2659, 4294901760
        %2661 = vmatprep.subr.mxu0 %v2660
        %v2662 = vand.u32 %v454, 4294901760
        %v2663 = vsub.f32 %v454, %v2662
        %v2664 = vand.u32 %v2663, 4294901760
        %2665 = vmatpush1.msra.mxu0 %v2664
        %v2666 = vand.u32 %v458, 4294901760
        %v2667 = vsub.f32 %v458, %v2666
        %v2668 = vand.u32 %v2667, 4294901760
        %2669 = vmatprep.subr.mxu0 %v2668
        %v2670 = vand.u32 %v457, 4294901760
        %v2671 = vsub.f32 %v457, %v2670
        %v2672 = vand.u32 %v2671, 4294901760
        %2673 = vmatpush1.msra.mxu0 %v2672
        %v2674 = vand.u32 %v461, 4294901760
        %v2675 = vsub.f32 %v461, %v2674
        %v2676 = vand.u32 %v2675, 4294901760
        %2677 = vmatprep.subr.mxu0 %v2676
        %v2678 = vand.u32 %v460, 4294901760
        %v2679 = vsub.f32 %v460, %v2678
        %v2680 = vand.u32 %v2679, 4294901760
        %2681 = vmatpush1.msra.mxu0 %v2680
        %v2682 = vand.u32 %v464, 4294901760
        %v2683 = vsub.f32 %v464, %v2682
        %v2684 = vand.u32 %v2683, 4294901760
        %2685 = vmatprep.subr.mxu0 %v2684
        %v2686 = vand.u32 %v463, 4294901760
        %v2687 = vsub.f32 %v463, %v2686
        %v2688 = vand.u32 %v2687, 4294901760
        %2689 = vmatpush1.msra.mxu0 %v2688
        %v2690 = vand.u32 %v467, 4294901760
        %v2691 = vsub.f32 %v467, %v2690
        %v2692 = vand.u32 %v2691, 4294901760
        %2693 = vmatprep.subr.mxu0 %v2692
        %v2694 = vand.u32 %v466, 4294901760
        %v2695 = vsub.f32 %v466, %v2694
        %v2696 = vand.u32 %v2695, 4294901760
        %2697 = vmatpush1.msra.mxu0 %v2696
        %v2698 = vand.u32 %v470, 4294901760
        %v2699 = vsub.f32 %v470, %v2698
        %v2700 = vand.u32 %v2699, 4294901760
        %2701 = vmatprep.subr.mxu0 %v2700
        %v2702 = vand.u32 %v469, 4294901760
        %v2703 = vsub.f32 %v469, %v2702
        %v2704 = vand.u32 %v2703, 4294901760
        %2705 = vmatpush1.msra.mxu0 %v2704
        %v2706 = vand.u32 %v473, 4294901760
        %v2707 = vsub.f32 %v473, %v2706
        %v2708 = vand.u32 %v2707, 4294901760
        %2709 = vmatprep.subr.mxu0 %v2708
        %v2710 = vand.u32 %v472, 4294901760
        %v2711 = vsub.f32 %v472, %v2710
        %v2712 = vand.u32 %v2711, 4294901760
        %2713 = vmatpush1.msra.mxu0 %v2712
        %v2714 = vand.u32 %v476, 4294901760
        %v2715 = vsub.f32 %v476, %v2714
        %v2716 = vand.u32 %v2715, 4294901760
        %2717 = vmatprep.subr.mxu0 %v2716
        %v2718 = vand.u32 %v475, 4294901760
        %v2719 = vsub.f32 %v475, %v2718
        %v2720 = vand.u32 %v2719, 4294901760
        %2721 = vmatpush1.msra.mxu0 %v2720
        %v2722 = vand.u32 %v479, 4294901760
        %v2723 = vsub.f32 %v479, %v2722
        %v2724 = vand.u32 %v2723, 4294901760
        %2725 = vmatprep.subr.mxu0 %v2724
        %v2726 = vand.u32 %v478, 4294901760
        %v2727 = vsub.f32 %v478, %v2726
        %v2728 = vand.u32 %v2727, 4294901760
        %2729 = vmatpush1.msra.mxu0 %v2728
        %v2730 = vand.u32 %v482, 4294901760
        %v2731 = vsub.f32 %v482, %v2730
        %v2732 = vand.u32 %v2731, 4294901760
        %2733 = vmatprep.subr.mxu0 %v2732
        %v2734 = vand.u32 %v481, 4294901760
        %v2735 = vsub.f32 %v481, %v2734
        %v2736 = vand.u32 %v2735, 4294901760
        %2737 = vmatpush1.msra.mxu0 %v2736
        %v2738 = vand.u32 %v485, 4294901760
        %v2739 = vsub.f32 %v485, %v2738
        %v2740 = vand.u32 %v2739, 4294901760
        %2741 = vmatprep.subr.mxu0 %v2740
        %v2742 = vand.u32 %v484, 4294901760
        %v2743 = vsub.f32 %v484, %v2742
        %v2744 = vand.u32 %v2743, 4294901760
        %2745 = vmatpush1.msra.mxu0 %v2744
        %2746 = vmatprep.subr.mxu0 0.0
        %2747 = vmatpush1.msra.mxu0 0.0
        %2748 = vmatprep.subr.mxu0 0.0
        %2749 = vmatpush1.msra.mxu0 0.0
        %2750 = vmatprep.subr.mxu0 0.0
        %2751 = vmatpush1.msra.mxu0 0.0
        %2752 = vmatprep.subr.mxu0 0.0
        %2753 = vmatpush1.msra.mxu0 0.0
        %2754 = vmatprep.subr.mxu0 0.0
        %2755 = vmatpush1.msra.mxu0 0.0
        %2756 = vmatprep.subr.mxu0 0.0
        %2757 = vmatpush1.msra.mxu0 0.0
        %2758 = vmatprep.subr.mxu0 0.0
        %2759 = vmatpush1.msra.mxu0 0.0
        %2760 = vmatprep.subr.mxu0 0.0
        %2761 = vmatpush1.msra.mxu0 0.0
        %2762 = vmatprep.subr.mxu0 0.0
        %2763 = vmatpush1.msra.mxu0 0.0
        %2764 = vmatprep.subr.mxu0 0.0
        %2765 = vmatpush1.msra.mxu0 0.0
        %2766 = vmatprep.subr.mxu0 0.0
        %2767 = vmatpush1.msra.mxu0 0.0
        %2768 = vmatprep.subr.mxu0 0.0
        %2769 = vmatpush1.msra.mxu0 0.0
        %2770 = vmatprep.subr.mxu0 0.0
        %2771 = vmatpush1.msra.mxu0 0.0
        %2772 = vmatprep.subr.mxu0 0.0
        %2773 = vmatpush1.msra.mxu0 0.0
        %2774 = vmatprep.subr.mxu0 0.0
        %2775 = vmatpush1.msra.mxu0 0.0
        %2776 = vmatprep.subr.mxu0 0.0
        %2777 = vmatpush1.msra.mxu0 0.0
        %2778 = vmatprep.mubr.f32.mxu0 0.0
        %v2779 = vand.u32 %v2029, 4294901760
        %2780 = vmatmul.mubr.f32.gmra.mrb[0].mxu0 %v2779
        %v2781 = vpop.f32.mrb[0].mxu0
        %v2782 = vadd.f32 %v2614, %v2781
        %v2783 = vpop.f32.mrb[0].mxu0
        %v2784 = vadd.f32 %v2616, %v2783
        %2785 = vdwg.mxu0
        %v2786 = vand.u32 %v440, 4294901760
        %2787 = vmatprep.subr.mxu0 %v2786
        %v2788 = vand.u32 %v439, 4294901760
        %2789 = vmatpush1.msra.mxu0 %v2788
        %v2790 = vand.u32 %v443, 4294901760
        %2791 = vmatprep.subr.mxu0 %v2790
        %v2792 = vand.u32 %v442, 4294901760
        %2793 = vmatpush1.msra.mxu0 %v2792
        %v2794 = vand.u32 %v446, 4294901760
        %2795 = vmatprep.subr.mxu0 %v2794
        %v2796 = vand.u32 %v445, 4294901760
        %2797 = vmatpush1.msra.mxu0 %v2796
        %v2798 = vand.u32 %v449, 4294901760
        %2799 = vmatprep.subr.mxu0 %v2798
        %v2800 = vand.u32 %v448, 4294901760
        %2801 = vmatpush1.msra.mxu0 %v2800
        %v2802 = vand.u32 %v452, 4294901760
        %2803 = vmatprep.subr.mxu0 %v2802
        %v2804 = vand.u32 %v451, 4294901760
        %2805 = vmatpush1.msra.mxu0 %v2804
        %v2806 = vand.u32 %v455, 4294901760
        %2807 = vmatprep.subr.mxu0 %v2806
        %v2808 = vand.u32 %v454, 4294901760
        %2809 = vmatpush1.msra.mxu0 %v2808
        %v2810 = vand.u32 %v458, 4294901760
        %2811 = vmatprep.subr.mxu0 %v2810
        %v2812 = vand.u32 %v457, 4294901760
        %2813 = vmatpush1.msra.mxu0 %v2812
        %v2814 = vand.u32 %v461, 4294901760
        %2815 = vmatprep.subr.mxu0 %v2814
        %v2816 = vand.u32 %v460, 4294901760
        %2817 = vmatpush1.msra.mxu0 %v2816
        %v2818 = vand.u32 %v464, 4294901760
        %2819 = vmatprep.subr.mxu0 %v2818
        %v2820 = vand.u32 %v463, 4294901760
        %2821 = vmatpush1.msra.mxu0 %v2820
        %v2822 = vand.u32 %v467, 4294901760
        %2823 = vmatprep.subr.mxu0 %v2822
        %v2824 = vand.u32 %v466, 4294901760
        %2825 = vmatpush1.msra.mxu0 %v2824
        %v2826 = vand.u32 %v470, 4294901760
        %2827 = vmatprep.subr.mxu0 %v2826
        %v2828 = vand.u32 %v469, 4294901760
        %2829 = vmatpush1.msra.mxu0 %v2828
        %v2830 = vand.u32 %v473, 4294901760
        %2831 = vmatprep.subr.mxu0 %v2830
        %v2832 = vand.u32 %v472, 4294901760
        %2833 = vmatpush1.msra.mxu0 %v2832
        %v2834 = vand.u32 %v476, 4294901760
        %2835 = vmatprep.subr.mxu0 %v2834
        %v2836 = vand.u32 %v475, 4294901760
        %2837 = vmatpush1.msra.mxu0 %v2836
        %v2838 = vand.u32 %v479, 4294901760
        %2839 = vmatprep.subr.mxu0 %v2838
        %v2840 = vand.u32 %v478, 4294901760
        %2841 = vmatpush1.msra.mxu0 %v2840
        %v2842 = vand.u32 %v482, 4294901760
        %2843 = vmatprep.subr.mxu0 %v2842
        %v2844 = vand.u32 %v481, 4294901760
        %2845 = vmatpush1.msra.mxu0 %v2844
        %v2846 = vand.u32 %v485, 4294901760
        %2847 = vmatprep.subr.mxu0 %v2846
        %v2848 = vand.u32 %v484, 4294901760
        %2849 = vmatpush1.msra.mxu0 %v2848
        %2850 = vmatprep.subr.mxu0 0.0
        %2851 = vmatpush1.msra.mxu0 0.0
        %2852 = vmatprep.subr.mxu0 0.0
        %2853 = vmatpush1.msra.mxu0 0.0
        %2854 = vmatprep.subr.mxu0 0.0
        %2855 = vmatpush1.msra.mxu0 0.0
        %2856 = vmatprep.subr.mxu0 0.0
        %2857 = vmatpush1.msra.mxu0 0.0
        %2858 = vmatprep.subr.mxu0 0.0
        %2859 = vmatpush1.msra.mxu0 0.0
        %2860 = vmatprep.subr.mxu0 0.0
        %2861 = vmatpush1.msra.mxu0 0.0
        %2862 = vmatprep.subr.mxu0 0.0
        %2863 = vmatpush1.msra.mxu0 0.0
        %2864 = vmatprep.subr.mxu0 0.0
        %2865 = vmatpush1.msra.mxu0 0.0
        %2866 = vmatprep.subr.mxu0 0.0
        %2867 = vmatpush1.msra.mxu0 0.0
        %2868 = vmatprep.subr.mxu0 0.0
        %2869 = vmatpush1.msra.mxu0 0.0
        %2870 = vmatprep.subr.mxu0 0.0
        %2871 = vmatpush1.msra.mxu0 0.0
        %2872 = vmatprep.subr.mxu0 0.0
        %2873 = vmatpush1.msra.mxu0 0.0
        %2874 = vmatprep.subr.mxu0 0.0
        %2875 = vmatpush1.msra.mxu0 0.0
        %2876 = vmatprep.subr.mxu0 0.0
        %2877 = vmatpush1.msra.mxu0 0.0
        %2878 = vmatprep.subr.mxu0 0.0
        %2879 = vmatpush1.msra.mxu0 0.0
        %2880 = vmatprep.subr.mxu0 0.0
        %2881 = vmatpush1.msra.mxu0 0.0
        %2882 = vmatprep.mubr.f32.mxu0 0.0
        %v2883 = vand.u32 %v2029, 4294901760
        %2884 = vmatmul.mubr.f32.gmra.mrb[0].mxu0 %v2883
        %v2885 = vpop.f32.mrb[0].mxu0
        %v2886 = vadd.f32 %v2782, %v2885
        %v2887 = vpop.f32.mrb[0].mxu0
        %v2888 = vadd.f32 %v2784, %v2887
        %2889 = vdwg.mxu0
        %2890 = vmatprep.subr.mxu0 0.0
        %v2891 = vand.u32 %v441, 4294901760
        %2892 = vmatpush1.msra.mxu0 %v2891
        %2893 = vmatprep.subr.mxu0 0.0
        %v2894 = vand.u32 %v444, 4294901760
        %2895 = vmatpush1.msra.mxu0 %v2894
        %2896 = vmatprep.subr.mxu0 0.0
        %v2897 = vand.u32 %v447, 4294901760
        %2898 = vmatpush1.msra.mxu0 %v2897
        %2899 = vmatprep.subr.mxu0 0.0
        %v2900 = vand.u32 %v450, 4294901760
        %2901 = vmatpush1.msra.mxu0 %v2900
        %2902 = vmatprep.subr.mxu0 0.0
        %v2903 = vand.u32 %v453, 4294901760
        %2904 = vmatpush1.msra.mxu0 %v2903
        %2905 = vmatprep.subr.mxu0 0.0
        %v2906 = vand.u32 %v456, 4294901760
        %2907 = vmatpush1.msra.mxu0 %v2906
        %2908 = vmatprep.subr.mxu0 0.0
        %v2909 = vand.u32 %v459, 4294901760
        %2910 = vmatpush1.msra.mxu0 %v2909
        %2911 = vmatprep.subr.mxu0 0.0
        %v2912 = vand.u32 %v462, 4294901760
        %2913 = vmatpush1.msra.mxu0 %v2912
        %2914 = vmatprep.subr.mxu0 0.0
        %v2915 = vand.u32 %v465, 4294901760
        %2916 = vmatpush1.msra.mxu0 %v2915
        %2917 = vmatprep.subr.mxu0 0.0
        %v2918 = vand.u32 %v468, 4294901760
        %2919 = vmatpush1.msra.mxu0 %v2918
        %2920 = vmatprep.subr.mxu0 0.0
        %v2921 = vand.u32 %v471, 4294901760
        %2922 = vmatpush1.msra.mxu0 %v2921
        %2923 = vmatprep.subr.mxu0 0.0
        %v2924 = vand.u32 %v474, 4294901760
        %2925 = vmatpush1.msra.mxu0 %v2924
        %2926 = vmatprep.subr.mxu0 0.0
        %v2927 = vand.u32 %v477, 4294901760
        %2928 = vmatpush1.msra.mxu0 %v2927
        %2929 = vmatprep.subr.mxu0 0.0
        %v2930 = vand.u32 %v480, 4294901760
        %2931 = vmatpush1.msra.mxu0 %v2930
        %2932 = vmatprep.subr.mxu0 0.0
        %v2933 = vand.u32 %v483, 4294901760
        %2934 = vmatpush1.msra.mxu0 %v2933
        %2935 = vmatprep.subr.mxu0 0.0
        %v2936 = vand.u32 %v486, 4294901760
        %2937 = vmatpush1.msra.mxu0 %v2936
        %2938 = vmatprep.subr.mxu0 0.0
        %2939 = vmatpush1.msra.mxu0 0.0
        %2940 = vmatprep.subr.mxu0 0.0
        %2941 = vmatpush1.msra.mxu0 0.0
        %2942 = vmatprep.subr.mxu0 0.0
        %2943 = vmatpush1.msra.mxu0 0.0
        %2944 = vmatprep.subr.mxu0 0.0
        %2945 = vmatpush1.msra.mxu0 0.0
        %2946 = vmatprep.subr.mxu0 0.0
        %2947 = vmatpush1.msra.mxu0 0.0
        %2948 = vmatprep.subr.mxu0 0.0
        %2949 = vmatpush1.msra.mxu0 0.0
        %2950 = vmatprep.subr.mxu0 0.0
        %2951 = vmatpush1.msra.mxu0 0.0
        %2952 = vmatprep.subr.mxu0 0.0
        %2953 = vmatpush1.msra.mxu0 0.0
        %2954 = vmatprep.subr.mxu0 0.0
        %2955 = vmatpush1.msra.mxu0 0.0
        %2956 = vmatprep.subr.mxu0 0.0
        %2957 = vmatpush1.msra.mxu0 0.0
        %2958 = vmatprep.subr.mxu0 0.0
        %2959 = vmatpush1.msra.mxu0 0.0
        %2960 = vmatprep.subr.mxu0 0.0
        %2961 = vmatpush1.msra.mxu0 0.0
        %2962 = vmatprep.subr.mxu0 0.0
        %2963 = vmatpush1.msra.mxu0 0.0
        %2964 = vmatprep.subr.mxu0 0.0
        %2965 = vmatpush1.msra.mxu0 0.0
        %2966 = vmatprep.subr.mxu0 0.0
        %2967 = vmatpush1.msra.mxu0 0.0
        %2968 = vmatprep.subr.mxu0 0.0
        %2969 = vmatpush1.msra.mxu0 0.0
        %2970 = vmatprep.mubr.f32.mxu0 0.0
        %v2971 = vand.u32 %v2029, 4294901760
        %v2972 = vsub.f32 %v2029, %v2971
        %v2973 = vand.u32 %v2972, 4294901760
        %v2974 = vsub.f32 %v2972, %v2973
        %v2975 = vand.u32 %v2974, 4294901760
        %2976 = vmatmul.mubr.f32.gmra.mrb[0].mxu0 %v2975
        %v2977 = vpop.f32.mrb[0].mxu0
        %v2978 = vadd.f32 %v500, %v2977
        %v2979 = vpop.f32.mrb[0].mxu0
        %2980 = vdwg.mxu0
        %2981 = vmatprep.subr.mxu0 0.0
        %v2982 = vand.u32 %v441, 4294901760
        %v2983 = vsub.f32 %v441, %v2982
        %v2984 = vand.u32 %v2983, 4294901760
        %v2985 = vsub.f32 %v2983, %v2984
        %v2986 = vand.u32 %v2985, 4294901760
        %2987 = vmatpush1.msra.mxu0 %v2986
        %2988 = vmatprep.subr.mxu0 0.0
        %v2989 = vand.u32 %v444, 4294901760
        %v2990 = vsub.f32 %v444, %v2989
        %v2991 = vand.u32 %v2990, 4294901760
        %v2992 = vsub.f32 %v2990, %v2991
        %v2993 = vand.u32 %v2992, 4294901760
        %2994 = vmatpush1.msra.mxu0 %v2993
        %2995 = vmatprep.subr.mxu0 0.0
        %v2996 = vand.u32 %v447, 4294901760
        %v2997 = vsub.f32 %v447, %v2996
        %v2998 = vand.u32 %v2997, 4294901760
        %v2999 = vsub.f32 %v2997, %v2998
        %v3000 = vand.u32 %v2999, 4294901760
        %3001 = vmatpush1.msra.mxu0 %v3000
        %3002 = vmatprep.subr.mxu0 0.0
        %v3003 = vand.u32 %v450, 4294901760
        %v3004 = vsub.f32 %v450, %v3003
        %v3005 = vand.u32 %v3004, 4294901760
        %v3006 = vsub.f32 %v3004, %v3005
        %v3007 = vand.u32 %v3006, 4294901760
        %3008 = vmatpush1.msra.mxu0 %v3007
        %3009 = vmatprep.subr.mxu0 0.0
        %v3010 = vand.u32 %v453, 4294901760
        %v3011 = vsub.f32 %v453, %v3010
        %v3012 = vand.u32 %v3011, 4294901760
        %v3013 = vsub.f32 %v3011, %v3012
        %v3014 = vand.u32 %v3013, 4294901760
        %3015 = vmatpush1.msra.mxu0 %v3014
        %3016 = vmatprep.subr.mxu0 0.0
        %v3017 = vand.u32 %v456, 4294901760
        %v3018 = vsub.f32 %v456, %v3017
        %v3019 = vand.u32 %v3018, 4294901760
        %v3020 = vsub.f32 %v3018, %v3019
        %v3021 = vand.u32 %v3020, 4294901760
        %3022 = vmatpush1.msra.mxu0 %v3021
        %3023 = vmatprep.subr.mxu0 0.0
        %v3024 = vand.u32 %v459, 4294901760
        %v3025 = vsub.f32 %v459, %v3024
        %v3026 = vand.u32 %v3025, 4294901760
        %v3027 = vsub.f32 %v3025, %v3026
        %v3028 = vand.u32 %v3027, 4294901760
        %3029 = vmatpush1.msra.mxu0 %v3028
        %3030 = vmatprep.subr.mxu0 0.0
        %v3031 = vand.u32 %v462, 4294901760
        %v3032 = vsub.f32 %v462, %v3031
        %v3033 = vand.u32 %v3032, 4294901760
        %v3034 = vsub.f32 %v3032, %v3033
        %v3035 = vand.u32 %v3034, 4294901760
        %3036 = vmatpush1.msra.mxu0 %v3035
        %3037 = vmatprep.subr.mxu0 0.0
        %v3038 = vand.u32 %v465, 4294901760
        %v3039 = vsub.f32 %v465, %v3038
        %v3040 = vand.u32 %v3039, 4294901760
        %v3041 = vsub.f32 %v3039, %v3040
        %v3042 = vand.u32 %v3041, 4294901760
        %3043 = vmatpush1.msra.mxu0 %v3042
        %3044 = vmatprep.subr.mxu0 0.0
        %v3045 = vand.u32 %v468, 4294901760
        %v3046 = vsub.f32 %v468, %v3045
        %v3047 = vand.u32 %v3046, 4294901760
        %v3048 = vsub.f32 %v3046, %v3047
        %v3049 = vand.u32 %v3048, 4294901760
        %3050 = vmatpush1.msra.mxu0 %v3049
        %3051 = vmatprep.subr.mxu0 0.0
        %v3052 = vand.u32 %v471, 4294901760
        %v3053 = vsub.f32 %v471, %v3052
        %v3054 = vand.u32 %v3053, 4294901760
        %v3055 = vsub.f32 %v3053, %v3054
        %v3056 = vand.u32 %v3055, 4294901760
        %3057 = vmatpush1.msra.mxu0 %v3056
        %3058 = vmatprep.subr.mxu0 0.0
        %v3059 = vand.u32 %v474, 4294901760
        %v3060 = vsub.f32 %v474, %v3059
        %v3061 = vand.u32 %v3060, 4294901760
        %v3062 = vsub.f32 %v3060, %v3061
        %v3063 = vand.u32 %v3062, 4294901760
        %3064 = vmatpush1.msra.mxu0 %v3063
        %3065 = vmatprep.subr.mxu0 0.0
        %v3066 = vand.u32 %v477, 4294901760
        %v3067 = vsub.f32 %v477, %v3066
        %v3068 = vand.u32 %v3067, 4294901760
        %v3069 = vsub.f32 %v3067, %v3068
        %v3070 = vand.u32 %v3069, 4294901760
        %3071 = vmatpush1.msra.mxu0 %v3070
        %3072 = vmatprep.subr.mxu0 0.0
        %v3073 = vand.u32 %v480, 4294901760
        %v3074 = vsub.f32 %v480, %v3073
        %v3075 = vand.u32 %v3074, 4294901760
        %v3076 = vsub.f32 %v3074, %v3075
        %v3077 = vand.u32 %v3076, 4294901760
        %3078 = vmatpush1.msra.mxu0 %v3077
        %3079 = vmatprep.subr.mxu0 0.0
        %v3080 = vand.u32 %v483, 4294901760
        %v3081 = vsub.f32 %v483, %v3080
        %v3082 = vand.u32 %v3081, 4294901760
        %v3083 = vsub.f32 %v3081, %v3082
        %v3084 = vand.u32 %v3083, 4294901760
        %3085 = vmatpush1.msra.mxu0 %v3084
        %3086 = vmatprep.subr.mxu0 0.0
        %v3087 = vand.u32 %v486, 4294901760
        %v3088 = vsub.f32 %v486, %v3087
        %v3089 = vand.u32 %v3088, 4294901760
        %v3090 = vsub.f32 %v3088, %v3089
        %v3091 = vand.u32 %v3090, 4294901760
        %3092 = vmatpush1.msra.mxu0 %v3091
        %3093 = vmatprep.subr.mxu0 0.0
        %3094 = vmatpush1.msra.mxu0 0.0
        %3095 = vmatprep.subr.mxu0 0.0
        %3096 = vmatpush1.msra.mxu0 0.0
        %3097 = vmatprep.subr.mxu0 0.0
        %3098 = vmatpush1.msra.mxu0 0.0
        %3099 = vmatprep.subr.mxu0 0.0
        %3100 = vmatpush1.msra.mxu0 0.0
        %3101 = vmatprep.subr.mxu0 0.0
        %3102 = vmatpush1.msra.mxu0 0.0
        %3103 = vmatprep.subr.mxu0 0.0
        %3104 = vmatpush1.msra.mxu0 0.0
        %3105 = vmatprep.subr.mxu0 0.0
        %3106 = vmatpush1.msra.mxu0 0.0
        %3107 = vmatprep.subr.mxu0 0.0
        %3108 = vmatpush1.msra.mxu0 0.0
        %3109 = vmatprep.subr.mxu0 0.0
        %3110 = vmatpush1.msra.mxu0 0.0
        %3111 = vmatprep.subr.mxu0 0.0
        %3112 = vmatpush1.msra.mxu0 0.0
        %3113 = vmatprep.subr.mxu0 0.0
        %3114 = vmatpush1.msra.mxu0 0.0
        %3115 = vmatprep.subr.mxu0 0.0
        %3116 = vmatpush1.msra.mxu0 0.0
        %3117 = vmatprep.subr.mxu0 0.0
        %3118 = vmatpush1.msra.mxu0 0.0
        %3119 = vmatprep.subr.mxu0 0.0
        %3120 = vmatpush1.msra.mxu0 0.0
        %3121 = vmatprep.subr.mxu0 0.0
        %3122 = vmatpush1.msra.mxu0 0.0
        %3123 = vmatprep.subr.mxu0 0.0
        %3124 = vmatpush1.msra.mxu0 0.0
        %3125 = vmatprep.mubr.f32.mxu0 0.0
        %v3126 = vand.u32 %v2029, 4294901760
        %3127 = vmatmul.mubr.f32.gmra.mrb[0].mxu0 %v3126
        %v3128 = vpop.f32.mrb[0].mxu0
        %v3129 = vadd.f32 %v2978, %v3128
        %v3130 = vpop.f32.mrb[0].mxu0
        %3131 = vdwg.mxu0
        %3132 = vmatprep.subr.mxu0 0.0
        %v3133 = vand.u32 %v441, 4294901760
        %v3134 = vsub.f32 %v441, %v3133
        %3135 = vmatpush1.msra.mxu0 %v3134
        %3136 = vmatprep.subr.mxu0 0.0
        %v3137 = vand.u32 %v444, 4294901760
        %v3138 = vsub.f32 %v444, %v3137
        %3139 = vmatpush1.msra.mxu0 %v3138
        %3140 = vmatprep.subr.mxu0 0.0
        %v3141 = vand.u32 %v447, 4294901760
        %v3142 = vsub.f32 %v447, %v3141
        %3143 = vmatpush1.msra.mxu0 %v3142
        %3144 = vmatprep.subr.mxu0 0.0
        %v3145 = vand.u32 %v450, 4294901760
        %v3146 = vsub.f32 %v450, %v3145
        %3147 = vmatpush1.msra.mxu0 %v3146
        %3148 = vmatprep.subr.mxu0 0.0
        %v3149 = vand.u32 %v453, 4294901760
        %v3150 = vsub.f32 %v453, %v3149
        %3151 = vmatpush1.msra.mxu0 %v3150
        %3152 = vmatprep.subr.mxu0 0.0
        %v3153 = vand.u32 %v456, 4294901760
        %v3154 = vsub.f32 %v456, %v3153
        %3155 = vmatpush1.msra.mxu0 %v3154
        %3156 = vmatprep.subr.mxu0 0.0
        %v3157 = vand.u32 %v459, 4294901760
        %v3158 = vsub.f32 %v459, %v3157
        %3159 = vmatpush1.msra.mxu0 %v3158
        %3160 = vmatprep.subr.mxu0 0.0
        %v3161 = vand.u32 %v462, 4294901760
        %v3162 = vsub.f32 %v462, %v3161
        %3163 = vmatpush1.msra.mxu0 %v3162
        %3164 = vmatprep.subr.mxu0 0.0
        %v3165 = vand.u32 %v465, 4294901760
        %v3166 = vsub.f32 %v465, %v3165
        %3167 = vmatpush1.msra.mxu0 %v3166
        %3168 = vmatprep.subr.mxu0 0.0
        %v3169 = vand.u32 %v468, 4294901760
        %v3170 = vsub.f32 %v468, %v3169
        %3171 = vmatpush1.msra.mxu0 %v3170
        %3172 = vmatprep.subr.mxu0 0.0
        %v3173 = vand.u32 %v471, 4294901760
        %v3174 = vsub.f32 %v471, %v3173
        %3175 = vmatpush1.msra.mxu0 %v3174
        %3176 = vmatprep.subr.mxu0 0.0
        %v3177 = vand.u32 %v474, 4294901760
        %v3178 = vsub.f32 %v474, %v3177
        %3179 = vmatpush1.msra.mxu0 %v3178
        %3180 = vmatprep.subr.mxu0 0.0
        %v3181 = vand.u32 %v477, 4294901760
        %v3182 = vsub.f32 %v477, %v3181
        %3183 = vmatpush1.msra.mxu0 %v3182
        %3184 = vmatprep.subr.mxu0 0.0
        %v3185 = vand.u32 %v480, 4294901760
        %v3186 = vsub.f32 %v480, %v3185
        %3187 = vmatpush1.msra.mxu0 %v3186
        %3188 = vmatprep.subr.mxu0 0.0
        %v3189 = vand.u32 %v483, 4294901760
        %v3190 = vsub.f32 %v483, %v3189
        %3191 = vmatpush1.msra.mxu0 %v3190
        %3192 = vmatprep.subr.mxu0 0.0
        %v3193 = vand.u32 %v486, 4294901760
        %v3194 = vsub.f32 %v486, %v3193
        %3195 = vmatpush1.msra.mxu0 %v3194
        %3196 = vmatprep.subr.mxu0 0.0
        %3197 = vmatpush1.msra.mxu0 0.0
        %3198 = vmatprep.subr.mxu0 0.0
        %3199 = vmatpush1.msra.mxu0 0.0
        %3200 = vmatprep.subr.mxu0 0.0
        %3201 = vmatpush1.msra.mxu0 0.0
        %3202 = vmatprep.subr.mxu0 0.0
        %3203 = vmatpush1.msra.mxu0 0.0
        %3204 = vmatprep.subr.mxu0 0.0
        %3205 = vmatpush1.msra.mxu0 0.0
        %3206 = vmatprep.subr.mxu0 0.0
        %3207 = vmatpush1.msra.mxu0 0.0
        %3208 = vmatprep.subr.mxu0 0.0
        %3209 = vmatpush1.msra.mxu0 0.0
        %3210 = vmatprep.subr.mxu0 0.0
        %3211 = vmatpush1.msra.mxu0 0.0
        %3212 = vmatprep.subr.mxu0 0.0
        %3213 = vmatpush1.msra.mxu0 0.0
        %3214 = vmatprep.subr.mxu0 0.0
        %3215 = vmatpush1.msra.mxu0 0.0
        %3216 = vmatprep.subr.mxu0 0.0
        %3217 = vmatpush1.msra.mxu0 0.0
        %3218 = vmatprep.subr.mxu0 0.0
        %3219 = vmatpush1.msra.mxu0 0.0
        %3220 = vmatprep.subr.mxu0 0.0
        %3221 = vmatpush1.msra.mxu0 0.0
        %3222 = vmatprep.subr.mxu0 0.0
        %3223 = vmatpush1.msra.mxu0 0.0
        %3224 = vmatprep.subr.mxu0 0.0
        %3225 = vmatpush1.msra.mxu0 0.0
        %3226 = vmatprep.subr.mxu0 0.0
        %3227 = vmatpush1.msra.mxu0 0.0
        %3228 = vmatprep.mubr.f32.mxu0 0.0
        %v3229 = vand.u32 %v2029, 4294901760
        %v3230 = vsub.f32 %v2029, %v3229
        %3231 = vmatmul.mubr.f32.gmra.mrb[0].mxu0 %v3230
        %v3232 = vpop.f32.mrb[0].mxu0
        %v3233 = vadd.f32 %v3129, %v3232
        %v3234 = vpop.f32.mrb[0].mxu0
        %3235 = vdwg.mxu0
        %3236 = vmatprep.subr.mxu0 0.0
        %v3237 = vand.u32 %v441, 4294901760
        %3238 = vmatpush1.msra.mxu0 %v3237
        %3239 = vmatprep.subr.mxu0 0.0
        %v3240 = vand.u32 %v444, 4294901760
        %3241 = vmatpush1.msra.mxu0 %v3240
        %3242 = vmatprep.subr.mxu0 0.0
        %v3243 = vand.u32 %v447, 4294901760
        %3244 = vmatpush1.msra.mxu0 %v3243
        %3245 = vmatprep.subr.mxu0 0.0
        %v3246 = vand.u32 %v450, 4294901760
        %3247 = vmatpush1.msra.mxu0 %v3246
        %3248 = vmatprep.subr.mxu0 0.0
        %v3249 = vand.u32 %v453, 4294901760
        %3250 = vmatpush1.msra.mxu0 %v3249
        %3251 = vmatprep.subr.mxu0 0.0
        %v3252 = vand.u32 %v456, 4294901760
        %3253 = vmatpush1.msra.mxu0 %v3252
        %3254 = vmatprep.subr.mxu0 0.0
        %v3255 = vand.u32 %v459, 4294901760
        %3256 = vmatpush1.msra.mxu0 %v3255
        %3257 = vmatprep.subr.mxu0 0.0
        %v3258 = vand.u32 %v462, 4294901760
        %3259 = vmatpush1.msra.mxu0 %v3258
        %3260 = vmatprep.subr.mxu0 0.0
        %v3261 = vand.u32 %v465, 4294901760
        %3262 = vmatpush1.msra.mxu0 %v3261
        %3263 = vmatprep.subr.mxu0 0.0
        %v3264 = vand.u32 %v468, 4294901760
        %3265 = vmatpush1.msra.mxu0 %v3264
        %3266 = vmatprep.subr.mxu0 0.0
        %v3267 = vand.u32 %v471, 4294901760
        %3268 = vmatpush1.msra.mxu0 %v3267
        %3269 = vmatprep.subr.mxu0 0.0
        %v3270 = vand.u32 %v474, 4294901760
        %3271 = vmatpush1.msra.mxu0 %v3270
        %3272 = vmatprep.subr.mxu0 0.0
        %v3273 = vand.u32 %v477, 4294901760
        %3274 = vmatpush1.msra.mxu0 %v3273
        %3275 = vmatprep.subr.mxu0 0.0
        %v3276 = vand.u32 %v480, 4294901760
        %3277 = vmatpush1.msra.mxu0 %v3276
        %3278 = vmatprep.subr.mxu0 0.0
        %v3279 = vand.u32 %v483, 4294901760
        %3280 = vmatpush1.msra.mxu0 %v3279
        %3281 = vmatprep.subr.mxu0 0.0
        %v3282 = vand.u32 %v486, 4294901760
        %3283 = vmatpush1.msra.mxu0 %v3282
        %3284 = vmatprep.subr.mxu0 0.0
        %3285 = vmatpush1.msra.mxu0 0.0
        %3286 = vmatprep.subr.mxu0 0.0
        %3287 = vmatpush1.msra.mxu0 0.0
        %3288 = vmatprep.subr.mxu0 0.0
        %3289 = vmatpush1.msra.mxu0 0.0
        %3290 = vmatprep.subr.mxu0 0.0
        %3291 = vmatpush1.msra.mxu0 0.0
        %3292 = vmatprep.subr.mxu0 0.0
        %3293 = vmatpush1.msra.mxu0 0.0
        %3294 = vmatprep.subr.mxu0 0.0
        %3295 = vmatpush1.msra.mxu0 0.0
        %3296 = vmatprep.subr.mxu0 0.0
        %3297 = vmatpush1.msra.mxu0 0.0
        %3298 = vmatprep.subr.mxu0 0.0
        %3299 = vmatpush1.msra.mxu0 0.0
        %3300 = vmatprep.subr.mxu0 0.0
        %3301 = vmatpush1.msra.mxu0 0.0
        %3302 = vmatprep.subr.mxu0 0.0
        %3303 = vmatpush1.msra.mxu0 0.0
        %3304 = vmatprep.subr.mxu0 0.0
        %3305 = vmatpush1.msra.mxu0 0.0
        %3306 = vmatprep.subr.mxu0 0.0
        %3307 = vmatpush1.msra.mxu0 0.0
        %3308 = vmatprep.subr.mxu0 0.0
        %3309 = vmatpush1.msra.mxu0 0.0
        %3310 = vmatprep.subr.mxu0 0.0
        %3311 = vmatpush1.msra.mxu0 0.0
        %3312 = vmatprep.subr.mxu0 0.0
        %3313 = vmatpush1.msra.mxu0 0.0
        %3314 = vmatprep.subr.mxu0 0.0
        %3315 = vmatpush1.msra.mxu0 0.0
        %3316 = vmatprep.mubr.f32.mxu0 0.0
        %v3317 = vand.u32 %v2029, 4294901760
        %v3318 = vsub.f32 %v2029, %v3317
        %v3319 = vand.u32 %v3318, 4294901760
        %3320 = vmatmul.mubr.f32.gmra.mrb[0].mxu0 %v3319
        %v3321 = vpop.f32.mrb[0].mxu0
        %v3322 = vadd.f32 %v3233, %v3321
        %v3323 = vpop.f32.mrb[0].mxu0
        %3324 = vdwg.mxu0
        %3325 = vmatprep.subr.mxu0 0.0
        %v3326 = vand.u32 %v441, 4294901760
        %v3327 = vsub.f32 %v441, %v3326
        %v3328 = vand.u32 %v3327, 4294901760
        %3329 = vmatpush1.msra.mxu0 %v3328
        %3330 = vmatprep.subr.mxu0 0.0
        %v3331 = vand.u32 %v444, 4294901760
        %v3332 = vsub.f32 %v444, %v3331
        %v3333 = vand.u32 %v3332, 4294901760
        %3334 = vmatpush1.msra.mxu0 %v3333
        %3335 = vmatprep.subr.mxu0 0.0
        %v3336 = vand.u32 %v447, 4294901760
        %v3337 = vsub.f32 %v447, %v3336
        %v3338 = vand.u32 %v3337, 4294901760
        %3339 = vmatpush1.msra.mxu0 %v3338
        %3340 = vmatprep.subr.mxu0 0.0
        %v3341 = vand.u32 %v450, 4294901760
        %v3342 = vsub.f32 %v450, %v3341
        %v3343 = vand.u32 %v3342, 4294901760
        %3344 = vmatpush1.msra.mxu0 %v3343
        %3345 = vmatprep.subr.mxu0 0.0
        %v3346 = vand.u32 %v453, 4294901760
        %v3347 = vsub.f32 %v453, %v3346
        %v3348 = vand.u32 %v3347, 4294901760
        %3349 = vmatpush1.msra.mxu0 %v3348
        %3350 = vmatprep.subr.mxu0 0.0
        %v3351 = vand.u32 %v456, 4294901760
        %v3352 = vsub.f32 %v456, %v3351
        %v3353 = vand.u32 %v3352, 4294901760
        %3354 = vmatpush1.msra.mxu0 %v3353
        %3355 = vmatprep.subr.mxu0 0.0
        %v3356 = vand.u32 %v459, 4294901760
        %v3357 = vsub.f32 %v459, %v3356
        %v3358 = vand.u32 %v3357, 4294901760
        %3359 = vmatpush1.msra.mxu0 %v3358
        %3360 = vmatprep.subr.mxu0 0.0
        %v3361 = vand.u32 %v462, 4294901760
        %v3362 = vsub.f32 %v462, %v3361
        %v3363 = vand.u32 %v3362, 4294901760
        %3364 = vmatpush1.msra.mxu0 %v3363
        %3365 = vmatprep.subr.mxu0 0.0
        %v3366 = vand.u32 %v465, 4294901760
        %v3367 = vsub.f32 %v465, %v3366
        %v3368 = vand.u32 %v3367, 4294901760
        %3369 = vmatpush1.msra.mxu0 %v3368
        %3370 = vmatprep.subr.mxu0 0.0
        %v3371 = vand.u32 %v468, 4294901760
        %v3372 = vsub.f32 %v468, %v3371
        %v3373 = vand.u32 %v3372, 4294901760
        %3374 = vmatpush1.msra.mxu0 %v3373
        %3375 = vmatprep.subr.mxu0 0.0
        %v3376 = vand.u32 %v471, 4294901760
        %v3377 = vsub.f32 %v471, %v3376
        %v3378 = vand.u32 %v3377, 4294901760
        %3379 = vmatpush1.msra.mxu0 %v3378
        %3380 = vmatprep.subr.mxu0 0.0
        %v3381 = vand.u32 %v474, 4294901760
        %v3382 = vsub.f32 %v474, %v3381
        %v3383 = vand.u32 %v3382, 4294901760
        %3384 = vmatpush1.msra.mxu0 %v3383
        %3385 = vmatprep.subr.mxu0 0.0
        %v3386 = vand.u32 %v477, 4294901760
        %v3387 = vsub.f32 %v477, %v3386
        %v3388 = vand.u32 %v3387, 4294901760
        %3389 = vmatpush1.msra.mxu0 %v3388
        %3390 = vmatprep.subr.mxu0 0.0
        %v3391 = vand.u32 %v480, 4294901760
        %v3392 = vsub.f32 %v480, %v3391
        %v3393 = vand.u32 %v3392, 4294901760
        %3394 = vmatpush1.msra.mxu0 %v3393
        %3395 = vmatprep.subr.mxu0 0.0
        %v3396 = vand.u32 %v483, 4294901760
        %v3397 = vsub.f32 %v483, %v3396
        %v3398 = vand.u32 %v3397, 4294901760
        %3399 = vmatpush1.msra.mxu0 %v3398
        %3400 = vmatprep.subr.mxu0 0.0
        %v3401 = vand.u32 %v486, 4294901760
        %v3402 = vsub.f32 %v486, %v3401
        %v3403 = vand.u32 %v3402, 4294901760
        %3404 = vmatpush1.msra.mxu0 %v3403
        %3405 = vmatprep.subr.mxu0 0.0
        %3406 = vmatpush1.msra.mxu0 0.0
        %3407 = vmatprep.subr.mxu0 0.0
        %3408 = vmatpush1.msra.mxu0 0.0
        %3409 = vmatprep.subr.mxu0 0.0
        %3410 = vmatpush1.msra.mxu0 0.0
        %3411 = vmatprep.subr.mxu0 0.0
        %3412 = vmatpush1.msra.mxu0 0.0
        %3413 = vmatprep.subr.mxu0 0.0
        %3414 = vmatpush1.msra.mxu0 0.0
        %3415 = vmatprep.subr.mxu0 0.0
        %3416 = vmatpush1.msra.mxu0 0.0
        %3417 = vmatprep.subr.mxu0 0.0
        %3418 = vmatpush1.msra.mxu0 0.0
        %3419 = vmatprep.subr.mxu0 0.0
        %3420 = vmatpush1.msra.mxu0 0.0
        %3421 = vmatprep.subr.mxu0 0.0
        %3422 = vmatpush1.msra.mxu0 0.0
        %3423 = vmatprep.subr.mxu0 0.0
        %3424 = vmatpush1.msra.mxu0 0.0
        %3425 = vmatprep.subr.mxu0 0.0
        %3426 = vmatpush1.msra.mxu0 0.0
        %3427 = vmatprep.subr.mxu0 0.0
        %3428 = vmatpush1.msra.mxu0 0.0
        %3429 = vmatprep.subr.mxu0 0.0
        %3430 = vmatpush1.msra.mxu0 0.0
        %3431 = vmatprep.subr.mxu0 0.0
        %3432 = vmatpush1.msra.mxu0 0.0
        %3433 = vmatprep.subr.mxu0 0.0
        %3434 = vmatpush1.msra.mxu0 0.0
        %3435 = vmatprep.subr.mxu0 0.0
        %3436 = vmatpush1.msra.mxu0 0.0
        %3437 = vmatprep.mubr.f32.mxu0 0.0
        %v3438 = vand.u32 %v2029, 4294901760
        %3439 = vmatmul.mubr.f32.gmra.mrb[0].mxu0 %v3438
        %v3440 = vpop.f32.mrb[0].mxu0
        %v3441 = vadd.f32 %v3322, %v3440
        %v3442 = vpop.f32.mrb[0].mxu0
        %3443 = vdwg.mxu0
        %3444 = vmatprep.subr.mxu0 0.0
        %v3445 = vand.u32 %v441, 4294901760
        %3446 = vmatpush1.msra.mxu0 %v3445
        %3447 = vmatprep.subr.mxu0 0.0
        %v3448 = vand.u32 %v444, 4294901760
        %3449 = vmatpush1.msra.mxu0 %v3448
        %3450 = vmatprep.subr.mxu0 0.0
        %v3451 = vand.u32 %v447, 4294901760
        %3452 = vmatpush1.msra.mxu0 %v3451
        %3453 = vmatprep.subr.mxu0 0.0
        %v3454 = vand.u32 %v450, 4294901760
        %3455 = vmatpush1.msra.mxu0 %v3454
        %3456 = vmatprep.subr.mxu0 0.0
        %v3457 = vand.u32 %v453, 4294901760
        %3458 = vmatpush1.msra.mxu0 %v3457
        %3459 = vmatprep.subr.mxu0 0.0
        %v3460 = vand.u32 %v456, 4294901760
        %3461 = vmatpush1.msra.mxu0 %v3460
        %3462 = vmatprep.subr.mxu0 0.0
        %v3463 = vand.u32 %v459, 4294901760
        %3464 = vmatpush1.msra.mxu0 %v3463
        %3465 = vmatprep.subr.mxu0 0.0
        %v3466 = vand.u32 %v462, 4294901760
        %3467 = vmatpush1.msra.mxu0 %v3466
        %3468 = vmatprep.subr.mxu0 0.0
        %v3469 = vand.u32 %v465, 4294901760
        %3470 = vmatpush1.msra.mxu0 %v3469
        %3471 = vmatprep.subr.mxu0 0.0
        %v3472 = vand.u32 %v468, 4294901760
        %3473 = vmatpush1.msra.mxu0 %v3472
        %3474 = vmatprep.subr.mxu0 0.0
        %v3475 = vand.u32 %v471, 4294901760
        %3476 = vmatpush1.msra.mxu0 %v3475
        %3477 = vmatprep.subr.mxu0 0.0
        %v3478 = vand.u32 %v474, 4294901760
        %3479 = vmatpush1.msra.mxu0 %v3478
        %3480 = vmatprep.subr.mxu0 0.0
        %v3481 = vand.u32 %v477, 4294901760
        %3482 = vmatpush1.msra.mxu0 %v3481
        %3483 = vmatprep.subr.mxu0 0.0
        %v3484 = vand.u32 %v480, 4294901760
        %3485 = vmatpush1.msra.mxu0 %v3484
        %3486 = vmatprep.subr.mxu0 0.0
        %v3487 = vand.u32 %v483, 4294901760
        %3488 = vmatpush1.msra.mxu0 %v3487
        %3489 = vmatprep.subr.mxu0 0.0
        %v3490 = vand.u32 %v486, 4294901760
        %3491 = vmatpush1.msra.mxu0 %v3490
        %3492 = vmatprep.subr.mxu0 0.0
        %3493 = vmatpush1.msra.mxu0 0.0
        %3494 = vmatprep.subr.mxu0 0.0
        %3495 = vmatpush1.msra.mxu0 0.0
        %3496 = vmatprep.subr.mxu0 0.0
        %3497 = vmatpush1.msra.mxu0 0.0
        %3498 = vmatprep.subr.mxu0 0.0
        %3499 = vmatpush1.msra.mxu0 0.0
        %3500 = vmatprep.subr.mxu0 0.0
        %3501 = vmatpush1.msra.mxu0 0.0
        %3502 = vmatprep.subr.mxu0 0.0
        %3503 = vmatpush1.msra.mxu0 0.0
        %3504 = vmatprep.subr.mxu0 0.0
        %3505 = vmatpush1.msra.mxu0 0.0
        %3506 = vmatprep.subr.mxu0 0.0
        %3507 = vmatpush1.msra.mxu0 0.0
        %3508 = vmatprep.subr.mxu0 0.0
        %3509 = vmatpush1.msra.mxu0 0.0
        %3510 = vmatprep.subr.mxu0 0.0
        %3511 = vmatpush1.msra.mxu0 0.0
        %3512 = vmatprep.subr.mxu0 0.0
        %3513 = vmatpush1.msra.mxu0 0.0
        %3514 = vmatprep.subr.mxu0 0.0
        %3515 = vmatpush1.msra.mxu0 0.0
        %3516 = vmatprep.subr.mxu0 0.0
        %3517 = vmatpush1.msra.mxu0 0.0
        %3518 = vmatprep.subr.mxu0 0.0
        %3519 = vmatpush1.msra.mxu0 0.0
        %3520 = vmatprep.subr.mxu0 0.0
        %3521 = vmatpush1.msra.mxu0 0.0
        %3522 = vmatprep.subr.mxu0 0.0
        %3523 = vmatpush1.msra.mxu0 0.0
        %3524 = vmatprep.mubr.f32.mxu0 0.0
        %v3525 = vand.u32 %v2029, 4294901760
        %3526 = vmatmul.mubr.f32.gmra.mrb[0].mxu0 %v3525
        %v3527 = vpop.f32.mrb[0].mxu0
        %v3528 = vadd.f32 %v3441, %v3527
        %v3529 = vpop.f32.mrb[0].mxu0
        %3530 = vdwg.mxu0
        %v3532 = vrot.slane %v2886, 4
        %v3534 = vadd.f32 %v2032, %v3532
        %v3535 = vxor.u32 %v3534, 2147483648
        %v3536 = vmul.f32 %v3535, 1.442695
        %v3537 = vpow.pop %v3536
        %v3538 = vadd.f32 %v3537, 1.0
        %v3539 = vrcp.pop %v3538
        %v3540 = vmul.f32 1.0, %v3539
        %v3542 = vrot.slane %v2888, 4
        %v3544 = vadd.f32 %v2033, %v3542
        %v3545 = vxor.u32 %v3544, 2147483648
        %v3546 = vmul.f32 %v3545, 1.442695
        %v3547 = vpow.pop %v3546
        %v3548 = vadd.f32 %v3547, 1.0
        %v3549 = vrcp.pop %v3548
        %v3550 = vmul.f32 1.0, %v3549
        %v3552 = vrot.slane %v3528, 4
        %v3554 = vmul.f32 %v3540, %v3552
        %v3555 = vadd.f32 %v2034, %v3554
        %v3556 = vtanh.pop %v3555
        %v3557 = vsub.f32 1.0, %v3550
        %v3558 = vmul.f32 %v3557, %v3556
        %v3560 = vrot.slane %v2029, 4
        %v3562 = vmul.f32 %v3550, %v3560
        %v3563 = vadd.f32 %v3558, %v3562
        %3564 = vst [vmem:[#allocation2 - $0x4] sm:$0xf0] %v3563
        %3565 = vst [vmem:[#allocation3] sm:$0xf0] %v3563
        %v3566 = vld [vmem:[#allocation2] sm:$0xf]
        %v3567 = vld [vmem:[%s378 + $0xc] sm:$0x33]
        %v3568 = vld [vmem:[%s378 + $0x14] sm:$0x3]
        %v3569 = vunpack.c.l.bf16 %v3567
        %v3570 = vunpack.c.h.bf16 %v3567
        %v3571 = vunpack.c.l.bf16 %v3568
        %v3572 = vand.u32 %v440, 4294901760
        %3573 = vmatprep.subr.mxu0 %v3572
        %v3574 = vand.u32 %v439, 4294901760
        %3575 = vmatpush1.msra.mxu0 %v3574
        %v3576 = vand.u32 %v443, 4294901760
        %3577 = vmatprep.subr.mxu0 %v3576
        %v3578 = vand.u32 %v442, 4294901760
        %3579 = vmatpush1.msra.mxu0 %v3578
        %v3580 = vand.u32 %v446, 4294901760
        %3581 = vmatprep.subr.mxu0 %v3580
        %v3582 = vand.u32 %v445, 4294901760
        %3583 = vmatpush1.msra.mxu0 %v3582
        %v3584 = vand.u32 %v449, 4294901760
        %3585 = vmatprep.subr.mxu0 %v3584
        %v3586 = vand.u32 %v448, 4294901760
        %3587 = vmatpush1.msra.mxu0 %v3586
        %v3588 = vand.u32 %v452, 4294901760
        %3589 = vmatprep.subr.mxu0 %v3588
        %v3590 = vand.u32 %v451, 4294901760
        %3591 = vmatpush1.msra.mxu0 %v3590
        %v3592 = vand.u32 %v455, 4294901760
        %3593 = vmatprep.subr.mxu0 %v3592
        %v3594 = vand.u32 %v454, 4294901760
        %3595 = vmatpush1.msra.mxu0 %v3594
        %v3596 = vand.u32 %v458, 4294901760
        %3597 = vmatprep.subr.mxu0 %v3596
        %v3598 = vand.u32 %v457, 4294901760
        %3599 = vmatpush1.msra.mxu0 %v3598
        %v3600 = vand.u32 %v461, 4294901760
        %3601 = vmatprep.subr.mxu0 %v3600
        %v3602 = vand.u32 %v460, 4294901760
        %3603 = vmatpush1.msra.mxu0 %v3602
        %v3604 = vand.u32 %v464, 4294901760
        %3605 = vmatprep.subr.mxu0 %v3604
        %v3606 = vand.u32 %v463, 4294901760
        %3607 = vmatpush1.msra.mxu0 %v3606
        %v3608 = vand.u32 %v467, 4294901760
        %3609 = vmatprep.subr.mxu0 %v3608
        %v3610 = vand.u32 %v466, 4294901760
        %3611 = vmatpush1.msra.mxu0 %v3610
        %v3612 = vand.u32 %v470, 4294901760
        %3613 = vmatprep.subr.mxu0 %v3612
        %v3614 = vand.u32 %v469, 4294901760
        %3615 = vmatpush1.msra.mxu0 %v3614
        %v3616 = vand.u32 %v473, 4294901760
        %3617 = vmatprep.subr.mxu0 %v3616
        %v3618 = vand.u32 %v472, 4294901760
        %3619 = vmatpush1.msra.mxu0 %v3618
        %v3620 = vand.u32 %v476, 4294901760
        %3621 = vmatprep.subr.mxu0 %v3620
        %v3622 = vand.u32 %v475, 4294901760
        %3623 = vmatpush1.msra.mxu0 %v3622
        %v3624 = vand.u32 %v479, 4294901760
        %3625 = vmatprep.subr.mxu0 %v3624
        %v3626 = vand.u32 %v478, 4294901760
        %3627 = vmatpush1.msra.mxu0 %v3626
        %v3628 = vand.u32 %v482, 4294901760
        %3629 = vmatprep.subr.mxu0 %v3628
        %v3630 = vand.u32 %v481, 4294901760
        %3631 = vmatpush1.msra.mxu0 %v3630
        %v3632 = vand.u32 %v485, 4294901760
        %3633 = vmatprep.subr.mxu0 %v3632
        %v3634 = vand.u32 %v484, 4294901760
        %3635 = vmatpush1.msra.mxu0 %v3634
        %3636 = vmatprep.subr.mxu0 0.0
        %3637 = vmatpush1.msra.mxu0 0.0
        %3638 = vmatprep.subr.mxu0 0.0
        %3639 = vmatpush1.msra.mxu0 0.0
        %3640 = vmatprep.subr.mxu0 0.0
        %3641 = vmatpush1.msra.mxu0 0.0
        %3642 = vmatprep.subr.mxu0 0.0
        %3643 = vmatpush1.msra.mxu0 0.0
        %3644 = vmatprep.subr.mxu0 0.0
        %3645 = vmatpush1.msra.mxu0 0.0
        %3646 = vmatprep.subr.mxu0 0.0
        %3647 = vmatpush1.msra.mxu0 0.0
        %3648 = vmatprep.subr.mxu0 0.0
        %3649 = vmatpush1.msra.mxu0 0.0
        %3650 = vmatprep.subr.mxu0 0.0
        %3651 = vmatpush1.msra.mxu0 0.0
        %3652 = vmatprep.subr.mxu0 0.0
        %3653 = vmatpush1.msra.mxu0 0.0
        %3654 = vmatprep.subr.mxu0 0.0
        %3655 = vmatpush1.msra.mxu0 0.0
        %3656 = vmatprep.subr.mxu0 0.0
        %3657 = vmatpush1.msra.mxu0 0.0
        %3658 = vmatprep.subr.mxu0 0.0
        %3659 = vmatpush1.msra.mxu0 0.0
        %3660 = vmatprep.subr.mxu0 0.0
        %3661 = vmatpush1.msra.mxu0 0.0
        %3662 = vmatprep.subr.mxu0 0.0
        %3663 = vmatpush1.msra.mxu0 0.0
        %3664 = vmatprep.subr.mxu0 0.0
        %3665 = vmatpush1.msra.mxu0 0.0
        %3666 = vmatprep.subr.mxu0 0.0
        %3667 = vmatpush1.msra.mxu0 0.0
        %3668 = vmatprep.mubr.f32.mxu0 0.0
        %v3669 = vand.u32 %v3566, 4294901760
        %v3670 = vsub.f32 %v3566, %v3669
        %v3671 = vand.u32 %v3670, 4294901760
        %v3672 = vsub.f32 %v3670, %v3671
        %v3673 = vand.u32 %v3672, 4294901760
        %3674 = vmatmul.mubr.f32.gmra.mrb[0].mxu0 %v3673
        %v3675 = vpop.f32.mrb[0].mxu0
        %v3676 = vadd.f32 %v492, %v3675
        %v3677 = vpop.f32.mrb[0].mxu0
        %v3678 = vadd.f32 %v496, %v3677
        %3679 = vdwg.mxu0
        %v3680 = vand.u32 %v440, 4294901760
        %v3681 = vsub.f32 %v440, %v3680
        %v3682 = vand.u32 %v3681, 4294901760
        %v3683 = vsub.f32 %v3681, %v3682
        %v3684 = vand.u32 %v3683, 4294901760
        %3685 = vmatprep.subr.mxu0 %v3684
        %v3686 = vand.u32 %v439, 4294901760
        %v3687 = vsub.f32 %v439, %v3686
        %v3688 = vand.u32 %v3687, 4294901760
        %v3689 = vsub.f32 %v3687, %v3688
        %v3690 = vand.u32 %v3689, 4294901760
        %3691 = vmatpush1.msra.mxu0 %v3690
        %v3692 = vand.u32 %v443, 4294901760
        %v3693 = vsub.f32 %v443, %v3692
        %v3694 = vand.u32 %v3693, 4294901760
        %v3695 = vsub.f32 %v3693, %v3694
        %v3696 = vand.u32 %v3695, 4294901760
        %3697 = vmatprep.subr.mxu0 %v3696
        %v3698 = vand.u32 %v442, 4294901760
        %v3699 = vsub.f32 %v442, %v3698
        %v3700 = vand.u32 %v3699, 4294901760
        %v3701 = vsub.f32 %v3699, %v3700
        %v3702 = vand.u32 %v3701, 4294901760
        %3703 = vmatpush1.msra.mxu0 %v3702
        %v3704 = vand.u32 %v446, 4294901760
        %v3705 = vsub.f32 %v446, %v3704
        %v3706 = vand.u32 %v3705, 4294901760
        %v3707 = vsub.f32 %v3705, %v3706
        %v3708 = vand.u32 %v3707, 4294901760
        %3709 = vmatprep.subr.mxu0 %v3708
        %v3710 = vand.u32 %v445, 4294901760
        %v3711 = vsub.f32 %v445, %v3710
        %v3712 = vand.u32 %v3711, 4294901760
        %v3713 = vsub.f32 %v3711, %v3712
        %v3714 = vand.u32 %v3713, 4294901760
        %3715 = vmatpush1.msra.mxu0 %v3714
        %v3716 = vand.u32 %v449, 4294901760
        %v3717 = vsub.f32 %v449, %v3716
        %v3718 = vand.u32 %v3717, 4294901760
        %v3719 = vsub.f32 %v3717, %v3718
        %v3720 = vand.u32 %v3719, 4294901760
        %3721 = vmatprep.subr.mxu0 %v3720
        %v3722 = vand.u32 %v448, 4294901760
        %v3723 = vsub.f32 %v448, %v3722
        %v3724 = vand.u32 %v3723, 4294901760
        %v3725 = vsub.f32 %v3723, %v3724
        %v3726 = vand.u32 %v3725, 4294901760
        %3727 = vmatpush1.msra.mxu0 %v3726
        %v3728 = vand.u32 %v452, 4294901760
        %v3729 = vsub.f32 %v452, %v3728
        %v3730 = vand.u32 %v3729, 4294901760
        %v3731 = vsub.f32 %v3729, %v3730
        %v3732 = vand.u32 %v3731, 4294901760
        %3733 = vmatprep.subr.mxu0 %v3732
        %v3734 = vand.u32 %v451, 4294901760
        %v3735 = vsub.f32 %v451, %v3734
        %v3736 = vand.u32 %v3735, 4294901760
        %v3737 = vsub.f32 %v3735, %v3736
        %v3738 = vand.u32 %v3737, 4294901760
        %3739 = vmatpush1.msra.mxu0 %v3738
        %v3740 = vand.u32 %v455, 4294901760
        %v3741 = vsub.f32 %v455, %v3740
        %v3742 = vand.u32 %v3741, 4294901760
        %v3743 = vsub.f32 %v3741, %v3742
        %v3744 = vand.u32 %v3743, 4294901760
        %3745 = vmatprep.subr.mxu0 %v3744
        %v3746 = vand.u32 %v454, 4294901760
        %v3747 = vsub.f32 %v454, %v3746
        %v3748 = vand.u32 %v3747, 4294901760
        %v3749 = vsub.f32 %v3747, %v3748
        %v3750 = vand.u32 %v3749, 4294901760
        %3751 = vmatpush1.msra.mxu0 %v3750
        %v3752 = vand.u32 %v458, 4294901760
        %v3753 = vsub.f32 %v458, %v3752
        %v3754 = vand.u32 %v3753, 4294901760
        %v3755 = vsub.f32 %v3753, %v3754
        %v3756 = vand.u32 %v3755, 4294901760
        %3757 = vmatprep.subr.mxu0 %v3756
        %v3758 = vand.u32 %v457, 4294901760
        %v3759 = vsub.f32 %v457, %v3758
        %v3760 = vand.u32 %v3759, 4294901760
        %v3761 = vsub.f32 %v3759, %v3760
        %v3762 = vand.u32 %v3761, 4294901760
        %3763 = vmatpush1.msra.mxu0 %v3762
        %v3764 = vand.u32 %v461, 4294901760
        %v3765 = vsub.f32 %v461, %v3764
        %v3766 = vand.u32 %v3765, 4294901760
        %v3767 = vsub.f32 %v3765, %v3766
        %v3768 = vand.u32 %v3767, 4294901760
        %3769 = vmatprep.subr.mxu0 %v3768
        %v3770 = vand.u32 %v460, 4294901760
        %v3771 = vsub.f32 %v460, %v3770
        %v3772 = vand.u32 %v3771, 4294901760
        %v3773 = vsub.f32 %v3771, %v3772
        %v3774 = vand.u32 %v3773, 4294901760
        %3775 = vmatpush1.msra.mxu0 %v3774
        %v3776 = vand.u32 %v464, 4294901760
        %v3777 = vsub.f32 %v464, %v3776
        %v3778 = vand.u32 %v3777, 4294901760
        %v3779 = vsub.f32 %v3777, %v3778
        %v3780 = vand.u32 %v3779, 4294901760
        %3781 = vmatprep.subr.mxu0 %v3780
        %v3782 = vand.u32 %v463, 4294901760
        %v3783 = vsub.f32 %v463, %v3782
        %v3784 = vand.u32 %v3783, 4294901760
        %v3785 = vsub.f32 %v3783, %v3784
        %v3786 = vand.u32 %v3785, 4294901760
        %3787 = vmatpush1.msra.mxu0 %v3786
        %v3788 = vand.u32 %v467, 4294901760
        %v3789 = vsub.f32 %v467, %v3788
        %v3790 = vand.u32 %v3789, 4294901760
        %v3791 = vsub.f32 %v3789, %v3790
        %v3792 = vand.u32 %v3791, 4294901760
        %3793 = vmatprep.subr.mxu0 %v3792
        %v3794 = vand.u32 %v466, 4294901760
        %v3795 = vsub.f32 %v466, %v3794
        %v3796 = vand.u32 %v3795, 4294901760
        %v3797 = vsub.f32 %v3795, %v3796
        %v3798 = vand.u32 %v3797, 4294901760
        %3799 = vmatpush1.msra.mxu0 %v3798
        %v3800 = vand.u32 %v470, 4294901760
        %v3801 = vsub.f32 %v470, %v3800
        %v3802 = vand.u32 %v3801, 4294901760
        %v3803 = vsub.f32 %v3801, %v3802
        %v3804 = vand.u32 %v3803, 4294901760
        %3805 = vmatprep.subr.mxu0 %v3804
        %v3806 = vand.u32 %v469, 4294901760
        %v3807 = vsub.f32 %v469, %v3806
        %v3808 = vand.u32 %v3807, 4294901760
        %v3809 = vsub.f32 %v3807, %v3808
        %v3810 = vand.u32 %v3809, 4294901760
        %3811 = vmatpush1.msra.mxu0 %v3810
        %v3812 = vand.u32 %v473, 4294901760
        %v3813 = vsub.f32 %v473, %v3812
        %v3814 = vand.u32 %v3813, 4294901760
        %v3815 = vsub.f32 %v3813, %v3814
        %v3816 = vand.u32 %v3815, 4294901760
        %3817 = vmatprep.subr.mxu0 %v3816
        %v3818 = vand.u32 %v472, 4294901760
        %v3819 = vsub.f32 %v472, %v3818
        %v3820 = vand.u32 %v3819, 4294901760
        %v3821 = vsub.f32 %v3819, %v3820
        %v3822 = vand.u32 %v3821, 4294901760
        %3823 = vmatpush1.msra.mxu0 %v3822
        %v3824 = vand.u32 %v476, 4294901760
        %v3825 = vsub.f32 %v476, %v3824
        %v3826 = vand.u32 %v3825, 4294901760
        %v3827 = vsub.f32 %v3825, %v3826
        %v3828 = vand.u32 %v3827, 4294901760
        %3829 = vmatprep.subr.mxu0 %v3828
        %v3830 = vand.u32 %v475, 4294901760
        %v3831 = vsub.f32 %v475, %v3830
        %v3832 = vand.u32 %v3831, 4294901760
        %v3833 = vsub.f32 %v3831, %v3832
        %v3834 = vand.u32 %v3833, 4294901760
        %3835 = vmatpush1.msra.mxu0 %v3834
        %v3836 = vand.u32 %v479, 4294901760
        %v3837 = vsub.f32 %v479, %v3836
        %v3838 = vand.u32 %v3837, 4294901760
        %v3839 = vsub.f32 %v3837, %v3838
        %v3840 = vand.u32 %v3839, 4294901760
        %3841 = vmatprep.subr.mxu0 %v3840
        %v3842 = vand.u32 %v478, 4294901760
        %v3843 = vsub.f32 %v478, %v3842
        %v3844 = vand.u32 %v3843, 4294901760
        %v3845 = vsub.f32 %v3843, %v3844
        %v3846 = vand.u32 %v3845, 4294901760
        %3847 = vmatpush1.msra.mxu0 %v3846
        %v3848 = vand.u32 %v482, 4294901760
        %v3849 = vsub.f32 %v482, %v3848
        %v3850 = vand.u32 %v3849, 4294901760
        %v3851 = vsub.f32 %v3849, %v3850
        %v3852 = vand.u32 %v3851, 4294901760
        %3853 = vmatprep.subr.mxu0 %v3852
        %v3854 = vand.u32 %v481, 4294901760
        %v3855 = vsub.f32 %v481, %v3854
        %v3856 = vand.u32 %v3855, 4294901760
        %v3857 = vsub.f32 %v3855, %v3856
        %v3858 = vand.u32 %v3857, 4294901760
        %3859 = vmatpush1.msra.mxu0 %v3858
        %v3860 = vand.u32 %v485, 4294901760
        %v3861 = vsub.f32 %v485, %v3860
        %v3862 = vand.u32 %v3861, 4294901760
        %v3863 = vsub.f32 %v3861, %v3862
        %v3864 = vand.u32 %v3863, 4294901760
        %3865 = vmatprep.subr.mxu0 %v3864
        %v3866 = vand.u32 %v484, 4294901760
        %v3867 = vsub.f32 %v484, %v3866
        %v3868 = vand.u32 %v3867, 4294901760
        %v3869 = vsub.f32 %v3867, %v3868
        %v3870 = vand.u32 %v3869, 4294901760
        %3871 = vmatpush1.msra.mxu0 %v3870
        %3872 = vmatprep.subr.mxu0 0.0
        %3873 = vmatpush1.msra.mxu0 0.0
        %3874 = vmatprep.subr.mxu0 0.0
        %3875 = vmatpush1.msra.mxu0 0.0
        %3876 = vmatprep.subr.mxu0 0.0
        %3877 = vmatpush1.msra.mxu0 0.0
        %3878 = vmatprep.subr.mxu0 0.0
        %3879 = vmatpush1.msra.mxu0 0.0
        %3880 = vmatprep.subr.mxu0 0.0
        %3881 = vmatpush1.msra.mxu0 0.0
        %3882 = vmatprep.subr.mxu0 0.0
        %3883 = vmatpush1.msra.mxu0 0.0
        %3884 = vmatprep.subr.mxu0 0.0
        %3885 = vmatpush1.msra.mxu0 0.0
        %3886 = vmatprep.subr.mxu0 0.0
        %3887 = vmatpush1.msra.mxu0 0.0
        %3888 = vmatprep.subr.mxu0 0.0
        %3889 = vmatpush1.msra.mxu0 0.0
        %3890 = vmatprep.subr.mxu0 0.0
        %3891 = vmatpush1.msra.mxu0 0.0
        %3892 = vmatprep.subr.mxu0 0.0
        %3893 = vmatpush1.msra.mxu0 0.0
        %3894 = vmatprep.subr.mxu0 0.0
        %3895 = vmatpush1.msra.mxu0 0.0
        %3896 = vmatprep.subr.mxu0 0.0
        %3897 = vmatpush1.msra.mxu0 0.0
        %3898 = vmatprep.subr.mxu0 0.0
        %3899 = vmatpush1.msra.mxu0 0.0
        %3900 = vmatprep.subr.mxu0 0.0
        %3901 = vmatpush1.msra.mxu0 0.0
        %3902 = vmatprep.subr.mxu0 0.0
        %3903 = vmatpush1.msra.mxu0 0.0
        %3904 = vmatprep.mubr.f32.mxu0 0.0
        %v3905 = vand.u32 %v3566, 4294901760
        %3906 = vmatmul.mubr.f32.gmra.mrb[0].mxu0 %v3905
        %v3907 = vpop.f32.mrb[0].mxu0
        %v3908 = vadd.f32 %v3676, %v3907
        %v3909 = vpop.f32.mrb[0].mxu0
        %v3910 = vadd.f32 %v3678, %v3909
        %3911 = vdwg.mxu0
        %v3912 = vand.u32 %v440, 4294901760
        %v3913 = vsub.f32 %v440, %v3912
        %3914 = vmatprep.subr.mxu0 %v3913
        %v3915 = vand.u32 %v439, 4294901760
        %v3916 = vsub.f32 %v439, %v3915
        %3917 = vmatpush1.msra.mxu0 %v3916
        %v3918 = vand.u32 %v443, 4294901760
        %v3919 = vsub.f32 %v443, %v3918
        %3920 = vmatprep.subr.mxu0 %v3919
        %v3921 = vand.u32 %v442, 4294901760
        %v3922 = vsub.f32 %v442, %v3921
        %3923 = vmatpush1.msra.mxu0 %v3922
        %v3924 = vand.u32 %v446, 4294901760
        %v3925 = vsub.f32 %v446, %v3924
        %3926 = vmatprep.subr.mxu0 %v3925
        %v3927 = vand.u32 %v445, 4294901760
        %v3928 = vsub.f32 %v445, %v3927
        %3929 = vmatpush1.msra.mxu0 %v3928
        %v3930 = vand.u32 %v449, 4294901760
        %v3931 = vsub.f32 %v449, %v3930
        %3932 = vmatprep.subr.mxu0 %v3931
        %v3933 = vand.u32 %v448, 4294901760
        %v3934 = vsub.f32 %v448, %v3933
        %3935 = vmatpush1.msra.mxu0 %v3934
        %v3936 = vand.u32 %v452, 4294901760
        %v3937 = vsub.f32 %v452, %v3936
        %3938 = vmatprep.subr.mxu0 %v3937
        %v3939 = vand.u32 %v451, 4294901760
        %v3940 = vsub.f32 %v451, %v3939
        %3941 = vmatpush1.msra.mxu0 %v3940
        %v3942 = vand.u32 %v455, 4294901760
        %v3943 = vsub.f32 %v455, %v3942
        %3944 = vmatprep.subr.mxu0 %v3943
        %v3945 = vand.u32 %v454, 4294901760
        %v3946 = vsub.f32 %v454, %v3945
        %3947 = vmatpush1.msra.mxu0 %v3946
        %v3948 = vand.u32 %v458, 4294901760
        %v3949 = vsub.f32 %v458, %v3948
        %3950 = vmatprep.subr.mxu0 %v3949
        %v3951 = vand.u32 %v457, 4294901760
        %v3952 = vsub.f32 %v457, %v3951
        %3953 = vmatpush1.msra.mxu0 %v3952
        %v3954 = vand.u32 %v461, 4294901760
        %v3955 = vsub.f32 %v461, %v3954
        %3956 = vmatprep.subr.mxu0 %v3955
        %v3957 = vand.u32 %v460, 4294901760
        %v3958 = vsub.f32 %v460, %v3957
        %3959 = vmatpush1.msra.mxu0 %v3958
        %v3960 = vand.u32 %v464, 4294901760
        %v3961 = vsub.f32 %v464, %v3960
        %3962 = vmatprep.subr.mxu0 %v3961
        %v3963 = vand.u32 %v463, 4294901760
        %v3964 = vsub.f32 %v463, %v3963
        %3965 = vmatpush1.msra.mxu0 %v3964
        %v3966 = vand.u32 %v467, 4294901760
        %v3967 = vsub.f32 %v467, %v3966
        %3968 = vmatprep.subr.mxu0 %v3967
        %v3969 = vand.u32 %v466, 4294901760
        %v3970 = vsub.f32 %v466, %v3969
        %3971 = vmatpush1.msra.mxu0 %v3970
        %v3972 = vand.u32 %v470, 4294901760
        %v3973 = vsub.f32 %v470, %v3972
        %3974 = vmatprep.subr.mxu0 %v3973
        %v3975 = vand.u32 %v469, 4294901760
        %v3976 = vsub.f32 %v469, %v3975
        %3977 = vmatpush1.msra.mxu0 %v3976
        %v3978 = vand.u32 %v473, 4294901760
        %v3979 = vsub.f32 %v473, %v3978
        %3980 = vmatprep.subr.mxu0 %v3979
        %v3981 = vand.u32 %v472, 4294901760
        %v3982 = vsub.f32 %v472, %v3981
        %3983 = vmatpush1.msra.mxu0 %v3982
        %v3984 = vand.u32 %v476, 4294901760
        %v3985 = vsub.f32 %v476, %v3984
        %3986 = vmatprep.subr.mxu0 %v3985
        %v3987 = vand.u32 %v475, 4294901760
        %v3988 = vsub.f32 %v475, %v3987
        %3989 = vmatpush1.msra.mxu0 %v3988
        %v3990 = vand.u32 %v479, 4294901760
        %v3991 = vsub.f32 %v479, %v3990
        %3992 = vmatprep.subr.mxu0 %v3991
        %v3993 = vand.u32 %v478, 4294901760
        %v3994 = vsub.f32 %v478, %v3993
        %3995 = vmatpush1.msra.mxu0 %v3994
        %v3996 = vand.u32 %v482, 4294901760
        %v3997 = vsub.f32 %v482, %v3996
        %3998 = vmatprep.subr.mxu0 %v3997
        %v3999 = vand.u32 %v481, 4294901760
        %v4000 = vsub.f32 %v481, %v3999
        %4001 = vmatpush1.msra.mxu0 %v4000
        %v4002 = vand.u32 %v485, 4294901760
        %v4003 = vsub.f32 %v485, %v4002
        %4004 = vmatprep.subr.mxu0 %v4003
        %v4005 = vand.u32 %v484, 4294901760
        %v4006 = vsub.f32 %v484, %v4005
        %4007 = vmatpush1.msra.mxu0 %v4006
        %4008 = vmatprep.subr.mxu0 0.0
        %4009 = vmatpush1.msra.mxu0 0.0
        %4010 = vmatprep.subr.mxu0 0.0
        %4011 = vmatpush1.msra.mxu0 0.0
        %4012 = vmatprep.subr.mxu0 0.0
        %4013 = vmatpush1.msra.mxu0 0.0
        %4014 = vmatprep.subr.mxu0 0.0
        %4015 = vmatpush1.msra.mxu0 0.0
        %4016 = vmatprep.subr.mxu0 0.0
        %4017 = vmatpush1.msra.mxu0 0.0
        %4018 = vmatprep.subr.mxu0 0.0
        %4019 = vmatpush1.msra.mxu0 0.0
        %4020 = vmatprep.subr.mxu0 0.0
        %4021 = vmatpush1.msra.mxu0 0.0
        %4022 = vmatprep.subr.mxu0 0.0
        %4023 = vmatpush1.msra.mxu0 0.0
        %4024 = vmatprep.subr.mxu0 0.0
        %4025 = vmatpush1.msra.mxu0 0.0
        %4026 = vmatprep.subr.mxu0 0.0
        %4027 = vmatpush1.msra.mxu0 0.0
        %4028 = vmatprep.subr.mxu0 0.0
        %4029 = vmatpush1.msra.mxu0 0.0
        %4030 = vmatprep.subr.mxu0 0.0
        %4031 = vmatpush1.msra.mxu0 0.0
        %4032 = vmatprep.subr.mxu0 0.0
        %4033 = vmatpush1.msra.mxu0 0.0
        %4034 = vmatprep.subr.mxu0 0.0
        %4035 = vmatpush1.msra.mxu0 0.0
        %4036 = vmatprep.subr.mxu0 0.0
        %4037 = vmatpush1.msra.mxu0 0.0
        %4038 = vmatprep.subr.mxu0 0.0
        %4039 = vmatpush1.msra.mxu0 0.0
        %4040 = vmatprep.mubr.f32.mxu0 0.0
        %v4041 = vand.u32 %v3566, 4294901760
        %v4042 = vsub.f32 %v3566, %v4041
        %4043 = vmatmul.mubr.f32.gmra.mrb[0].mxu0 %v4042
        %v4044 = vpop.f32.mrb[0].mxu0
        %v4045 = vadd.f32 %v3908, %v4044
        %v4046 = vpop.f32.mrb[0].mxu0
        %v4047 = vadd.f32 %v3910, %v4046
        %4048 = vdwg.mxu0
        %v4049 = vand.u32 %v440, 4294901760
        %4050 = vmatprep.subr.mxu0 %v4049
        %v4051 = vand.u32 %v439, 4294901760
        %4052 = vmatpush1.msra.mxu0 %v4051
        %v4053 = vand.u32 %v443, 4294901760
        %4054 = vmatprep.subr.mxu0 %v4053
        %v4055 = vand.u32 %v442, 4294901760
        %4056 = vmatpush1.msra.mxu0 %v4055
        %v4057 = vand.u32 %v446, 4294901760
        %4058 = vmatprep.subr.mxu0 %v4057
        %v4059 = vand.u32 %v445, 4294901760
        %4060 = vmatpush1.msra.mxu0 %v4059
        %v4061 = vand.u32 %v449, 4294901760
        %4062 = vmatprep.subr.mxu0 %v4061
        %v4063 = vand.u32 %v448, 4294901760
        %4064 = vmatpush1.msra.mxu0 %v4063
        %v4065 = vand.u32 %v452, 4294901760
        %4066 = vmatprep.subr.mxu0 %v4065
        %v4067 = vand.u32 %v451, 4294901760
        %4068 = vmatpush1.msra.mxu0 %v4067
        %v4069 = vand.u32 %v455, 4294901760
        %4070 = vmatprep.subr.mxu0 %v4069
        %v4071 = vand.u32 %v454, 4294901760
        %4072 = vmatpush1.msra.mxu0 %v4071
        %v4073 = vand.u32 %v458, 4294901760
        %4074 = vmatprep.subr.mxu0 %v4073
        %v4075 = vand.u32 %v457, 4294901760
        %4076 = vmatpush1.msra.mxu0 %v4075
        %v4077 = vand.u32 %v461, 4294901760
        %4078 = vmatprep.subr.mxu0 %v4077
        %v4079 = vand.u32 %v460, 4294901760
        %4080 = vmatpush1.msra.mxu0 %v4079
        %v4081 = vand.u32 %v464, 4294901760
        %4082 = vmatprep.subr.mxu0 %v4081
        %v4083 = vand.u32 %v463, 4294901760
        %4084 = vmatpush1.msra.mxu0 %v4083
        %v4085 = vand.u32 %v467, 4294901760
        %4086 = vmatprep.subr.mxu0 %v4085
        %v4087 = vand.u32 %v466, 4294901760
        %4088 = vmatpush1.msra.mxu0 %v4087
        %v4089 = vand.u32 %v470, 4294901760
        %4090 = vmatprep.subr.mxu0 %v4089
        %v4091 = vand.u32 %v469, 4294901760
        %4092 = vmatpush1.msra.mxu0 %v4091
        %v4093 = vand.u32 %v473, 4294901760
        %4094 = vmatprep.subr.mxu0 %v4093
        %v4095 = vand.u32 %v472, 4294901760
        %4096 = vmatpush1.msra.mxu0 %v4095
        %v4097 = vand.u32 %v476, 4294901760
        %4098 = vmatprep.subr.mxu0 %v4097
        %v4099 = vand.u32 %v475, 4294901760
        %4100 = vmatpush1.msra.mxu0 %v4099
        %v4101 = vand.u32 %v479, 4294901760
        %4102 = vmatprep.subr.mxu0 %v4101
        %v4103 = vand.u32 %v478, 4294901760
        %4104 = vmatpush1.msra.mxu0 %v4103
        %v4105 = vand.u32 %v482, 4294901760
        %4106 = vmatprep.subr.mxu0 %v4105
        %v4107 = vand.u32 %v481, 4294901760
        %4108 = vmatpush1.msra.mxu0 %v4107
        %v4109 = vand.u32 %v485, 4294901760
        %4110 = vmatprep.subr.mxu0 %v4109
        %v4111 = vand.u32 %v484, 4294901760
        %4112 = vmatpush1.msra.mxu0 %v4111
        %4113 = vmatprep.subr.mxu0 0.0
        %4114 = vmatpush1.msra.mxu0 0.0
        %4115 = vmatprep.subr.mxu0 0.0
        %4116 = vmatpush1.msra.mxu0 0.0
        %4117 = vmatprep.subr.mxu0 0.0
        %4118 = vmatpush1.msra.mxu0 0.0
        %4119 = vmatprep.subr.mxu0 0.0
        %4120 = vmatpush1.msra.mxu0 0.0
        %4121 = vmatprep.subr.mxu0 0.0
        %4122 = vmatpush1.msra.mxu0 0.0
        %4123 = vmatprep.subr.mxu0 0.0
        %4124 = vmatpush1.msra.mxu0 0.0
        %4125 = vmatprep.subr.mxu0 0.0
        %4126 = vmatpush1.msra.mxu0 0.0
        %4127 = vmatprep.subr.mxu0 0.0
        %4128 = vmatpush1.msra.mxu0 0.0
        %4129 = vmatprep.subr.mxu0 0.0
        %4130 = vmatpush1.msra.mxu0 0.0
        %4131 = vmatprep.subr.mxu0 0.0
        %4132 = vmatpush1.msra.mxu0 0.0
        %4133 = vmatprep.subr.mxu0 0.0
        %4134 = vmatpush1.msra.mxu0 0.0
        %4135 = vmatprep.subr.mxu0 0.0
        %4136 = vmatpush1.msra.mxu0 0.0
        %4137 = vmatprep.subr.mxu0 0.0
        %4138 = vmatpush1.msra.mxu0 0.0
        %4139 = vmatprep.subr.mxu0 0.0
        %4140 = vmatpush1.msra.mxu0 0.0
        %4141 = vmatprep.subr.mxu0 0.0
        %4142 = vmatpush1.msra.mxu0 0.0
        %4143 = vmatprep.subr.mxu0 0.0
        %4144 = vmatpush1.msra.mxu0 0.0
        %4145 = vmatprep.mubr.f32.mxu0 0.0
        %v4146 = vand.u32 %v3566, 4294901760
        %v4147 = vsub.f32 %v3566, %v4146
        %v4148 = vand.u32 %v4147, 4294901760
        %4149 = vmatmul.mubr.f32.gmra.mrb[0].mxu0 %v4148
        %v4150 = vpop.f32.mrb[0].mxu0
        %v4151 = vadd.f32 %v4045, %v4150
        %v4152 = vpop.f32.mrb[0].mxu0
        %v4153 = vadd.f32 %v4047, %v4152
        %4154 = vdwg.mxu0
        %v4155 = vand.u32 %v440, 4294901760
        %v4156 = vsub.f32 %v440, %v4155
        %v4157 = vand.u32 %v4156, 4294901760
        %4158 = vmatprep.subr.mxu0 %v4157
        %v4159 = vand.u32 %v439, 4294901760
        %v4160 = vsub.f32 %v439, %v4159
        %v4161 = vand.u32 %v4160, 4294901760
        %4162 = vmatpush1.msra.mxu0 %v4161
        %v4163 = vand.u32 %v443, 4294901760
        %v4164 = vsub.f32 %v443, %v4163
        %v4165 = vand.u32 %v4164, 4294901760
        %4166 = vmatprep.subr.mxu0 %v4165
        %v4167 = vand.u32 %v442, 4294901760
        %v4168 = vsub.f32 %v442, %v4167
        %v4169 = vand.u32 %v4168, 4294901760
        %4170 = vmatpush1.msra.mxu0 %v4169
        %v4171 = vand.u32 %v446, 4294901760
        %v4172 = vsub.f32 %v446, %v4171
        %v4173 = vand.u32 %v4172, 4294901760
        %4174 = vmatprep.subr.mxu0 %v4173
        %v4175 = vand.u32 %v445, 4294901760
        %v4176 = vsub.f32 %v445, %v4175
        %v4177 = vand.u32 %v4176, 4294901760
        %4178 = vmatpush1.msra.mxu0 %v4177
        %v4179 = vand.u32 %v449, 4294901760
        %v4180 = vsub.f32 %v449, %v4179
        %v4181 = vand.u32 %v4180, 4294901760
        %4182 = vmatprep.subr.mxu0 %v4181
        %v4183 = vand.u32 %v448, 4294901760
        %v4184 = vsub.f32 %v448, %v4183
        %v4185 = vand.u32 %v4184, 4294901760
        %4186 = vmatpush1.msra.mxu0 %v4185
        %v4187 = vand.u32 %v452, 4294901760
        %v4188 = vsub.f32 %v452, %v4187
        %v4189 = vand.u32 %v4188, 4294901760
        %4190 = vmatprep.subr.mxu0 %v4189
        %v4191 = vand.u32 %v451, 4294901760
        %v4192 = vsub.f32 %v451, %v4191
        %v4193 = vand.u32 %v4192, 4294901760
        %4194 = vmatpush1.msra.mxu0 %v4193
        %v4195 = vand.u32 %v455, 4294901760
        %v4196 = vsub.f32 %v455, %v4195
        %v4197 = vand.u32 %v4196, 4294901760
        %4198 = vmatprep.subr.mxu0 %v4197
        %v4199 = vand.u32 %v454, 4294901760
        %v4200 = vsub.f32 %v454, %v4199
        %v4201 = vand.u32 %v4200, 4294901760
        %4202 = vmatpush1.msra.mxu0 %v4201
        %v4203 = vand.u32 %v458, 4294901760
        %v4204 = vsub.f32 %v458, %v4203
        %v4205 = vand.u32 %v4204, 4294901760
        %4206 = vmatprep.subr.mxu0 %v4205
        %v4207 = vand.u32 %v457, 4294901760
        %v4208 = vsub.f32 %v457, %v4207
        %v4209 = vand.u32 %v4208, 4294901760
        %4210 = vmatpush1.msra.mxu0 %v4209
        %v4211 = vand.u32 %v461, 4294901760
        %v4212 = vsub.f32 %v461, %v4211
        %v4213 = vand.u32 %v4212, 4294901760
        %4214 = vmatprep.subr.mxu0 %v4213
        %v4215 = vand.u32 %v460, 4294901760
        %v4216 = vsub.f32 %v460, %v4215
        %v4217 = vand.u32 %v4216, 4294901760
        %4218 = vmatpush1.msra.mxu0 %v4217
        %v4219 = vand.u32 %v464, 4294901760
        %v4220 = vsub.f32 %v464, %v4219
        %v4221 = vand.u32 %v4220, 4294901760
        %4222 = vmatprep.subr.mxu0 %v4221
        %v4223 = vand.u32 %v463, 4294901760
        %v4224 = vsub.f32 %v463, %v4223
        %v4225 = vand.u32 %v4224, 4294901760
        %4226 = vmatpush1.msra.mxu0 %v4225
        %v4227 = vand.u32 %v467, 4294901760
        %v4228 = vsub.f32 %v467, %v4227
        %v4229 = vand.u32 %v4228, 4294901760
        %4230 = vmatprep.subr.mxu0 %v4229
        %v4231 = vand.u32 %v466, 4294901760
        %v4232 = vsub.f32 %v466, %v4231
        %v4233 = vand.u32 %v4232, 4294901760
        %4234 = vmatpush1.msra.mxu0 %v4233
        %v4235 = vand.u32 %v470, 4294901760
        %v4236 = vsub.f32 %v470, %v4235
        %v4237 = vand.u32 %v4236, 4294901760
        %4238 = vmatprep.subr.mxu0 %v4237
        %v4239 = vand.u32 %v469, 4294901760
        %v4240 = vsub.f32 %v469, %v4239
        %v4241 = vand.u32 %v4240, 4294901760
        %4242 = vmatpush1.msra.mxu0 %v4241
        %v4243 = vand.u32 %v473, 4294901760
        %v4244 = vsub.f32 %v473, %v4243
        %v4245 = vand.u32 %v4244, 4294901760
        %4246 = vmatprep.subr.mxu0 %v4245
        %v4247 = vand.u32 %v472, 4294901760
        %v4248 = vsub.f32 %v472, %v4247
        %v4249 = vand.u32 %v4248, 4294901760
        %4250 = vmatpush1.msra.mxu0 %v4249
        %v4251 = vand.u32 %v476, 4294901760
        %v4252 = vsub.f32 %v476, %v4251
        %v4253 = vand.u32 %v4252, 4294901760
        %4254 = vmatprep.subr.mxu0 %v4253
        %v4255 = vand.u32 %v475, 4294901760
        %v4256 = vsub.f32 %v475, %v4255
        %v4257 = vand.u32 %v4256, 4294901760
        %4258 = vmatpush1.msra.mxu0 %v4257
        %v4259 = vand.u32 %v479, 4294901760
        %v4260 = vsub.f32 %v479, %v4259
        %v4261 = vand.u32 %v4260, 4294901760
        %4262 = vmatprep.subr.mxu0 %v4261
        %v4263 = vand.u32 %v478, 4294901760
        %v4264 = vsub.f32 %v478, %v4263
        %v4265 = vand.u32 %v4264, 4294901760
        %4266 = vmatpush1.msra.mxu0 %v4265
        %v4267 = vand.u32 %v482, 4294901760
        %v4268 = vsub.f32 %v482, %v4267
        %v4269 = vand.u32 %v4268, 4294901760
        %4270 = vmatprep.subr.mxu0 %v4269
        %v4271 = vand.u32 %v481, 4294901760
        %v4272 = vsub.f32 %v481, %v4271
        %v4273 = vand.u32 %v4272, 4294901760
        %4274 = vmatpush1.msra.mxu0 %v4273
        %v4275 = vand.u32 %v485, 4294901760
        %v4276 = vsub.f32 %v485, %v4275
        %v4277 = vand.u32 %v4276, 4294901760
        %4278 = vmatprep.subr.mxu0 %v4277
        %v4279 = vand.u32 %v484, 4294901760
        %v4280 = vsub.f32 %v484, %v4279
        %v4281 = vand.u32 %v4280, 4294901760
        %4282 = vmatpush1.msra.mxu0 %v4281
        %4283 = vmatprep.subr.mxu0 0.0
        %4284 = vmatpush1.msra.mxu0 0.0
        %4285 = vmatprep.subr.mxu0 0.0
        %4286 = vmatpush1.msra.mxu0 0.0
        %4287 = vmatprep.subr.mxu0 0.0
        %4288 = vmatpush1.msra.mxu0 0.0
        %4289 = vmatprep.subr.mxu0 0.0
        %4290 = vmatpush1.msra.mxu0 0.0
        %4291 = vmatprep.subr.mxu0 0.0
        %4292 = vmatpush1.msra.mxu0 0.0
        %4293 = vmatprep.subr.mxu0 0.0
        %4294 = vmatpush1.msra.mxu0 0.0
        %4295 = vmatprep.subr.mxu0 0.0
        %4296 = vmatpush1.msra.mxu0 0.0
        %4297 = vmatprep.subr.mxu0 0.0
        %4298 = vmatpush1.msra.mxu0 0.0
        %4299 = vmatprep.subr.mxu0 0.0
        %4300 = vmatpush1.msra.mxu0 0.0
        %4301 = vmatprep.subr.mxu0 0.0
        %4302 = vmatpush1.msra.mxu0 0.0
        %4303 = vmatprep.subr.mxu0 0.0
        %4304 = vmatpush1.msra.mxu0 0.0
        %4305 = vmatprep.subr.mxu0 0.0
        %4306 = vmatpush1.msra.mxu0 0.0
        %4307 = vmatprep.subr.mxu0 0.0
        %4308 = vmatpush1.msra.mxu0 0.0
        %4309 = vmatprep.subr.mxu0 0.0
        %4310 = vmatpush1.msra.mxu0 0.0
        %4311 = vmatprep.subr.mxu0 0.0
        %4312 = vmatpush1.msra.mxu0 0.0
        %4313 = vmatprep.subr.mxu0 0.0
        %4314 = vmatpush1.msra.mxu0 0.0
        %4315 = vmatprep.mubr.f32.mxu0 0.0
        %v4316 = vand.u32 %v3566, 4294901760
        %4317 = vmatmul.mubr.f32.gmra.mrb[0].mxu0 %v4316
        %v4318 = vpop.f32.mrb[0].mxu0
        %v4319 = vadd.f32 %v4151, %v4318
        %v4320 = vpop.f32.mrb[0].mxu0
        %v4321 = vadd.f32 %v4153, %v4320
        %4322 = vdwg.mxu0
        %v4323 = vand.u32 %v440, 4294901760
        %4324 = vmatprep.subr.mxu0 %v4323
        %v4325 = vand.u32 %v439, 4294901760
        %4326 = vmatpush1.msra.mxu0 %v4325
        %v4327 = vand.u32 %v443, 4294901760
        %4328 = vmatprep.subr.mxu0 %v4327
        %v4329 = vand.u32 %v442, 4294901760
        %4330 = vmatpush1.msra.mxu0 %v4329
        %v4331 = vand.u32 %v446, 4294901760
        %4332 = vmatprep.subr.mxu0 %v4331
        %v4333 = vand.u32 %v445, 4294901760
        %4334 = vmatpush1.msra.mxu0 %v4333
        %v4335 = vand.u32 %v449, 4294901760
        %4336 = vmatprep.subr.mxu0 %v4335
        %v4337 = vand.u32 %v448, 4294901760
        %4338 = vmatpush1.msra.mxu0 %v4337
        %v4339 = vand.u32 %v452, 4294901760
        %4340 = vmatprep.subr.mxu0 %v4339
        %v4341 = vand.u32 %v451, 4294901760
        %4342 = vmatpush1.msra.mxu0 %v4341
        %v4343 = vand.u32 %v455, 4294901760
        %4344 = vmatprep.subr.mxu0 %v4343
        %v4345 = vand.u32 %v454, 4294901760
        %4346 = vmatpush1.msra.mxu0 %v4345
        %v4347 = vand.u32 %v458, 4294901760
        %4348 = vmatprep.subr.mxu0 %v4347
        %v4349 = vand.u32 %v457, 4294901760
        %4350 = vmatpush1.msra.mxu0 %v4349
        %v4351 = vand.u32 %v461, 4294901760
        %4352 = vmatprep.subr.mxu0 %v4351
        %v4353 = vand.u32 %v460, 4294901760
        %4354 = vmatpush1.msra.mxu0 %v4353
        %v4355 = vand.u32 %v464, 4294901760
        %4356 = vmatprep.subr.mxu0 %v4355
        %v4357 = vand.u32 %v463, 4294901760
        %4358 = vmatpush1.msra.mxu0 %v4357
        %v4359 = vand.u32 %v467, 4294901760
        %4360 = vmatprep.subr.mxu0 %v4359
        %v4361 = vand.u32 %v466, 4294901760
        %4362 = vmatpush1.msra.mxu0 %v4361
        %v4363 = vand.u32 %v470, 4294901760
        %4364 = vmatprep.subr.mxu0 %v4363
        %v4365 = vand.u32 %v469, 4294901760
        %4366 = vmatpush1.msra.mxu0 %v4365
        %v4367 = vand.u32 %v473, 4294901760
        %4368 = vmatprep.subr.mxu0 %v4367
        %v4369 = vand.u32 %v472, 4294901760
        %4370 = vmatpush1.msra.mxu0 %v4369
        %v4371 = vand.u32 %v476, 4294901760
        %4372 = vmatprep.subr.mxu0 %v4371
        %v4373 = vand.u32 %v475, 4294901760
        %4374 = vmatpush1.msra.mxu0 %v4373
        %v4375 = vand.u32 %v479, 4294901760
        %4376 = vmatprep.subr.mxu0 %v4375
        %v4377 = vand.u32 %v478, 4294901760
        %4378 = vmatpush1.msra.mxu0 %v4377
        %v4379 = vand.u32 %v482, 4294901760
        %4380 = vmatprep.subr.mxu0 %v4379
        %v4381 = vand.u32 %v481, 4294901760
        %4382 = vmatpush1.msra.mxu0 %v4381
        %v4383 = vand.u32 %v485, 4294901760
        %4384 = vmatprep.subr.mxu0 %v4383
        %v4385 = vand.u32 %v484, 4294901760
        %4386 = vmatpush1.msra.mxu0 %v4385
        %4387 = vmatprep.subr.mxu0 0.0
        %4388 = vmatpush1.msra.mxu0 0.0
        %4389 = vmatprep.subr.mxu0 0.0
        %4390 = vmatpush1.msra.mxu0 0.0
        %4391 = vmatprep.subr.mxu0 0.0
        %4392 = vmatpush1.msra.mxu0 0.0
        %4393 = vmatprep.subr.mxu0 0.0
        %4394 = vmatpush1.msra.mxu0 0.0
        %4395 = vmatprep.subr.mxu0 0.0
        %4396 = vmatpush1.msra.mxu0 0.0
        %4397 = vmatprep.subr.mxu0 0.0
        %4398 = vmatpush1.msra.mxu0 0.0
        %4399 = vmatprep.subr.mxu0 0.0
        %4400 = vmatpush1.msra.mxu0 0.0
        %4401 = vmatprep.subr.mxu0 0.0
        %4402 = vmatpush1.msra.mxu0 0.0
        %4403 = vmatprep.subr.mxu0 0.0
        %4404 = vmatpush1.msra.mxu0 0.0
        %4405 = vmatprep.subr.mxu0 0.0
        %4406 = vmatpush1.msra.mxu0 0.0
        %4407 = vmatprep.subr.mxu0 0.0
        %4408 = vmatpush1.msra.mxu0 0.0
        %4409 = vmatprep.subr.mxu0 0.0
        %4410 = vmatpush1.msra.mxu0 0.0
        %4411 = vmatprep.subr.mxu0 0.0
        %4412 = vmatpush1.msra.mxu0 0.0
        %4413 = vmatprep.subr.mxu0 0.0
        %4414 = vmatpush1.msra.mxu0 0.0
        %4415 = vmatprep.subr.mxu0 0.0
        %4416 = vmatpush1.msra.mxu0 0.0
        %4417 = vmatprep.subr.mxu0 0.0
        %4418 = vmatpush1.msra.mxu0 0.0
        %4419 = vmatprep.mubr.f32.mxu0 0.0
        %v4420 = vand.u32 %v3566, 4294901760
        %4421 = vmatmul.mubr.f32.gmra.mrb[0].mxu0 %v4420
        %v4422 = vpop.f32.mrb[0].mxu0
        %v4423 = vadd.f32 %v4319, %v4422
        %v4424 = vpop.f32.mrb[0].mxu0
        %v4425 = vadd.f32 %v4321, %v4424
        %4426 = vdwg.mxu0
        %4427 = vmatprep.subr.mxu0 0.0
        %v4428 = vand.u32 %v441, 4294901760
        %4429 = vmatpush1.msra.mxu0 %v4428
        %4430 = vmatprep.subr.mxu0 0.0
        %v4431 = vand.u32 %v444, 4294901760
        %4432 = vmatpush1.msra.mxu0 %v4431
        %4433 = vmatprep.subr.mxu0 0.0
        %v4434 = vand.u32 %v447, 4294901760
        %4435 = vmatpush1.msra.mxu0 %v4434
        %4436 = vmatprep.subr.mxu0 0.0
        %v4437 = vand.u32 %v450, 4294901760
        %4438 = vmatpush1.msra.mxu0 %v4437
        %4439 = vmatprep.subr.mxu0 0.0
        %v4440 = vand.u32 %v453, 4294901760
        %4441 = vmatpush1.msra.mxu0 %v4440
        %4442 = vmatprep.subr.mxu0 0.0
        %v4443 = vand.u32 %v456, 4294901760
        %4444 = vmatpush1.msra.mxu0 %v4443
        %4445 = vmatprep.subr.mxu0 0.0
        %v4446 = vand.u32 %v459, 4294901760
        %4447 = vmatpush1.msra.mxu0 %v4446
        %4448 = vmatprep.subr.mxu0 0.0
        %v4449 = vand.u32 %v462, 4294901760
        %4450 = vmatpush1.msra.mxu0 %v4449
        %4451 = vmatprep.subr.mxu0 0.0
        %v4452 = vand.u32 %v465, 4294901760
        %4453 = vmatpush1.msra.mxu0 %v4452
        %4454 = vmatprep.subr.mxu0 0.0
        %v4455 = vand.u32 %v468, 4294901760
        %4456 = vmatpush1.msra.mxu0 %v4455
        %4457 = vmatprep.subr.mxu0 0.0
        %v4458 = vand.u32 %v471, 4294901760
        %4459 = vmatpush1.msra.mxu0 %v4458
        %4460 = vmatprep.subr.mxu0 0.0
        %v4461 = vand.u32 %v474, 4294901760
        %4462 = vmatpush1.msra.mxu0 %v4461
        %4463 = vmatprep.subr.mxu0 0.0
        %v4464 = vand.u32 %v477, 4294901760
        %4465 = vmatpush1.msra.mxu0 %v4464
        %4466 = vmatprep.subr.mxu0 0.0
        %v4467 = vand.u32 %v480, 4294901760
        %4468 = vmatpush1.msra.mxu0 %v4467
        %4469 = vmatprep.subr.mxu0 0.0
        %v4470 = vand.u32 %v483, 4294901760
        %4471 = vmatpush1.msra.mxu0 %v4470
        %4472 = vmatprep.subr.mxu0 0.0
        %v4473 = vand.u32 %v486, 4294901760
        %4474 = vmatpush1.msra.mxu0 %v4473
        %4475 = vmatprep.subr.mxu0 0.0
        %4476 = vmatpush1.msra.mxu0 0.0
        %4477 = vmatprep.subr.mxu0 0.0
        %4478 = vmatpush1.msra.mxu0 0.0
        %4479 = vmatprep.subr.mxu0 0.0
        %4480 = vmatpush1.msra.mxu0 0.0
        %4481 = vmatprep.subr.mxu0 0.0
        %4482 = vmatpush1.msra.mxu0 0.0
        %4483 = vmatprep.subr.mxu0 0.0
        %4484 = vmatpush1.msra.mxu0 0.0
        %4485 = vmatprep.subr.mxu0 0.0
        %4486 = vmatpush1.msra.mxu0 0.0
        %4487 = vmatprep.subr.mxu0 0.0
        %4488 = vmatpush1.msra.mxu0 0.0
        %4489 = vmatprep.subr.mxu0 0.0
        %4490 = vmatpush1.msra.mxu0 0.0
        %4491 = vmatprep.subr.mxu0 0.0
        %4492 = vmatpush1.msra.mxu0 0.0
        %4493 = vmatprep.subr.mxu0 0.0
        %4494 = vmatpush1.msra.mxu0 0.0
        %4495 = vmatprep.subr.mxu0 0.0
        %4496 = vmatpush1.msra.mxu0 0.0
        %4497 = vmatprep.subr.mxu0 0.0
        %4498 = vmatpush1.msra.mxu0 0.0
        %4499 = vmatprep.subr.mxu0 0.0
        %4500 = vmatpush1.msra.mxu0 0.0
        %4501 = vmatprep.subr.mxu0 0.0
        %4502 = vmatpush1.msra.mxu0 0.0
        %4503 = vmatprep.subr.mxu0 0.0
        %4504 = vmatpush1.msra.mxu0 0.0
        %4505 = vmatprep.subr.mxu0 0.0
        %4506 = vmatpush1.msra.mxu0 0.0
        %4507 = vmatprep.mubr.f32.mxu0 0.0
        %v4508 = vand.u32 %v3566, 4294901760
        %v4509 = vsub.f32 %v3566, %v4508
        %v4510 = vand.u32 %v4509, 4294901760
        %v4511 = vsub.f32 %v4509, %v4510
        %v4512 = vand.u32 %v4511, 4294901760
        %4513 = vmatmul.mubr.f32.gmra.mrb[0].mxu0 %v4512
        %v4514 = vpop.f32.mrb[0].mxu0
        %v4515 = vadd.f32 %v500, %v4514
        %v4516 = vpop.f32.mrb[0].mxu0
        %4517 = vdwg.mxu0
        %4518 = vmatprep.subr.mxu0 0.0
        %v4519 = vand.u32 %v441, 4294901760
        %v4520 = vsub.f32 %v441, %v4519
        %v4521 = vand.u32 %v4520, 4294901760
        %v4522 = vsub.f32 %v4520, %v4521
        %v4523 = vand.u32 %v4522, 4294901760
        %4524 = vmatpush1.msra.mxu0 %v4523
        %4525 = vmatprep.subr.mxu0 0.0
        %v4526 = vand.u32 %v444, 4294901760
        %v4527 = vsub.f32 %v444, %v4526
        %v4528 = vand.u32 %v4527, 4294901760
        %v4529 = vsub.f32 %v4527, %v4528
        %v4530 = vand.u32 %v4529, 4294901760
        %4531 = vmatpush1.msra.mxu0 %v4530
        %4532 = vmatprep.subr.mxu0 0.0
        %v4533 = vand.u32 %v447, 4294901760
        %v4534 = vsub.f32 %v447, %v4533
        %v4535 = vand.u32 %v4534, 4294901760
        %v4536 = vsub.f32 %v4534, %v4535
        %v4537 = vand.u32 %v4536, 4294901760
        %4538 = vmatpush1.msra.mxu0 %v4537
        %4539 = vmatprep.subr.mxu0 0.0
        %v4540 = vand.u32 %v450, 4294901760
        %v4541 = vsub.f32 %v450, %v4540
        %v4542 = vand.u32 %v4541, 4294901760
        %v4543 = vsub.f32 %v4541, %v4542
        %v4544 = vand.u32 %v4543, 4294901760
        %4545 = vmatpush1.msra.mxu0 %v4544
        %4546 = vmatprep.subr.mxu0 0.0
        %v4547 = vand.u32 %v453, 4294901760
        %v4548 = vsub.f32 %v453, %v4547
        %v4549 = vand.u32 %v4548, 4294901760
        %v4550 = vsub.f32 %v4548, %v4549
        %v4551 = vand.u32 %v4550, 4294901760
        %4552 = vmatpush1.msra.mxu0 %v4551
        %4553 = vmatprep.subr.mxu0 0.0
        %v4554 = vand.u32 %v456, 4294901760
        %v4555 = vsub.f32 %v456, %v4554
        %v4556 = vand.u32 %v4555, 4294901760
        %v4557 = vsub.f32 %v4555, %v4556
        %v4558 = vand.u32 %v4557, 4294901760
        %4559 = vmatpush1.msra.mxu0 %v4558
        %4560 = vmatprep.subr.mxu0 0.0
        %v4561 = vand.u32 %v459, 4294901760
        %v4562 = vsub.f32 %v459, %v4561
        %v4563 = vand.u32 %v4562, 4294901760
        %v4564 = vsub.f32 %v4562, %v4563
        %v4565 = vand.u32 %v4564, 4294901760
        %4566 = vmatpush1.msra.mxu0 %v4565
        %4567 = vmatprep.subr.mxu0 0.0
        %v4568 = vand.u32 %v462, 4294901760
        %v4569 = vsub.f32 %v462, %v4568
        %v4570 = vand.u32 %v4569, 4294901760
        %v4571 = vsub.f32 %v4569, %v4570
        %v4572 = vand.u32 %v4571, 4294901760
        %4573 = vmatpush1.msra.mxu0 %v4572
        %4574 = vmatprep.subr.mxu0 0.0
        %v4575 = vand.u32 %v465, 4294901760
        %v4576 = vsub.f32 %v465, %v4575
        %v4577 = vand.u32 %v4576, 4294901760
        %v4578 = vsub.f32 %v4576, %v4577
        %v4579 = vand.u32 %v4578, 4294901760
        %4580 = vmatpush1.msra.mxu0 %v4579
        %4581 = vmatprep.subr.mxu0 0.0
        %v4582 = vand.u32 %v468, 4294901760
        %v4583 = vsub.f32 %v468, %v4582
        %v4584 = vand.u32 %v4583, 4294901760
        %v4585 = vsub.f32 %v4583, %v4584
        %v4586 = vand.u32 %v4585, 4294901760
        %4587 = vmatpush1.msra.mxu0 %v4586
        %4588 = vmatprep.subr.mxu0 0.0
        %v4589 = vand.u32 %v471, 4294901760
        %v4590 = vsub.f32 %v471, %v4589
        %v4591 = vand.u32 %v4590, 4294901760
        %v4592 = vsub.f32 %v4590, %v4591
        %v4593 = vand.u32 %v4592, 4294901760
        %4594 = vmatpush1.msra.mxu0 %v4593
        %4595 = vmatprep.subr.mxu0 0.0
        %v4596 = vand.u32 %v474, 4294901760
        %v4597 = vsub.f32 %v474, %v4596
        %v4598 = vand.u32 %v4597, 4294901760
        %v4599 = vsub.f32 %v4597, %v4598
        %v4600 = vand.u32 %v4599, 4294901760
        %4601 = vmatpush1.msra.mxu0 %v4600
        %4602 = vmatprep.subr.mxu0 0.0
        %v4603 = vand.u32 %v477, 4294901760
        %v4604 = vsub.f32 %v477, %v4603
        %v4605 = vand.u32 %v4604, 4294901760
        %v4606 = vsub.f32 %v4604, %v4605
        %v4607 = vand.u32 %v4606, 4294901760
        %4608 = vmatpush1.msra.mxu0 %v4607
        %4609 = vmatprep.subr.mxu0 0.0
        %v4610 = vand.u32 %v480, 4294901760
        %v4611 = vsub.f32 %v480, %v4610
        %v4612 = vand.u32 %v4611, 4294901760
        %v4613 = vsub.f32 %v4611, %v4612
        %v4614 = vand.u32 %v4613, 4294901760
        %4615 = vmatpush1.msra.mxu0 %v4614
        %4616 = vmatprep.subr.mxu0 0.0
        %v4617 = vand.u32 %v483, 4294901760
        %v4618 = vsub.f32 %v483, %v4617
        %v4619 = vand.u32 %v4618, 4294901760
        %v4620 = vsub.f32 %v4618, %v4619
        %v4621 = vand.u32 %v4620, 4294901760
        %4622 = vmatpush1.msra.mxu0 %v4621
        %4623 = vmatprep.subr.mxu0 0.0
        %v4624 = vand.u32 %v486, 4294901760
        %v4625 = vsub.f32 %v486, %v4624
        %v4626 = vand.u32 %v4625, 4294901760
        %v4627 = vsub.f32 %v4625, %v4626
        %v4628 = vand.u32 %v4627, 4294901760
        %4629 = vmatpush1.msra.mxu0 %v4628
        %4630 = vmatprep.subr.mxu0 0.0
        %4631 = vmatpush1.msra.mxu0 0.0
        %4632 = vmatprep.subr.mxu0 0.0
        %4633 = vmatpush1.msra.mxu0 0.0
        %4634 = vmatprep.subr.mxu0 0.0
        %4635 = vmatpush1.msra.mxu0 0.0
        %4636 = vmatprep.subr.mxu0 0.0
        %4637 = vmatpush1.msra.mxu0 0.0
        %4638 = vmatprep.subr.mxu0 0.0
        %4639 = vmatpush1.msra.mxu0 0.0
        %4640 = vmatprep.subr.mxu0 0.0
        %4641 = vmatpush1.msra.mxu0 0.0
        %4642 = vmatprep.subr.mxu0 0.0
        %4643 = vmatpush1.msra.mxu0 0.0
        %4644 = vmatprep.subr.mxu0 0.0
        %4645 = vmatpush1.msra.mxu0 0.0
        %4646 = vmatprep.subr.mxu0 0.0
        %4647 = vmatpush1.msra.mxu0 0.0
        %4648 = vmatprep.subr.mxu0 0.0
        %4649 = vmatpush1.msra.mxu0 0.0
        %4650 = vmatprep.subr.mxu0 0.0
        %4651 = vmatpush1.msra.mxu0 0.0
        %4652 = vmatprep.subr.mxu0 0.0
        %4653 = vmatpush1.msra.mxu0 0.0
        %4654 = vmatprep.subr.mxu0 0.0
        %4655 = vmatpush1.msra.mxu0 0.0
        %4656 = vmatprep.subr.mxu0 0.0
        %4657 = vmatpush1.msra.mxu0 0.0
        %4658 = vmatprep.subr.mxu0 0.0
        %4659 = vmatpush1.msra.mxu0 0.0
        %4660 = vmatprep.subr.mxu0 0.0
        %4661 = vmatpush1.msra.mxu0 0.0
        %4662 = vmatprep.mubr.f32.mxu0 0.0
        %v4663 = vand.u32 %v3566, 4294901760
        %4664 = vmatmul.mubr.f32.gmra.mrb[0].mxu0 %v4663
        %v4665 = vpop.f32.mrb[0].mxu0
        %v4666 = vadd.f32 %v4515, %v4665
        %v4667 = vpop.f32.mrb[0].mxu0
        %4668 = vdwg.mxu0
        %4669 = vmatprep.subr.mxu0 0.0
        %v4670 = vand.u32 %v441, 4294901760
        %v4671 = vsub.f32 %v441, %v4670
        %4672 = vmatpush1.msra.mxu0 %v4671
        %4673 = vmatprep.subr.mxu0 0.0
        %v4674 = vand.u32 %v444, 4294901760
        %v4675 = vsub.f32 %v444, %v4674
        %4676 = vmatpush1.msra.mxu0 %v4675
        %4677 = vmatprep.subr.mxu0 0.0
        %v4678 = vand.u32 %v447, 4294901760
        %v4679 = vsub.f32 %v447, %v4678
        %4680 = vmatpush1.msra.mxu0 %v4679
        %4681 = vmatprep.subr.mxu0 0.0
        %v4682 = vand.u32 %v450, 4294901760
        %v4683 = vsub.f32 %v450, %v4682
        %4684 = vmatpush1.msra.mxu0 %v4683
        %4685 = vmatprep.subr.mxu0 0.0
        %v4686 = vand.u32 %v453, 4294901760
        %v4687 = vsub.f32 %v453, %v4686
        %4688 = vmatpush1.msra.mxu0 %v4687
        %4689 = vmatprep.subr.mxu0 0.0
        %v4690 = vand.u32 %v456, 4294901760
        %v4691 = vsub.f32 %v456, %v4690
        %4692 = vmatpush1.msra.mxu0 %v4691
        %4693 = vmatprep.subr.mxu0 0.0
        %v4694 = vand.u32 %v459, 4294901760
        %v4695 = vsub.f32 %v459, %v4694
        %4696 = vmatpush1.msra.mxu0 %v4695
        %4697 = vmatprep.subr.mxu0 0.0
        %v4698 = vand.u32 %v462, 4294901760
        %v4699 = vsub.f32 %v462, %v4698
        %4700 = vmatpush1.msra.mxu0 %v4699
        %4701 = vmatprep.subr.mxu0 0.0
        %v4702 = vand.u32 %v465, 4294901760
        %v4703 = vsub.f32 %v465, %v4702
        %4704 = vmatpush1.msra.mxu0 %v4703
        %4705 = vmatprep.subr.mxu0 0.0
        %v4706 = vand.u32 %v468, 4294901760
        %v4707 = vsub.f32 %v468, %v4706
        %4708 = vmatpush1.msra.mxu0 %v4707
        %4709 = vmatprep.subr.mxu0 0.0
        %v4710 = vand.u32 %v471, 4294901760
        %v4711 = vsub.f32 %v471, %v4710
        %4712 = vmatpush1.msra.mxu0 %v4711
        %4713 = vmatprep.subr.mxu0 0.0
        %v4714 = vand.u32 %v474, 4294901760
        %v4715 = vsub.f32 %v474, %v4714
        %4716 = vmatpush1.msra.mxu0 %v4715
        %4717 = vmatprep.subr.mxu0 0.0
        %v4718 = vand.u32 %v477, 4294901760
        %v4719 = vsub.f32 %v477, %v4718
        %4720 = vmatpush1.msra.mxu0 %v4719
        %4721 = vmatprep.subr.mxu0 0.0
        %v4722 = vand.u32 %v480, 4294901760
        %v4723 = vsub.f32 %v480, %v4722
        %4724 = vmatpush1.msra.mxu0 %v4723
        %4725 = vmatprep.subr.mxu0 0.0
        %v4726 = vand.u32 %v483, 4294901760
        %v4727 = vsub.f32 %v483, %v4726
        %4728 = vmatpush1.msra.mxu0 %v4727
        %4729 = vmatprep.subr.mxu0 0.0
        %v4730 = vand.u32 %v486, 4294901760
        %v4731 = vsub.f32 %v486, %v4730
        %4732 = vmatpush1.msra.mxu0 %v4731
        %4733 = vmatprep.subr.mxu0 0.0
        %4734 = vmatpush1.msra.mxu0 0.0
        %4735 = vmatprep.subr.mxu0 0.0
        %4736 = vmatpush1.msra.mxu0 0.0
        %4737 = vmatprep.subr.mxu0 0.0
        %4738 = vmatpush1.msra.mxu0 0.0
        %4739 = vmatprep.subr.mxu0 0.0
        %4740 = vmatpush1.msra.mxu0 0.0
        %4741 = vmatprep.subr.mxu0 0.0
        %4742 = vmatpush1.msra.mxu0 0.0
        %4743 = vmatprep.subr.mxu0 0.0
        %4744 = vmatpush1.msra.mxu0 0.0
        %4745 = vmatprep.subr.mxu0 0.0
        %4746 = vmatpush1.msra.mxu0 0.0
        %4747 = vmatprep.subr.mxu0 0.0
        %4748 = vmatpush1.msra.mxu0 0.0
        %4749 = vmatprep.subr.mxu0 0.0
        %4750 = vmatpush1.msra.mxu0 0.0
        %4751 = vmatprep.subr.mxu0 0.0
        %4752 = vmatpush1.msra.mxu0 0.0
        %4753 = vmatprep.subr.mxu0 0.0
        %4754 = vmatpush1.msra.mxu0 0.0
        %4755 = vmatprep.subr.mxu0 0.0
        %4756 = vmatpush1.msra.mxu0 0.0
        %4757 = vmatprep.subr.mxu0 0.0
        %4758 = vmatpush1.msra.mxu0 0.0
        %4759 = vmatprep.subr.mxu0 0.0
        %4760 = vmatpush1.msra.mxu0 0.0
        %4761 = vmatprep.subr.mxu0 0.0
        %4762 = vmatpush1.msra.mxu0 0.0
        %4763 = vmatprep.subr.mxu0 0.0
        %4764 = vmatpush1.msra.mxu0 0.0
        %4765 = vmatprep.mubr.f32.mxu0 0.0
        %v4766 = vand.u32 %v3566, 4294901760
        %v4767 = vsub.f32 %v3566, %v4766
        %4768 = vmatmul.mubr.f32.gmra.mrb[0].mxu0 %v4767
        %v4769 = vpop.f32.mrb[0].mxu0
        %v4770 = vadd.f32 %v4666, %v4769
        %v4771 = vpop.f32.mrb[0].mxu0
        %4772 = vdwg.mxu0
        %4773 = vmatprep.subr.mxu0 0.0
        %v4774 = vand.u32 %v441, 4294901760
        %4775 = vmatpush1.msra.mxu0 %v4774
        %4776 = vmatprep.subr.mxu0 0.0
        %v4777 = vand.u32 %v444, 4294901760
        %4778 = vmatpush1.msra.mxu0 %v4777
        %4779 = vmatprep.subr.mxu0 0.0
        %v4780 = vand.u32 %v447, 4294901760
        %4781 = vmatpush1.msra.mxu0 %v4780
        %4782 = vmatprep.subr.mxu0 0.0
        %v4783 = vand.u32 %v450, 4294901760
        %4784 = vmatpush1.msra.mxu0 %v4783
        %4785 = vmatprep.subr.mxu0 0.0
        %v4786 = vand.u32 %v453, 4294901760
        %4787 = vmatpush1.msra.mxu0 %v4786
        %4788 = vmatprep.subr.mxu0 0.0
        %v4789 = vand.u32 %v456, 4294901760
        %4790 = vmatpush1.msra.mxu0 %v4789
        %4791 = vmatprep.subr.mxu0 0.0
        %v4792 = vand.u32 %v459, 4294901760
        %4793 = vmatpush1.msra.mxu0 %v4792
        %4794 = vmatprep.subr.mxu0 0.0
        %v4795 = vand.u32 %v462, 4294901760
        %4796 = vmatpush1.msra.mxu0 %v4795
        %4797 = vmatprep.subr.mxu0 0.0
        %v4798 = vand.u32 %v465, 4294901760
        %4799 = vmatpush1.msra.mxu0 %v4798
        %4800 = vmatprep.subr.mxu0 0.0
        %v4801 = vand.u32 %v468, 4294901760
        %4802 = vmatpush1.msra.mxu0 %v4801
        %4803 = vmatprep.subr.mxu0 0.0
        %v4804 = vand.u32 %v471, 4294901760
        %4805 = vmatpush1.msra.mxu0 %v4804
        %4806 = vmatprep.subr.mxu0 0.0
        %v4807 = vand.u32 %v474, 4294901760
        %4808 = vmatpush1.msra.mxu0 %v4807
        %4809 = vmatprep.subr.mxu0 0.0
        %v4810 = vand.u32 %v477, 4294901760
        %4811 = vmatpush1.msra.mxu0 %v4810
        %4812 = vmatprep.subr.mxu0 0.0
        %v4813 = vand.u32 %v480, 4294901760
        %4814 = vmatpush1.msra.mxu0 %v4813
        %4815 = vmatprep.subr.mxu0 0.0
        %v4816 = vand.u32 %v483, 4294901760
        %4817 = vmatpush1.msra.mxu0 %v4816
        %4818 = vmatprep.subr.mxu0 0.0
        %v4819 = vand.u32 %v486, 4294901760
        %4820 = vmatpush1.msra.mxu0 %v4819
        %4821 = vmatprep.subr.mxu0 0.0
        %4822 = vmatpush1.msra.mxu0 0.0
        %4823 = vmatprep.subr.mxu0 0.0
        %4824 = vmatpush1.msra.mxu0 0.0
        %4825 = vmatprep.subr.mxu0 0.0
        %4826 = vmatpush1.msra.mxu0 0.0
        %4827 = vmatprep.subr.mxu0 0.0
        %4828 = vmatpush1.msra.mxu0 0.0
        %4829 = vmatprep.subr.mxu0 0.0
        %4830 = vmatpush1.msra.mxu0 0.0
        %4831 = vmatprep.subr.mxu0 0.0
        %4832 = vmatpush1.msra.mxu0 0.0
        %4833 = vmatprep.subr.mxu0 0.0
        %4834 = vmatpush1.msra.mxu0 0.0
        %4835 = vmatprep.subr.mxu0 0.0
        %4836 = vmatpush1.msra.mxu0 0.0
        %4837 = vmatprep.subr.mxu0 0.0
        %4838 = vmatpush1.msra.mxu0 0.0
        %4839 = vmatprep.subr.mxu0 0.0
        %4840 = vmatpush1.msra.mxu0 0.0
        %4841 = vmatprep.subr.mxu0 0.0
        %4842 = vmatpush1.msra.mxu0 0.0
        %4843 = vmatprep.subr.mxu0 0.0
        %4844 = vmatpush1.msra.mxu0 0.0
        %4845 = vmatprep.subr.mxu0 0.0
        %4846 = vmatpush1.msra.mxu0 0.0
        %4847 = vmatprep.subr.mxu0 0.0
        %4848 = vmatpush1.msra.mxu0 0.0
        %4849 = vmatprep.subr.mxu0 0.0
        %4850 = vmatpush1.msra.mxu0 0.0
        %4851 = vmatprep.subr.mxu0 0.0
        %4852 = vmatpush1.msra.mxu0 0.0
        %4853 = vmatprep.mubr.f32.mxu0 0.0
        %v4854 = vand.u32 %v3566, 4294901760
        %v4855 = vsub.f32 %v3566, %v4854
        %v4856 = vand.u32 %v4855, 4294901760
        %4857 = vmatmul.mubr.f32.gmra.mrb[0].mxu0 %v4856
        %v4858 = vpop.f32.mrb[0].mxu0
        %v4859 = vadd.f32 %v4770, %v4858
        %v4860 = vpop.f32.mrb[0].mxu0
        %4861 = vdwg.mxu0
        %4862 = vmatprep.subr.mxu0 0.0
        %v4863 = vand.u32 %v441, 4294901760
        %v4864 = vsub.f32 %v441, %v4863
        %v4865 = vand.u32 %v4864, 4294901760
        %4866 = vmatpush1.msra.mxu0 %v4865
        %4867 = vmatprep.subr.mxu0 0.0
        %v4868 = vand.u32 %v444, 4294901760
        %v4869 = vsub.f32 %v444, %v4868
        %v4870 = vand.u32 %v4869, 4294901760
        %4871 = vmatpush1.msra.mxu0 %v4870
        %4872 = vmatprep.subr.mxu0 0.0
        %v4873 = vand.u32 %v447, 4294901760
        %v4874 = vsub.f32 %v447, %v4873
        %v4875 = vand.u32 %v4874, 4294901760
        %4876 = vmatpush1.msra.mxu0 %v4875
        %4877 = vmatprep.subr.mxu0 0.0
        %v4878 = vand.u32 %v450, 4294901760
        %v4879 = vsub.f32 %v450, %v4878
        %v4880 = vand.u32 %v4879, 4294901760
        %4881 = vmatpush1.msra.mxu0 %v4880
        %4882 = vmatprep.subr.mxu0 0.0
        %v4883 = vand.u32 %v453, 4294901760
        %v4884 = vsub.f32 %v453, %v4883
        %v4885 = vand.u32 %v4884, 4294901760
        %4886 = vmatpush1.msra.mxu0 %v4885
        %4887 = vmatprep.subr.mxu0 0.0
        %v4888 = vand.u32 %v456, 4294901760
        %v4889 = vsub.f32 %v456, %v4888
        %v4890 = vand.u32 %v4889, 4294901760
        %4891 = vmatpush1.msra.mxu0 %v4890
        %4892 = vmatprep.subr.mxu0 0.0
        %v4893 = vand.u32 %v459, 4294901760
        %v4894 = vsub.f32 %v459, %v4893
        %v4895 = vand.u32 %v4894, 4294901760
        %4896 = vmatpush1.msra.mxu0 %v4895
        %4897 = vmatprep.subr.mxu0 0.0
        %v4898 = vand.u32 %v462, 4294901760
        %v4899 = vsub.f32 %v462, %v4898
        %v4900 = vand.u32 %v4899, 4294901760
        %4901 = vmatpush1.msra.mxu0 %v4900
        %4902 = vmatprep.subr.mxu0 0.0
        %v4903 = vand.u32 %v465, 4294901760
        %v4904 = vsub.f32 %v465, %v4903
        %v4905 = vand.u32 %v4904, 4294901760
        %4906 = vmatpush1.msra.mxu0 %v4905
        %4907 = vmatprep.subr.mxu0 0.0
        %v4908 = vand.u32 %v468, 4294901760
        %v4909 = vsub.f32 %v468, %v4908
        %v4910 = vand.u32 %v4909, 4294901760
        %4911 = vmatpush1.msra.mxu0 %v4910
        %4912 = vmatprep.subr.mxu0 0.0
        %v4913 = vand.u32 %v471, 4294901760
        %v4914 = vsub.f32 %v471, %v4913
        %v4915 = vand.u32 %v4914, 4294901760
        %4916 = vmatpush1.msra.mxu0 %v4915
        %4917 = vmatprep.subr.mxu0 0.0
        %v4918 = vand.u32 %v474, 4294901760
        %v4919 = vsub.f32 %v474, %v4918
        %v4920 = vand.u32 %v4919, 4294901760
        %4921 = vmatpush1.msra.mxu0 %v4920
        %4922 = vmatprep.subr.mxu0 0.0
        %v4923 = vand.u32 %v477, 4294901760
        %v4924 = vsub.f32 %v477, %v4923
        %v4925 = vand.u32 %v4924, 4294901760
        %4926 = vmatpush1.msra.mxu0 %v4925
        %4927 = vmatprep.subr.mxu0 0.0
        %v4928 = vand.u32 %v480, 4294901760
        %v4929 = vsub.f32 %v480, %v4928
        %v4930 = vand.u32 %v4929, 4294901760
        %4931 = vmatpush1.msra.mxu0 %v4930
        %4932 = vmatprep.subr.mxu0 0.0
        %v4933 = vand.u32 %v483, 4294901760
        %v4934 = vsub.f32 %v483, %v4933
        %v4935 = vand.u32 %v4934, 4294901760
        %4936 = vmatpush1.msra.mxu0 %v4935
        %4937 = vmatprep.subr.mxu0 0.0
        %v4938 = vand.u32 %v486, 4294901760
        %v4939 = vsub.f32 %v486, %v4938
        %v4940 = vand.u32 %v4939, 4294901760
        %4941 = vmatpush1.msra.mxu0 %v4940
        %4942 = vmatprep.subr.mxu0 0.0
        %4943 = vmatpush1.msra.mxu0 0.0
        %4944 = vmatprep.subr.mxu0 0.0
        %4945 = vmatpush1.msra.mxu0 0.0
        %4946 = vmatprep.subr.mxu0 0.0
        %4947 = vmatpush1.msra.mxu0 0.0
        %4948 = vmatprep.subr.mxu0 0.0
        %4949 = vmatpush1.msra.mxu0 0.0
        %4950 = vmatprep.subr.mxu0 0.0
        %4951 = vmatpush1.msra.mxu0 0.0
        %4952 = vmatprep.subr.mxu0 0.0
        %4953 = vmatpush1.msra.mxu0 0.0
        %4954 = vmatprep.subr.mxu0 0.0
        %4955 = vmatpush1.msra.mxu0 0.0
        %4956 = vmatprep.subr.mxu0 0.0
        %4957 = vmatpush1.msra.mxu0 0.0
        %4958 = vmatprep.subr.mxu0 0.0
        %4959 = vmatpush1.msra.mxu0 0.0
        %4960 = vmatprep.subr.mxu0 0.0
        %4961 = vmatpush1.msra.mxu0 0.0
        %4962 = vmatprep.subr.mxu0 0.0
        %4963 = vmatpush1.msra.mxu0 0.0
        %4964 = vmatprep.subr.mxu0 0.0
        %4965 = vmatpush1.msra.mxu0 0.0
        %4966 = vmatprep.subr.mxu0 0.0
        %4967 = vmatpush1.msra.mxu0 0.0
        %4968 = vmatprep.subr.mxu0 0.0
        %4969 = vmatpush1.msra.mxu0 0.0
        %4970 = vmatprep.subr.mxu0 0.0
        %4971 = vmatpush1.msra.mxu0 0.0
        %4972 = vmatprep.subr.mxu0 0.0
        %4973 = vmatpush1.msra.mxu0 0.0
        %4974 = vmatprep.mubr.f32.mxu0 0.0
        %v4975 = vand.u32 %v3566, 4294901760
        %4976 = vmatmul.mubr.f32.gmra.mrb[0].mxu0 %v4975
        %v4977 = vpop.f32.mrb[0].mxu0
        %v4978 = vadd.f32 %v4859, %v4977
        %v4979 = vpop.f32.mrb[0].mxu0
        %4980 = vdwg.mxu0
        %4981 = vmatprep.subr.mxu0 0.0
        %v4982 = vand.u32 %v441, 4294901760
        %4983 = vmatpush1.msra.mxu0 %v4982
        %4984 = vmatprep.subr.mxu0 0.0
        %v4985 = vand.u32 %v444, 4294901760
        %4986 = vmatpush1.msra.mxu0 %v4985
        %4987 = vmatprep.subr.mxu0 0.0
        %v4988 = vand.u32 %v447, 4294901760
        %4989 = vmatpush1.msra.mxu0 %v4988
        %4990 = vmatprep.subr.mxu0 0.0
        %v4991 = vand.u32 %v450, 4294901760
        %4992 = vmatpush1.msra.mxu0 %v4991
        %4993 = vmatprep.subr.mxu0 0.0
        %v4994 = vand.u32 %v453, 4294901760
        %4995 = vmatpush1.msra.mxu0 %v4994
        %4996 = vmatprep.subr.mxu0 0.0
        %v4997 = vand.u32 %v456, 4294901760
        %4998 = vmatpush1.msra.mxu0 %v4997
        %4999 = vmatprep.subr.mxu0 0.0
        %v5000 = vand.u32 %v459, 4294901760
        %5001 = vmatpush1.msra.mxu0 %v5000
        %5002 = vmatprep.subr.mxu0 0.0
        %v5003 = vand.u32 %v462, 4294901760
        %5004 = vmatpush1.msra.mxu0 %v5003
        %5005 = vmatprep.subr.mxu0 0.0
        %v5006 = vand.u32 %v465, 4294901760
        %5007 = vmatpush1.msra.mxu0 %v5006
        %5008 = vmatprep.subr.mxu0 0.0
        %v5009 = vand.u32 %v468, 4294901760
        %5010 = vmatpush1.msra.mxu0 %v5009
        %5011 = vmatprep.subr.mxu0 0.0
        %v5012 = vand.u32 %v471, 4294901760
        %5013 = vmatpush1.msra.mxu0 %v5012
        %5014 = vmatprep.subr.mxu0 0.0
        %v5015 = vand.u32 %v474, 4294901760
        %5016 = vmatpush1.msra.mxu0 %v5015
        %5017 = vmatprep.subr.mxu0 0.0
        %v5018 = vand.u32 %v477, 4294901760
        %5019 = vmatpush1.msra.mxu0 %v5018
        %5020 = vmatprep.subr.mxu0 0.0
        %v5021 = vand.u32 %v480, 4294901760
        %5022 = vmatpush1.msra.mxu0 %v5021
        %5023 = vmatprep.subr.mxu0 0.0
        %v5024 = vand.u32 %v483, 4294901760
        %5025 = vmatpush1.msra.mxu0 %v5024
        %5026 = vmatprep.subr.mxu0 0.0
        %v5027 = vand.u32 %v486, 4294901760
        %5028 = vmatpush1.msra.mxu0 %v5027
        %5029 = vmatprep.subr.mxu0 0.0
        %5030 = vmatpush1.msra.mxu0 0.0
        %5031 = vmatprep.subr.mxu0 0.0
        %5032 = vmatpush1.msra.mxu0 0.0
        %5033 = vmatprep.subr.mxu0 0.0
        %5034 = vmatpush1.msra.mxu0 0.0
        %5035 = vmatprep.subr.mxu0 0.0
        %5036 = vmatpush1.msra.mxu0 0.0
        %5037 = vmatprep.subr.mxu0 0.0
        %5038 = vmatpush1.msra.mxu0 0.0
        %5039 = vmatprep.subr.mxu0 0.0
        %5040 = vmatpush1.msra.mxu0 0.0
        %5041 = vmatprep.subr.mxu0 0.0
        %5042 = vmatpush1.msra.mxu0 0.0
        %5043 = vmatprep.subr.mxu0 0.0
        %5044 = vmatpush1.msra.mxu0 0.0
        %5045 = vmatprep.subr.mxu0 0.0
        %5046 = vmatpush1.msra.mxu0 0.0
        %5047 = vmatprep.subr.mxu0 0.0
        %5048 = vmatpush1.msra.mxu0 0.0
        %5049 = vmatprep.subr.mxu0 0.0
        %5050 = vmatpush1.msra.mxu0 0.0
        %5051 = vmatprep.subr.mxu0 0.0
        %5052 = vmatpush1.msra.mxu0 0.0
        %5053 = vmatprep.subr.mxu0 0.0
        %5054 = vmatpush1.msra.mxu0 0.0
        %5055 = vmatprep.subr.mxu0 0.0
        %5056 = vmatpush1.msra.mxu0 0.0
        %5057 = vmatprep.subr.mxu0 0.0
        %5058 = vmatpush1.msra.mxu0 0.0
        %5059 = vmatprep.subr.mxu0 0.0
        %5060 = vmatpush1.msra.mxu0 0.0
        %5061 = vmatprep.mubr.f32.mxu0 0.0
        %v5062 = vand.u32 %v3566, 4294901760
        %5063 = vmatmul.mubr.f32.gmra.mrb[0].mxu0 %v5062
        %v5064 = vpop.f32.mrb[0].mxu0
        %v5065 = vadd.f32 %v4978, %v5064
        %v5066 = vpop.f32.mrb[0].mxu0
        %5067 = vdwg.mxu0
        %v5068 = vadd.f32 %v3569, %v4423
        %v5069 = vxor.u32 %v5068, 2147483648
        %v5070 = vmul.f32 %v5069, 1.442695
        %v5071 = vpow.pop %v5070
        %v5072 = vadd.f32 %v5071, 1.0
        %v5073 = vrcp.pop %v5072
        %v5074 = vmul.f32 1.0, %v5073
        %v5075 = vadd.f32 %v3570, %v4425
        %v5076 = vxor.u32 %v5075, 2147483648
        %v5077 = vmul.f32 %v5076, 1.442695
        %v5078 = vpow.pop %v5077
        %v5079 = vadd.f32 %v5078, 1.0
        %v5080 = vrcp.pop %v5079
        %v5081 = vmul.f32 1.0, %v5080
        %v5082 = vmul.f32 %v5074, %v5065
        %v5083 = vadd.f32 %v3571, %v5082
        %v5084 = vtanh.pop %v5083
        %v5085 = vsub.f32 1.0, %v5081
        %v5086 = vmul.f32 %v5085, %v5084
        %v5087 = vmul.f32 %v5081, %v3566
        %v5088 = vadd.f32 %v5086, %v5087
        %5089 = vst [vmem:[#allocation2] sm:$0xf] %v5088
        %5090 = vst [vmem:[#allocation3 + $0x8] sm:$0xf] %v5088
        %v5091 = vld [vmem:[#allocation2] sm:$0xf]
        %v5092 = vld [vmem:[%s378 + $0xc] sm:$0xcc]
        %v5093 = vld [vmem:[%s378 + $0x14] sm:$0xc]
        %v5094 = vunpack.c.l.bf16 %v5092
        %v5095 = vunpack.c.h.bf16 %v5092
        %v5096 = vunpack.c.l.bf16 %v5093
        %v5097 = vand.u32 %v440, 4294901760
        %5098 = vmatprep.subr.mxu0 %v5097
        %v5099 = vand.u32 %v439, 4294901760
        %5100 = vmatpush1.msra.mxu0 %v5099
        %v5101 = vand.u32 %v443, 4294901760
        %5102 = vmatprep.subr.mxu0 %v5101
        %v5103 = vand.u32 %v442, 4294901760
        %5104 = vmatpush1.msra.mxu0 %v5103
        %v5105 = vand.u32 %v446, 4294901760
        %5106 = vmatprep.subr.mxu0 %v5105
        %v5107 = vand.u32 %v445, 4294901760
        %5108 = vmatpush1.msra.mxu0 %v5107
        %v5109 = vand.u32 %v449, 4294901760
        %5110 = vmatprep.subr.mxu0 %v5109
        %v5111 = vand.u32 %v448, 4294901760
        %5112 = vmatpush1.msra.mxu0 %v5111
        %v5113 = vand.u32 %v452, 4294901760
        %5114 = vmatprep.subr.mxu0 %v5113
        %v5115 = vand.u32 %v451, 4294901760
        %5116 = vmatpush1.msra.mxu0 %v5115
        %v5117 = vand.u32 %v455, 4294901760
        %5118 = vmatprep.subr.mxu0 %v5117
        %v5119 = vand.u32 %v454, 4294901760
        %5120 = vmatpush1.msra.mxu0 %v5119
        %v5121 = vand.u32 %v458, 4294901760
        %5122 = vmatprep.subr.mxu0 %v5121
        %v5123 = vand.u32 %v457, 4294901760
        %5124 = vmatpush1.msra.mxu0 %v5123
        %v5125 = vand.u32 %v461, 4294901760
        %5126 = vmatprep.subr.mxu0 %v5125
        %v5127 = vand.u32 %v460, 4294901760
        %5128 = vmatpush1.msra.mxu0 %v5127
        %v5129 = vand.u32 %v464, 4294901760
        %5130 = vmatprep.subr.mxu0 %v5129
        %v5131 = vand.u32 %v463, 4294901760
        %5132 = vmatpush1.msra.mxu0 %v5131
        %v5133 = vand.u32 %v467, 4294901760
        %5134 = vmatprep.subr.mxu0 %v5133
        %v5135 = vand.u32 %v466, 4294901760
        %5136 = vmatpush1.msra.mxu0 %v5135
        %v5137 = vand.u32 %v470, 4294901760
        %5138 = vmatprep.subr.mxu0 %v5137
        %v5139 = vand.u32 %v469, 4294901760
        %5140 = vmatpush1.msra.mxu0 %v5139
        %v5141 = vand.u32 %v473, 4294901760
        %5142 = vmatprep.subr.mxu0 %v5141
        %v5143 = vand.u32 %v472, 4294901760
        %5144 = vmatpush1.msra.mxu0 %v5143
        %v5145 = vand.u32 %v476, 4294901760
        %5146 = vmatprep.subr.mxu0 %v5145
        %v5147 = vand.u32 %v475, 4294901760
        %5148 = vmatpush1.msra.mxu0 %v5147
        %v5149 = vand.u32 %v479, 4294901760
        %5150 = vmatprep.subr.mxu0 %v5149
        %v5151 = vand.u32 %v478, 4294901760
        %5152 = vmatpush1.msra.mxu0 %v5151
        %v5153 = vand.u32 %v482, 4294901760
        %5154 = vmatprep.subr.mxu0 %v5153
        %v5155 = vand.u32 %v481, 4294901760
        %5156 = vmatpush1.msra.mxu0 %v5155
        %v5157 = vand.u32 %v485, 4294901760
        %5158 = vmatprep.subr.mxu0 %v5157
        %v5159 = vand.u32 %v484, 4294901760
        %5160 = vmatpush1.msra.mxu0 %v5159
        %5161 = vmatprep.subr.mxu0 0.0
        %5162 = vmatpush1.msra.mxu0 0.0
        %5163 = vmatprep.subr.mxu0 0.0
        %5164 = vmatpush1.msra.mxu0 0.0
        %5165 = vmatprep.subr.mxu0 0.0
        %5166 = vmatpush1.msra.mxu0 0.0
        %5167 = vmatprep.subr.mxu0 0.0
        %5168 = vmatpush1.msra.mxu0 0.0
        %5169 = vmatprep.subr.mxu0 0.0
        %5170 = vmatpush1.msra.mxu0 0.0
        %5171 = vmatprep.subr.mxu0 0.0
        %5172 = vmatpush1.msra.mxu0 0.0
        %5173 = vmatprep.subr.mxu0 0.0
        %5174 = vmatpush1.msra.mxu0 0.0
        %5175 = vmatprep.subr.mxu0 0.0
        %5176 = vmatpush1.msra.mxu0 0.0
        %5177 = vmatprep.subr.mxu0 0.0
        %5178 = vmatpush1.msra.mxu0 0.0
        %5179 = vmatprep.subr.mxu0 0.0
        %5180 = vmatpush1.msra.mxu0 0.0
        %5181 = vmatprep.subr.mxu0 0.0
        %5182 = vmatpush1.msra.mxu0 0.0
        %5183 = vmatprep.subr.mxu0 0.0
        %5184 = vmatpush1.msra.mxu0 0.0
        %5185 = vmatprep.subr.mxu0 0.0
        %5186 = vmatpush1.msra.mxu0 0.0
        %5187 = vmatprep.subr.mxu0 0.0
        %5188 = vmatpush1.msra.mxu0 0.0
        %5189 = vmatprep.subr.mxu0 0.0
        %5190 = vmatpush1.msra.mxu0 0.0
        %5191 = vmatprep.subr.mxu0 0.0
        %5192 = vmatpush1.msra.mxu0 0.0
        %5193 = vmatprep.mubr.f32.mxu0 0.0
        %v5194 = vand.u32 %v5091, 4294901760
        %v5195 = vsub.f32 %v5091, %v5194
        %v5196 = vand.u32 %v5195, 4294901760
        %v5197 = vsub.f32 %v5195, %v5196
        %v5198 = vand.u32 %v5197, 4294901760
        %5199 = vmatmul.mubr.f32.gmra.mrb[0].mxu0 %v5198
        %v5200 = vpop.f32.mrb[0].mxu0
        %v5201 = vadd.f32 %v492, %v5200
        %v5202 = vpop.f32.mrb[0].mxu0
        %v5203 = vadd.f32 %v496, %v5202
        %5204 = vdwg.mxu0
        %v5205 = vand.u32 %v440, 4294901760
        %v5206 = vsub.f32 %v440, %v5205
        %v5207 = vand.u32 %v5206, 4294901760
        %v5208 = vsub.f32 %v5206, %v5207
        %v5209 = vand.u32 %v5208, 4294901760
        %5210 = vmatprep.subr.mxu0 %v5209
        %v5211 = vand.u32 %v439, 4294901760
        %v5212 = vsub.f32 %v439, %v5211
        %v5213 = vand.u32 %v5212, 4294901760
        %v5214 = vsub.f32 %v5212, %v5213
        %v5215 = vand.u32 %v5214, 4294901760
        %5216 = vmatpush1.msra.mxu0 %v5215
        %v5217 = vand.u32 %v443, 4294901760
        %v5218 = vsub.f32 %v443, %v5217
        %v5219 = vand.u32 %v5218, 4294901760
        %v5220 = vsub.f32 %v5218, %v5219
        %v5221 = vand.u32 %v5220, 4294901760
        %5222 = vmatprep.subr.mxu0 %v5221
        %v5223 = vand.u32 %v442, 4294901760
        %v5224 = vsub.f32 %v442, %v5223
        %v5225 = vand.u32 %v5224, 4294901760
        %v5226 = vsub.f32 %v5224, %v5225
        %v5227 = vand.u32 %v5226, 4294901760
        %5228 = vmatpush1.msra.mxu0 %v5227
        %v5229 = vand.u32 %v446, 4294901760
        %v5230 = vsub.f32 %v446, %v5229
        %v5231 = vand.u32 %v5230, 4294901760
        %v5232 = vsub.f32 %v5230, %v5231
        %v5233 = vand.u32 %v5232, 4294901760
        %5234 = vmatprep.subr.mxu0 %v5233
        %v5235 = vand.u32 %v445, 4294901760
        %v5236 = vsub.f32 %v445, %v5235
        %v5237 = vand.u32 %v5236, 4294901760
        %v5238 = vsub.f32 %v5236, %v5237
        %v5239 = vand.u32 %v5238, 4294901760
        %5240 = vmatpush1.msra.mxu0 %v5239
        %v5241 = vand.u32 %v449, 4294901760
        %v5242 = vsub.f32 %v449, %v5241
        %v5243 = vand.u32 %v5242, 4294901760
        %v5244 = vsub.f32 %v5242, %v5243
        %v5245 = vand.u32 %v5244, 4294901760
        %5246 = vmatprep.subr.mxu0 %v5245
        %v5247 = vand.u32 %v448, 4294901760
        %v5248 = vsub.f32 %v448, %v5247
        %v5249 = vand.u32 %v5248, 4294901760
        %v5250 = vsub.f32 %v5248, %v5249
        %v5251 = vand.u32 %v5250, 4294901760
        %5252 = vmatpush1.msra.mxu0 %v5251
        %v5253 = vand.u32 %v452, 4294901760
        %v5254 = vsub.f32 %v452, %v5253
        %v5255 = vand.u32 %v5254, 4294901760
        %v5256 = vsub.f32 %v5254, %v5255
        %v5257 = vand.u32 %v5256, 4294901760
        %5258 = vmatprep.subr.mxu0 %v5257
        %v5259 = vand.u32 %v451, 4294901760
        %v5260 = vsub.f32 %v451, %v5259
        %v5261 = vand.u32 %v5260, 4294901760
        %v5262 = vsub.f32 %v5260, %v5261
        %v5263 = vand.u32 %v5262, 4294901760
        %5264 = vmatpush1.msra.mxu0 %v5263
        %v5265 = vand.u32 %v455, 4294901760
        %v5266 = vsub.f32 %v455, %v5265
        %v5267 = vand.u32 %v5266, 4294901760
        %v5268 = vsub.f32 %v5266, %v5267
        %v5269 = vand.u32 %v5268, 4294901760
        %5270 = vmatprep.subr.mxu0 %v5269
        %v5271 = vand.u32 %v454, 4294901760
        %v5272 = vsub.f32 %v454, %v5271
        %v5273 = vand.u32 %v5272, 4294901760
        %v5274 = vsub.f32 %v5272, %v5273
        %v5275 = vand.u32 %v5274, 4294901760
        %5276 = vmatpush1.msra.mxu0 %v5275
        %v5277 = vand.u32 %v458, 4294901760
        %v5278 = vsub.f32 %v458, %v5277
        %v5279 = vand.u32 %v5278, 4294901760
        %v5280 = vsub.f32 %v5278, %v5279
        %v5281 = vand.u32 %v5280, 4294901760
        %5282 = vmatprep.subr.mxu0 %v5281
        %v5283 = vand.u32 %v457, 4294901760
        %v5284 = vsub.f32 %v457, %v5283
        %v5285 = vand.u32 %v5284, 4294901760
        %v5286 = vsub.f32 %v5284, %v5285
        %v5287 = vand.u32 %v5286, 4294901760
        %5288 = vmatpush1.msra.mxu0 %v5287
        %v5289 = vand.u32 %v461, 4294901760
        %v5290 = vsub.f32 %v461, %v5289
        %v5291 = vand.u32 %v5290, 4294901760
        %v5292 = vsub.f32 %v5290, %v5291
        %v5293 = vand.u32 %v5292, 4294901760
        %5294 = vmatprep.subr.mxu0 %v5293
        %v5295 = vand.u32 %v460, 4294901760
        %v5296 = vsub.f32 %v460, %v5295
        %v5297 = vand.u32 %v5296, 4294901760
        %v5298 = vsub.f32 %v5296, %v5297
        %v5299 = vand.u32 %v5298, 4294901760
        %5300 = vmatpush1.msra.mxu0 %v5299
        %v5301 = vand.u32 %v464, 4294901760
        %v5302 = vsub.f32 %v464, %v5301
        %v5303 = vand.u32 %v5302, 4294901760
        %v5304 = vsub.f32 %v5302, %v5303
        %v5305 = vand.u32 %v5304, 4294901760
        %5306 = vmatprep.subr.mxu0 %v5305
        %v5307 = vand.u32 %v463, 4294901760
        %v5308 = vsub.f32 %v463, %v5307
        %v5309 = vand.u32 %v5308, 4294901760
        %v5310 = vsub.f32 %v5308, %v5309
        %v5311 = vand.u32 %v5310, 4294901760
        %5312 = vmatpush1.msra.mxu0 %v5311
        %v5313 = vand.u32 %v467, 4294901760
        %v5314 = vsub.f32 %v467, %v5313
        %v5315 = vand.u32 %v5314, 4294901760
        %v5316 = vsub.f32 %v5314, %v5315
        %v5317 = vand.u32 %v5316, 4294901760
        %5318 = vmatprep.subr.mxu0 %v5317
        %v5319 = vand.u32 %v466, 4294901760
        %v5320 = vsub.f32 %v466, %v5319
        %v5321 = vand.u32 %v5320, 4294901760
        %v5322 = vsub.f32 %v5320, %v5321
        %v5323 = vand.u32 %v5322, 4294901760
        %5324 = vmatpush1.msra.mxu0 %v5323
        %v5325 = vand.u32 %v470, 4294901760
        %v5326 = vsub.f32 %v470, %v5325
        %v5327 = vand.u32 %v5326, 4294901760
        %v5328 = vsub.f32 %v5326, %v5327
        %v5329 = vand.u32 %v5328, 4294901760
        %5330 = vmatprep.subr.mxu0 %v5329
        %v5331 = vand.u32 %v469, 4294901760
        %v5332 = vsub.f32 %v469, %v5331
        %v5333 = vand.u32 %v5332, 4294901760
        %v5334 = vsub.f32 %v5332, %v5333
        %v5335 = vand.u32 %v5334, 4294901760
        %5336 = vmatpush1.msra.mxu0 %v5335
        %v5337 = vand.u32 %v473, 4294901760
        %v5338 = vsub.f32 %v473, %v5337
        %v5339 = vand.u32 %v5338, 4294901760
        %v5340 = vsub.f32 %v5338, %v5339
        %v5341 = vand.u32 %v5340, 4294901760
        %5342 = vmatprep.subr.mxu0 %v5341
        %v5343 = vand.u32 %v472, 4294901760
        %v5344 = vsub.f32 %v472, %v5343
        %v5345 = vand.u32 %v5344, 4294901760
        %v5346 = vsub.f32 %v5344, %v5345
        %v5347 = vand.u32 %v5346, 4294901760
        %5348 = vmatpush1.msra.mxu0 %v5347
        %v5349 = vand.u32 %v476, 4294901760
        %v5350 = vsub.f32 %v476, %v5349
        %v5351 = vand.u32 %v5350, 4294901760
        %v5352 = vsub.f32 %v5350, %v5351
        %v5353 = vand.u32 %v5352, 4294901760
        %5354 = vmatprep.subr.mxu0 %v5353
        %v5355 = vand.u32 %v475, 4294901760
        %v5356 = vsub.f32 %v475, %v5355
        %v5357 = vand.u32 %v5356, 4294901760
        %v5358 = vsub.f32 %v5356, %v5357
        %v5359 = vand.u32 %v5358, 4294901760
        %5360 = vmatpush1.msra.mxu0 %v5359
        %v5361 = vand.u32 %v479, 4294901760
        %v5362 = vsub.f32 %v479, %v5361
        %v5363 = vand.u32 %v5362, 4294901760
        %v5364 = vsub.f32 %v5362, %v5363
        %v5365 = vand.u32 %v5364, 4294901760
        %5366 = vmatprep.subr.mxu0 %v5365
        %v5367 = vand.u32 %v478, 4294901760
        %v5368 = vsub.f32 %v478, %v5367
        %v5369 = vand.u32 %v5368, 4294901760
        %v5370 = vsub.f32 %v5368, %v5369
        %v5371 = vand.u32 %v5370, 4294901760
        %5372 = vmatpush1.msra.mxu0 %v5371
        %v5373 = vand.u32 %v482, 4294901760
        %v5374 = vsub.f32 %v482, %v5373
        %v5375 = vand.u32 %v5374, 4294901760
        %v5376 = vsub.f32 %v5374, %v5375
        %v5377 = vand.u32 %v5376, 4294901760
        %5378 = vmatprep.subr.mxu0 %v5377
        %v5379 = vand.u32 %v481, 4294901760
        %v5380 = vsub.f32 %v481, %v5379
        %v5381 = vand.u32 %v5380, 4294901760
        %v5382 = vsub.f32 %v5380, %v5381
        %v5383 = vand.u32 %v5382, 4294901760
        %5384 = vmatpush1.msra.mxu0 %v5383
        %v5385 = vand.u32 %v485, 4294901760
        %v5386 = vsub.f32 %v485, %v5385
        %v5387 = vand.u32 %v5386, 4294901760
        %v5388 = vsub.f32 %v5386, %v5387
        %v5389 = vand.u32 %v5388, 4294901760
        %5390 = vmatprep.subr.mxu0 %v5389
        %v5391 = vand.u32 %v484, 4294901760
        %v5392 = vsub.f32 %v484, %v5391
        %v5393 = vand.u32 %v5392, 4294901760
        %v5394 = vsub.f32 %v5392, %v5393
        %v5395 = vand.u32 %v5394, 4294901760
        %5396 = vmatpush1.msra.mxu0 %v5395
        %5397 = vmatprep.subr.mxu0 0.0
        %5398 = vmatpush1.msra.mxu0 0.0
        %5399 = vmatprep.subr.mxu0 0.0
        %5400 = vmatpush1.msra.mxu0 0.0
        %5401 = vmatprep.subr.mxu0 0.0
        %5402 = vmatpush1.msra.mxu0 0.0
        %5403 = vmatprep.subr.mxu0 0.0
        %5404 = vmatpush1.msra.mxu0 0.0
        %5405 = vmatprep.subr.mxu0 0.0
        %5406 = vmatpush1.msra.mxu0 0.0
        %5407 = vmatprep.subr.mxu0 0.0
        %5408 = vmatpush1.msra.mxu0 0.0
        %5409 = vmatprep.subr.mxu0 0.0
        %5410 = vmatpush1.msra.mxu0 0.0
        %5411 = vmatprep.subr.mxu0 0.0
        %5412 = vmatpush1.msra.mxu0 0.0
        %5413 = vmatprep.subr.mxu0 0.0
        %5414 = vmatpush1.msra.mxu0 0.0
        %5415 = vmatprep.subr.mxu0 0.0
        %5416 = vmatpush1.msra.mxu0 0.0
        %5417 = vmatprep.subr.mxu0 0.0
        %5418 = vmatpush1.msra.mxu0 0.0
        %5419 = vmatprep.subr.mxu0 0.0
        %5420 = vmatpush1.msra.mxu0 0.0
        %5421 = vmatprep.subr.mxu0 0.0
        %5422 = vmatpush1.msra.mxu0 0.0
        %5423 = vmatprep.subr.mxu0 0.0
        %5424 = vmatpush1.msra.mxu0 0.0
        %5425 = vmatprep.subr.mxu0 0.0
        %5426 = vmatpush1.msra.mxu0 0.0
        %5427 = vmatprep.subr.mxu0 0.0
        %5428 = vmatpush1.msra.mxu0 0.0
        %5429 = vmatprep.mubr.f32.mxu0 0.0
        %v5430 = vand.u32 %v5091, 4294901760
        %5431 = vmatmul.mubr.f32.gmra.mrb[0].mxu0 %v5430
        %v5432 = vpop.f32.mrb[0].mxu0
        %v5433 = vadd.f32 %v5201, %v5432
        %v5434 = vpop.f32.mrb[0].mxu0
        %v5435 = vadd.f32 %v5203, %v5434
        %5436 = vdwg.mxu0
        %v5437 = vand.u32 %v440, 4294901760
        %v5438 = vsub.f32 %v440, %v5437
        %5439 = vmatprep.subr.mxu0 %v5438
        %v5440 = vand.u32 %v439, 4294901760
        %v5441 = vsub.f32 %v439, %v5440
        %5442 = vmatpush1.msra.mxu0 %v5441
        %v5443 = vand.u32 %v443, 4294901760
        %v5444 = vsub.f32 %v443, %v5443
        %5445 = vmatprep.subr.mxu0 %v5444
        %v5446 = vand.u32 %v442, 4294901760
        %v5447 = vsub.f32 %v442, %v5446
        %5448 = vmatpush1.msra.mxu0 %v5447
        %v5449 = vand.u32 %v446, 4294901760
        %v5450 = vsub.f32 %v446, %v5449
        %5451 = vmatprep.subr.mxu0 %v5450
        %v5452 = vand.u32 %v445, 4294901760
        %v5453 = vsub.f32 %v445, %v5452
        %5454 = vmatpush1.msra.mxu0 %v5453
        %v5455 = vand.u32 %v449, 4294901760
        %v5456 = vsub.f32 %v449, %v5455
        %5457 = vmatprep.subr.mxu0 %v5456
        %v5458 = vand.u32 %v448, 4294901760
        %v5459 = vsub.f32 %v448, %v5458
        %5460 = vmatpush1.msra.mxu0 %v5459
        %v5461 = vand.u32 %v452, 4294901760
        %v5462 = vsub.f32 %v452, %v5461
        %5463 = vmatprep.subr.mxu0 %v5462
        %v5464 = vand.u32 %v451, 4294901760
        %v5465 = vsub.f32 %v451, %v5464
        %5466 = vmatpush1.msra.mxu0 %v5465
        %v5467 = vand.u32 %v455, 4294901760
        %v5468 = vsub.f32 %v455, %v5467
        %5469 = vmatprep.subr.mxu0 %v5468
        %v5470 = vand.u32 %v454, 4294901760
        %v5471 = vsub.f32 %v454, %v5470
        %5472 = vmatpush1.msra.mxu0 %v5471
        %v5473 = vand.u32 %v458, 4294901760
        %v5474 = vsub.f32 %v458, %v5473
        %5475 = vmatprep.subr.mxu0 %v5474
        %v5476 = vand.u32 %v457, 4294901760
        %v5477 = vsub.f32 %v457, %v5476
        %5478 = vmatpush1.msra.mxu0 %v5477
        %v5479 = vand.u32 %v461, 4294901760
        %v5480 = vsub.f32 %v461, %v5479
        %5481 = vmatprep.subr.mxu0 %v5480
        %v5482 = vand.u32 %v460, 4294901760
        %v5483 = vsub.f32 %v460, %v5482
        %5484 = vmatpush1.msra.mxu0 %v5483
        %v5485 = vand.u32 %v464, 4294901760
        %v5486 = vsub.f32 %v464, %v5485
        %5487 = vmatprep.subr.mxu0 %v5486
        %v5488 = vand.u32 %v463, 4294901760
        %v5489 = vsub.f32 %v463, %v5488
        %5490 = vmatpush1.msra.mxu0 %v5489
        %v5491 = vand.u32 %v467, 4294901760
        %v5492 = vsub.f32 %v467, %v5491
        %5493 = vmatprep.subr.mxu0 %v5492
        %v5494 = vand.u32 %v466, 4294901760
        %v5495 = vsub.f32 %v466, %v5494
        %5496 = vmatpush1.msra.mxu0 %v5495
        %v5497 = vand.u32 %v470, 4294901760
        %v5498 = vsub.f32 %v470, %v5497
        %5499 = vmatprep.subr.mxu0 %v5498
        %v5500 = vand.u32 %v469, 4294901760
        %v5501 = vsub.f32 %v469, %v5500
        %5502 = vmatpush1.msra.mxu0 %v5501
        %v5503 = vand.u32 %v473, 4294901760
        %v5504 = vsub.f32 %v473, %v5503
        %5505 = vmatprep.subr.mxu0 %v5504
        %v5506 = vand.u32 %v472, 4294901760
        %v5507 = vsub.f32 %v472, %v5506
        %5508 = vmatpush1.msra.mxu0 %v5507
        %v5509 = vand.u32 %v476, 4294901760
        %v5510 = vsub.f32 %v476, %v5509
        %5511 = vmatprep.subr.mxu0 %v5510
        %v5512 = vand.u32 %v475, 4294901760
        %v5513 = vsub.f32 %v475, %v5512
        %5514 = vmatpush1.msra.mxu0 %v5513
        %v5515 = vand.u32 %v479, 4294901760
        %v5516 = vsub.f32 %v479, %v5515
        %5517 = vmatprep.subr.mxu0 %v5516
        %v5518 = vand.u32 %v478, 4294901760
        %v5519 = vsub.f32 %v478, %v5518
        %5520 = vmatpush1.msra.mxu0 %v5519
        %v5521 = vand.u32 %v482, 4294901760
        %v5522 = vsub.f32 %v482, %v5521
        %5523 = vmatprep.subr.mxu0 %v5522
        %v5524 = vand.u32 %v481, 4294901760
        %v5525 = vsub.f32 %v481, %v5524
        %5526 = vmatpush1.msra.mxu0 %v5525
        %v5527 = vand.u32 %v485, 4294901760
        %v5528 = vsub.f32 %v485, %v5527
        %5529 = vmatprep.subr.mxu0 %v5528
        %v5530 = vand.u32 %v484, 4294901760
        %v5531 = vsub.f32 %v484, %v5530
        %5532 = vmatpush1.msra.mxu0 %v5531
        %5533 = vmatprep.subr.mxu0 0.0
        %5534 = vmatpush1.msra.mxu0 0.0
        %5535 = vmatprep.subr.mxu0 0.0
        %5536 = vmatpush1.msra.mxu0 0.0
        %5537 = vmatprep.subr.mxu0 0.0
        %5538 = vmatpush1.msra.mxu0 0.0
        %5539 = vmatprep.subr.mxu0 0.0
        %5540 = vmatpush1.msra.mxu0 0.0
        %5541 = vmatprep.subr.mxu0 0.0
        %5542 = vmatpush1.msra.mxu0 0.0
        %5543 = vmatprep.subr.mxu0 0.0
        %5544 = vmatpush1.msra.mxu0 0.0
        %5545 = vmatprep.subr.mxu0 0.0
        %5546 = vmatpush1.msra.mxu0 0.0
        %5547 = vmatprep.subr.mxu0 0.0
        %5548 = vmatpush1.msra.mxu0 0.0
        %5549 = vmatprep.subr.mxu0 0.0
        %5550 = vmatpush1.msra.mxu0 0.0
        %5551 = vmatprep.subr.mxu0 0.0
        %5552 = vmatpush1.msra.mxu0 0.0
        %5553 = vmatprep.subr.mxu0 0.0
        %5554 = vmatpush1.msra.mxu0 0.0
        %5555 = vmatprep.subr.mxu0 0.0
        %5556 = vmatpush1.msra.mxu0 0.0
        %5557 = vmatprep.subr.mxu0 0.0
        %5558 = vmatpush1.msra.mxu0 0.0
        %5559 = vmatprep.subr.mxu0 0.0
        %5560 = vmatpush1.msra.mxu0 0.0
        %5561 = vmatprep.subr.mxu0 0.0
        %5562 = vmatpush1.msra.mxu0 0.0
        %5563 = vmatprep.subr.mxu0 0.0
        %5564 = vmatpush1.msra.mxu0 0.0
        %5565 = vmatprep.mubr.f32.mxu0 0.0
        %v5566 = vand.u32 %v5091, 4294901760
        %v5567 = vsub.f32 %v5091, %v5566
        %5568 = vmatmul.mubr.f32.gmra.mrb[0].mxu0 %v5567
        %v5569 = vpop.f32.mrb[0].mxu0
        %v5570 = vadd.f32 %v5433, %v5569
        %v5571 = vpop.f32.mrb[0].mxu0
        %v5572 = vadd.f32 %v5435, %v5571
        %5573 = vdwg.mxu0
        %v5574 = vand.u32 %v440, 4294901760
        %5575 = vmatprep.subr.mxu0 %v5574
        %v5576 = vand.u32 %v439, 4294901760
        %5577 = vmatpush1.msra.mxu0 %v5576
        %v5578 = vand.u32 %v443, 4294901760
        %5579 = vmatprep.subr.mxu0 %v5578
        %v5580 = vand.u32 %v442, 4294901760
        %5581 = vmatpush1.msra.mxu0 %v5580
        %v5582 = vand.u32 %v446, 4294901760
        %5583 = vmatprep.subr.mxu0 %v5582
        %v5584 = vand.u32 %v445, 4294901760
        %5585 = vmatpush1.msra.mxu0 %v5584
        %v5586 = vand.u32 %v449, 4294901760
        %5587 = vmatprep.subr.mxu0 %v5586
        %v5588 = vand.u32 %v448, 4294901760
        %5589 = vmatpush1.msra.mxu0 %v5588
        %v5590 = vand.u32 %v452, 4294901760
        %5591 = vmatprep.subr.mxu0 %v5590
        %v5592 = vand.u32 %v451, 4294901760
        %5593 = vmatpush1.msra.mxu0 %v5592
        %v5594 = vand.u32 %v455, 4294901760
        %5595 = vmatprep.subr.mxu0 %v5594
        %v5596 = vand.u32 %v454, 4294901760
        %5597 = vmatpush1.msra.mxu0 %v5596
        %v5598 = vand.u32 %v458, 4294901760
        %5599 = vmatprep.subr.mxu0 %v5598
        %v5600 = vand.u32 %v457, 4294901760
        %5601 = vmatpush1.msra.mxu0 %v5600
        %v5602 = vand.u32 %v461, 4294901760
        %5603 = vmatprep.subr.mxu0 %v5602
        %v5604 = vand.u32 %v460, 4294901760
        %5605 = vmatpush1.msra.mxu0 %v5604
        %v5606 = vand.u32 %v464, 4294901760
        %5607 = vmatprep.subr.mxu0 %v5606
        %v5608 = vand.u32 %v463, 4294901760
        %5609 = vmatpush1.msra.mxu0 %v5608
        %v5610 = vand.u32 %v467, 4294901760
        %5611 = vmatprep.subr.mxu0 %v5610
        %v5612 = vand.u32 %v466, 4294901760
        %5613 = vmatpush1.msra.mxu0 %v5612
        %v5614 = vand.u32 %v470, 4294901760
        %5615 = vmatprep.subr.mxu0 %v5614
        %v5616 = vand.u32 %v469, 4294901760
        %5617 = vmatpush1.msra.mxu0 %v5616
        %v5618 = vand.u32 %v473, 4294901760
        %5619 = vmatprep.subr.mxu0 %v5618
        %v5620 = vand.u32 %v472, 4294901760
        %5621 = vmatpush1.msra.mxu0 %v5620
        %v5622 = vand.u32 %v476, 4294901760
        %5623 = vmatprep.subr.mxu0 %v5622
        %v5624 = vand.u32 %v475, 4294901760
        %5625 = vmatpush1.msra.mxu0 %v5624
        %v5626 = vand.u32 %v479, 4294901760
        %5627 = vmatprep.subr.mxu0 %v5626
        %v5628 = vand.u32 %v478, 4294901760
        %5629 = vmatpush1.msra.mxu0 %v5628
        %v5630 = vand.u32 %v482, 4294901760
        %5631 = vmatprep.subr.mxu0 %v5630
        %v5632 = vand.u32 %v481, 4294901760
        %5633 = vmatpush1.msra.mxu0 %v5632
        %v5634 = vand.u32 %v485, 4294901760
        %5635 = vmatprep.subr.mxu0 %v5634
        %v5636 = vand.u32 %v484, 4294901760
        %5637 = vmatpush1.msra.mxu0 %v5636
        %5638 = vmatprep.subr.mxu0 0.0
        %5639 = vmatpush1.msra.mxu0 0.0
        %5640 = vmatprep.subr.mxu0 0.0
        %5641 = vmatpush1.msra.mxu0 0.0
        %5642 = vmatprep.subr.mxu0 0.0
        %5643 = vmatpush1.msra.mxu0 0.0
        %5644 = vmatprep.subr.mxu0 0.0
        %5645 = vmatpush1.msra.mxu0 0.0
        %5646 = vmatprep.subr.mxu0 0.0
        %5647 = vmatpush1.msra.mxu0 0.0
        %5648 = vmatprep.subr.mxu0 0.0
        %5649 = vmatpush1.msra.mxu0 0.0
        %5650 = vmatprep.subr.mxu0 0.0
        %5651 = vmatpush1.msra.mxu0 0.0
        %5652 = vmatprep.subr.mxu0 0.0
        %5653 = vmatpush1.msra.mxu0 0.0
        %5654 = vmatprep.subr.mxu0 0.0
        %5655 = vmatpush1.msra.mxu0 0.0
        %5656 = vmatprep.subr.mxu0 0.0
        %5657 = vmatpush1.msra.mxu0 0.0
        %5658 = vmatprep.subr.mxu0 0.0
        %5659 = vmatpush1.msra.mxu0 0.0
        %5660 = vmatprep.subr.mxu0 0.0
        %5661 = vmatpush1.msra.mxu0 0.0
        %5662 = vmatprep.subr.mxu0 0.0
        %5663 = vmatpush1.msra.mxu0 0.0
        %5664 = vmatprep.subr.mxu0 0.0
        %5665 = vmatpush1.msra.mxu0 0.0
        %5666 = vmatprep.subr.mxu0 0.0
        %5667 = vmatpush1.msra.mxu0 0.0
        %5668 = vmatprep.subr.mxu0 0.0
        %5669 = vmatpush1.msra.mxu0 0.0
        %5670 = vmatprep.mubr.f32.mxu0 0.0
        %v5671 = vand.u32 %v5091, 4294901760
        %v5672 = vsub.f32 %v5091, %v5671
        %v5673 = vand.u32 %v5672, 4294901760
        %5674 = vmatmul.mubr.f32.gmra.mrb[0].mxu0 %v5673
        %v5675 = vpop.f32.mrb[0].mxu0
        %v5676 = vadd.f32 %v5570, %v5675
        %v5677 = vpop.f32.mrb[0].mxu0
        %v5678 = vadd.f32 %v5572, %v5677
        %5679 = vdwg.mxu0
        %v5680 = vand.u32 %v440, 4294901760
        %v5681 = vsub.f32 %v440, %v5680
        %v5682 = vand.u32 %v5681, 4294901760
        %5683 = vmatprep.subr.mxu0 %v5682
        %v5684 = vand.u32 %v439, 4294901760
        %v5685 = vsub.f32 %v439, %v5684
        %v5686 = vand.u32 %v5685, 4294901760
        %5687 = vmatpush1.msra.mxu0 %v5686
        %v5688 = vand.u32 %v443, 4294901760
        %v5689 = vsub.f32 %v443, %v5688
        %v5690 = vand.u32 %v5689, 4294901760
        %5691 = vmatprep.subr.mxu0 %v5690
        %v5692 = vand.u32 %v442, 4294901760
        %v5693 = vsub.f32 %v442, %v5692
        %v5694 = vand.u32 %v5693, 4294901760
        %5695 = vmatpush1.msra.mxu0 %v5694
        %v5696 = vand.u32 %v446, 4294901760
        %v5697 = vsub.f32 %v446, %v5696
        %v5698 = vand.u32 %v5697, 4294901760
        %5699 = vmatprep.subr.mxu0 %v5698
        %v5700 = vand.u32 %v445, 4294901760
        %v5701 = vsub.f32 %v445, %v5700
        %v5702 = vand.u32 %v5701, 4294901760
        %5703 = vmatpush1.msra.mxu0 %v5702
        %v5704 = vand.u32 %v449, 4294901760
        %v5705 = vsub.f32 %v449, %v5704
        %v5706 = vand.u32 %v5705, 4294901760
        %5707 = vmatprep.subr.mxu0 %v5706
        %v5708 = vand.u32 %v448, 4294901760
        %v5709 = vsub.f32 %v448, %v5708
        %v5710 = vand.u32 %v5709, 4294901760
        %5711 = vmatpush1.msra.mxu0 %v5710
        %v5712 = vand.u32 %v452, 4294901760
        %v5713 = vsub.f32 %v452, %v5712
        %v5714 = vand.u32 %v5713, 4294901760
        %5715 = vmatprep.subr.mxu0 %v5714
        %v5716 = vand.u32 %v451, 4294901760
        %v5717 = vsub.f32 %v451, %v5716
        %v5718 = vand.u32 %v5717, 4294901760
        %5719 = vmatpush1.msra.mxu0 %v5718
        %v5720 = vand.u32 %v455, 4294901760
        %v5721 = vsub.f32 %v455, %v5720
        %v5722 = vand.u32 %v5721, 4294901760
        %5723 = vmatprep.subr.mxu0 %v5722
        %v5724 = vand.u32 %v454, 4294901760
        %v5725 = vsub.f32 %v454, %v5724
        %v5726 = vand.u32 %v5725, 4294901760
        %5727 = vmatpush1.msra.mxu0 %v5726
        %v5728 = vand.u32 %v458, 4294901760
        %v5729 = vsub.f32 %v458, %v5728
        %v5730 = vand.u32 %v5729, 4294901760
        %5731 = vmatprep.subr.mxu0 %v5730
        %v5732 = vand.u32 %v457, 4294901760
        %v5733 = vsub.f32 %v457, %v5732
        %v5734 = vand.u32 %v5733, 4294901760
        %5735 = vmatpush1.msra.mxu0 %v5734
        %v5736 = vand.u32 %v461, 4294901760
        %v5737 = vsub.f32 %v461, %v5736
        %v5738 = vand.u32 %v5737, 4294901760
        %5739 = vmatprep.subr.mxu0 %v5738
        %v5740 = vand.u32 %v460, 4294901760
        %v5741 = vsub.f32 %v460, %v5740
        %v5742 = vand.u32 %v5741, 4294901760
        %5743 = vmatpush1.msra.mxu0 %v5742
        %v5744 = vand.u32 %v464, 4294901760
        %v5745 = vsub.f32 %v464, %v5744
        %v5746 = vand.u32 %v5745, 4294901760
        %5747 = vmatprep.subr.mxu0 %v5746
        %v5748 = vand.u32 %v463, 4294901760
        %v5749 = vsub.f32 %v463, %v5748
        %v5750 = vand.u32 %v5749, 4294901760
        %5751 = vmatpush1.msra.mxu0 %v5750
        %v5752 = vand.u32 %v467, 4294901760
        %v5753 = vsub.f32 %v467, %v5752
        %v5754 = vand.u32 %v5753, 4294901760
        %5755 = vmatprep.subr.mxu0 %v5754
        %v5756 = vand.u32 %v466, 4294901760
        %v5757 = vsub.f32 %v466, %v5756
        %v5758 = vand.u32 %v5757, 4294901760
        %5759 = vmatpush1.msra.mxu0 %v5758
        %v5760 = vand.u32 %v470, 4294901760
        %v5761 = vsub.f32 %v470, %v5760
        %v5762 = vand.u32 %v5761, 4294901760
        %5763 = vmatprep.subr.mxu0 %v5762
        %v5764 = vand.u32 %v469, 4294901760
        %v5765 = vsub.f32 %v469, %v5764
        %v5766 = vand.u32 %v5765, 4294901760
        %5767 = vmatpush1.msra.mxu0 %v5766
        %v5768 = vand.u32 %v473, 4294901760
        %v5769 = vsub.f32 %v473, %v5768
        %v5770 = vand.u32 %v5769, 4294901760
        %5771 = vmatprep.subr.mxu0 %v5770
        %v5772 = vand.u32 %v472, 4294901760
        %v5773 = vsub.f32 %v472, %v5772
        %v5774 = vand.u32 %v5773, 4294901760
        %5775 = vmatpush1.msra.mxu0 %v5774
        %v5776 = vand.u32 %v476, 4294901760
        %v5777 = vsub.f32 %v476, %v5776
        %v5778 = vand.u32 %v5777, 4294901760
        %5779 = vmatprep.subr.mxu0 %v5778
        %v5780 = vand.u32 %v475, 4294901760
        %v5781 = vsub.f32 %v475, %v5780
        %v5782 = vand.u32 %v5781, 4294901760
        %5783 = vmatpush1.msra.mxu0 %v5782
        %v5784 = vand.u32 %v479, 4294901760
        %v5785 = vsub.f32 %v479, %v5784
        %v5786 = vand.u32 %v5785, 4294901760
        %5787 = vmatprep.subr.mxu0 %v5786
        %v5788 = vand.u32 %v478, 4294901760
        %v5789 = vsub.f32 %v478, %v5788
        %v5790 = vand.u32 %v5789, 4294901760
        %5791 = vmatpush1.msra.mxu0 %v5790
        %v5792 = vand.u32 %v482, 4294901760
        %v5793 = vsub.f32 %v482, %v5792
        %v5794 = vand.u32 %v5793, 4294901760
        %5795 = vmatprep.subr.mxu0 %v5794
        %v5796 = vand.u32 %v481, 4294901760
        %v5797 = vsub.f32 %v481, %v5796
        %v5798 = vand.u32 %v5797, 4294901760
        %5799 = vmatpush1.msra.mxu0 %v5798
        %v5800 = vand.u32 %v485, 4294901760
        %v5801 = vsub.f32 %v485, %v5800
        %v5802 = vand.u32 %v5801, 4294901760
        %5803 = vmatprep.subr.mxu0 %v5802
        %v5804 = vand.u32 %v484, 4294901760
        %v5805 = vsub.f32 %v484, %v5804
        %v5806 = vand.u32 %v5805, 4294901760
        %5807 = vmatpush1.msra.mxu0 %v5806
        %5808 = vmatprep.subr.mxu0 0.0
        %5809 = vmatpush1.msra.mxu0 0.0
        %5810 = vmatprep.subr.mxu0 0.0
        %5811 = vmatpush1.msra.mxu0 0.0
        %5812 = vmatprep.subr.mxu0 0.0
        %5813 = vmatpush1.msra.mxu0 0.0
        %5814 = vmatprep.subr.mxu0 0.0
        %5815 = vmatpush1.msra.mxu0 0.0
        %5816 = vmatprep.subr.mxu0 0.0
        %5817 = vmatpush1.msra.mxu0 0.0
        %5818 = vmatprep.subr.mxu0 0.0
        %5819 = vmatpush1.msra.mxu0 0.0
        %5820 = vmatprep.subr.mxu0 0.0
        %5821 = vmatpush1.msra.mxu0 0.0
        %5822 = vmatprep.subr.mxu0 0.0
        %5823 = vmatpush1.msra.mxu0 0.0
        %5824 = vmatprep.subr.mxu0 0.0
        %5825 = vmatpush1.msra.mxu0 0.0
        %5826 = vmatprep.subr.mxu0 0.0
        %5827 = vmatpush1.msra.mxu0 0.0
        %5828 = vmatprep.subr.mxu0 0.0
        %5829 = vmatpush1.msra.mxu0 0.0
        %5830 = vmatprep.subr.mxu0 0.0
        %5831 = vmatpush1.msra.mxu0 0.0
        %5832 = vmatprep.subr.mxu0 0.0
        %5833 = vmatpush1.msra.mxu0 0.0
        %5834 = vmatprep.subr.mxu0 0.0
        %5835 = vmatpush1.msra.mxu0 0.0
        %5836 = vmatprep.subr.mxu0 0.0
        %5837 = vmatpush1.msra.mxu0 0.0
        %5838 = vmatprep.subr.mxu0 0.0
        %5839 = vmatpush1.msra.mxu0 0.0
        %5840 = vmatprep.mubr.f32.mxu0 0.0
        %v5841 = vand.u32 %v5091, 4294901760
        %5842 = vmatmul.mubr.f32.gmra.mrb[0].mxu0 %v5841
        %v5843 = vpop.f32.mrb[0].mxu0
        %v5844 = vadd.f32 %v5676, %v5843
        %v5845 = vpop.f32.mrb[0].mxu0
        %v5846 = vadd.f32 %v5678, %v5845
        %5847 = vdwg.mxu0
        %v5848 = vand.u32 %v440, 4294901760
        %5849 = vmatprep.subr.mxu0 %v5848
        %v5850 = vand.u32 %v439, 4294901760
        %5851 = vmatpush1.msra.mxu0 %v5850
        %v5852 = vand.u32 %v443, 4294901760
        %5853 = vmatprep.subr.mxu0 %v5852
        %v5854 = vand.u32 %v442, 4294901760
        %5855 = vmatpush1.msra.mxu0 %v5854
        %v5856 = vand.u32 %v446, 4294901760
        %5857 = vmatprep.subr.mxu0 %v5856
        %v5858 = vand.u32 %v445, 4294901760
        %5859 = vmatpush1.msra.mxu0 %v5858
        %v5860 = vand.u32 %v449, 4294901760
        %5861 = vmatprep.subr.mxu0 %v5860
        %v5862 = vand.u32 %v448, 4294901760
        %5863 = vmatpush1.msra.mxu0 %v5862
        %v5864 = vand.u32 %v452, 4294901760
        %5865 = vmatprep.subr.mxu0 %v5864
        %v5866 = vand.u32 %v451, 4294901760
        %5867 = vmatpush1.msra.mxu0 %v5866
        %v5868 = vand.u32 %v455, 4294901760
        %5869 = vmatprep.subr.mxu0 %v5868
        %v5870 = vand.u32 %v454, 4294901760
        %5871 = vmatpush1.msra.mxu0 %v5870
        %v5872 = vand.u32 %v458, 4294901760
        %5873 = vmatprep.subr.mxu0 %v5872
        %v5874 = vand.u32 %v457, 4294901760
        %5875 = vmatpush1.msra.mxu0 %v5874
        %v5876 = vand.u32 %v461, 4294901760
        %5877 = vmatprep.subr.mxu0 %v5876
        %v5878 = vand.u32 %v460, 4294901760
        %5879 = vmatpush1.msra.mxu0 %v5878
        %v5880 = vand.u32 %v464, 4294901760
        %5881 = vmatprep.subr.mxu0 %v5880
        %v5882 = vand.u32 %v463, 4294901760
        %5883 = vmatpush1.msra.mxu0 %v5882
        %v5884 = vand.u32 %v467, 4294901760
        %5885 = vmatprep.subr.mxu0 %v5884
        %v5886 = vand.u32 %v466, 4294901760
        %5887 = vmatpush1.msra.mxu0 %v5886
        %v5888 = vand.u32 %v470, 4294901760
        %5889 = vmatprep.subr.mxu0 %v5888
        %v5890 = vand.u32 %v469, 4294901760
        %5891 = vmatpush1.msra.mxu0 %v5890
        %v5892 = vand.u32 %v473, 4294901760
        %5893 = vmatprep.subr.mxu0 %v5892
        %v5894 = vand.u32 %v472, 4294901760
        %5895 = vmatpush1.msra.mxu0 %v5894
        %v5896 = vand.u32 %v476, 4294901760
        %5897 = vmatprep.subr.mxu0 %v5896
        %v5898 = vand.u32 %v475, 4294901760
        %5899 = vmatpush1.msra.mxu0 %v5898
        %v5900 = vand.u32 %v479, 4294901760
        %5901 = vmatprep.subr.mxu0 %v5900
        %v5902 = vand.u32 %v478, 4294901760
        %5903 = vmatpush1.msra.mxu0 %v5902
        %v5904 = vand.u32 %v482, 4294901760
        %5905 = vmatprep.subr.mxu0 %v5904
        %v5906 = vand.u32 %v481, 4294901760
        %5907 = vmatpush1.msra.mxu0 %v5906
        %v5908 = vand.u32 %v485, 4294901760
        %5909 = vmatprep.subr.mxu0 %v5908
        %v5910 = vand.u32 %v484, 4294901760
        %5911 = vmatpush1.msra.mxu0 %v5910
        %5912 = vmatprep.subr.mxu0 0.0
        %5913 = vmatpush1.msra.mxu0 0.0
        %5914 = vmatprep.subr.mxu0 0.0
        %5915 = vmatpush1.msra.mxu0 0.0
        %5916 = vmatprep.subr.mxu0 0.0
        %5917 = vmatpush1.msra.mxu0 0.0
        %5918 = vmatprep.subr.mxu0 0.0
        %5919 = vmatpush1.msra.mxu0 0.0
        %5920 = vmatprep.subr.mxu0 0.0
        %5921 = vmatpush1.msra.mxu0 0.0
        %5922 = vmatprep.subr.mxu0 0.0
        %5923 = vmatpush1.msra.mxu0 0.0
        %5924 = vmatprep.subr.mxu0 0.0
        %5925 = vmatpush1.msra.mxu0 0.0
        %5926 = vmatprep.subr.mxu0 0.0
        %5927 = vmatpush1.msra.mxu0 0.0
        %5928 = vmatprep.subr.mxu0 0.0
        %5929 = vmatpush1.msra.mxu0 0.0
        %5930 = vmatprep.subr.mxu0 0.0
        %5931 = vmatpush1.msra.mxu0 0.0
        %5932 = vmatprep.subr.mxu0 0.0
        %5933 = vmatpush1.msra.mxu0 0.0
        %5934 = vmatprep.subr.mxu0 0.0
        %5935 = vmatpush1.msra.mxu0 0.0
        %5936 = vmatprep.subr.mxu0 0.0
        %5937 = vmatpush1.msra.mxu0 0.0
        %5938 = vmatprep.subr.mxu0 0.0
        %5939 = vmatpush1.msra.mxu0 0.0
        %5940 = vmatprep.subr.mxu0 0.0
        %5941 = vmatpush1.msra.mxu0 0.0
        %5942 = vmatprep.subr.mxu0 0.0
        %5943 = vmatpush1.msra.mxu0 0.0
        %5944 = vmatprep.mubr.f32.mxu0 0.0
        %v5945 = vand.u32 %v5091, 4294901760
        %5946 = vmatmul.mubr.f32.gmra.mrb[0].mxu0 %v5945
        %v5947 = vpop.f32.mrb[0].mxu0
        %v5948 = vadd.f32 %v5844, %v5947
        %v5949 = vpop.f32.mrb[0].mxu0
        %v5950 = vadd.f32 %v5846, %v5949
        %5951 = vdwg.mxu0
        %5952 = vmatprep.subr.mxu0 0.0
        %v5953 = vand.u32 %v441, 4294901760
        %5954 = vmatpush1.msra.mxu0 %v5953
        %5955 = vmatprep.subr.mxu0 0.0
        %v5956 = vand.u32 %v444, 4294901760
        %5957 = vmatpush1.msra.mxu0 %v5956
        %5958 = vmatprep.subr.mxu0 0.0
        %v5959 = vand.u32 %v447, 4294901760
        %5960 = vmatpush1.msra.mxu0 %v5959
        %5961 = vmatprep.subr.mxu0 0.0
        %v5962 = vand.u32 %v450, 4294901760
        %5963 = vmatpush1.msra.mxu0 %v5962
        %5964 = vmatprep.subr.mxu0 0.0
        %v5965 = vand.u32 %v453, 4294901760
        %5966 = vmatpush1.msra.mxu0 %v5965
        %5967 = vmatprep.subr.mxu0 0.0
        %v5968 = vand.u32 %v456, 4294901760
        %5969 = vmatpush1.msra.mxu0 %v5968
        %5970 = vmatprep.subr.mxu0 0.0
        %v5971 = vand.u32 %v459, 4294901760
        %5972 = vmatpush1.msra.mxu0 %v5971
        %5973 = vmatprep.subr.mxu0 0.0
        %v5974 = vand.u32 %v462, 4294901760
        %5975 = vmatpush1.msra.mxu0 %v5974
        %5976 = vmatprep.subr.mxu0 0.0
        %v5977 = vand.u32 %v465, 4294901760
        %5978 = vmatpush1.msra.mxu0 %v5977
        %5979 = vmatprep.subr.mxu0 0.0
        %v5980 = vand.u32 %v468, 4294901760
        %5981 = vmatpush1.msra.mxu0 %v5980
        %5982 = vmatprep.subr.mxu0 0.0
        %v5983 = vand.u32 %v471, 4294901760
        %5984 = vmatpush1.msra.mxu0 %v5983
        %5985 = vmatprep.subr.mxu0 0.0
        %v5986 = vand.u32 %v474, 4294901760
        %5987 = vmatpush1.msra.mxu0 %v5986
        %5988 = vmatprep.subr.mxu0 0.0
        %v5989 = vand.u32 %v477, 4294901760
        %5990 = vmatpush1.msra.mxu0 %v5989
        %5991 = vmatprep.subr.mxu0 0.0
        %v5992 = vand.u32 %v480, 4294901760
        %5993 = vmatpush1.msra.mxu0 %v5992
        %5994 = vmatprep.subr.mxu0 0.0
        %v5995 = vand.u32 %v483, 4294901760
        %5996 = vmatpush1.msra.mxu0 %v5995
        %5997 = vmatprep.subr.mxu0 0.0
        %v5998 = vand.u32 %v486, 4294901760
        %5999 = vmatpush1.msra.mxu0 %v5998
        %6000 = vmatprep.subr.mxu0 0.0
        %6001 = vmatpush1.msra.mxu0 0.0
        %6002 = vmatprep.subr.mxu0 0.0
        %6003 = vmatpush1.msra.mxu0 0.0
        %6004 = vmatprep.subr.mxu0 0.0
        %6005 = vmatpush1.msra.mxu0 0.0
        %6006 = vmatprep.subr.mxu0 0.0
        %6007 = vmatpush1.msra.mxu0 0.0
        %6008 = vmatprep.subr.mxu0 0.0
        %6009 = vmatpush1.msra.mxu0 0.0
        %6010 = vmatprep.subr.mxu0 0.0
        %6011 = vmatpush1.msra.mxu0 0.0
        %6012 = vmatprep.subr.mxu0 0.0
        %6013 = vmatpush1.msra.mxu0 0.0
        %6014 = vmatprep.subr.mxu0 0.0
        %6015 = vmatpush1.msra.mxu0 0.0
        %6016 = vmatprep.subr.mxu0 0.0
        %6017 = vmatpush1.msra.mxu0 0.0
        %6018 = vmatprep.subr.mxu0 0.0
        %6019 = vmatpush1.msra.mxu0 0.0
        %6020 = vmatprep.subr.mxu0 0.0
        %6021 = vmatpush1.msra.mxu0 0.0
        %6022 = vmatprep.subr.mxu0 0.0
        %6023 = vmatpush1.msra.mxu0 0.0
        %6024 = vmatprep.subr.mxu0 0.0
        %6025 = vmatpush1.msra.mxu0 0.0
        %6026 = vmatprep.subr.mxu0 0.0
        %6027 = vmatpush1.msra.mxu0 0.0
        %6028 = vmatprep.subr.mxu0 0.0
        %6029 = vmatpush1.msra.mxu0 0.0
        %6030 = vmatprep.subr.mxu0 0.0
        %6031 = vmatpush1.msra.mxu0 0.0
        %6032 = vmatprep.mubr.f32.mxu0 0.0
        %v6033 = vand.u32 %v5091, 4294901760
        %v6034 = vsub.f32 %v5091, %v6033
        %v6035 = vand.u32 %v6034, 4294901760
        %v6036 = vsub.f32 %v6034, %v6035
        %v6037 = vand.u32 %v6036, 4294901760
        %6038 = vmatmul.mubr.f32.gmra.mrb[0].mxu0 %v6037
        %v6039 = vpop.f32.mrb[0].mxu0
        %v6040 = vadd.f32 %v500, %v6039
        %v6041 = vpop.f32.mrb[0].mxu0
        %6042 = vdwg.mxu0
        %6043 = vmatprep.subr.mxu0 0.0
        %v6044 = vand.u32 %v441, 4294901760
        %v6045 = vsub.f32 %v441, %v6044
        %v6046 = vand.u32 %v6045, 4294901760
        %v6047 = vsub.f32 %v6045, %v6046
        %v6048 = vand.u32 %v6047, 4294901760
        %6049 = vmatpush1.msra.mxu0 %v6048
        %6050 = vmatprep.subr.mxu0 0.0
        %v6051 = vand.u32 %v444, 4294901760
        %v6052 = vsub.f32 %v444, %v6051
        %v6053 = vand.u32 %v6052, 4294901760
        %v6054 = vsub.f32 %v6052, %v6053
        %v6055 = vand.u32 %v6054, 4294901760
        %6056 = vmatpush1.msra.mxu0 %v6055
        %6057 = vmatprep.subr.mxu0 0.0
        %v6058 = vand.u32 %v447, 4294901760
        %v6059 = vsub.f32 %v447, %v6058
        %v6060 = vand.u32 %v6059, 4294901760
        %v6061 = vsub.f32 %v6059, %v6060
        %v6062 = vand.u32 %v6061, 4294901760
        %6063 = vmatpush1.msra.mxu0 %v6062
        %6064 = vmatprep.subr.mxu0 0.0
        %v6065 = vand.u32 %v450, 4294901760
        %v6066 = vsub.f32 %v450, %v6065
        %v6067 = vand.u32 %v6066, 4294901760
        %v6068 = vsub.f32 %v6066, %v6067
        %v6069 = vand.u32 %v6068, 4294901760
        %6070 = vmatpush1.msra.mxu0 %v6069
        %6071 = vmatprep.subr.mxu0 0.0
        %v6072 = vand.u32 %v453, 4294901760
        %v6073 = vsub.f32 %v453, %v6072
        %v6074 = vand.u32 %v6073, 4294901760
        %v6075 = vsub.f32 %v6073, %v6074
        %v6076 = vand.u32 %v6075, 4294901760
        %6077 = vmatpush1.msra.mxu0 %v6076
        %6078 = vmatprep.subr.mxu0 0.0
        %v6079 = vand.u32 %v456, 4294901760
        %v6080 = vsub.f32 %v456, %v6079
        %v6081 = vand.u32 %v6080, 4294901760
        %v6082 = vsub.f32 %v6080, %v6081
        %v6083 = vand.u32 %v6082, 4294901760
        %6084 = vmatpush1.msra.mxu0 %v6083
        %6085 = vmatprep.subr.mxu0 0.0
        %v6086 = vand.u32 %v459, 4294901760
        %v6087 = vsub.f32 %v459, %v6086
        %v6088 = vand.u32 %v6087, 4294901760
        %v6089 = vsub.f32 %v6087, %v6088
        %v6090 = vand.u32 %v6089, 4294901760
        %6091 = vmatpush1.msra.mxu0 %v6090
        %6092 = vmatprep.subr.mxu0 0.0
        %v6093 = vand.u32 %v462, 4294901760
        %v6094 = vsub.f32 %v462, %v6093
        %v6095 = vand.u32 %v6094, 4294901760
        %v6096 = vsub.f32 %v6094, %v6095
        %v6097 = vand.u32 %v6096, 4294901760
        %6098 = vmatpush1.msra.mxu0 %v6097
        %6099 = vmatprep.subr.mxu0 0.0
        %v6100 = vand.u32 %v465, 4294901760
        %v6101 = vsub.f32 %v465, %v6100
        %v6102 = vand.u32 %v6101, 4294901760
        %v6103 = vsub.f32 %v6101, %v6102
        %v6104 = vand.u32 %v6103, 4294901760
        %6105 = vmatpush1.msra.mxu0 %v6104
        %6106 = vmatprep.subr.mxu0 0.0
        %v6107 = vand.u32 %v468, 4294901760
        %v6108 = vsub.f32 %v468, %v6107
        %v6109 = vand.u32 %v6108, 4294901760
        %v6110 = vsub.f32 %v6108, %v6109
        %v6111 = vand.u32 %v6110, 4294901760
        %6112 = vmatpush1.msra.mxu0 %v6111
        %6113 = vmatprep.subr.mxu0 0.0
        %v6114 = vand.u32 %v471, 4294901760
        %v6115 = vsub.f32 %v471, %v6114
        %v6116 = vand.u32 %v6115, 4294901760
        %v6117 = vsub.f32 %v6115, %v6116
        %v6118 = vand.u32 %v6117, 4294901760
        %6119 = vmatpush1.msra.mxu0 %v6118
        %6120 = vmatprep.subr.mxu0 0.0
        %v6121 = vand.u32 %v474, 4294901760
        %v6122 = vsub.f32 %v474, %v6121
        %v6123 = vand.u32 %v6122, 4294901760
        %v6124 = vsub.f32 %v6122, %v6123
        %v6125 = vand.u32 %v6124, 4294901760
        %6126 = vmatpush1.msra.mxu0 %v6125
        %6127 = vmatprep.subr.mxu0 0.0
        %v6128 = vand.u32 %v477, 4294901760
        %v6129 = vsub.f32 %v477, %v6128
        %v6130 = vand.u32 %v6129, 4294901760
        %v6131 = vsub.f32 %v6129, %v6130
        %v6132 = vand.u32 %v6131, 4294901760
        %6133 = vmatpush1.msra.mxu0 %v6132
        %6134 = vmatprep.subr.mxu0 0.0
        %v6135 = vand.u32 %v480, 4294901760
        %v6136 = vsub.f32 %v480, %v6135
        %v6137 = vand.u32 %v6136, 4294901760
        %v6138 = vsub.f32 %v6136, %v6137
        %v6139 = vand.u32 %v6138, 4294901760
        %6140 = vmatpush1.msra.mxu0 %v6139
        %6141 = vmatprep.subr.mxu0 0.0
        %v6142 = vand.u32 %v483, 4294901760
        %v6143 = vsub.f32 %v483, %v6142
        %v6144 = vand.u32 %v6143, 4294901760
        %v6145 = vsub.f32 %v6143, %v6144
        %v6146 = vand.u32 %v6145, 4294901760
        %6147 = vmatpush1.msra.mxu0 %v6146
        %6148 = vmatprep.subr.mxu0 0.0
        %v6149 = vand.u32 %v486, 4294901760
        %v6150 = vsub.f32 %v486, %v6149
        %v6151 = vand.u32 %v6150, 4294901760
        %v6152 = vsub.f32 %v6150, %v6151
        %v6153 = vand.u32 %v6152, 4294901760
        %6154 = vmatpush1.msra.mxu0 %v6153
        %6155 = vmatprep.subr.mxu0 0.0
        %6156 = vmatpush1.msra.mxu0 0.0
        %6157 = vmatprep.subr.mxu0 0.0
        %6158 = vmatpush1.msra.mxu0 0.0
        %6159 = vmatprep.subr.mxu0 0.0
        %6160 = vmatpush1.msra.mxu0 0.0
        %6161 = vmatprep.subr.mxu0 0.0
        %6162 = vmatpush1.msra.mxu0 0.0
        %6163 = vmatprep.subr.mxu0 0.0
        %6164 = vmatpush1.msra.mxu0 0.0
        %6165 = vmatprep.subr.mxu0 0.0
        %6166 = vmatpush1.msra.mxu0 0.0
        %6167 = vmatprep.subr.mxu0 0.0
        %6168 = vmatpush1.msra.mxu0 0.0
        %6169 = vmatprep.subr.mxu0 0.0
        %6170 = vmatpush1.msra.mxu0 0.0
        %6171 = vmatprep.subr.mxu0 0.0
        %6172 = vmatpush1.msra.mxu0 0.0
        %6173 = vmatprep.subr.mxu0 0.0
        %6174 = vmatpush1.msra.mxu0 0.0
        %6175 = vmatprep.subr.mxu0 0.0
        %6176 = vmatpush1.msra.mxu0 0.0
        %6177 = vmatprep.subr.mxu0 0.0
        %6178 = vmatpush1.msra.mxu0 0.0
        %6179 = vmatprep.subr.mxu0 0.0
        %6180 = vmatpush1.msra.mxu0 0.0
        %6181 = vmatprep.subr.mxu0 0.0
        %6182 = vmatpush1.msra.mxu0 0.0
        %6183 = vmatprep.subr.mxu0 0.0
        %6184 = vmatpush1.msra.mxu0 0.0
        %6185 = vmatprep.subr.mxu0 0.0
        %6186 = vmatpush1.msra.mxu0 0.0
        %6187 = vmatprep.mubr.f32.mxu0 0.0
        %v6188 = vand.u32 %v5091, 4294901760
        %6189 = vmatmul.mubr.f32.gmra.mrb[0].mxu0 %v6188
        %v6190 = vpop.f32.mrb[0].mxu0
        %v6191 = vadd.f32 %v6040, %v6190
        %v6192 = vpop.f32.mrb[0].mxu0
        %6193 = vdwg.mxu0
        %6194 = vmatprep.subr.mxu0 0.0
        %v6195 = vand.u32 %v441, 4294901760
        %v6196 = vsub.f32 %v441, %v6195
        %6197 = vmatpush1.msra.mxu0 %v6196
        %6198 = vmatprep.subr.mxu0 0.0
        %v6199 = vand.u32 %v444, 4294901760
        %v6200 = vsub.f32 %v444, %v6199
        %6201 = vmatpush1.msra.mxu0 %v6200
        %6202 = vmatprep.subr.mxu0 0.0
        %v6203 = vand.u32 %v447, 4294901760
        %v6204 = vsub.f32 %v447, %v6203
        %6205 = vmatpush1.msra.mxu0 %v6204
        %6206 = vmatprep.subr.mxu0 0.0
        %v6207 = vand.u32 %v450, 4294901760
        %v6208 = vsub.f32 %v450, %v6207
        %6209 = vmatpush1.msra.mxu0 %v6208
        %6210 = vmatprep.subr.mxu0 0.0
        %v6211 = vand.u32 %v453, 4294901760
        %v6212 = vsub.f32 %v453, %v6211
        %6213 = vmatpush1.msra.mxu0 %v6212
        %6214 = vmatprep.subr.mxu0 0.0
        %v6215 = vand.u32 %v456, 4294901760
        %v6216 = vsub.f32 %v456, %v6215
        %6217 = vmatpush1.msra.mxu0 %v6216
        %6218 = vmatprep.subr.mxu0 0.0
        %v6219 = vand.u32 %v459, 4294901760
        %v6220 = vsub.f32 %v459, %v6219
        %6221 = vmatpush1.msra.mxu0 %v6220
        %6222 = vmatprep.subr.mxu0 0.0
        %v6223 = vand.u32 %v462, 4294901760
        %v6224 = vsub.f32 %v462, %v6223
        %6225 = vmatpush1.msra.mxu0 %v6224
        %6226 = vmatprep.subr.mxu0 0.0
        %v6227 = vand.u32 %v465, 4294901760
        %v6228 = vsub.f32 %v465, %v6227
        %6229 = vmatpush1.msra.mxu0 %v6228
        %6230 = vmatprep.subr.mxu0 0.0
        %v6231 = vand.u32 %v468, 4294901760
        %v6232 = vsub.f32 %v468, %v6231
        %6233 = vmatpush1.msra.mxu0 %v6232
        %6234 = vmatprep.subr.mxu0 0.0
        %v6235 = vand.u32 %v471, 4294901760
        %v6236 = vsub.f32 %v471, %v6235
        %6237 = vmatpush1.msra.mxu0 %v6236
        %6238 = vmatprep.subr.mxu0 0.0
        %v6239 = vand.u32 %v474, 4294901760
        %v6240 = vsub.f32 %v474, %v6239
        %6241 = vmatpush1.msra.mxu0 %v6240
        %6242 = vmatprep.subr.mxu0 0.0
        %v6243 = vand.u32 %v477, 4294901760
        %v6244 = vsub.f32 %v477, %v6243
        %6245 = vmatpush1.msra.mxu0 %v6244
        %6246 = vmatprep.subr.mxu0 0.0
        %v6247 = vand.u32 %v480, 4294901760
        %v6248 = vsub.f32 %v480, %v6247
        %6249 = vmatpush1.msra.mxu0 %v6248
        %6250 = vmatprep.subr.mxu0 0.0
        %v6251 = vand.u32 %v483, 4294901760
        %v6252 = vsub.f32 %v483, %v6251
        %6253 = vmatpush1.msra.mxu0 %v6252
        %6254 = vmatprep.subr.mxu0 0.0
        %v6255 = vand.u32 %v486, 4294901760
        %v6256 = vsub.f32 %v486, %v6255
        %6257 = vmatpush1.msra.mxu0 %v6256
        %6258 = vmatprep.subr.mxu0 0.0
        %6259 = vmatpush1.msra.mxu0 0.0
        %6260 = vmatprep.subr.mxu0 0.0
        %6261 = vmatpush1.msra.mxu0 0.0
        %6262 = vmatprep.subr.mxu0 0.0
        %6263 = vmatpush1.msra.mxu0 0.0
        %6264 = vmatprep.subr.mxu0 0.0
        %6265 = vmatpush1.msra.mxu0 0.0
        %6266 = vmatprep.subr.mxu0 0.0
        %6267 = vmatpush1.msra.mxu0 0.0
        %6268 = vmatprep.subr.mxu0 0.0
        %6269 = vmatpush1.msra.mxu0 0.0
        %6270 = vmatprep.subr.mxu0 0.0
        %6271 = vmatpush1.msra.mxu0 0.0
        %6272 = vmatprep.subr.mxu0 0.0
        %6273 = vmatpush1.msra.mxu0 0.0
        %6274 = vmatprep.subr.mxu0 0.0
        %6275 = vmatpush1.msra.mxu0 0.0
        %6276 = vmatprep.subr.mxu0 0.0
        %6277 = vmatpush1.msra.mxu0 0.0
        %6278 = vmatprep.subr.mxu0 0.0
        %6279 = vmatpush1.msra.mxu0 0.0
        %6280 = vmatprep.subr.mxu0 0.0
        %6281 = vmatpush1.msra.mxu0 0.0
        %6282 = vmatprep.subr.mxu0 0.0
        %6283 = vmatpush1.msra.mxu0 0.0
        %6284 = vmatprep.subr.mxu0 0.0
        %6285 = vmatpush1.msra.mxu0 0.0
        %6286 = vmatprep.subr.mxu0 0.0
        %6287 = vmatpush1.msra.mxu0 0.0
        %6288 = vmatprep.subr.mxu0 0.0
        %6289 = vmatpush1.msra.mxu0 0.0
        %6290 = vmatprep.mubr.f32.mxu0 0.0
        %v6291 = vand.u32 %v5091, 4294901760
        %v6292 = vsub.f32 %v5091, %v6291
        %6293 = vmatmul.mubr.f32.gmra.mrb[0].mxu0 %v6292
        %v6294 = vpop.f32.mrb[0].mxu0
        %v6295 = vadd.f32 %v6191, %v6294
        %v6296 = vpop.f32.mrb[0].mxu0
        %6297 = vdwg.mxu0
        %6298 = vmatprep.subr.mxu0 0.0
        %v6299 = vand.u32 %v441, 4294901760
        %6300 = vmatpush1.msra.mxu0 %v6299
        %6301 = vmatprep.subr.mxu0 0.0
        %v6302 = vand.u32 %v444, 4294901760
        %6303 = vmatpush1.msra.mxu0 %v6302
        %6304 = vmatprep.subr.mxu0 0.0
        %v6305 = vand.u32 %v447, 4294901760
        %6306 = vmatpush1.msra.mxu0 %v6305
        %6307 = vmatprep.subr.mxu0 0.0
        %v6308 = vand.u32 %v450, 4294901760
        %6309 = vmatpush1.msra.mxu0 %v6308
        %6310 = vmatprep.subr.mxu0 0.0
        %v6311 = vand.u32 %v453, 4294901760
        %6312 = vmatpush1.msra.mxu0 %v6311
        %6313 = vmatprep.subr.mxu0 0.0
        %v6314 = vand.u32 %v456, 4294901760
        %6315 = vmatpush1.msra.mxu0 %v6314
        %6316 = vmatprep.subr.mxu0 0.0
        %v6317 = vand.u32 %v459, 4294901760
        %6318 = vmatpush1.msra.mxu0 %v6317
        %6319 = vmatprep.subr.mxu0 0.0
        %v6320 = vand.u32 %v462, 4294901760
        %6321 = vmatpush1.msra.mxu0 %v6320
        %6322 = vmatprep.subr.mxu0 0.0
        %v6323 = vand.u32 %v465, 4294901760
        %6324 = vmatpush1.msra.mxu0 %v6323
        %6325 = vmatprep.subr.mxu0 0.0
        %v6326 = vand.u32 %v468, 4294901760
        %6327 = vmatpush1.msra.mxu0 %v6326
        %6328 = vmatprep.subr.mxu0 0.0
        %v6329 = vand.u32 %v471, 4294901760
        %6330 = vmatpush1.msra.mxu0 %v6329
        %6331 = vmatprep.subr.mxu0 0.0
        %v6332 = vand.u32 %v474, 4294901760
        %6333 = vmatpush1.msra.mxu0 %v6332
        %6334 = vmatprep.subr.mxu0 0.0
        %v6335 = vand.u32 %v477, 4294901760
        %6336 = vmatpush1.msra.mxu0 %v6335
        %6337 = vmatprep.subr.mxu0 0.0
        %v6338 = vand.u32 %v480, 4294901760
        %6339 = vmatpush1.msra.mxu0 %v6338
        %6340 = vmatprep.subr.mxu0 0.0
        %v6341 = vand.u32 %v483, 4294901760
        %6342 = vmatpush1.msra.mxu0 %v6341
        %6343 = vmatprep.subr.mxu0 0.0
        %v6344 = vand.u32 %v486, 4294901760
        %6345 = vmatpush1.msra.mxu0 %v6344
        %6346 = vmatprep.subr.mxu0 0.0
        %6347 = vmatpush1.msra.mxu0 0.0
        %6348 = vmatprep.subr.mxu0 0.0
        %6349 = vmatpush1.msra.mxu0 0.0
        %6350 = vmatprep.subr.mxu0 0.0
        %6351 = vmatpush1.msra.mxu0 0.0
        %6352 = vmatprep.subr.mxu0 0.0
        %6353 = vmatpush1.msra.mxu0 0.0
        %6354 = vmatprep.subr.mxu0 0.0
        %6355 = vmatpush1.msra.mxu0 0.0
        %6356 = vmatprep.subr.mxu0 0.0
        %6357 = vmatpush1.msra.mxu0 0.0
        %6358 = vmatprep.subr.mxu0 0.0
        %6359 = vmatpush1.msra.mxu0 0.0
        %6360 = vmatprep.subr.mxu0 0.0
        %6361 = vmatpush1.msra.mxu0 0.0
        %6362 = vmatprep.subr.mxu0 0.0
        %6363 = vmatpush1.msra.mxu0 0.0
        %6364 = vmatprep.subr.mxu0 0.0
        %6365 = vmatpush1.msra.mxu0 0.0
        %6366 = vmatprep.subr.mxu0 0.0
        %6367 = vmatpush1.msra.mxu0 0.0
        %6368 = vmatprep.subr.mxu0 0.0
        %6369 = vmatpush1.msra.mxu0 0.0
        %6370 = vmatprep.subr.mxu0 0.0
        %6371 = vmatpush1.msra.mxu0 0.0
        %6372 = vmatprep.subr.mxu0 0.0
        %6373 = vmatpush1.msra.mxu0 0.0
        %6374 = vmatprep.subr.mxu0 0.0
        %6375 = vmatpush1.msra.mxu0 0.0
        %6376 = vmatprep.subr.mxu0 0.0
        %6377 = vmatpush1.msra.mxu0 0.0
        %6378 = vmatprep.mubr.f32.mxu0 0.0
        %v6379 = vand.u32 %v5091, 4294901760
        %v6380 = vsub.f32 %v5091, %v6379
        %v6381 = vand.u32 %v6380, 4294901760
        %6382 = vmatmul.mubr.f32.gmra.mrb[0].mxu0 %v6381
        %v6383 = vpop.f32.mrb[0].mxu0
        %v6384 = vadd.f32 %v6295, %v6383
        %v6385 = vpop.f32.mrb[0].mxu0
        %6386 = vdwg.mxu0
        %6387 = vmatprep.subr.mxu0 0.0
        %v6388 = vand.u32 %v441, 4294901760
        %v6389 = vsub.f32 %v441, %v6388
        %v6390 = vand.u32 %v6389, 4294901760
        %6391 = vmatpush1.msra.mxu0 %v6390
        %6392 = vmatprep.subr.mxu0 0.0
        %v6393 = vand.u32 %v444, 4294901760
        %v6394 = vsub.f32 %v444, %v6393
        %v6395 = vand.u32 %v6394, 4294901760
        %6396 = vmatpush1.msra.mxu0 %v6395
        %6397 = vmatprep.subr.mxu0 0.0
        %v6398 = vand.u32 %v447, 4294901760
        %v6399 = vsub.f32 %v447, %v6398
        %v6400 = vand.u32 %v6399, 4294901760
        %6401 = vmatpush1.msra.mxu0 %v6400
        %6402 = vmatprep.subr.mxu0 0.0
        %v6403 = vand.u32 %v450, 4294901760
        %v6404 = vsub.f32 %v450, %v6403
        %v6405 = vand.u32 %v6404, 4294901760
        %6406 = vmatpush1.msra.mxu0 %v6405
        %6407 = vmatprep.subr.mxu0 0.0
        %v6408 = vand.u32 %v453, 4294901760
        %v6409 = vsub.f32 %v453, %v6408
        %v6410 = vand.u32 %v6409, 4294901760
        %6411 = vmatpush1.msra.mxu0 %v6410
        %6412 = vmatprep.subr.mxu0 0.0
        %v6413 = vand.u32 %v456, 4294901760
        %v6414 = vsub.f32 %v456, %v6413
        %v6415 = vand.u32 %v6414, 4294901760
        %6416 = vmatpush1.msra.mxu0 %v6415
        %6417 = vmatprep.subr.mxu0 0.0
        %v6418 = vand.u32 %v459, 4294901760
        %v6419 = vsub.f32 %v459, %v6418
        %v6420 = vand.u32 %v6419, 4294901760
        %6421 = vmatpush1.msra.mxu0 %v6420
        %6422 = vmatprep.subr.mxu0 0.0
        %v6423 = vand.u32 %v462, 4294901760
        %v6424 = vsub.f32 %v462, %v6423
        %v6425 = vand.u32 %v6424, 4294901760
        %6426 = vmatpush1.msra.mxu0 %v6425
        %6427 = vmatprep.subr.mxu0 0.0
        %v6428 = vand.u32 %v465, 4294901760
        %v6429 = vsub.f32 %v465, %v6428
        %v6430 = vand.u32 %v6429, 4294901760
        %6431 = vmatpush1.msra.mxu0 %v6430
        %6432 = vmatprep.subr.mxu0 0.0
        %v6433 = vand.u32 %v468, 4294901760
        %v6434 = vsub.f32 %v468, %v6433
        %v6435 = vand.u32 %v6434, 4294901760
        %6436 = vmatpush1.msra.mxu0 %v6435
        %6437 = vmatprep.subr.mxu0 0.0
        %v6438 = vand.u32 %v471, 4294901760
        %v6439 = vsub.f32 %v471, %v6438
        %v6440 = vand.u32 %v6439, 4294901760
        %6441 = vmatpush1.msra.mxu0 %v6440
        %6442 = vmatprep.subr.mxu0 0.0
        %v6443 = vand.u32 %v474, 4294901760
        %v6444 = vsub.f32 %v474, %v6443
        %v6445 = vand.u32 %v6444, 4294901760
        %6446 = vmatpush1.msra.mxu0 %v6445
        %6447 = vmatprep.subr.mxu0 0.0
        %v6448 = vand.u32 %v477, 4294901760
        %v6449 = vsub.f32 %v477, %v6448
        %v6450 = vand.u32 %v6449, 4294901760
        %6451 = vmatpush1.msra.mxu0 %v6450
        %6452 = vmatprep.subr.mxu0 0.0
        %v6453 = vand.u32 %v480, 4294901760
        %v6454 = vsub.f32 %v480, %v6453
        %v6455 = vand.u32 %v6454, 4294901760
        %6456 = vmatpush1.msra.mxu0 %v6455
        %6457 = vmatprep.subr.mxu0 0.0
        %v6458 = vand.u32 %v483, 4294901760
        %v6459 = vsub.f32 %v483, %v6458
        %v6460 = vand.u32 %v6459, 4294901760
        %6461 = vmatpush1.msra.mxu0 %v6460
        %6462 = vmatprep.subr.mxu0 0.0
        %v6463 = vand.u32 %v486, 4294901760
        %v6464 = vsub.f32 %v486, %v6463
        %v6465 = vand.u32 %v6464, 4294901760
        %6466 = vmatpush1.msra.mxu0 %v6465
        %6467 = vmatprep.subr.mxu0 0.0
        %6468 = vmatpush1.msra.mxu0 0.0
        %6469 = vmatprep.subr.mxu0 0.0
        %6470 = vmatpush1.msra.mxu0 0.0
        %6471 = vmatprep.subr.mxu0 0.0
        %6472 = vmatpush1.msra.mxu0 0.0
        %6473 = vmatprep.subr.mxu0 0.0
        %6474 = vmatpush1.msra.mxu0 0.0
        %6475 = vmatprep.subr.mxu0 0.0
        %6476 = vmatpush1.msra.mxu0 0.0
        %6477 = vmatprep.subr.mxu0 0.0
        %6478 = vmatpush1.msra.mxu0 0.0
        %6479 = vmatprep.subr.mxu0 0.0
        %6480 = vmatpush1.msra.mxu0 0.0
        %6481 = vmatprep.subr.mxu0 0.0
        %6482 = vmatpush1.msra.mxu0 0.0
        %6483 = vmatprep.subr.mxu0 0.0
        %6484 = vmatpush1.msra.mxu0 0.0
        %6485 = vmatprep.subr.mxu0 0.0
        %6486 = vmatpush1.msra.mxu0 0.0
        %6487 = vmatprep.subr.mxu0 0.0
        %6488 = vmatpush1.msra.mxu0 0.0
        %6489 = vmatprep.subr.mxu0 0.0
        %6490 = vmatpush1.msra.mxu0 0.0
        %6491 = vmatprep.subr.mxu0 0.0
        %6492 = vmatpush1.msra.mxu0 0.0
        %6493 = vmatprep.subr.mxu0 0.0
        %6494 = vmatpush1.msra.mxu0 0.0
        %6495 = vmatprep.subr.mxu0 0.0
        %6496 = vmatpush1.msra.mxu0 0.0
        %6497 = vmatprep.subr.mxu0 0.0
        %6498 = vmatpush1.msra.mxu0 0.0
        %6499 = vmatprep.mubr.f32.mxu0 0.0
        %v6500 = vand.u32 %v5091, 4294901760
        %6501 = vmatmul.mubr.f32.gmra.mrb[0].mxu0 %v6500
        %v6502 = vpop.f32.mrb[0].mxu0
        %v6503 = vadd.f32 %v6384, %v6502
        %v6504 = vpop.f32.mrb[0].mxu0
        %6505 = vdwg.mxu0
        %6506 = vmatprep.subr.mxu0 0.0
        %v6507 = vand.u32 %v441, 4294901760
        %6508 = vmatpush1.msra.mxu0 %v6507
        %6509 = vmatprep.subr.mxu0 0.0
        %v6510 = vand.u32 %v444, 4294901760
        %6511 = vmatpush1.msra.mxu0 %v6510
        %6512 = vmatprep.subr.mxu0 0.0
        %v6513 = vand.u32 %v447, 4294901760
        %6514 = vmatpush1.msra.mxu0 %v6513
        %6515 = vmatprep.subr.mxu0 0.0
        %v6516 = vand.u32 %v450, 4294901760
        %6517 = vmatpush1.msra.mxu0 %v6516
        %6518 = vmatprep.subr.mxu0 0.0
        %v6519 = vand.u32 %v453, 4294901760
        %6520 = vmatpush1.msra.mxu0 %v6519
        %6521 = vmatprep.subr.mxu0 0.0
        %v6522 = vand.u32 %v456, 4294901760
        %6523 = vmatpush1.msra.mxu0 %v6522
        %6524 = vmatprep.subr.mxu0 0.0
        %v6525 = vand.u32 %v459, 4294901760
        %6526 = vmatpush1.msra.mxu0 %v6525
        %6527 = vmatprep.subr.mxu0 0.0
        %v6528 = vand.u32 %v462, 4294901760
        %6529 = vmatpush1.msra.mxu0 %v6528
        %6530 = vmatprep.subr.mxu0 0.0
        %v6531 = vand.u32 %v465, 4294901760
        %6532 = vmatpush1.msra.mxu0 %v6531
        %6533 = vmatprep.subr.mxu0 0.0
        %v6534 = vand.u32 %v468, 4294901760
        %6535 = vmatpush1.msra.mxu0 %v6534
        %6536 = vmatprep.subr.mxu0 0.0
        %v6537 = vand.u32 %v471, 4294901760
        %6538 = vmatpush1.msra.mxu0 %v6537
        %6539 = vmatprep.subr.mxu0 0.0
        %v6540 = vand.u32 %v474, 4294901760
        %6541 = vmatpush1.msra.mxu0 %v6540
        %6542 = vmatprep.subr.mxu0 0.0
        %v6543 = vand.u32 %v477, 4294901760
        %6544 = vmatpush1.msra.mxu0 %v6543
        %6545 = vmatprep.subr.mxu0 0.0
        %v6546 = vand.u32 %v480, 4294901760
        %6547 = vmatpush1.msra.mxu0 %v6546
        %6548 = vmatprep.subr.mxu0 0.0
        %v6549 = vand.u32 %v483, 4294901760
        %6550 = vmatpush1.msra.mxu0 %v6549
        %6551 = vmatprep.subr.mxu0 0.0
        %v6552 = vand.u32 %v486, 4294901760
        %6553 = vmatpush1.msra.mxu0 %v6552
        %6554 = vmatprep.subr.mxu0 0.0
        %6555 = vmatpush1.msra.mxu0 0.0
        %6556 = vmatprep.subr.mxu0 0.0
        %6557 = vmatpush1.msra.mxu0 0.0
        %6558 = vmatprep.subr.mxu0 0.0
        %6559 = vmatpush1.msra.mxu0 0.0
        %6560 = vmatprep.subr.mxu0 0.0
        %6561 = vmatpush1.msra.mxu0 0.0
        %6562 = vmatprep.subr.mxu0 0.0
        %6563 = vmatpush1.msra.mxu0 0.0
        %6564 = vmatprep.subr.mxu0 0.0
        %6565 = vmatpush1.msra.mxu0 0.0
        %6566 = vmatprep.subr.mxu0 0.0
        %6567 = vmatpush1.msra.mxu0 0.0
        %6568 = vmatprep.subr.mxu0 0.0
        %6569 = vmatpush1.msra.mxu0 0.0
        %6570 = vmatprep.subr.mxu0 0.0
        %6571 = vmatpush1.msra.mxu0 0.0
        %6572 = vmatprep.subr.mxu0 0.0
        %6573 = vmatpush1.msra.mxu0 0.0
        %6574 = vmatprep.subr.mxu0 0.0
        %6575 = vmatpush1.msra.mxu0 0.0
        %6576 = vmatprep.subr.mxu0 0.0
        %6577 = vmatpush1.msra.mxu0 0.0
        %6578 = vmatprep.subr.mxu0 0.0
        %6579 = vmatpush1.msra.mxu0 0.0
        %6580 = vmatprep.subr.mxu0 0.0
        %6581 = vmatpush1.msra.mxu0 0.0
        %6582 = vmatprep.subr.mxu0 0.0
        %6583 = vmatpush1.msra.mxu0 0.0
        %6584 = vmatprep.subr.mxu0 0.0
        %6585 = vmatpush1.msra.mxu0 0.0
        %6586 = vmatprep.mubr.f32.mxu0 0.0
        %v6587 = vand.u32 %v5091, 4294901760
        %6588 = vmatmul.mubr.f32.gmra.mrb[0].mxu0 %v6587
        %v6589 = vpop.f32.mrb[0].mxu0
        %v6590 = vadd.f32 %v6503, %v6589
        %v6591 = vpop.f32.mrb[0].mxu0
        %6592 = vdwg.mxu0
        %v6594 = vrot.slane %v5948, 4
        %v6596 = vadd.f32 %v5094, %v6594
        %v6597 = vxor.u32 %v6596, 2147483648
        %v6598 = vmul.f32 %v6597, 1.442695
        %v6599 = vpow.pop %v6598
        %v6600 = vadd.f32 %v6599, 1.0
        %v6601 = vrcp.pop %v6600
        %v6602 = vmul.f32 1.0, %v6601
        %v6604 = vrot.slane %v5950, 4
        %v6606 = vadd.f32 %v5095, %v6604
        %v6607 = vxor.u32 %v6606, 2147483648
        %v6608 = vmul.f32 %v6607, 1.442695
        %v6609 = vpow.pop %v6608
        %v6610 = vadd.f32 %v6609, 1.0
        %v6611 = vrcp.pop %v6610
        %v6612 = vmul.f32 1.0, %v6611
        %v6614 = vrot.slane %v6590, 4
        %v6616 = vmul.f32 %v6602, %v6614
        %v6617 = vadd.f32 %v5096, %v6616
        %v6618 = vtanh.pop %v6617
        %v6619 = vsub.f32 1.0, %v6612
        %v6620 = vmul.f32 %v6619, %v6618
        %v6622 = vrot.slane %v5091, 4
        %v6624 = vmul.f32 %v6612, %v6622
        %v6625 = vadd.f32 %v6620, %v6624
        %6626 = vst [vmem:[#allocation2 - $0x4] sm:$0xf0] %v6625
        %6627 = vst [vmem:[#allocation3 + $0x8] sm:$0xf0] %v6625
        %v6628 = vld [vmem:[#allocation3] sm:$0xff]
        %v6629 = vld [vmem:[#allocation3 + $0x8] sm:$0xff]
        %v6630 = vld [vmem:[#allocation10] sm:$0xff]
        %v6631 = vld [vmem:[#allocation10 + $0x8] sm:$0xff]
        %v6632 = vld [vmem:[#allocation10 + $0x10] sm:$0xff]
        %v6633 = vld [vmem:[#allocation10 + $0x18] sm:$0xff]
        %v6634 = vld [vmem:[#allocation10 + $0x20] sm:$0xff]
        %v6635 = vld [vmem:[#allocation10 + $0x28] sm:$0xff]
        %v6636 = vld [vmem:[#allocation10 + $0x30] sm:$0xff]
        %v6637 = vld [vmem:[#allocation10 + $0x38] sm:$0xff]
        %v6638 = vld [vmem:[#allocation10 + $0x40] sm:$0xff]
        %v6639 = vld [vmem:[#allocation10 + $0x48] sm:$0xff]
        %v6640 = vld [vmem:[#allocation10 + $0x50] sm:$0xff]
        %v6641 = vld [vmem:[#allocation10 + $0x58] sm:$0xff]
        %v6642 = vld [vmem:[#allocation10 + $0x60] sm:$0xff]
        %v6643 = vld [vmem:[#allocation10 + $0x68] sm:$0xff]
        %v6644 = vld [vmem:[#allocation10 + $0x70] sm:$0xff]
        %v6645 = vld [vmem:[#allocation10 + $0x78] sm:$0xff]
        %v6646 = vld [vmem:[%s5] sm:$0x1]
        %v6648 = vlaneseq
        %v6649 = vshrl.u32 %v6648, 7
        %v6650 = vsub.s32 0, %v6649
        %v6651 = vrot.slane %v6646, %v6650
        %6653 = vmatprep.subr.mxu0 0.0
        %v6654 = vand.u32 %v6630, 4294901760
        %6655 = vmatpush1.msra.mxu0 %v6654
        %6656 = vmatprep.subr.mxu0 0.0
        %v6657 = vand.u32 %v6631, 4294901760
        %6658 = vmatpush1.msra.mxu0 %v6657
        %6659 = vmatprep.subr.mxu0 0.0
        %v6660 = vand.u32 %v6632, 4294901760
        %6661 = vmatpush1.msra.mxu0 %v6660
        %6662 = vmatprep.subr.mxu0 0.0
        %v6663 = vand.u32 %v6633, 4294901760
        %6664 = vmatpush1.msra.mxu0 %v6663
        %6665 = vmatprep.subr.mxu0 0.0
        %v6666 = vand.u32 %v6634, 4294901760
        %6667 = vmatpush1.msra.mxu0 %v6666
        %6668 = vmatprep.subr.mxu0 0.0
        %v6669 = vand.u32 %v6635, 4294901760
        %6670 = vmatpush1.msra.mxu0 %v6669
        %6671 = vmatprep.subr.mxu0 0.0
        %v6672 = vand.u32 %v6636, 4294901760
        %6673 = vmatpush1.msra.mxu0 %v6672
        %6674 = vmatprep.subr.mxu0 0.0
        %v6675 = vand.u32 %v6637, 4294901760
        %6676 = vmatpush1.msra.mxu0 %v6675
        %6677 = vmatprep.subr.mxu0 0.0
        %v6678 = vand.u32 %v6638, 4294901760
        %6679 = vmatpush1.msra.mxu0 %v6678
        %6680 = vmatprep.subr.mxu0 0.0
        %v6681 = vand.u32 %v6639, 4294901760
        %6682 = vmatpush1.msra.mxu0 %v6681
        %6683 = vmatprep.subr.mxu0 0.0
        %v6684 = vand.u32 %v6640, 4294901760
        %6685 = vmatpush1.msra.mxu0 %v6684
        %6686 = vmatprep.subr.mxu0 0.0
        %v6687 = vand.u32 %v6641, 4294901760
        %6688 = vmatpush1.msra.mxu0 %v6687
        %6689 = vmatprep.subr.mxu0 0.0
        %v6690 = vand.u32 %v6642, 4294901760
        %6691 = vmatpush1.msra.mxu0 %v6690
        %6692 = vmatprep.subr.mxu0 0.0
        %v6693 = vand.u32 %v6643, 4294901760
        %6694 = vmatpush1.msra.mxu0 %v6693
        %6695 = vmatprep.subr.mxu0 0.0
        %v6696 = vand.u32 %v6644, 4294901760
        %6697 = vmatpush1.msra.mxu0 %v6696
        %6698 = vmatprep.subr.mxu0 0.0
        %v6699 = vand.u32 %v6645, 4294901760
        %6700 = vmatpush1.msra.mxu0 %v6699
        %6701 = vmatprep.subr.mxu0 0.0
        %6702 = vmatpush1.msra.mxu0 0.0
        %6703 = vmatprep.subr.mxu0 0.0
        %6704 = vmatpush1.msra.mxu0 0.0
        %6705 = vmatprep.subr.mxu0 0.0
        %6706 = vmatpush1.msra.mxu0 0.0
        %6707 = vmatprep.subr.mxu0 0.0
        %6708 = vmatpush1.msra.mxu0 0.0
        %6709 = vmatprep.subr.mxu0 0.0
        %6710 = vmatpush1.msra.mxu0 0.0
        %6711 = vmatprep.subr.mxu0 0.0
        %6712 = vmatpush1.msra.mxu0 0.0
        %6713 = vmatprep.subr.mxu0 0.0
        %6714 = vmatpush1.msra.mxu0 0.0
        %6715 = vmatprep.subr.mxu0 0.0
        %6716 = vmatpush1.msra.mxu0 0.0
        %6717 = vmatprep.subr.mxu0 0.0
        %6718 = vmatpush1.msra.mxu0 0.0
        %6719 = vmatprep.subr.mxu0 0.0
        %6720 = vmatpush1.msra.mxu0 0.0
        %6721 = vmatprep.subr.mxu0 0.0
        %6722 = vmatpush1.msra.mxu0 0.0
        %6723 = vmatprep.subr.mxu0 0.0
        %6724 = vmatpush1.msra.mxu0 0.0
        %6725 = vmatprep.subr.mxu0 0.0
        %6726 = vmatpush1.msra.mxu0 0.0
        %6727 = vmatprep.subr.mxu0 0.0
        %6728 = vmatpush1.msra.mxu0 0.0
        %6729 = vmatprep.subr.mxu0 0.0
        %6730 = vmatpush1.msra.mxu0 0.0
        %6731 = vmatprep.subr.mxu0 0.0
        %6732 = vmatpush1.msra.mxu0 0.0
        %6733 = vmatprep.mubr.f32.mxu0 0.0
        %v6734 = vand.u32 %v6628, 4294901760
        %v6735 = vsub.f32 %v6628, %v6734
        %v6736 = vand.u32 %v6735, 4294901760
        %v6737 = vsub.f32 %v6735, %v6736
        %v6738 = vand.u32 %v6737, 4294901760
        %6739 = vmatmul.mubr.f32.gmra.mrb[0].mxu0 %v6738
        %v6740 = vpop.f32.mrb[0].mxu0
        %v6741 = vadd.f32 %v6651, %v6740
        %v6742 = vpop.f32.mrb[0].mxu0
        %6743 = vmatprep.mubr.f32.mxu0 0.0
        %v6744 = vand.u32 %v6629, 4294901760
        %v6745 = vsub.f32 %v6629, %v6744
        %v6746 = vand.u32 %v6745, 4294901760
        %v6747 = vsub.f32 %v6745, %v6746
        %v6748 = vand.u32 %v6747, 4294901760
        %6749 = vmatmul.mubr.f32.gmra.mrb[0].mxu0 %v6748
        %v6750 = vpop.f32.mrb[0].mxu0
        %v6751 = vadd.f32 %v6651, %v6750
        %v6752 = vpop.f32.mrb[0].mxu0
        %6753 = vdwg.mxu0
        %6754 = vmatprep.subr.mxu0 0.0
        %v6755 = vand.u32 %v6630, 4294901760
        %v6756 = vsub.f32 %v6630, %v6755
        %v6757 = vand.u32 %v6756, 4294901760
        %v6758 = vsub.f32 %v6756, %v6757
        %v6759 = vand.u32 %v6758, 4294901760
        %6760 = vmatpush1.msra.mxu0 %v6759
        %6761 = vmatprep.subr.mxu0 0.0
        %v6762 = vand.u32 %v6631, 4294901760
        %v6763 = vsub.f32 %v6631, %v6762
        %v6764 = vand.u32 %v6763, 4294901760
        %v6765 = vsub.f32 %v6763, %v6764
        %v6766 = vand.u32 %v6765, 4294901760
        %6767 = vmatpush1.msra.mxu0 %v6766
        %6768 = vmatprep.subr.mxu0 0.0
        %v6769 = vand.u32 %v6632, 4294901760
        %v6770 = vsub.f32 %v6632, %v6769
        %v6771 = vand.u32 %v6770, 4294901760
        %v6772 = vsub.f32 %v6770, %v6771
        %v6773 = vand.u32 %v6772, 4294901760
        %6774 = vmatpush1.msra.mxu0 %v6773
        %6775 = vmatprep.subr.mxu0 0.0
        %v6776 = vand.u32 %v6633, 4294901760
        %v6777 = vsub.f32 %v6633, %v6776
        %v6778 = vand.u32 %v6777, 4294901760
        %v6779 = vsub.f32 %v6777, %v6778
        %v6780 = vand.u32 %v6779, 4294901760
        %6781 = vmatpush1.msra.mxu0 %v6780
        %6782 = vmatprep.subr.mxu0 0.0
        %v6783 = vand.u32 %v6634, 4294901760
        %v6784 = vsub.f32 %v6634, %v6783
        %v6785 = vand.u32 %v6784, 4294901760
        %v6786 = vsub.f32 %v6784, %v6785
        %v6787 = vand.u32 %v6786, 4294901760
        %6788 = vmatpush1.msra.mxu0 %v6787
        %6789 = vmatprep.subr.mxu0 0.0
        %v6790 = vand.u32 %v6635, 4294901760
        %v6791 = vsub.f32 %v6635, %v6790
        %v6792 = vand.u32 %v6791, 4294901760
        %v6793 = vsub.f32 %v6791, %v6792
        %v6794 = vand.u32 %v6793, 4294901760
        %6795 = vmatpush1.msra.mxu0 %v6794
        %6796 = vmatprep.subr.mxu0 0.0
        %v6797 = vand.u32 %v6636, 4294901760
        %v6798 = vsub.f32 %v6636, %v6797
        %v6799 = vand.u32 %v6798, 4294901760
        %v6800 = vsub.f32 %v6798, %v6799
        %v6801 = vand.u32 %v6800, 4294901760
        %6802 = vmatpush1.msra.mxu0 %v6801
        %6803 = vmatprep.subr.mxu0 0.0
        %v6804 = vand.u32 %v6637, 4294901760
        %v6805 = vsub.f32 %v6637, %v6804
        %v6806 = vand.u32 %v6805, 4294901760
        %v6807 = vsub.f32 %v6805, %v6806
        %v6808 = vand.u32 %v6807, 4294901760
        %6809 = vmatpush1.msra.mxu0 %v6808
        %6810 = vmatprep.subr.mxu0 0.0
        %v6811 = vand.u32 %v6638, 4294901760
        %v6812 = vsub.f32 %v6638, %v6811
        %v6813 = vand.u32 %v6812, 4294901760
        %v6814 = vsub.f32 %v6812, %v6813
        %v6815 = vand.u32 %v6814, 4294901760
        %6816 = vmatpush1.msra.mxu0 %v6815
        %6817 = vmatprep.subr.mxu0 0.0
        %v6818 = vand.u32 %v6639, 4294901760
        %v6819 = vsub.f32 %v6639, %v6818
        %v6820 = vand.u32 %v6819, 4294901760
        %v6821 = vsub.f32 %v6819, %v6820
        %v6822 = vand.u32 %v6821, 4294901760
        %6823 = vmatpush1.msra.mxu0 %v6822
        %6824 = vmatprep.subr.mxu0 0.0
        %v6825 = vand.u32 %v6640, 4294901760
        %v6826 = vsub.f32 %v6640, %v6825
        %v6827 = vand.u32 %v6826, 4294901760
        %v6828 = vsub.f32 %v6826, %v6827
        %v6829 = vand.u32 %v6828, 4294901760
        %6830 = vmatpush1.msra.mxu0 %v6829
        %6831 = vmatprep.subr.mxu0 0.0
        %v6832 = vand.u32 %v6641, 4294901760
        %v6833 = vsub.f32 %v6641, %v6832
        %v6834 = vand.u32 %v6833, 4294901760
        %v6835 = vsub.f32 %v6833, %v6834
        %v6836 = vand.u32 %v6835, 4294901760
        %6837 = vmatpush1.msra.mxu0 %v6836
        %6838 = vmatprep.subr.mxu0 0.0
        %v6839 = vand.u32 %v6642, 4294901760
        %v6840 = vsub.f32 %v6642, %v6839
        %v6841 = vand.u32 %v6840, 4294901760
        %v6842 = vsub.f32 %v6840, %v6841
        %v6843 = vand.u32 %v6842, 4294901760
        %6844 = vmatpush1.msra.mxu0 %v6843
        %6845 = vmatprep.subr.mxu0 0.0
        %v6846 = vand.u32 %v6643, 4294901760
        %v6847 = vsub.f32 %v6643, %v6846
        %v6848 = vand.u32 %v6847, 4294901760
        %v6849 = vsub.f32 %v6847, %v6848
        %v6850 = vand.u32 %v6849, 4294901760
        %6851 = vmatpush1.msra.mxu0 %v6850
        %6852 = vmatprep.subr.mxu0 0.0
        %v6853 = vand.u32 %v6644, 4294901760
        %v6854 = vsub.f32 %v6644, %v6853
        %v6855 = vand.u32 %v6854, 4294901760
        %v6856 = vsub.f32 %v6854, %v6855
        %v6857 = vand.u32 %v6856, 4294901760
        %6858 = vmatpush1.msra.mxu0 %v6857
        %6859 = vmatprep.subr.mxu0 0.0
        %v6860 = vand.u32 %v6645, 4294901760
        %v6861 = vsub.f32 %v6645, %v6860
        %v6862 = vand.u32 %v6861, 4294901760
        %v6863 = vsub.f32 %v6861, %v6862
        %v6864 = vand.u32 %v6863, 4294901760
        %6865 = vmatpush1.msra.mxu0 %v6864
        %6866 = vmatprep.subr.mxu0 0.0
        %6867 = vmatpush1.msra.mxu0 0.0
        %6868 = vmatprep.subr.mxu0 0.0
        %6869 = vmatpush1.msra.mxu0 0.0
        %6870 = vmatprep.subr.mxu0 0.0
        %6871 = vmatpush1.msra.mxu0 0.0
        %6872 = vmatprep.subr.mxu0 0.0
        %6873 = vmatpush1.msra.mxu0 0.0
        %6874 = vmatprep.subr.mxu0 0.0
        %6875 = vmatpush1.msra.mxu0 0.0
        %6876 = vmatprep.subr.mxu0 0.0
        %6877 = vmatpush1.msra.mxu0 0.0
        %6878 = vmatprep.subr.mxu0 0.0
        %6879 = vmatpush1.msra.mxu0 0.0
        %6880 = vmatprep.subr.mxu0 0.0
        %6881 = vmatpush1.msra.mxu0 0.0
        %6882 = vmatprep.subr.mxu0 0.0
        %6883 = vmatpush1.msra.mxu0 0.0
        %6884 = vmatprep.subr.mxu0 0.0
        %6885 = vmatpush1.msra.mxu0 0.0
        %6886 = vmatprep.subr.mxu0 0.0
        %6887 = vmatpush1.msra.mxu0 0.0
        %6888 = vmatprep.subr.mxu0 0.0
        %6889 = vmatpush1.msra.mxu0 0.0
        %6890 = vmatprep.subr.mxu0 0.0
        %6891 = vmatpush1.msra.mxu0 0.0
        %6892 = vmatprep.subr.mxu0 0.0
        %6893 = vmatpush1.msra.mxu0 0.0
        %6894 = vmatprep.subr.mxu0 0.0
        %6895 = vmatpush1.msra.mxu0 0.0
        %6896 = vmatprep.subr.mxu0 0.0
        %6897 = vmatpush1.msra.mxu0 0.0
        %6898 = vmatprep.mubr.f32.mxu0 0.0
        %v6899 = vand.u32 %v6628, 4294901760
        %6900 = vmatmul.mubr.f32.gmra.mrb[0].mxu0 %v6899
        %v6901 = vpop.f32.mrb[0].mxu0
        %v6902 = vadd.f32 %v6741, %v6901
        %v6903 = vpop.f32.mrb[0].mxu0
        %6904 = vmatprep.mubr.f32.mxu0 0.0
        %v6905 = vand.u32 %v6629, 4294901760
        %6906 = vmatmul.mubr.f32.gmra.mrb[0].mxu0 %v6905
        %v6907 = vpop.f32.mrb[0].mxu0
        %v6908 = vadd.f32 %v6751, %v6907
        %v6909 = vpop.f32.mrb[0].mxu0
        %6910 = vdwg.mxu0
        %6911 = vmatprep.subr.mxu0 0.0
        %v6912 = vand.u32 %v6630, 4294901760
        %v6913 = vsub.f32 %v6630, %v6912
        %6914 = vmatpush1.msra.mxu0 %v6913
        %6915 = vmatprep.subr.mxu0 0.0
        %v6916 = vand.u32 %v6631, 4294901760
        %v6917 = vsub.f32 %v6631, %v6916
        %6918 = vmatpush1.msra.mxu0 %v6917
        %6919 = vmatprep.subr.mxu0 0.0
        %v6920 = vand.u32 %v6632, 4294901760
        %v6921 = vsub.f32 %v6632, %v6920
        %6922 = vmatpush1.msra.mxu0 %v6921
        %6923 = vmatprep.subr.mxu0 0.0
        %v6924 = vand.u32 %v6633, 4294901760
        %v6925 = vsub.f32 %v6633, %v6924
        %6926 = vmatpush1.msra.mxu0 %v6925
        %6927 = vmatprep.subr.mxu0 0.0
        %v6928 = vand.u32 %v6634, 4294901760
        %v6929 = vsub.f32 %v6634, %v6928
        %6930 = vmatpush1.msra.mxu0 %v6929
        %6931 = vmatprep.subr.mxu0 0.0
        %v6932 = vand.u32 %v6635, 4294901760
        %v6933 = vsub.f32 %v6635, %v6932
        %6934 = vmatpush1.msra.mxu0 %v6933
        %6935 = vmatprep.subr.mxu0 0.0
        %v6936 = vand.u32 %v6636, 4294901760
        %v6937 = vsub.f32 %v6636, %v6936
        %6938 = vmatpush1.msra.mxu0 %v6937
        %6939 = vmatprep.subr.mxu0 0.0
        %v6940 = vand.u32 %v6637, 4294901760
        %v6941 = vsub.f32 %v6637, %v6940
        %6942 = vmatpush1.msra.mxu0 %v6941
        %6943 = vmatprep.subr.mxu0 0.0
        %v6944 = vand.u32 %v6638, 4294901760
        %v6945 = vsub.f32 %v6638, %v6944
        %6946 = vmatpush1.msra.mxu0 %v6945
        %6947 = vmatprep.subr.mxu0 0.0
        %v6948 = vand.u32 %v6639, 4294901760
        %v6949 = vsub.f32 %v6639, %v6948
        %6950 = vmatpush1.msra.mxu0 %v6949
        %6951 = vmatprep.subr.mxu0 0.0
        %v6952 = vand.u32 %v6640, 4294901760
        %v6953 = vsub.f32 %v6640, %v6952
        %6954 = vmatpush1.msra.mxu0 %v6953
        %6955 = vmatprep.subr.mxu0 0.0
        %v6956 = vand.u32 %v6641, 4294901760
        %v6957 = vsub.f32 %v6641, %v6956
        %6958 = vmatpush1.msra.mxu0 %v6957
        %6959 = vmatprep.subr.mxu0 0.0
        %v6960 = vand.u32 %v6642, 4294901760
        %v6961 = vsub.f32 %v6642, %v6960
        %6962 = vmatpush1.msra.mxu0 %v6961
        %6963 = vmatprep.subr.mxu0 0.0
        %v6964 = vand.u32 %v6643, 4294901760
        %v6965 = vsub.f32 %v6643, %v6964
        %6966 = vmatpush1.msra.mxu0 %v6965
        %6967 = vmatprep.subr.mxu0 0.0
        %v6968 = vand.u32 %v6644, 4294901760
        %v6969 = vsub.f32 %v6644, %v6968
        %6970 = vmatpush1.msra.mxu0 %v6969
        %6971 = vmatprep.subr.mxu0 0.0
        %v6972 = vand.u32 %v6645, 4294901760
        %v6973 = vsub.f32 %v6645, %v6972
        %6974 = vmatpush1.msra.mxu0 %v6973
        %6975 = vmatprep.subr.mxu0 0.0
        %6976 = vmatpush1.msra.mxu0 0.0
        %6977 = vmatprep.subr.mxu0 0.0
        %6978 = vmatpush1.msra.mxu0 0.0
        %6979 = vmatprep.subr.mxu0 0.0
        %6980 = vmatpush1.msra.mxu0 0.0
        %6981 = vmatprep.subr.mxu0 0.0
        %6982 = vmatpush1.msra.mxu0 0.0
        %6983 = vmatprep.subr.mxu0 0.0
        %6984 = vmatpush1.msra.mxu0 0.0
        %6985 = vmatprep.subr.mxu0 0.0
        %6986 = vmatpush1.msra.mxu0 0.0
        %6987 = vmatprep.subr.mxu0 0.0
        %6988 = vmatpush1.msra.mxu0 0.0
        %6989 = vmatprep.subr.mxu0 0.0
        %6990 = vmatpush1.msra.mxu0 0.0
        %6991 = vmatprep.subr.mxu0 0.0
        %6992 = vmatpush1.msra.mxu0 0.0
        %6993 = vmatprep.subr.mxu0 0.0
        %6994 = vmatpush1.msra.mxu0 0.0
        %6995 = vmatprep.subr.mxu0 0.0
        %6996 = vmatpush1.msra.mxu0 0.0
        %6997 = vmatprep.subr.mxu0 0.0
        %6998 = vmatpush1.msra.mxu0 0.0
        %6999 = vmatprep.subr.mxu0 0.0
        %7000 = vmatpush1.msra.mxu0 0.0
        %7001 = vmatprep.subr.mxu0 0.0
        %7002 = vmatpush1.msra.mxu0 0.0
        %7003 = vmatprep.subr.mxu0 0.0
        %7004 = vmatpush1.msra.mxu0 0.0
        %7005 = vmatprep.subr.mxu0 0.0
        %7006 = vmatpush1.msra.mxu0 0.0
        %7007 = vmatprep.mubr.f32.mxu0 0.0
        %v7008 = vand.u32 %v6628, 4294901760
        %v7009 = vsub.f32 %v6628, %v7008
        %7010 = vmatmul.mubr.f32.gmra.mrb[0].mxu0 %v7009
        %v7011 = vpop.f32.mrb[0].mxu0
        %v7012 = vadd.f32 %v6902, %v7011
        %v7013 = vpop.f32.mrb[0].mxu0
        %7014 = vmatprep.mubr.f32.mxu0 0.0
        %v7015 = vand.u32 %v6629, 4294901760
        %v7016 = vsub.f32 %v6629, %v7015
        %7017 = vmatmul.mubr.f32.gmra.mrb[0].mxu0 %v7016
        %v7018 = vpop.f32.mrb[0].mxu0
        %v7019 = vadd.f32 %v6908, %v7018
        %v7020 = vpop.f32.mrb[0].mxu0
        %7021 = vdwg.mxu0
        %7022 = vmatprep.subr.mxu0 0.0
        %v7023 = vand.u32 %v6630, 4294901760
        %7024 = vmatpush1.msra.mxu0 %v7023
        %7025 = vmatprep.subr.mxu0 0.0
        %v7026 = vand.u32 %v6631, 4294901760
        %7027 = vmatpush1.msra.mxu0 %v7026
        %7028 = vmatprep.subr.mxu0 0.0
        %v7029 = vand.u32 %v6632, 4294901760
        %7030 = vmatpush1.msra.mxu0 %v7029
        %7031 = vmatprep.subr.mxu0 0.0
        %v7032 = vand.u32 %v6633, 4294901760
        %7033 = vmatpush1.msra.mxu0 %v7032
        %7034 = vmatprep.subr.mxu0 0.0
        %v7035 = vand.u32 %v6634, 4294901760
        %7036 = vmatpush1.msra.mxu0 %v7035
        %7037 = vmatprep.subr.mxu0 0.0
        %v7038 = vand.u32 %v6635, 4294901760
        %7039 = vmatpush1.msra.mxu0 %v7038
        %7040 = vmatprep.subr.mxu0 0.0
        %v7041 = vand.u32 %v6636, 4294901760
        %7042 = vmatpush1.msra.mxu0 %v7041
        %7043 = vmatprep.subr.mxu0 0.0
        %v7044 = vand.u32 %v6637, 4294901760
        %7045 = vmatpush1.msra.mxu0 %v7044
        %7046 = vmatprep.subr.mxu0 0.0
        %v7047 = vand.u32 %v6638, 4294901760
        %7048 = vmatpush1.msra.mxu0 %v7047
        %7049 = vmatprep.subr.mxu0 0.0
        %v7050 = vand.u32 %v6639, 4294901760
        %7051 = vmatpush1.msra.mxu0 %v7050
        %7052 = vmatprep.subr.mxu0 0.0
        %v7053 = vand.u32 %v6640, 4294901760
        %7054 = vmatpush1.msra.mxu0 %v7053
        %7055 = vmatprep.subr.mxu0 0.0
        %v7056 = vand.u32 %v6641, 4294901760
        %7057 = vmatpush1.msra.mxu0 %v7056
        %7058 = vmatprep.subr.mxu0 0.0
        %v7059 = vand.u32 %v6642, 4294901760
        %7060 = vmatpush1.msra.mxu0 %v7059
        %7061 = vmatprep.subr.mxu0 0.0
        %v7062 = vand.u32 %v6643, 4294901760
        %7063 = vmatpush1.msra.mxu0 %v7062
        %7064 = vmatprep.subr.mxu0 0.0
        %v7065 = vand.u32 %v6644, 4294901760
        %7066 = vmatpush1.msra.mxu0 %v7065
        %7067 = vmatprep.subr.mxu0 0.0
        %v7068 = vand.u32 %v6645, 4294901760
        %7069 = vmatpush1.msra.mxu0 %v7068
        %7070 = vmatprep.subr.mxu0 0.0
        %7071 = vmatpush1.msra.mxu0 0.0
        %7072 = vmatprep.subr.mxu0 0.0
        %7073 = vmatpush1.msra.mxu0 0.0
        %7074 = vmatprep.subr.mxu0 0.0
        %7075 = vmatpush1.msra.mxu0 0.0
        %7076 = vmatprep.subr.mxu0 0.0
        %7077 = vmatpush1.msra.mxu0 0.0
        %7078 = vmatprep.subr.mxu0 0.0
        %7079 = vmatpush1.msra.mxu0 0.0
        %7080 = vmatprep.subr.mxu0 0.0
        %7081 = vmatpush1.msra.mxu0 0.0
        %7082 = vmatprep.subr.mxu0 0.0
        %7083 = vmatpush1.msra.mxu0 0.0
        %7084 = vmatprep.subr.mxu0 0.0
        %7085 = vmatpush1.msra.mxu0 0.0
        %7086 = vmatprep.subr.mxu0 0.0
        %7087 = vmatpush1.msra.mxu0 0.0
        %7088 = vmatprep.subr.mxu0 0.0
        %7089 = vmatpush1.msra.mxu0 0.0
        %7090 = vmatprep.subr.mxu0 0.0
        %7091 = vmatpush1.msra.mxu0 0.0
        %7092 = vmatprep.subr.mxu0 0.0
        %7093 = vmatpush1.msra.mxu0 0.0
        %7094 = vmatprep.subr.mxu0 0.0
        %7095 = vmatpush1.msra.mxu0 0.0
        %7096 = vmatprep.subr.mxu0 0.0
        %7097 = vmatpush1.msra.mxu0 0.0
        %7098 = vmatprep.subr.mxu0 0.0
        %7099 = vmatpush1.msra.mxu0 0.0
        %7100 = vmatprep.subr.mxu0 0.0
        %7101 = vmatpush1.msra.mxu0 0.0
        %7102 = vmatprep.mubr.f32.mxu0 0.0
        %v7103 = vand.u32 %v6628, 4294901760
        %v7104 = vsub.f32 %v6628, %v7103
        %v7105 = vand.u32 %v7104, 4294901760
        %7106 = vmatmul.mubr.f32.gmra.mrb[0].mxu0 %v7105
        %v7107 = vpop.f32.mrb[0].mxu0
        %v7108 = vadd.f32 %v7012, %v7107
        %v7109 = vpop.f32.mrb[0].mxu0
        %7110 = vmatprep.mubr.f32.mxu0 0.0
        %v7111 = vand.u32 %v6629, 4294901760
        %v7112 = vsub.f32 %v6629, %v7111
        %v7113 = vand.u32 %v7112, 4294901760
        %7114 = vmatmul.mubr.f32.gmra.mrb[0].mxu0 %v7113
        %v7115 = vpop.f32.mrb[0].mxu0
        %v7116 = vadd.f32 %v7019, %v7115
        %v7117 = vpop.f32.mrb[0].mxu0
        %7118 = vdwg.mxu0
        %7119 = vmatprep.subr.mxu0 0.0
        %v7120 = vand.u32 %v6630, 4294901760
        %v7121 = vsub.f32 %v6630, %v7120
        %v7122 = vand.u32 %v7121, 4294901760
        %7123 = vmatpush1.msra.mxu0 %v7122
        %7124 = vmatprep.subr.mxu0 0.0
        %v7125 = vand.u32 %v6631, 4294901760
        %v7126 = vsub.f32 %v6631, %v7125
        %v7127 = vand.u32 %v7126, 4294901760
        %7128 = vmatpush1.msra.mxu0 %v7127
        %7129 = vmatprep.subr.mxu0 0.0
        %v7130 = vand.u32 %v6632, 4294901760
        %v7131 = vsub.f32 %v6632, %v7130
        %v7132 = vand.u32 %v7131, 4294901760
        %7133 = vmatpush1.msra.mxu0 %v7132
        %7134 = vmatprep.subr.mxu0 0.0
        %v7135 = vand.u32 %v6633, 4294901760
        %v7136 = vsub.f32 %v6633, %v7135
        %v7137 = vand.u32 %v7136, 4294901760
        %7138 = vmatpush1.msra.mxu0 %v7137
        %7139 = vmatprep.subr.mxu0 0.0
        %v7140 = vand.u32 %v6634, 4294901760
        %v7141 = vsub.f32 %v6634, %v7140
        %v7142 = vand.u32 %v7141, 4294901760
        %7143 = vmatpush1.msra.mxu0 %v7142
        %7144 = vmatprep.subr.mxu0 0.0
        %v7145 = vand.u32 %v6635, 4294901760
        %v7146 = vsub.f32 %v6635, %v7145
        %v7147 = vand.u32 %v7146, 4294901760
        %7148 = vmatpush1.msra.mxu0 %v7147
        %7149 = vmatprep.subr.mxu0 0.0
        %v7150 = vand.u32 %v6636, 4294901760
        %v7151 = vsub.f32 %v6636, %v7150
        %v7152 = vand.u32 %v7151, 4294901760
        %7153 = vmatpush1.msra.mxu0 %v7152
        %7154 = vmatprep.subr.mxu0 0.0
        %v7155 = vand.u32 %v6637, 4294901760
        %v7156 = vsub.f32 %v6637, %v7155
        %v7157 = vand.u32 %v7156, 4294901760
        %7158 = vmatpush1.msra.mxu0 %v7157
        %7159 = vmatprep.subr.mxu0 0.0
        %v7160 = vand.u32 %v6638, 4294901760
        %v7161 = vsub.f32 %v6638, %v7160
        %v7162 = vand.u32 %v7161, 4294901760
        %7163 = vmatpush1.msra.mxu0 %v7162
        %7164 = vmatprep.subr.mxu0 0.0
        %v7165 = vand.u32 %v6639, 4294901760
        %v7166 = vsub.f32 %v6639, %v7165
        %v7167 = vand.u32 %v7166, 4294901760
        %7168 = vmatpush1.msra.mxu0 %v7167
        %7169 = vmatprep.subr.mxu0 0.0
        %v7170 = vand.u32 %v6640, 4294901760
        %v7171 = vsub.f32 %v6640, %v7170
        %v7172 = vand.u32 %v7171, 4294901760
        %7173 = vmatpush1.msra.mxu0 %v7172
        %7174 = vmatprep.subr.mxu0 0.0
        %v7175 = vand.u32 %v6641, 4294901760
        %v7176 = vsub.f32 %v6641, %v7175
        %v7177 = vand.u32 %v7176, 4294901760
        %7178 = vmatpush1.msra.mxu0 %v7177
        %7179 = vmatprep.subr.mxu0 0.0
        %v7180 = vand.u32 %v6642, 4294901760
        %v7181 = vsub.f32 %v6642, %v7180
        %v7182 = vand.u32 %v7181, 4294901760
        %7183 = vmatpush1.msra.mxu0 %v7182
        %7184 = vmatprep.subr.mxu0 0.0
        %v7185 = vand.u32 %v6643, 4294901760
        %v7186 = vsub.f32 %v6643, %v7185
        %v7187 = vand.u32 %v7186, 4294901760
        %7188 = vmatpush1.msra.mxu0 %v7187
        %7189 = vmatprep.subr.mxu0 0.0
        %v7190 = vand.u32 %v6644, 4294901760
        %v7191 = vsub.f32 %v6644, %v7190
        %v7192 = vand.u32 %v7191, 4294901760
        %7193 = vmatpush1.msra.mxu0 %v7192
        %7194 = vmatprep.subr.mxu0 0.0
        %v7195 = vand.u32 %v6645, 4294901760
        %v7196 = vsub.f32 %v6645, %v7195
        %v7197 = vand.u32 %v7196, 4294901760
        %7198 = vmatpush1.msra.mxu0 %v7197
        %7199 = vmatprep.subr.mxu0 0.0
        %7200 = vmatpush1.msra.mxu0 0.0
        %7201 = vmatprep.subr.mxu0 0.0
        %7202 = vmatpush1.msra.mxu0 0.0
        %7203 = vmatprep.subr.mxu0 0.0
        %7204 = vmatpush1.msra.mxu0 0.0
        %7205 = vmatprep.subr.mxu0 0.0
        %7206 = vmatpush1.msra.mxu0 0.0
        %7207 = vmatprep.subr.mxu0 0.0
        %7208 = vmatpush1.msra.mxu0 0.0
        %7209 = vmatprep.subr.mxu0 0.0
        %7210 = vmatpush1.msra.mxu0 0.0
        %7211 = vmatprep.subr.mxu0 0.0
        %7212 = vmatpush1.msra.mxu0 0.0
        %7213 = vmatprep.subr.mxu0 0.0
        %7214 = vmatpush1.msra.mxu0 0.0
        %7215 = vmatprep.subr.mxu0 0.0
        %7216 = vmatpush1.msra.mxu0 0.0
        %7217 = vmatprep.subr.mxu0 0.0
        %7218 = vmatpush1.msra.mxu0 0.0
        %7219 = vmatprep.subr.mxu0 0.0
        %7220 = vmatpush1.msra.mxu0 0.0
        %7221 = vmatprep.subr.mxu0 0.0
        %7222 = vmatpush1.msra.mxu0 0.0
        %7223 = vmatprep.subr.mxu0 0.0
        %7224 = vmatpush1.msra.mxu0 0.0
        %7225 = vmatprep.subr.mxu0 0.0
        %7226 = vmatpush1.msra.mxu0 0.0
        %7227 = vmatprep.subr.mxu0 0.0
        %7228 = vmatpush1.msra.mxu0 0.0
        %7229 = vmatprep.subr.mxu0 0.0
        %7230 = vmatpush1.msra.mxu0 0.0
        %7231 = vmatprep.mubr.f32.mxu0 0.0
        %v7232 = vand.u32 %v6628, 4294901760
        %7233 = vmatmul.mubr.f32.gmra.mrb[0].mxu0 %v7232
        %v7234 = vpop.f32.mrb[0].mxu0
        %v7235 = vadd.f32 %v7108, %v7234
        %v7236 = vpop.f32.mrb[0].mxu0
        %7237 = vmatprep.mubr.f32.mxu0 0.0
        %v7238 = vand.u32 %v6629, 4294901760
        %7239 = vmatmul.mubr.f32.gmra.mrb[0].mxu0 %v7238
        %v7240 = vpop.f32.mrb[0].mxu0
        %v7241 = vadd.f32 %v7116, %v7240
        %v7242 = vpop.f32.mrb[0].mxu0
        %7243 = vdwg.mxu0
        %7244 = vmatprep.subr.mxu0 0.0
        %v7245 = vand.u32 %v6630, 4294901760
        %7246 = vmatpush1.msra.mxu0 %v7245
        %7247 = vmatprep.subr.mxu0 0.0
        %v7248 = vand.u32 %v6631, 4294901760
        %7249 = vmatpush1.msra.mxu0 %v7248
        %7250 = vmatprep.subr.mxu0 0.0
        %v7251 = vand.u32 %v6632, 4294901760
        %7252 = vmatpush1.msra.mxu0 %v7251
        %7253 = vmatprep.subr.mxu0 0.0
        %v7254 = vand.u32 %v6633, 4294901760
        %7255 = vmatpush1.msra.mxu0 %v7254
        %7256 = vmatprep.subr.mxu0 0.0
        %v7257 = vand.u32 %v6634, 4294901760
        %7258 = vmatpush1.msra.mxu0 %v7257
        %7259 = vmatprep.subr.mxu0 0.0
        %v7260 = vand.u32 %v6635, 4294901760
        %7261 = vmatpush1.msra.mxu0 %v7260
        %7262 = vmatprep.subr.mxu0 0.0
        %v7263 = vand.u32 %v6636, 4294901760
        %7264 = vmatpush1.msra.mxu0 %v7263
        %7265 = vmatprep.subr.mxu0 0.0
        %v7266 = vand.u32 %v6637, 4294901760
        %7267 = vmatpush1.msra.mxu0 %v7266
        %7268 = vmatprep.subr.mxu0 0.0
        %v7269 = vand.u32 %v6638, 4294901760
        %7270 = vmatpush1.msra.mxu0 %v7269
        %7271 = vmatprep.subr.mxu0 0.0
        %v7272 = vand.u32 %v6639, 4294901760
        %7273 = vmatpush1.msra.mxu0 %v7272
        %7274 = vmatprep.subr.mxu0 0.0
        %v7275 = vand.u32 %v6640, 4294901760
        %7276 = vmatpush1.msra.mxu0 %v7275
        %7277 = vmatprep.subr.mxu0 0.0
        %v7278 = vand.u32 %v6641, 4294901760
        %7279 = vmatpush1.msra.mxu0 %v7278
        %7280 = vmatprep.subr.mxu0 0.0
        %v7281 = vand.u32 %v6642, 4294901760
        %7282 = vmatpush1.msra.mxu0 %v7281
        %7283 = vmatprep.subr.mxu0 0.0
        %v7284 = vand.u32 %v6643, 4294901760
        %7285 = vmatpush1.msra.mxu0 %v7284
        %7286 = vmatprep.subr.mxu0 0.0
        %v7287 = vand.u32 %v6644, 4294901760
        %7288 = vmatpush1.msra.mxu0 %v7287
        %7289 = vmatprep.subr.mxu0 0.0
        %v7290 = vand.u32 %v6645, 4294901760
        %7291 = vmatpush1.msra.mxu0 %v7290
        %7292 = vmatprep.subr.mxu0 0.0
        %7293 = vmatpush1.msra.mxu0 0.0
        %7294 = vmatprep.subr.mxu0 0.0
        %7295 = vmatpush1.msra.mxu0 0.0
        %7296 = vmatprep.subr.mxu0 0.0
        %7297 = vmatpush1.msra.mxu0 0.0
        %7298 = vmatprep.subr.mxu0 0.0
        %7299 = vmatpush1.msra.mxu0 0.0
        %7300 = vmatprep.subr.mxu0 0.0
        %7301 = vmatpush1.msra.mxu0 0.0
        %7302 = vmatprep.subr.mxu0 0.0
        %7303 = vmatpush1.msra.mxu0 0.0
        %7304 = vmatprep.subr.mxu0 0.0
        %7305 = vmatpush1.msra.mxu0 0.0
        %7306 = vmatprep.subr.mxu0 0.0
        %7307 = vmatpush1.msra.mxu0 0.0
        %7308 = vmatprep.subr.mxu0 0.0
        %7309 = vmatpush1.msra.mxu0 0.0
        %7310 = vmatprep.subr.mxu0 0.0
        %7311 = vmatpush1.msra.mxu0 0.0
        %7312 = vmatprep.subr.mxu0 0.0
        %7313 = vmatpush1.msra.mxu0 0.0
        %7314 = vmatprep.subr.mxu0 0.0
        %7315 = vmatpush1.msra.mxu0 0.0
        %7316 = vmatprep.subr.mxu0 0.0
        %7317 = vmatpush1.msra.mxu0 0.0
        %7318 = vmatprep.subr.mxu0 0.0
        %7319 = vmatpush1.msra.mxu0 0.0
        %7320 = vmatprep.subr.mxu0 0.0
        %7321 = vmatpush1.msra.mxu0 0.0
        %7322 = vmatprep.subr.mxu0 0.0
        %7323 = vmatpush1.msra.mxu0 0.0
        %7324 = vmatprep.mubr.f32.mxu0 0.0
        %v7325 = vand.u32 %v6628, 4294901760
        %7326 = vmatmul.mubr.f32.gmra.mrb[0].mxu0 %v7325
        %v7327 = vpop.f32.mrb[0].mxu0
        %v7328 = vadd.f32 %v7235, %v7327
        %v7329 = vpop.f32.mrb[0].mxu0
        %7330 = vmatprep.mubr.f32.mxu0 0.0
        %v7331 = vand.u32 %v6629, 4294901760
        %7332 = vmatmul.mubr.f32.gmra.mrb[0].mxu0 %v7331
        %v7333 = vpop.f32.mrb[0].mxu0
        %v7334 = vadd.f32 %v7241, %v7333
        %v7335 = vpop.f32.mrb[0].mxu0
        %7336 = vdwg.mxu0
        %7337 = vst [vmem:[%s426] sm:$0xff] %v7328
        %7338 = vst [vmem:[%s426 + $0x8] sm:$0xff] %v7334
        %v7339 = vld [vmem:[#allocation2] sm:$0xf]
        %7340 = vst [vmem:[#allocation14] sm:$0xf] %v7339
        %v7341 = vld [vmem:[#allocation12] sm:$0xff]
        %v7342 = vld [vmem:[#allocation12 + $0x8] sm:$0xff]
        %v7343 = vld [vmem:[#allocation12 + $0x10] sm:$0xff]
        %v7344 = vld [vmem:[#allocation12 + $0x18] sm:$0xff]
        %v7345 = vld [vmem:[#allocation12 + $0x20] sm:$0xff]
        %v7346 = vld [vmem:[#allocation12 + $0x28] sm:$0xff]
        %v7347 = vld [vmem:[#allocation12 + $0x30] sm:$0xff]
        %v7348 = vld [vmem:[#allocation12 + $0x38] sm:$0xff]
        %v7349 = vld [vmem:[#allocation12 + $0x40] sm:$0xff]
        %v7350 = vld [vmem:[#allocation12 + $0x48] sm:$0xff]
        %v7351 = vld [vmem:[#allocation12 + $0x50] sm:$0xff]
        %v7352 = vld [vmem:[#allocation12 + $0x58] sm:$0xff]
        %v7353 = vld [vmem:[#allocation12 + $0x60] sm:$0xff]
        %v7354 = vld [vmem:[#allocation12 + $0x68] sm:$0xff]
        %v7355 = vld [vmem:[#allocation12 + $0x70] sm:$0xff]
        %v7356 = vld [vmem:[#allocation12 + $0x78] sm:$0xff]
        %v7357 = vld [vmem:[%s7] sm:$0x1]
        %v7359 = vlaneseq
        %v7360 = vshrl.u32 %v7359, 7
        %v7361 = vsub.s32 0, %v7360
        %v7362 = vrot.slane %v7357, %v7361
        %7364 = vmatprep.subr.mxu0 0.0
        %v7365 = vand.u32 %v7341, 4294901760
        %7366 = vmatpush1.msra.mxu0 %v7365
        %7367 = vmatprep.subr.mxu0 0.0
        %v7368 = vand.u32 %v7342, 4294901760
        %7369 = vmatpush1.msra.mxu0 %v7368
        %7370 = vmatprep.subr.mxu0 0.0
        %v7371 = vand.u32 %v7343, 4294901760
        %7372 = vmatpush1.msra.mxu0 %v7371
        %7373 = vmatprep.subr.mxu0 0.0
        %v7374 = vand.u32 %v7344, 4294901760
        %7375 = vmatpush1.msra.mxu0 %v7374
        %7376 = vmatprep.subr.mxu0 0.0
        %v7377 = vand.u32 %v7345, 4294901760
        %7378 = vmatpush1.msra.mxu0 %v7377
        %7379 = vmatprep.subr.mxu0 0.0
        %v7380 = vand.u32 %v7346, 4294901760
        %7381 = vmatpush1.msra.mxu0 %v7380
        %7382 = vmatprep.subr.mxu0 0.0
        %v7383 = vand.u32 %v7347, 4294901760
        %7384 = vmatpush1.msra.mxu0 %v7383
        %7385 = vmatprep.subr.mxu0 0.0
        %v7386 = vand.u32 %v7348, 4294901760
        %7387 = vmatpush1.msra.mxu0 %v7386
        %7388 = vmatprep.subr.mxu0 0.0
        %v7389 = vand.u32 %v7349, 4294901760
        %7390 = vmatpush1.msra.mxu0 %v7389
        %7391 = vmatprep.subr.mxu0 0.0
        %v7392 = vand.u32 %v7350, 4294901760
        %7393 = vmatpush1.msra.mxu0 %v7392
        %7394 = vmatprep.subr.mxu0 0.0
        %v7395 = vand.u32 %v7351, 4294901760
        %7396 = vmatpush1.msra.mxu0 %v7395
        %7397 = vmatprep.subr.mxu0 0.0
        %v7398 = vand.u32 %v7352, 4294901760
        %7399 = vmatpush1.msra.mxu0 %v7398
        %7400 = vmatprep.subr.mxu0 0.0
        %v7401 = vand.u32 %v7353, 4294901760
        %7402 = vmatpush1.msra.mxu0 %v7401
        %7403 = vmatprep.subr.mxu0 0.0
        %v7404 = vand.u32 %v7354, 4294901760
        %7405 = vmatpush1.msra.mxu0 %v7404
        %7406 = vmatprep.subr.mxu0 0.0
        %v7407 = vand.u32 %v7355, 4294901760
        %7408 = vmatpush1.msra.mxu0 %v7407
        %7409 = vmatprep.subr.mxu0 0.0
        %v7410 = vand.u32 %v7356, 4294901760
        %7411 = vmatpush1.msra.mxu0 %v7410
        %7412 = vmatprep.subr.mxu0 0.0
        %7413 = vmatpush1.msra.mxu0 0.0
        %7414 = vmatprep.subr.mxu0 0.0
        %7415 = vmatpush1.msra.mxu0 0.0
        %7416 = vmatprep.subr.mxu0 0.0
        %7417 = vmatpush1.msra.mxu0 0.0
        %7418 = vmatprep.subr.mxu0 0.0
        %7419 = vmatpush1.msra.mxu0 0.0
        %7420 = vmatprep.subr.mxu0 0.0
        %7421 = vmatpush1.msra.mxu0 0.0
        %7422 = vmatprep.subr.mxu0 0.0
        %7423 = vmatpush1.msra.mxu0 0.0
        %7424 = vmatprep.subr.mxu0 0.0
        %7425 = vmatpush1.msra.mxu0 0.0
        %7426 = vmatprep.subr.mxu0 0.0
        %7427 = vmatpush1.msra.mxu0 0.0
        %7428 = vmatprep.subr.mxu0 0.0
        %7429 = vmatpush1.msra.mxu0 0.0
        %7430 = vmatprep.subr.mxu0 0.0
        %7431 = vmatpush1.msra.mxu0 0.0
        %7432 = vmatprep.subr.mxu0 0.0
        %7433 = vmatpush1.msra.mxu0 0.0
        %7434 = vmatprep.subr.mxu0 0.0
        %7435 = vmatpush1.msra.mxu0 0.0
        %7436 = vmatprep.subr.mxu0 0.0
        %7437 = vmatpush1.msra.mxu0 0.0
        %7438 = vmatprep.subr.mxu0 0.0
        %7439 = vmatpush1.msra.mxu0 0.0
        %7440 = vmatprep.subr.mxu0 0.0
        %7441 = vmatpush1.msra.mxu0 0.0
        %7442 = vmatprep.subr.mxu0 0.0
        %7443 = vmatpush1.msra.mxu0 0.0
        %7444 = vmatprep.mubr.f32.mxu0 0.0
        %v7445 = vand.u32 %v7339, 4294901760
        %v7446 = vsub.f32 %v7339, %v7445
        %v7447 = vand.u32 %v7446, 4294901760
        %v7448 = vsub.f32 %v7446, %v7447
        %v7449 = vand.u32 %v7448, 4294901760
        %7450 = vmatmul.mubr.f32.gmra.mrb[0].mxu0 %v7449
        %v7451 = vpop.f32.mrb[0].mxu0
        %v7452 = vadd.f32 %v7362, %v7451
        %v7453 = vpop.f32.mrb[0].mxu0
        %7454 = vdwg.mxu0
        %7455 = vmatprep.subr.mxu0 0.0
        %v7456 = vand.u32 %v7341, 4294901760
        %v7457 = vsub.f32 %v7341, %v7456
        %v7458 = vand.u32 %v7457, 4294901760
        %v7459 = vsub.f32 %v7457, %v7458
        %v7460 = vand.u32 %v7459, 4294901760
        %7461 = vmatpush1.msra.mxu0 %v7460
        %7462 = vmatprep.subr.mxu0 0.0
        %v7463 = vand.u32 %v7342, 4294901760
        %v7464 = vsub.f32 %v7342, %v7463
        %v7465 = vand.u32 %v7464, 4294901760
        %v7466 = vsub.f32 %v7464, %v7465
        %v7467 = vand.u32 %v7466, 4294901760
        %7468 = vmatpush1.msra.mxu0 %v7467
        %7469 = vmatprep.subr.mxu0 0.0
        %v7470 = vand.u32 %v7343, 4294901760
        %v7471 = vsub.f32 %v7343, %v7470
        %v7472 = vand.u32 %v7471, 4294901760
        %v7473 = vsub.f32 %v7471, %v7472
        %v7474 = vand.u32 %v7473, 4294901760
        %7475 = vmatpush1.msra.mxu0 %v7474
        %7476 = vmatprep.subr.mxu0 0.0
        %v7477 = vand.u32 %v7344, 4294901760
        %v7478 = vsub.f32 %v7344, %v7477
        %v7479 = vand.u32 %v7478, 4294901760
        %v7480 = vsub.f32 %v7478, %v7479
        %v7481 = vand.u32 %v7480, 4294901760
        %7482 = vmatpush1.msra.mxu0 %v7481
        %7483 = vmatprep.subr.mxu0 0.0
        %v7484 = vand.u32 %v7345, 4294901760
        %v7485 = vsub.f32 %v7345, %v7484
        %v7486 = vand.u32 %v7485, 4294901760
        %v7487 = vsub.f32 %v7485, %v7486
        %v7488 = vand.u32 %v7487, 4294901760
        %7489 = vmatpush1.msra.mxu0 %v7488
        %7490 = vmatprep.subr.mxu0 0.0
        %v7491 = vand.u32 %v7346, 4294901760
        %v7492 = vsub.f32 %v7346, %v7491
        %v7493 = vand.u32 %v7492, 4294901760
        %v7494 = vsub.f32 %v7492, %v7493
        %v7495 = vand.u32 %v7494, 4294901760
        %7496 = vmatpush1.msra.mxu0 %v7495
        %7497 = vmatprep.subr.mxu0 0.0
        %v7498 = vand.u32 %v7347, 4294901760
        %v7499 = vsub.f32 %v7347, %v7498
        %v7500 = vand.u32 %v7499, 4294901760
        %v7501 = vsub.f32 %v7499, %v7500
        %v7502 = vand.u32 %v7501, 4294901760
        %7503 = vmatpush1.msra.mxu0 %v7502
        %7504 = vmatprep.subr.mxu0 0.0
        %v7505 = vand.u32 %v7348, 4294901760
        %v7506 = vsub.f32 %v7348, %v7505
        %v7507 = vand.u32 %v7506, 4294901760
        %v7508 = vsub.f32 %v7506, %v7507
        %v7509 = vand.u32 %v7508, 4294901760
        %7510 = vmatpush1.msra.mxu0 %v7509
        %7511 = vmatprep.subr.mxu0 0.0
        %v7512 = vand.u32 %v7349, 4294901760
        %v7513 = vsub.f32 %v7349, %v7512
        %v7514 = vand.u32 %v7513, 4294901760
        %v7515 = vsub.f32 %v7513, %v7514
        %v7516 = vand.u32 %v7515, 4294901760
        %7517 = vmatpush1.msra.mxu0 %v7516
        %7518 = vmatprep.subr.mxu0 0.0
        %v7519 = vand.u32 %v7350, 4294901760
        %v7520 = vsub.f32 %v7350, %v7519
        %v7521 = vand.u32 %v7520, 4294901760
        %v7522 = vsub.f32 %v7520, %v7521
        %v7523 = vand.u32 %v7522, 4294901760
        %7524 = vmatpush1.msra.mxu0 %v7523
        %7525 = vmatprep.subr.mxu0 0.0
        %v7526 = vand.u32 %v7351, 4294901760
        %v7527 = vsub.f32 %v7351, %v7526
        %v7528 = vand.u32 %v7527, 4294901760
        %v7529 = vsub.f32 %v7527, %v7528
        %v7530 = vand.u32 %v7529, 4294901760
        %7531 = vmatpush1.msra.mxu0 %v7530
        %7532 = vmatprep.subr.mxu0 0.0
        %v7533 = vand.u32 %v7352, 4294901760
        %v7534 = vsub.f32 %v7352, %v7533
        %v7535 = vand.u32 %v7534, 4294901760
        %v7536 = vsub.f32 %v7534, %v7535
        %v7537 = vand.u32 %v7536, 4294901760
        %7538 = vmatpush1.msra.mxu0 %v7537
        %7539 = vmatprep.subr.mxu0 0.0
        %v7540 = vand.u32 %v7353, 4294901760
        %v7541 = vsub.f32 %v7353, %v7540
        %v7542 = vand.u32 %v7541, 4294901760
        %v7543 = vsub.f32 %v7541, %v7542
        %v7544 = vand.u32 %v7543, 4294901760
        %7545 = vmatpush1.msra.mxu0 %v7544
        %7546 = vmatprep.subr.mxu0 0.0
        %v7547 = vand.u32 %v7354, 4294901760
        %v7548 = vsub.f32 %v7354, %v7547
        %v7549 = vand.u32 %v7548, 4294901760
        %v7550 = vsub.f32 %v7548, %v7549
        %v7551 = vand.u32 %v7550, 4294901760
        %7552 = vmatpush1.msra.mxu0 %v7551
        %7553 = vmatprep.subr.mxu0 0.0
        %v7554 = vand.u32 %v7355, 4294901760
        %v7555 = vsub.f32 %v7355, %v7554
        %v7556 = vand.u32 %v7555, 4294901760
        %v7557 = vsub.f32 %v7555, %v7556
        %v7558 = vand.u32 %v7557, 4294901760
        %7559 = vmatpush1.msra.mxu0 %v7558
        %7560 = vmatprep.subr.mxu0 0.0
        %v7561 = vand.u32 %v7356, 4294901760
        %v7562 = vsub.f32 %v7356, %v7561
        %v7563 = vand.u32 %v7562, 4294901760
        %v7564 = vsub.f32 %v7562, %v7563
        %v7565 = vand.u32 %v7564, 4294901760
        %7566 = vmatpush1.msra.mxu0 %v7565
        %7567 = vmatprep.subr.mxu0 0.0
        %7568 = vmatpush1.msra.mxu0 0.0
        %7569 = vmatprep.subr.mxu0 0.0
        %7570 = vmatpush1.msra.mxu0 0.0
        %7571 = vmatprep.subr.mxu0 0.0
        %7572 = vmatpush1.msra.mxu0 0.0
        %7573 = vmatprep.subr.mxu0 0.0
        %7574 = vmatpush1.msra.mxu0 0.0
        %7575 = vmatprep.subr.mxu0 0.0
        %7576 = vmatpush1.msra.mxu0 0.0
        %7577 = vmatprep.subr.mxu0 0.0
        %7578 = vmatpush1.msra.mxu0 0.0
        %7579 = vmatprep.subr.mxu0 0.0
        %7580 = vmatpush1.msra.mxu0 0.0
        %7581 = vmatprep.subr.mxu0 0.0
        %7582 = vmatpush1.msra.mxu0 0.0
        %7583 = vmatprep.subr.mxu0 0.0
        %7584 = vmatpush1.msra.mxu0 0.0
        %7585 = vmatprep.subr.mxu0 0.0
        %7586 = vmatpush1.msra.mxu0 0.0
        %7587 = vmatprep.subr.mxu0 0.0
        %7588 = vmatpush1.msra.mxu0 0.0
        %7589 = vmatprep.subr.mxu0 0.0
        %7590 = vmatpush1.msra.mxu0 0.0
        %7591 = vmatprep.subr.mxu0 0.0
        %7592 = vmatpush1.msra.mxu0 0.0
        %7593 = vmatprep.subr.mxu0 0.0
        %7594 = vmatpush1.msra.mxu0 0.0
        %7595 = vmatprep.subr.mxu0 0.0
        %7596 = vmatpush1.msra.mxu0 0.0
        %7597 = vmatprep.subr.mxu0 0.0
        %7598 = vmatpush1.msra.mxu0 0.0
        %7599 = vmatprep.mubr.f32.mxu0 0.0
        %v7600 = vand.u32 %v7339, 4294901760
        %7601 = vmatmul.mubr.f32.gmra.mrb[0].mxu0 %v7600
        %v7602 = vpop.f32.mrb[0].mxu0
        %v7603 = vadd.f32 %v7452, %v7602
        %v7604 = vpop.f32.mrb[0].mxu0
        %7605 = vdwg.mxu0
        %7606 = vmatprep.subr.mxu0 0.0
        %v7607 = vand.u32 %v7341, 4294901760
        %v7608 = vsub.f32 %v7341, %v7607
        %7609 = vmatpush1.msra.mxu0 %v7608
        %7610 = vmatprep.subr.mxu0 0.0
        %v7611 = vand.u32 %v7342, 4294901760
        %v7612 = vsub.f32 %v7342, %v7611
        %7613 = vmatpush1.msra.mxu0 %v7612
        %7614 = vmatprep.subr.mxu0 0.0
        %v7615 = vand.u32 %v7343, 4294901760
        %v7616 = vsub.f32 %v7343, %v7615
        %7617 = vmatpush1.msra.mxu0 %v7616
        %7618 = vmatprep.subr.mxu0 0.0
        %v7619 = vand.u32 %v7344, 4294901760
        %v7620 = vsub.f32 %v7344, %v7619
        %7621 = vmatpush1.msra.mxu0 %v7620
        %7622 = vmatprep.subr.mxu0 0.0
        %v7623 = vand.u32 %v7345, 4294901760
        %v7624 = vsub.f32 %v7345, %v7623
        %7625 = vmatpush1.msra.mxu0 %v7624
        %7626 = vmatprep.subr.mxu0 0.0
        %v7627 = vand.u32 %v7346, 4294901760
        %v7628 = vsub.f32 %v7346, %v7627
        %7629 = vmatpush1.msra.mxu0 %v7628
        %7630 = vmatprep.subr.mxu0 0.0
        %v7631 = vand.u32 %v7347, 4294901760
        %v7632 = vsub.f32 %v7347, %v7631
        %7633 = vmatpush1.msra.mxu0 %v7632
        %7634 = vmatprep.subr.mxu0 0.0
        %v7635 = vand.u32 %v7348, 4294901760
        %v7636 = vsub.f32 %v7348, %v7635
        %7637 = vmatpush1.msra.mxu0 %v7636
        %7638 = vmatprep.subr.mxu0 0.0
        %v7639 = vand.u32 %v7349, 4294901760
        %v7640 = vsub.f32 %v7349, %v7639
        %7641 = vmatpush1.msra.mxu0 %v7640
        %7642 = vmatprep.subr.mxu0 0.0
        %v7643 = vand.u32 %v7350, 4294901760
        %v7644 = vsub.f32 %v7350, %v7643
        %7645 = vmatpush1.msra.mxu0 %v7644
        %7646 = vmatprep.subr.mxu0 0.0
        %v7647 = vand.u32 %v7351, 4294901760
        %v7648 = vsub.f32 %v7351, %v7647
        %7649 = vmatpush1.msra.mxu0 %v7648
        %7650 = vmatprep.subr.mxu0 0.0
        %v7651 = vand.u32 %v7352, 4294901760
        %v7652 = vsub.f32 %v7352, %v7651
        %7653 = vmatpush1.msra.mxu0 %v7652
        %7654 = vmatprep.subr.mxu0 0.0
        %v7655 = vand.u32 %v7353, 4294901760
        %v7656 = vsub.f32 %v7353, %v7655
        %7657 = vmatpush1.msra.mxu0 %v7656
        %7658 = vmatprep.subr.mxu0 0.0
        %v7659 = vand.u32 %v7354, 4294901760
        %v7660 = vsub.f32 %v7354, %v7659
        %7661 = vmatpush1.msra.mxu0 %v7660
        %7662 = vmatprep.subr.mxu0 0.0
        %v7663 = vand.u32 %v7355, 4294901760
        %v7664 = vsub.f32 %v7355, %v7663
        %7665 = vmatpush1.msra.mxu0 %v7664
        %7666 = vmatprep.subr.mxu0 0.0
        %v7667 = vand.u32 %v7356, 4294901760
        %v7668 = vsub.f32 %v7356, %v7667
        %7669 = vmatpush1.msra.mxu0 %v7668
        %7670 = vmatprep.subr.mxu0 0.0
        %7671 = vmatpush1.msra.mxu0 0.0
        %7672 = vmatprep.subr.mxu0 0.0
        %7673 = vmatpush1.msra.mxu0 0.0
        %7674 = vmatprep.subr.mxu0 0.0
        %7675 = vmatpush1.msra.mxu0 0.0
        %7676 = vmatprep.subr.mxu0 0.0
        %7677 = vmatpush1.msra.mxu0 0.0
        %7678 = vmatprep.subr.mxu0 0.0
        %7679 = vmatpush1.msra.mxu0 0.0
        %7680 = vmatprep.subr.mxu0 0.0
        %7681 = vmatpush1.msra.mxu0 0.0
        %7682 = vmatprep.subr.mxu0 0.0
        %7683 = vmatpush1.msra.mxu0 0.0
        %7684 = vmatprep.subr.mxu0 0.0
        %7685 = vmatpush1.msra.mxu0 0.0
        %7686 = vmatprep.subr.mxu0 0.0
        %7687 = vmatpush1.msra.mxu0 0.0
        %7688 = vmatprep.subr.mxu0 0.0
        %7689 = vmatpush1.msra.mxu0 0.0
        %7690 = vmatprep.subr.mxu0 0.0
        %7691 = vmatpush1.msra.mxu0 0.0
        %7692 = vmatprep.subr.mxu0 0.0
        %7693 = vmatpush1.msra.mxu0 0.0
        %7694 = vmatprep.subr.mxu0 0.0
        %7695 = vmatpush1.msra.mxu0 0.0
        %7696 = vmatprep.subr.mxu0 0.0
        %7697 = vmatpush1.msra.mxu0 0.0
        %7698 = vmatprep.subr.mxu0 0.0
        %7699 = vmatpush1.msra.mxu0 0.0
        %7700 = vmatprep.subr.mxu0 0.0
        %7701 = vmatpush1.msra.mxu0 0.0
        %7702 = vmatprep.mubr.f32.mxu0 0.0
        %v7703 = vand.u32 %v7339, 4294901760
        %v7704 = vsub.f32 %v7339, %v7703
        %7705 = vmatmul.mubr.f32.gmra.mrb[0].mxu0 %v7704
        %v7706 = vpop.f32.mrb[0].mxu0
        %v7707 = vadd.f32 %v7603, %v7706
        %v7708 = vpop.f32.mrb[0].mxu0
        %7709 = vdwg.mxu0
        %7710 = vmatprep.subr.mxu0 0.0
        %v7711 = vand.u32 %v7341, 4294901760
        %7712 = vmatpush1.msra.mxu0 %v7711
        %7713 = vmatprep.subr.mxu0 0.0
        %v7714 = vand.u32 %v7342, 4294901760
        %7715 = vmatpush1.msra.mxu0 %v7714
        %7716 = vmatprep.subr.mxu0 0.0
        %v7717 = vand.u32 %v7343, 4294901760
        %7718 = vmatpush1.msra.mxu0 %v7717
        %7719 = vmatprep.subr.mxu0 0.0
        %v7720 = vand.u32 %v7344, 4294901760
        %7721 = vmatpush1.msra.mxu0 %v7720
        %7722 = vmatprep.subr.mxu0 0.0
        %v7723 = vand.u32 %v7345, 4294901760
        %7724 = vmatpush1.msra.mxu0 %v7723
        %7725 = vmatprep.subr.mxu0 0.0
        %v7726 = vand.u32 %v7346, 4294901760
        %7727 = vmatpush1.msra.mxu0 %v7726
        %7728 = vmatprep.subr.mxu0 0.0
        %v7729 = vand.u32 %v7347, 4294901760
        %7730 = vmatpush1.msra.mxu0 %v7729
        %7731 = vmatprep.subr.mxu0 0.0
        %v7732 = vand.u32 %v7348, 4294901760
        %7733 = vmatpush1.msra.mxu0 %v7732
        %7734 = vmatprep.subr.mxu0 0.0
        %v7735 = vand.u32 %v7349, 4294901760
        %7736 = vmatpush1.msra.mxu0 %v7735
        %7737 = vmatprep.subr.mxu0 0.0
        %v7738 = vand.u32 %v7350, 4294901760
        %7739 = vmatpush1.msra.mxu0 %v7738
        %7740 = vmatprep.subr.mxu0 0.0
        %v7741 = vand.u32 %v7351, 4294901760
        %7742 = vmatpush1.msra.mxu0 %v7741
        %7743 = vmatprep.subr.mxu0 0.0
        %v7744 = vand.u32 %v7352, 4294901760
        %7745 = vmatpush1.msra.mxu0 %v7744
        %7746 = vmatprep.subr.mxu0 0.0
        %v7747 = vand.u32 %v7353, 4294901760
        %7748 = vmatpush1.msra.mxu0 %v7747
        %7749 = vmatprep.subr.mxu0 0.0
        %v7750 = vand.u32 %v7354, 4294901760
        %7751 = vmatpush1.msra.mxu0 %v7750
        %7752 = vmatprep.subr.mxu0 0.0
        %v7753 = vand.u32 %v7355, 4294901760
        %7754 = vmatpush1.msra.mxu0 %v7753
        %7755 = vmatprep.subr.mxu0 0.0
        %v7756 = vand.u32 %v7356, 4294901760
        %7757 = vmatpush1.msra.mxu0 %v7756
        %7758 = vmatprep.subr.mxu0 0.0
        %7759 = vmatpush1.msra.mxu0 0.0
        %7760 = vmatprep.subr.mxu0 0.0
        %7761 = vmatpush1.msra.mxu0 0.0
        %7762 = vmatprep.subr.mxu0 0.0
        %7763 = vmatpush1.msra.mxu0 0.0
        %7764 = vmatprep.subr.mxu0 0.0
        %7765 = vmatpush1.msra.mxu0 0.0
        %7766 = vmatprep.subr.mxu0 0.0
        %7767 = vmatpush1.msra.mxu0 0.0
        %7768 = vmatprep.subr.mxu0 0.0
        %7769 = vmatpush1.msra.mxu0 0.0
        %7770 = vmatprep.subr.mxu0 0.0
        %7771 = vmatpush1.msra.mxu0 0.0
        %7772 = vmatprep.subr.mxu0 0.0
        %7773 = vmatpush1.msra.mxu0 0.0
        %7774 = vmatprep.subr.mxu0 0.0
        %7775 = vmatpush1.msra.mxu0 0.0
        %7776 = vmatprep.subr.mxu0 0.0
        %7777 = vmatpush1.msra.mxu0 0.0
        %7778 = vmatprep.subr.mxu0 0.0
        %7779 = vmatpush1.msra.mxu0 0.0
        %7780 = vmatprep.subr.mxu0 0.0
        %7781 = vmatpush1.msra.mxu0 0.0
        %7782 = vmatprep.subr.mxu0 0.0
        %7783 = vmatpush1.msra.mxu0 0.0
        %7784 = vmatprep.subr.mxu0 0.0
        %7785 = vmatpush1.msra.mxu0 0.0
        %7786 = vmatprep.subr.mxu0 0.0
        %7787 = vmatpush1.msra.mxu0 0.0
        %7788 = vmatprep.subr.mxu0 0.0
        %7789 = vmatpush1.msra.mxu0 0.0
        %7790 = vmatprep.mubr.f32.mxu0 0.0
        %v7791 = vand.u32 %v7339, 4294901760
        %v7792 = vsub.f32 %v7339, %v7791
        %v7793 = vand.u32 %v7792, 4294901760
        %7794 = vmatmul.mubr.f32.gmra.mrb[0].mxu0 %v7793
        %v7795 = vpop.f32.mrb[0].mxu0
        %v7796 = vadd.f32 %v7707, %v7795
        %v7797 = vpop.f32.mrb[0].mxu0
        %7798 = vdwg.mxu0
        %7799 = vmatprep.subr.mxu0 0.0
        %v7800 = vand.u32 %v7341, 4294901760
        %v7801 = vsub.f32 %v7341, %v7800
        %v7802 = vand.u32 %v7801, 4294901760
        %7803 = vmatpush1.msra.mxu0 %v7802
        %7804 = vmatprep.subr.mxu0 0.0
        %v7805 = vand.u32 %v7342, 4294901760
        %v7806 = vsub.f32 %v7342, %v7805
        %v7807 = vand.u32 %v7806, 4294901760
        %7808 = vmatpush1.msra.mxu0 %v7807
        %7809 = vmatprep.subr.mxu0 0.0
        %v7810 = vand.u32 %v7343, 4294901760
        %v7811 = vsub.f32 %v7343, %v7810
        %v7812 = vand.u32 %v7811, 4294901760
        %7813 = vmatpush1.msra.mxu0 %v7812
        %7814 = vmatprep.subr.mxu0 0.0
        %v7815 = vand.u32 %v7344, 4294901760
        %v7816 = vsub.f32 %v7344, %v7815
        %v7817 = vand.u32 %v7816, 4294901760
        %7818 = vmatpush1.msra.mxu0 %v7817
        %7819 = vmatprep.subr.mxu0 0.0
        %v7820 = vand.u32 %v7345, 4294901760
        %v7821 = vsub.f32 %v7345, %v7820
        %v7822 = vand.u32 %v7821, 4294901760
        %7823 = vmatpush1.msra.mxu0 %v7822
        %7824 = vmatprep.subr.mxu0 0.0
        %v7825 = vand.u32 %v7346, 4294901760
        %v7826 = vsub.f32 %v7346, %v7825
        %v7827 = vand.u32 %v7826, 4294901760
        %7828 = vmatpush1.msra.mxu0 %v7827
        %7829 = vmatprep.subr.mxu0 0.0
        %v7830 = vand.u32 %v7347, 4294901760
        %v7831 = vsub.f32 %v7347, %v7830
        %v7832 = vand.u32 %v7831, 4294901760
        %7833 = vmatpush1.msra.mxu0 %v7832
        %7834 = vmatprep.subr.mxu0 0.0
        %v7835 = vand.u32 %v7348, 4294901760
        %v7836 = vsub.f32 %v7348, %v7835
        %v7837 = vand.u32 %v7836, 4294901760
        %7838 = vmatpush1.msra.mxu0 %v7837
        %7839 = vmatprep.subr.mxu0 0.0
        %v7840 = vand.u32 %v7349, 4294901760
        %v7841 = vsub.f32 %v7349, %v7840
        %v7842 = vand.u32 %v7841, 4294901760
        %7843 = vmatpush1.msra.mxu0 %v7842
        %7844 = vmatprep.subr.mxu0 0.0
        %v7845 = vand.u32 %v7350, 4294901760
        %v7846 = vsub.f32 %v7350, %v7845
        %v7847 = vand.u32 %v7846, 4294901760
        %7848 = vmatpush1.msra.mxu0 %v7847
        %7849 = vmatprep.subr.mxu0 0.0
        %v7850 = vand.u32 %v7351, 4294901760
        %v7851 = vsub.f32 %v7351, %v7850
        %v7852 = vand.u32 %v7851, 4294901760
        %7853 = vmatpush1.msra.mxu0 %v7852
        %7854 = vmatprep.subr.mxu0 0.0
        %v7855 = vand.u32 %v7352, 4294901760
        %v7856 = vsub.f32 %v7352, %v7855
        %v7857 = vand.u32 %v7856, 4294901760
        %7858 = vmatpush1.msra.mxu0 %v7857
        %7859 = vmatprep.subr.mxu0 0.0
        %v7860 = vand.u32 %v7353, 4294901760
        %v7861 = vsub.f32 %v7353, %v7860
        %v7862 = vand.u32 %v7861, 4294901760
        %7863 = vmatpush1.msra.mxu0 %v7862
        %7864 = vmatprep.subr.mxu0 0.0
        %v7865 = vand.u32 %v7354, 4294901760
        %v7866 = vsub.f32 %v7354, %v7865
        %v7867 = vand.u32 %v7866, 4294901760
        %7868 = vmatpush1.msra.mxu0 %v7867
        %7869 = vmatprep.subr.mxu0 0.0
        %v7870 = vand.u32 %v7355, 4294901760
        %v7871 = vsub.f32 %v7355, %v7870
        %v7872 = vand.u32 %v7871, 4294901760
        %7873 = vmatpush1.msra.mxu0 %v7872
        %7874 = vmatprep.subr.mxu0 0.0
        %v7875 = vand.u32 %v7356, 4294901760
        %v7876 = vsub.f32 %v7356, %v7875
        %v7877 = vand.u32 %v7876, 4294901760
        %7878 = vmatpush1.msra.mxu0 %v7877
        %7879 = vmatprep.subr.mxu0 0.0
        %7880 = vmatpush1.msra.mxu0 0.0
        %7881 = vmatprep.subr.mxu0 0.0
        %7882 = vmatpush1.msra.mxu0 0.0
        %7883 = vmatprep.subr.mxu0 0.0
        %7884 = vmatpush1.msra.mxu0 0.0
        %7885 = vmatprep.subr.mxu0 0.0
        %7886 = vmatpush1.msra.mxu0 0.0
        %7887 = vmatprep.subr.mxu0 0.0
        %7888 = vmatpush1.msra.mxu0 0.0
        %7889 = vmatprep.subr.mxu0 0.0
        %7890 = vmatpush1.msra.mxu0 0.0
        %7891 = vmatprep.subr.mxu0 0.0
        %7892 = vmatpush1.msra.mxu0 0.0
        %7893 = vmatprep.subr.mxu0 0.0
        %7894 = vmatpush1.msra.mxu0 0.0
        %7895 = vmatprep.subr.mxu0 0.0
        %7896 = vmatpush1.msra.mxu0 0.0
        %7897 = vmatprep.subr.mxu0 0.0
        %7898 = vmatpush1.msra.mxu0 0.0
        %7899 = vmatprep.subr.mxu0 0.0
        %7900 = vmatpush1.msra.mxu0 0.0
        %7901 = vmatprep.subr.mxu0 0.0
        %7902 = vmatpush1.msra.mxu0 0.0
        %7903 = vmatprep.subr.mxu0 0.0
        %7904 = vmatpush1.msra.mxu0 0.0
        %7905 = vmatprep.subr.mxu0 0.0
        %7906 = vmatpush1.msra.mxu0 0.0
        %7907 = vmatprep.subr.mxu0 0.0
        %7908 = vmatpush1.msra.mxu0 0.0
        %7909 = vmatprep.subr.mxu0 0.0
        %7910 = vmatpush1.msra.mxu0 0.0
        %7911 = vmatprep.mubr.f32.mxu0 0.0
        %v7912 = vand.u32 %v7339, 4294901760
        %7913 = vmatmul.mubr.f32.gmra.mrb[0].mxu0 %v7912
        %v7914 = vpop.f32.mrb[0].mxu0
        %v7915 = vadd.f32 %v7796, %v7914
        %v7916 = vpop.f32.mrb[0].mxu0
        %7917 = vdwg.mxu0
        %7918 = vmatprep.subr.mxu0 0.0
        %v7919 = vand.u32 %v7341, 4294901760
        %7920 = vmatpush1.msra.mxu0 %v7919
        %7921 = vmatprep.subr.mxu0 0.0
        %v7922 = vand.u32 %v7342, 4294901760
        %7923 = vmatpush1.msra.mxu0 %v7922
        %7924 = vmatprep.subr.mxu0 0.0
        %v7925 = vand.u32 %v7343, 4294901760
        %7926 = vmatpush1.msra.mxu0 %v7925
        %7927 = vmatprep.subr.mxu0 0.0
        %v7928 = vand.u32 %v7344, 4294901760
        %7929 = vmatpush1.msra.mxu0 %v7928
        %7930 = vmatprep.subr.mxu0 0.0
        %v7931 = vand.u32 %v7345, 4294901760
        %7932 = vmatpush1.msra.mxu0 %v7931
        %7933 = vmatprep.subr.mxu0 0.0
        %v7934 = vand.u32 %v7346, 4294901760
        %7935 = vmatpush1.msra.mxu0 %v7934
        %7936 = vmatprep.subr.mxu0 0.0
        %v7937 = vand.u32 %v7347, 4294901760
        %7938 = vmatpush1.msra.mxu0 %v7937
        %7939 = vmatprep.subr.mxu0 0.0
        %v7940 = vand.u32 %v7348, 4294901760
        %7941 = vmatpush1.msra.mxu0 %v7940
        %7942 = vmatprep.subr.mxu0 0.0
        %v7943 = vand.u32 %v7349, 4294901760
        %7944 = vmatpush1.msra.mxu0 %v7943
        %7945 = vmatprep.subr.mxu0 0.0
        %v7946 = vand.u32 %v7350, 4294901760
        %7947 = vmatpush1.msra.mxu0 %v7946
        %7948 = vmatprep.subr.mxu0 0.0
        %v7949 = vand.u32 %v7351, 4294901760
        %7950 = vmatpush1.msra.mxu0 %v7949
        %7951 = vmatprep.subr.mxu0 0.0
        %v7952 = vand.u32 %v7352, 4294901760
        %7953 = vmatpush1.msra.mxu0 %v7952
        %7954 = vmatprep.subr.mxu0 0.0
        %v7955 = vand.u32 %v7353, 4294901760
        %7956 = vmatpush1.msra.mxu0 %v7955
        %7957 = vmatprep.subr.mxu0 0.0
        %v7958 = vand.u32 %v7354, 4294901760
        %7959 = vmatpush1.msra.mxu0 %v7958
        %7960 = vmatprep.subr.mxu0 0.0
        %v7961 = vand.u32 %v7355, 4294901760
        %7962 = vmatpush1.msra.mxu0 %v7961
        %7963 = vmatprep.subr.mxu0 0.0
        %v7964 = vand.u32 %v7356, 4294901760
        %7965 = vmatpush1.msra.mxu0 %v7964
        %7966 = vmatprep.subr.mxu0 0.0
        %7967 = vmatpush1.msra.mxu0 0.0
        %7968 = vmatprep.subr.mxu0 0.0
        %7969 = vmatpush1.msra.mxu0 0.0
        %7970 = vmatprep.subr.mxu0 0.0
        %7971 = vmatpush1.msra.mxu0 0.0
        %7972 = vmatprep.subr.mxu0 0.0
        %7973 = vmatpush1.msra.mxu0 0.0
        %7974 = vmatprep.subr.mxu0 0.0
        %7975 = vmatpush1.msra.mxu0 0.0
        %7976 = vmatprep.subr.mxu0 0.0
        %7977 = vmatpush1.msra.mxu0 0.0
        %7978 = vmatprep.subr.mxu0 0.0
        %7979 = vmatpush1.msra.mxu0 0.0
        %7980 = vmatprep.subr.mxu0 0.0
        %7981 = vmatpush1.msra.mxu0 0.0
        %7982 = vmatprep.subr.mxu0 0.0
        %7983 = vmatpush1.msra.mxu0 0.0
        %7984 = vmatprep.subr.mxu0 0.0
        %7985 = vmatpush1.msra.mxu0 0.0
        %7986 = vmatprep.subr.mxu0 0.0
        %7987 = vmatpush1.msra.mxu0 0.0
        %7988 = vmatprep.subr.mxu0 0.0
        %7989 = vmatpush1.msra.mxu0 0.0
        %7990 = vmatprep.subr.mxu0 0.0
        %7991 = vmatpush1.msra.mxu0 0.0
        %7992 = vmatprep.subr.mxu0 0.0
        %7993 = vmatpush1.msra.mxu0 0.0
        %7994 = vmatprep.subr.mxu0 0.0
        %7995 = vmatpush1.msra.mxu0 0.0
        %7996 = vmatprep.subr.mxu0 0.0
        %7997 = vmatpush1.msra.mxu0 0.0
        %7998 = vmatprep.mubr.f32.mxu0 0.0
        %v7999 = vand.u32 %v7339, 4294901760
        %8000 = vmatmul.mubr.f32.gmra.mrb[0].mxu0 %v7999
        %v8001 = vpop.f32.mrb[0].mxu0
        %v8002 = vadd.f32 %v7915, %v8001
        %v8003 = vpop.f32.mrb[0].mxu0
        %8004 = vdwg.mxu0
        %8005 = vst [vmem:[#allocation16] sm:$0xf] %v8002
        %s8006 = sand.u32 %s212, 1
        %s8007 = scalar_lea.sflag [#allocation6], %s8006
        %s8008 = sand.u32 %s212, 1
        %s8009 = smul.addr %s8008, 16
        %s8010 = scalar_lea.vmem [#allocation13], %s8009
        // Predicated region
        $region77: #{tpu_custom_call.1} parent=51 // pred_check
          %p8011 = pneg %p222
        $region78: #{tpu_custom_call.1} parent=51 // pred_check_branch
          %8013 = sbr.rel (%p8011) target = $region80
        $region79: #{tpu_custom_call.1} parent=51 // pred_region
          %s8014 = smul.u32 2, %s31
          %s8016 = ssub.s32 256, 256
          %8017 = vsyncadd %s8007, %s8016
          %s8018 = smul.addr %s8014, 128
          %s8019 = scalar_lea.hbm %s8, %s8018
          %s8020 = sshll.u32 %s8010, 4
          %s8021 = int_to_ptr.vmem [resolvable:$true] %s8020
          %8026 = dma.vmem_to_hbm [thread:$0]  %s8021, 256, %s8019, %s8007, 128, 128, 8
        $region80: #{tpu_custom_call.1} parent=51 // pred_fallthru
          _
        // Predicated region
        $region81: #{tpu_custom_call.1} parent=51 // pred_check
          %p8027 = pneg %p243
        $region82: #{tpu_custom_call.1} parent=51 // pred_check_branch
          %8029 = sbr.rel (%p8027) target = $region84
        $region83: #{tpu_custom_call.1} parent=51 // pred_region
          %s8031 = ssub.s32 64, 64
          %8032 = vsyncadd [#allocation15], %s8031
          %s8034 = sshll.u32 [#allocation14], 4
          %s8035 = int_to_ptr.vmem [resolvable:$true] %s8034
          %8037 = dma.vmem_to_hbm [thread:$0]  %s8035, 64, %s9, [#allocation15]
        $region84: #{tpu_custom_call.1} parent=51 // pred_fallthru
          _
        // Predicated region
        $region85: #{tpu_custom_call.1} parent=51 // pred_check
          %p8038 = pneg %p264
        $region86: #{tpu_custom_call.1} parent=51 // pred_check_branch
          %8040 = sbr.rel (%p8038) target = $region88
        $region87: #{tpu_custom_call.1} parent=51 // pred_region
          %s8042 = ssub.s32 64, 64
          %8043 = vsyncadd [#allocation15], %s8042
          %s8045 = sshll.u32 [#allocation16], 4
          %s8046 = int_to_ptr.vmem [resolvable:$true] %s8045
          %8048 = dma.vmem_to_hbm [thread:$0]  %s8046, 64, %s10, [#allocation15]
        $region88: #{tpu_custom_call.1} parent=51 // pred_fallthru
          _
        // Predicated region
        $region89: #{tpu_custom_call.1} parent=51 // pred_check
          %p8049 = pneg %p243
        $region90: #{tpu_custom_call.1} parent=51 // pred_check_branch
          %8051 = sbr.rel (%p8049) target = $region92
        $region91: #{tpu_custom_call.1} parent=51 // pred_region
          %8052 = dma.done [#allocation15], 64
        $region92: #{tpu_custom_call.1} parent=51 // pred_fallthru
          _
        // Predicated region
        $region93: #{tpu_custom_call.1} parent=51 // pred_check
          %p8053 = pneg %p264
        $region94: #{tpu_custom_call.1} parent=51 // pred_check_branch
          %8055 = sbr.rel (%p8053) target = $region96
        $region95: #{tpu_custom_call.1} parent=51 // pred_region
          %8056 = dma.done [#allocation15], 64
        $region96: #{tpu_custom_call.1} parent=51 // pred_fallthru
          _
      $region52: #{tpu_custom_call.1} parent=5 // pred_fallthru
        _
      %p8057 = scmp.le.s32.totalorder 2, %s26
      // Predicated region
      $region97: #{tpu_custom_call.1} parent=5 // pred_check
        %p8058 = pneg %p8057
      $region98: #{tpu_custom_call.1} parent=5 // pred_check_branch
        %8060 = sbr.rel (%p8058) target = $region100
      $region99: #{tpu_custom_call.1} parent=5 // pred_region
        %s8061 = ssub.s32 %s26, 2
        // Predicated region
        $region101: #{tpu_custom_call.1} parent=99 // pred_check
          %p8062 = pneg %p228
        $region102: #{tpu_custom_call.1} parent=99 // pred_check_branch
          %8064 = sbr.rel (%p8062) target = $region104
        $region103: #{tpu_custom_call.1} parent=99 // pred_region
          %s8065 = sand.u32 %s213, 1
          %s8066 = scalar_lea.sflag [#allocation6], %s8065
          %s8067 = sand.u32 %s213, 1
          %s8068 = smul.addr %s8067, 16
          %s8069 = scalar_lea.vmem [#allocation13], %s8068
          %8070 = dma.done %s8066, 256
        $region104: #{tpu_custom_call.1} parent=99 // pred_fallthru
          _
      $region100: #{tpu_custom_call.1} parent=5 // pred_fallthru
        _
    $region6: #{tpu_custom_call.1} parent=1 // loop_footer
      %s30 = sadd.s32 1, %s26
    $region7: #{tpu_custom_call.1} parent=1 // loop_footer_branch
      %25 = sbr.rel target = $region3
    $region8: #{tpu_custom_call.1} parent=1 // loop_exit
      _
    %8071 = vsyncpa [#allocation5], 1
    %s8072 = scalar_lea.sflag [#allocation5], 1
    %8073 = vsyncpa %s8072, 1
    %8074 = vsyncpa [#allocation8], 1
    %8075 = vsyncpa [#allocation11], 1
    %8076 = vsyncpa [#allocation6], 1
    %s8077 = scalar_lea.sflag [#allocation6], 1
    %8078 = vsyncpa %s8077, 1
    %8079 = vsyncpa [#allocation15], 1

</llo_original>
